<compile_context>
chip_gen: v5e
topology: v5e:2x2
jax: 0.10.0
libtpu: 0.0.40
codegen_flags: <defaults>
</compile_context>

<pallas_src>
import functools

import jax
import jax.numpy as jnp
from jax.experimental import pallas as pl
from jax.experimental.pallas import tpu as pltpu


def _cdiv(a, b):
    return -(-a // b)


def _round_up(n, m):
    return _cdiv(n, m) * m


def _pad_gates(w, H, Hp):
    """Pad the trailing 4*H gate axis ([i,f,g,o] blocks) to 4*Hp with zeros."""
    lead = w.shape[:-1]
    w4 = w.reshape(lead + (4, H))
    w4 = jnp.pad(w4, [(0, 0)] * len(lead) + [(0, 0), (0, Hp - H)])
    return w4.reshape(lead + (4 * Hp,))


def _timenet_kernel(num_layers, seq_len, compute_dtype, *refs):
    # refs layout:
    #   x_ref                   (TT*Btile, I)    streamed chunk (compute dtype)
    #   (w_ih_T, w_hh_T, bias) * num_layers      resident weights
    #   w_lin_T, b_lin                           resident linear head
    #   out_ref                 (Btile, Cp)
    #   h_ref, c_ref            (L, Btile, Hp)   f32 carry (scratch)
    #   proj_ref                (TT*Btile, 4Hp)  f32 scratch (hoisted proj)
    #   seq_ref                 (TT*Btile, Hp)   scratch (next layer's input)
    x_ref = refs[0]
    layer_refs = [(refs[1 + 3 * l], refs[2 + 3 * l], refs[3 + 3 * l])
                  for l in range(num_layers)]
    base = 1 + 3 * num_layers
    w_lin_ref, b_lin_ref = refs[base], refs[base + 1]
    out_ref = refs[base + 2]
    h_ref, c_ref = refs[base + 3], refs[base + 4]
    proj_ref, seq_ref = refs[base + 5], refs[base + 6]

    chunk = pl.program_id(1)
    nchunks = pl.num_programs(1)

    _, Btile, Hp = h_ref.shape
    TT = x_ref.shape[0] // Btile              # timesteps per chunk (static)
    needs_mask = (seq_len % TT) != 0          # static: only last chunk ragged

    @pl.when(chunk == 0)
    def _init():
        # New batch tile: reset the recurrent carry.  Zeroing out_ref is cheap
        # insurance against writeback of uninitialised VMEM.
        h_ref[...] = jnp.zeros_like(h_ref)
        c_ref[...] = jnp.zeros_like(c_ref)
        out_ref[...] = jnp.zeros_like(out_ref)

    h = None
    for l in range(num_layers):
        w_ih_ref, w_hh_ref, bias_ref = layer_refs[l]

        src = x_ref[...] if l == 0 else seq_ref[...]
        if src.dtype != compute_dtype:
            src = src.astype(compute_dtype)
        # Whole-chunk input projection: one big MXU matmul off the serial
        # h-dependence chain; result lives in VMEM, not vregs.  Bias folded
        # in once per layer per chunk.
        proj_ref[...] = (jnp.dot(src, w_ih_ref[...],
                                 preferred_element_type=jnp.float32)
                         + bias_ref[...])

        w_hh = w_hh_ref[...]                  # (Hp, 4Hp) compute dtype
        h = h_ref[l]                          # (Btile, Hp) f32 carry
        c = c_ref[l]
        keep_seq = (l + 1 < num_layers)

        # Serial recurrence.  TT is bounded by the wrapper (<= 32 by default),
        # so a static unroll is fine; live ranges stay bounded because each
        # step's h goes straight to seq_ref.
        # TODO(synk): layer-wavefront (1-step skew across layers) and
        # pltpu.matmul_push_rhs staging of w_hh would further shorten the
        # latency-bound per-step chain; not implemented here.
        for t in range(TT):
            row = t * Btile                   # static, sublane-aligned offset
            gates = (proj_ref[row:row + Btile, :]
                     + jnp.dot(h.astype(compute_dtype), w_hh,
                               preferred_element_type=jnp.float32))
            # Lane-aligned 128-wide gate slices (Hp is a multiple of 128).
            i_g = jax.nn.sigmoid(gates[:, 0 * Hp:1 * Hp])
            f_g = jax.nn.sigmoid(gates[:, 1 * Hp:2 * Hp])
            g_g = jnp.tanh(gates[:, 2 * Hp:3 * Hp])
            o_g = jax.nn.sigmoid(gates[:, 3 * Hp:4 * Hp])
            c_new = f_g * c + i_g * g_g
            h_new = o_g * jnp.tanh(c_new)
            if needs_mask:
                valid = (chunk * TT + t) < seq_len   # hold state on padding
                c = jnp.where(valid, c_new, c)
                h = jnp.where(valid, h_new, h)
            else:
                c, h = c_new, h_new
            if keep_seq:
                seq_ref[row:row + Btile, :] = h.astype(seq_ref.dtype)
        h_ref[l] = h
        c_ref[l] = c

    last_h = h  # top-layer hidden state at the end of this chunk

    @pl.when(chunk == nchunks - 1)
    def _finalize():
        # Lane-dense (Btile, Cp) output block; real classes sliced outside.
        logits = (jnp.dot(last_h.astype(compute_dtype), w_lin_ref[...],
                          preferred_element_type=jnp.float32)
                  + b_lin_ref[...])
        out_ref[...] = logits.astype(out_ref.dtype)


def timenet_forward(x, lstm_params, lin_w, lin_b, *, num_layers, hidden_size,
                    num_classes, time_chunk=None, batch_tile=None,
                    use_bf16=True):
    """x: (B, T, input_size) f32.  lstm_params: list of (w_ih, w_hh, b_ih, b_hh)
    with PyTorch shapes.  lin_w: (num_classes, hidden), lin_b: (num_classes,)."""
    B, T, I = x.shape
    H = hidden_size
    Hp = _round_up(H, 128)             # lane-aligned per-gate blocks
    Cp = _round_up(num_classes, 128)   # lane-dense output block
    wdt = jnp.bfloat16 if use_bf16 else jnp.float32
    wbytes = 2 if use_bf16 else 4

    # TODO(synk): if production H is genuinely < 128, pack the whole 4H gate
    # axis into one 128-lane block instead of padding each gate to Hp.

    # ---- batch tiling: leading "parallel" grid axis (v7x dual TensorCore).
    Bp = _round_up(B, 8)
    if batch_tile is None:
        if Bp >= 16:
            num_btiles = 2
            batch_tile = _round_up(_cdiv(Bp, 2), 8)
        else:
            num_btiles = 1
            batch_tile = Bp
    else:
        batch_tile = _round_up(batch_tile, 8)
        num_btiles = _cdiv(Bp, batch_tile)
    Bfull = num_btiles * batch_tile

    # ---- time chunking: cdiv grid + in-kernel masking for ragged T.
    if time_chunk is None:
        # Target >= 256 MXU LHS rows for the hoisted projection (fills the
        # 256-row v6e/v7x MXU), capped so the f32 proj scratch stays <= 8 MiB.
        tt = max(1, 256 // batch_tile)
        tt = min(tt, max(1, (8 << 20) // (batch_tile * 4 * Hp * 4)))
        time_chunk = max(1, min(tt, T))
    else:
        time_chunk = max(1, min(time_chunk, T))
    nchunks = _cdiv(T, time_chunk)
    Tp = nchunks * time_chunk

    # bf16 sequence scratch only when per-step stores stay (16,128)-tile
    # aligned; otherwise keep it f32 (native (8,128) tiles) and cast at the
    # next layer's batched projection.
    seq_dt = wdt if (not use_bf16 or batch_tile % 16 == 0) else jnp.float32
    seq_bytes = 2 if seq_dt == jnp.bfloat16 else 4

    # ---- operand layout: time-major rows per batch tile, flattened to 2-D so
    # each chunk is a contiguous row slab and per-step views are aligned.
    # Padded batch rows / hidden columns are exactly zero and never affect
    # real units (zero-padded weights & biases); padded timesteps are masked.
    x_p = jnp.pad(x.astype(jnp.float32),
                  ((0, Bfull - B), (0, Tp - T), (0, 0)))
    x_t = x_p.reshape(num_btiles, batch_tile, Tp, I).transpose(0, 2, 1, 3)
    x_2d = x_t.reshape(num_btiles, Tp * batch_tile, I).astype(wdt)

    weight_inputs = []
    weight_shapes = []
    for l in range(num_layers):
        w_ih, w_hh, b_ih, b_hh = lstm_params[l]
        in_sz = w_ih.shape[1]
        in_pad = in_sz if l == 0 else Hp   # deeper layers consume padded h

        w_ih_t = _pad_gates(w_ih.T.astype(jnp.float32), H, Hp)   # (in_sz, 4Hp)
        w_ih_t = jnp.pad(w_ih_t, ((0, in_pad - in_sz), (0, 0)))
        w_hh_t = _pad_gates(w_hh.T.astype(jnp.float32), H, Hp)   # (H, 4Hp)
        w_hh_t = jnp.pad(w_hh_t, ((0, Hp - H), (0, 0)))
        bias = _pad_gates((b_ih + b_hh).astype(jnp.float32)[None, :], H, Hp)

        weight_inputs += [w_ih_t.astype(wdt), w_hh_t.astype(wdt), bias]
        weight_shapes += [(in_pad, 4 * Hp), (Hp, 4 * Hp), (1, 4 * Hp)]

    w_lin_t = jnp.zeros((Hp, Cp), jnp.float32).at[:H, :num_classes].set(
        lin_w.T.astype(jnp.float32)).astype(wdt)
    b_lin_p = jnp.zeros((1, Cp), jnp.float32).at[0, :num_classes].set(
        lin_b.astype(jnp.float32))
    weight_inputs += [w_lin_t, b_lin_p]
    weight_shapes += [(Hp, Cp), (1, Cp)]

    kernel = functools.partial(_timenet_kernel, num_layers, T, wdt)

    # Explicit scoped-VMEM budget: resident weights (x buffers) + streamed x
    # chunk (x2) + proj/seq/h/c scratch + output block, with headroom.
    def _vmem_limit(weight_buffers):
        w = 0
        for (r, c) in weight_shapes:
            w += r * c * (4 if r == 1 else wbytes)   # biases stay f32
        w *= weight_buffers
        est = (w
               + 2 * time_chunk * batch_tile * I * wbytes
               + time_chunk * batch_tile * 4 * Hp * 4
               + time_chunk * batch_tile * Hp * seq_bytes
               + 2 * num_layers * batch_tile * Hp * 4
               + 2 * batch_tile * Cp * 4)
        return max(min(int(est * 1.25) + (8 << 20), 128 << 20), 32 << 20)

    def _run(weight_buffers):
        def wspec(shape):
            if weight_buffers == 1:
                # Resident weights never change: single-buffer them so they
                # are not held twice in VMEM (the critical constraint on
                # v7x's 64 MiB physical VMEM).
                return pl.BlockSpec(shape, lambda b, t: (0, 0),
                                    pipeline_mode=pl.Buffered(1))
            return pl.BlockSpec(shape, lambda b, t: (0, 0))

        in_specs = [pl.BlockSpec((None, time_chunk * batch_tile, I),
                                 lambda b, t: (b, t, 0))]
        in_specs += [wspec(s) for s in weight_shapes]

        out_padded = pl.pallas_call(
            kernel,
            out_shape=jax.ShapeDtypeStruct((num_btiles, batch_tile, Cp),
                                           jnp.float32),
            grid=(num_btiles, nchunks),
            in_specs=in_specs,
            out_specs=pl.BlockSpec((None, batch_tile, Cp),
                                   lambda b, t: (b, 0, 0)),
            scratch_shapes=[
                pltpu.VMEM((num_layers, batch_tile, Hp), jnp.float32),   # h
                pltpu.VMEM((num_layers, batch_tile, Hp), jnp.float32),   # c
                pltpu.VMEM((time_chunk * batch_tile, 4 * Hp), jnp.float32),
                pltpu.VMEM((time_chunk * batch_tile, Hp), seq_dt),
            ],
            compiler_params=pltpu.CompilerParams(
                dimension_semantics=("parallel", "arbitrary"),
                vmem_limit_bytes=_vmem_limit(weight_buffers)),
        )(x_2d, *weight_inputs)
        return jax.block_until_ready(out_padded)

    try:
        out_padded = _run(1)       # single-buffered resident weights
    except Exception:              # fallback: default double-buffered pipeline
        out_padded = _run(2)

    return out_padded.reshape(Bfull, Cp)[:B, :num_classes]


def timenet_reference(x, lstm_params, lin_w, lin_b):
    """Pure-JAX (f32) reference mirroring torch.nn.LSTM + Linear semantics."""
    B, T, _ = x.shape
    out = x
    for (w_ih, w_hh, b_ih, b_hh) in lstm_params:
        H = w_hh.shape[1]
        h = jnp.zeros((B, H), jnp.float32)
        c = jnp.zeros((B, H), jnp.float32)
        hs = []
        for t in range(T):
            gates = out[:, t, :] @ w_ih.T + h @ w_hh.T + b_ih + b_hh
            i_g = jax.nn.sigmoid(gates[:, 0 * H:1 * H])
            f_g = jax.nn.sigmoid(gates[:, 1 * H:2 * H])
            g_g = jnp.tanh(gates[:, 2 * H:3 * H])
            o_g = jax.nn.sigmoid(gates[:, 3 * H:4 * H])
            c = f_g * c + i_g * g_g
            h = o_g * jnp.tanh(c)
            hs.append(h)
        out = jnp.stack(hs, axis=1)
    return out[:, -1, :] @ lin_w.T + lin_b


if __name__ == "__main__":
    # Small shapes consistent with timeNet(num_layers, input_size, hidden_size,
    # num_classes).  T=13 with time_chunk=8 exercises both the time-chunked
    # grid and the ragged-T masking path.
    num_layers, input_size, hidden_size, num_classes = 2, 16, 32, 4
    B, T = 8, 13

    key = jax.random.PRNGKey(0)

    def uniform(key, shape, scale=0.1):
        return jax.random.uniform(key, shape, jnp.float32, -scale, scale)

    # Deterministic parameter init (synthetic; matches PyTorch parameter shapes).
    lstm_params = []
    for l in range(num_layers):
        in_sz = input_size if l == 0 else hidden_size
        key, k1, k2, k3, k4 = jax.random.split(key, 5)
        w_ih = uniform(k1, (4 * hidden_size, in_sz))
        w_hh = uniform(k2, (4 * hidden_size, hidden_size))
        b_ih = uniform(k3, (4 * hidden_size,))
        b_hh = uniform(k4, (4 * hidden_size,))
        lstm_params.append((w_ih, w_hh, b_ih, b_hh))

    key, k_lw, k_lb, k_x = jax.random.split(key, 4)
    lin_w = uniform(k_lw, (num_classes, hidden_size))
    lin_b = uniform(k_lb, (num_classes,))

    x = jax.random.normal(k_x, (B, T, input_size), jnp.float32)

    out = timenet_forward(x, lstm_params, lin_w, lin_b,
                          num_layers=num_layers, hidden_size=hidden_size,
                          num_classes=num_classes, time_chunk=8)
    out = jax.block_until_ready(out)

    ref = timenet_reference(x, lstm_params, lin_w, lin_b)
    assert out.shape == (B, num_classes)
    # bf16 matmul operands / bf16-streamed x with f32 accumulation.
    assert jnp.allclose(out, ref, rtol=2e-2, atol=2e-2), "mismatch vs reference"

    print("KERNEL_OK")
</pallas_src>

<mosaic_0001>
module attributes {stable_mosaic.version = 11 : i64} {
  func.func @_timenet_kernel(%arg0: i32, %arg1: i32, %arg2: memref<1x64x16xbf16, #tpu.memory_space<vmem>>, %arg3: memref<16x512xbf16, #tpu.memory_space<vmem>>, %arg4: memref<128x512xbf16, #tpu.memory_space<vmem>>, %arg5: memref<1x512xf32, #tpu.memory_space<vmem>>, %arg6: memref<128x512xbf16, #tpu.memory_space<vmem>>, %arg7: memref<128x512xbf16, #tpu.memory_space<vmem>>, %arg8: memref<1x512xf32, #tpu.memory_space<vmem>>, %arg9: memref<128x128xbf16, #tpu.memory_space<vmem>>, %arg10: memref<1x128xf32, #tpu.memory_space<vmem>>, %arg11: memref<1x8x128xf32, #tpu.memory_space<vmem>>, %arg12: memref<2x8x128xf32, #tpu.memory_space<vmem>>, %arg13: memref<2x8x128xf32, #tpu.memory_space<vmem>>, %arg14: memref<64x512xf32, #tpu.memory_space<vmem>>, %arg15: memref<64x128xf32, #tpu.memory_space<vmem>>) attributes {dimension_semantics = [#tpu.dimension_semantics<parallel>, #tpu.dimension_semantics<arbitrary>], iteration_bounds = array<i64: 1, 2>, scalar_prefetch = 0 : i64, scratch_operands = 4 : i64, tpu.core_type = #tpu.core_type<tc>, window_params = [{transform_indices = @transform_0, window_bounds = array<i64: 1, 64, 16>}, {pipeline_mode = #tpu.pipeline_mode<synchronous>, transform_indices = @transform_1, window_bounds = array<i64: 16, 512>}, {pipeline_mode = #tpu.pipeline_mode<synchronous>, transform_indices = @transform_2, window_bounds = array<i64: 128, 512>}, {pipeline_mode = #tpu.pipeline_mode<synchronous>, transform_indices = @transform_3, window_bounds = array<i64: 1, 512>}, {pipeline_mode = #tpu.pipeline_mode<synchronous>, transform_indices = @transform_4, window_bounds = array<i64: 128, 512>}, {pipeline_mode = #tpu.pipeline_mode<synchronous>, transform_indices = @transform_5, window_bounds = array<i64: 128, 512>}, {pipeline_mode = #tpu.pipeline_mode<synchronous>, transform_indices = @transform_6, window_bounds = array<i64: 1, 512>}, {pipeline_mode = #tpu.pipeline_mode<synchronous>, transform_indices = @transform_7, window_bounds = array<i64: 128, 128>}, {pipeline_mode = #tpu.pipeline_mode<synchronous>, transform_indices = @transform_8, window_bounds = array<i64: 1, 128>}, {transform_indices = @transform_9, window_bounds = array<i64: 1, 8, 128>}]} {
    %c0_i32 = arith.constant 0 : i32
    %0 = arith.cmpi eq, %arg1, %c0_i32 : i32
    %1 = arith.extui %0 : i1 to i32
    %c0_i32_0 = arith.constant 0 : i32
    %2 = arith.cmpi ne, %1, %c0_i32_0 : i32
    scf.if %2 {
      %cst_191 = arith.constant 0.000000e+00 : f32
      %596 = vector.broadcast %cst_191 : f32 to vector<2x8x128xf32>
      %c0_192 = arith.constant 0 : index
      %c0_193 = arith.constant 0 : index
      %c0_194 = arith.constant 0 : index
      %597 = vector.load %arg12[%c0_192, %c0_193, %c0_194] : memref<2x8x128xf32, #tpu.memory_space<vmem>>, vector<2x8x128xf32>
      tpu.vector_store %arg12[%c0_192, %c0_193, %c0_194], %596 {strides = array<i32>} : memref<2x8x128xf32, #tpu.memory_space<vmem>>, vector<2x8x128xf32>,
      %cst_195 = arith.constant 0.000000e+00 : f32
      %598 = vector.broadcast %cst_195 : f32 to vector<2x8x128xf32>
      %c0_196 = arith.constant 0 : index
      %c0_197 = arith.constant 0 : index
      %c0_198 = arith.constant 0 : index
      %599 = vector.load %arg13[%c0_196, %c0_197, %c0_198] : memref<2x8x128xf32, #tpu.memory_space<vmem>>, vector<2x8x128xf32>
      tpu.vector_store %arg13[%c0_196, %c0_197, %c0_198], %598 {strides = array<i32>} : memref<2x8x128xf32, #tpu.memory_space<vmem>>, vector<2x8x128xf32>,
      %cst_199 = arith.constant 0.000000e+00 : f32
      %600 = vector.broadcast %cst_199 : f32 to vector<8x128xf32>
      %c0_200 = arith.constant 0 : index
      %c0_201 = arith.constant 0 : index
      %c0_202 = arith.constant 0 : index
      %601 = vector.load %arg11[%c0_200, %c0_201, %c0_202] : memref<1x8x128xf32, #tpu.memory_space<vmem>>, vector<1x8x128xf32>
      %602 = vector.shape_cast %601 : vector<1x8x128xf32> to vector<8x128xf32>
      %603 = vector.shape_cast %600 : vector<8x128xf32> to vector<1x8x128xf32>
      tpu.vector_store %arg11[%c0_200, %c0_201, %c0_202], %603 {strides = array<i32>} : memref<1x8x128xf32, #tpu.memory_space<vmem>>, vector<1x8x128xf32>,
    } else {
    }
    %c0 = arith.constant 0 : index
    %c0_1 = arith.constant 0 : index
    %c0_2 = arith.constant 0 : index
    %3 = vector.load %arg2[%c0, %c0_1, %c0_2] : memref<1x64x16xbf16, #tpu.memory_space<vmem>>, vector<1x64x16xbf16>
    %4 = vector.shape_cast %3 : vector<1x64x16xbf16> to vector<64x16xbf16>
    %c0_3 = arith.constant 0 : index
    %c0_4 = arith.constant 0 : index
    %5 = vector.load %arg3[%c0_3, %c0_4] : memref<16x512xbf16, #tpu.memory_space<vmem>>, vector<16x512xbf16>
    %cst = arith.constant dense<0.000000e+00> : vector<64x512xf32>
    %6 = tpu.matmul %4, %5, %cst {dimension_numbers = #tpu.dot_dimension_numbers<[1], [0], [0], [1], [0, 0, 1, 1], [], []>} : vector<64x16xbf16>, vector<16x512xbf16>, vector<64x512xf32> -> vector<64x512xf32>
    %c0_5 = arith.constant 0 : index
    %c0_6 = arith.constant 0 : index
    %7 = vector.load %arg5[%c0_5, %c0_6] : memref<1x512xf32, #tpu.memory_space<vmem>>, vector<1x512xf32>
    %8 = vector.broadcast %7 : vector<1x512xf32> to vector<64x512xf32>
    %9 = arith.addf %6, %8 : vector<64x512xf32>
    %c0_7 = arith.constant 0 : index
    %c0_8 = arith.constant 0 : index
    %10 = vector.load %arg14[%c0_7, %c0_8] : memref<64x512xf32, #tpu.memory_space<vmem>>, vector<64x512xf32>
    tpu.vector_store %arg14[%c0_7, %c0_8], %9 {strides = array<i32>} : memref<64x512xf32, #tpu.memory_space<vmem>>, vector<64x512xf32>,
    %c0_9 = arith.constant 0 : index
    %c0_10 = arith.constant 0 : index
    %11 = vector.load %arg4[%c0_9, %c0_10] : memref<128x512xbf16, #tpu.memory_space<vmem>>, vector<128x512xbf16>
    %c0_11 = arith.constant 0 : index
    %c0_12 = arith.constant 0 : index
    %c0_13 = arith.constant 0 : index
    %12 = vector.load %arg12[%c0_11, %c0_12, %c0_13] : memref<2x8x128xf32, #tpu.memory_space<vmem>>, vector<1x8x128xf32>
    %13 = vector.shape_cast %12 : vector<1x8x128xf32> to vector<8x128xf32>
    %c0_14 = arith.constant 0 : index
    %c0_15 = arith.constant 0 : index
    %c0_16 = arith.constant 0 : index
    %14 = vector.load %arg13[%c0_14, %c0_15, %c0_16] : memref<2x8x128xf32, #tpu.memory_space<vmem>>, vector<1x8x128xf32>
    %15 = vector.shape_cast %14 : vector<1x8x128xf32> to vector<8x128xf32>
    %c0_17 = arith.constant 0 : index
    %c0_18 = arith.constant 0 : index
    %16 = vector.load %arg14[%c0_17, %c0_18] : memref<64x512xf32, #tpu.memory_space<vmem>>, vector<8x512xf32>
    %17 = arith.truncf %13 : vector<8x128xf32> to vector<8x128xbf16>
    %cst_19 = arith.constant dense<0.000000e+00> : vector<8x512xf32>
    %18 = tpu.matmul %17, %11, %cst_19 {dimension_numbers = #tpu.dot_dimension_numbers<[1], [0], [0], [1], [0, 0, 1, 1], [], []>} : vector<8x128xbf16>, vector<128x512xbf16>, vector<8x512xf32> -> vector<8x512xf32>
    %19 = arith.addf %16, %18 : vector<8x512xf32>
    %20 = vector.extract_strided_slice %19 {offsets = [0, 0], sizes = [8, 128], strides = [1, 1]} : vector<8x512xf32> to vector<8x128xf32>
    %21 = arith.negf %20 : vector<8x128xf32>
    %22 = math.exp %21 : vector<8x128xf32>
    %cst_20 = arith.constant 1.000000e+00 : f32
    %23 = vector.broadcast %cst_20 : f32 to vector<8x128xf32>
    %24 = arith.addf %23, %22 : vector<8x128xf32>
    %25 = arith.divf %23, %24 : vector<8x128xf32>
    %26 = vector.extract_strided_slice %19 {offsets = [0, 128], sizes = [8, 128], strides = [1, 1]} : vector<8x512xf32> to vector<8x128xf32>
    %27 = arith.negf %26 : vector<8x128xf32>
    %28 = math.exp %27 : vector<8x128xf32>
    %cst_21 = arith.constant 1.000000e+00 : f32
    %29 = vector.broadcast %cst_21 : f32 to vector<8x128xf32>
    %30 = arith.addf %29, %28 : vector<8x128xf32>
    %31 = arith.divf %29, %30 : vector<8x128xf32>
    %32 = vector.extract_strided_slice %19 {offsets = [0, 256], sizes = [8, 128], strides = [1, 1]} : vector<8x512xf32> to vector<8x128xf32>
    %33 = math.tanh %32 : vector<8x128xf32>
    %34 = vector.extract_strided_slice %19 {offsets = [0, 384], sizes = [8, 128], strides = [1, 1]} : vector<8x512xf32> to vector<8x128xf32>
    %35 = arith.negf %34 : vector<8x128xf32>
    %36 = math.exp %35 : vector<8x128xf32>
    %cst_22 = arith.constant 1.000000e+00 : f32
    %37 = vector.broadcast %cst_22 : f32 to vector<8x128xf32>
    %38 = arith.addf %37, %36 : vector<8x128xf32>
    %39 = arith.divf %37, %38 : vector<8x128xf32>
    %40 = arith.mulf %31, %15 : vector<8x128xf32>
    %41 = arith.mulf %25, %33 : vector<8x128xf32>
    %42 = arith.addf %40, %41 : vector<8x128xf32>
    %43 = math.tanh %42 : vector<8x128xf32>
    %44 = arith.mulf %39, %43 : vector<8x128xf32>
    %c8_i32 = arith.constant 8 : i32
    %45 = arith.muli %arg1, %c8_i32 : i32
    %c0_i32_23 = arith.constant 0 : i32
    %46 = arith.addi %45, %c0_i32_23 : i32
    %c13_i32 = arith.constant 13 : i32
    %47 = arith.cmpi slt, %46, %c13_i32 : i32
    %48 = arith.select %47, %42, %15 : vector<8x128xf32>
    %49 = arith.select %47, %44, %13 : vector<8x128xf32>
    %c0_24 = arith.constant 0 : index
    %c0_25 = arith.constant 0 : index
    %50 = vector.load %arg15[%c0_24, %c0_25] : memref<64x128xf32, #tpu.memory_space<vmem>>, vector<8x128xf32>
    tpu.vector_store %arg15[%c0_24, %c0_25], %49 {strides = array<i32>} : memref<64x128xf32, #tpu.memory_space<vmem>>, vector<8x128xf32>,
    %c8 = arith.constant 8 : index
    %c0_26 = arith.constant 0 : index
    %51 = vector.load %arg14[%c8, %c0_26] : memref<64x512xf32, #tpu.memory_space<vmem>>, vector<8x512xf32>
    %52 = arith.truncf %49 : vector<8x128xf32> to vector<8x128xbf16>
    %cst_27 = arith.constant dense<0.000000e+00> : vector<8x512xf32>
    %53 = tpu.matmul %52, %11, %cst_27 {dimension_numbers = #tpu.dot_dimension_numbers<[1], [0], [0], [1], [0, 0, 1, 1], [], []>} : vector<8x128xbf16>, vector<128x512xbf16>, vector<8x512xf32> -> vector<8x512xf32>
    %54 = arith.addf %51, %53 : vector<8x512xf32>
    %55 = vector.extract_strided_slice %54 {offsets = [0, 0], sizes = [8, 128], strides = [1, 1]} : vector<8x512xf32> to vector<8x128xf32>
    %56 = arith.negf %55 : vector<8x128xf32>
    %57 = math.exp %56 : vector<8x128xf32>
    %cst_28 = arith.constant 1.000000e+00 : f32
    %58 = vector.broadcast %cst_28 : f32 to vector<8x128xf32>
    %59 = arith.addf %58, %57 : vector<8x128xf32>
    %60 = arith.divf %58, %59 : vector<8x128xf32>
    %61 = vector.extract_strided_slice %54 {offsets = [0, 128], sizes = [8, 128], strides = [1, 1]} : vector<8x512xf32> to vector<8x128xf32>
    %62 = arith.negf %61 : vector<8x128xf32>
    %63 = math.exp %62 : vector<8x128xf32>
    %cst_29 = arith.constant 1.000000e+00 : f32
    %64 = vector.broadcast %cst_29 : f32 to vector<8x128xf32>
    %65 = arith.addf %64, %63 : vector<8x128xf32>
    %66 = arith.divf %64, %65 : vector<8x128xf32>
    %67 = vector.extract_strided_slice %54 {offsets = [0, 256], sizes = [8, 128], strides = [1, 1]} : vector<8x512xf32> to vector<8x128xf32>
    %68 = math.tanh %67 : vector<8x128xf32>
    %69 = vector.extract_strided_slice %54 {offsets = [0, 384], sizes = [8, 128], strides = [1, 1]} : vector<8x512xf32> to vector<8x128xf32>
    %70 = arith.negf %69 : vector<8x128xf32>
    %71 = math.exp %70 : vector<8x128xf32>
    %cst_30 = arith.constant 1.000000e+00 : f32
    %72 = vector.broadcast %cst_30 : f32 to vector<8x128xf32>
    %73 = arith.addf %72, %71 : vector<8x128xf32>
    %74 = arith.divf %72, %73 : vector<8x128xf32>
    %75 = arith.mulf %66, %48 : vector<8x128xf32>
    %76 = arith.mulf %60, %68 : vector<8x128xf32>
    %77 = arith.addf %75, %76 : vector<8x128xf32>
    %78 = math.tanh %77 : vector<8x128xf32>
    %79 = arith.mulf %74, %78 : vector<8x128xf32>
    %c8_i32_31 = arith.constant 8 : i32
    %80 = arith.muli %arg1, %c8_i32_31 : i32
    %c1_i32 = arith.constant 1 : i32
    %81 = arith.addi %80, %c1_i32 : i32
    %c13_i32_32 = arith.constant 13 : i32
    %82 = arith.cmpi slt, %81, %c13_i32_32 : i32
    %83 = arith.select %82, %77, %48 : vector<8x128xf32>
    %84 = arith.select %82, %79, %49 : vector<8x128xf32>
    %c8_33 = arith.constant 8 : index
    %c0_34 = arith.constant 0 : index
    %85 = vector.load %arg15[%c8_33, %c0_34] : memref<64x128xf32, #tpu.memory_space<vmem>>, vector<8x128xf32>
    tpu.vector_store %arg15[%c8_33, %c0_34], %84 {strides = array<i32>} : memref<64x128xf32, #tpu.memory_space<vmem>>, vector<8x128xf32>,
    %c16 = arith.constant 16 : index
    %c0_35 = arith.constant 0 : index
    %86 = vector.load %arg14[%c16, %c0_35] : memref<64x512xf32, #tpu.memory_space<vmem>>, vector<8x512xf32>
    %87 = arith.truncf %84 : vector<8x128xf32> to vector<8x128xbf16>
    %cst_36 = arith.constant dense<0.000000e+00> : vector<8x512xf32>
    %88 = tpu.matmul %87, %11, %cst_36 {dimension_numbers = #tpu.dot_dimension_numbers<[1], [0], [0], [1], [0, 0, 1, 1], [], []>} : vector<8x128xbf16>, vector<128x512xbf16>, vector<8x512xf32> -> vector<8x512xf32>
    %89 = arith.addf %86, %88 : vector<8x512xf32>
    %90 = vector.extract_strided_slice %89 {offsets = [0, 0], sizes = [8, 128], strides = [1, 1]} : vector<8x512xf32> to vector<8x128xf32>
    %91 = arith.negf %90 : vector<8x128xf32>
    %92 = math.exp %91 : vector<8x128xf32>
    %cst_37 = arith.constant 1.000000e+00 : f32
    %93 = vector.broadcast %cst_37 : f32 to vector<8x128xf32>
    %94 = arith.addf %93, %92 : vector<8x128xf32>
    %95 = arith.divf %93, %94 : vector<8x128xf32>
    %96 = vector.extract_strided_slice %89 {offsets = [0, 128], sizes = [8, 128], strides = [1, 1]} : vector<8x512xf32> to vector<8x128xf32>
    %97 = arith.negf %96 : vector<8x128xf32>
    %98 = math.exp %97 : vector<8x128xf32>
    %cst_38 = arith.constant 1.000000e+00 : f32
    %99 = vector.broadcast %cst_38 : f32 to vector<8x128xf32>
    %100 = arith.addf %99, %98 : vector<8x128xf32>
    %101 = arith.divf %99, %100 : vector<8x128xf32>
    %102 = vector.extract_strided_slice %89 {offsets = [0, 256], sizes = [8, 128], strides = [1, 1]} : vector<8x512xf32> to vector<8x128xf32>
    %103 = math.tanh %102 : vector<8x128xf32>
    %104 = vector.extract_strided_slice %89 {offsets = [0, 384], sizes = [8, 128], strides = [1, 1]} : vector<8x512xf32> to vector<8x128xf32>
    %105 = arith.negf %104 : vector<8x128xf32>
    %106 = math.exp %105 : vector<8x128xf32>
    %cst_39 = arith.constant 1.000000e+00 : f32
    %107 = vector.broadcast %cst_39 : f32 to vector<8x128xf32>
    %108 = arith.addf %107, %106 : vector<8x128xf32>
    %109 = arith.divf %107, %108 : vector<8x128xf32>
    %110 = arith.mulf %101, %83 : vector<8x128xf32>
    %111 = arith.mulf %95, %103 : vector<8x128xf32>
    %112 = arith.addf %110, %111 : vector<8x128xf32>
    %113 = math.tanh %112 : vector<8x128xf32>
    %114 = arith.mulf %109, %113 : vector<8x128xf32>
    %c8_i32_40 = arith.constant 8 : i32
    %115 = arith.muli %arg1, %c8_i32_40 : i32
    %c2_i32 = arith.constant 2 : i32
    %116 = arith.addi %115, %c2_i32 : i32
    %c13_i32_41 = arith.constant 13 : i32
    %117 = arith.cmpi slt, %116, %c13_i32_41 : i32
    %118 = arith.select %117, %112, %83 : vector<8x128xf32>
    %119 = arith.select %117, %114, %84 : vector<8x128xf32>
    %c16_42 = arith.constant 16 : index
    %c0_43 = arith.constant 0 : index
    %120 = vector.load %arg15[%c16_42, %c0_43] : memref<64x128xf32, #tpu.memory_space<vmem>>, vector<8x128xf32>
    tpu.vector_store %arg15[%c16_42, %c0_43], %119 {strides = array<i32>} : memref<64x128xf32, #tpu.memory_space<vmem>>, vector<8x128xf32>,
    %c24 = arith.constant 24 : index
    %c0_44 = arith.constant 0 : index
    %121 = vector.load %arg14[%c24, %c0_44] : memref<64x512xf32, #tpu.memory_space<vmem>>, vector<8x512xf32>
    %122 = arith.truncf %119 : vector<8x128xf32> to vector<8x128xbf16>
    %cst_45 = arith.constant dense<0.000000e+00> : vector<8x512xf32>
    %123 = tpu.matmul %122, %11, %cst_45 {dimension_numbers = #tpu.dot_dimension_numbers<[1], [0], [0], [1], [0, 0, 1, 1], [], []>} : vector<8x128xbf16>, vector<128x512xbf16>, vector<8x512xf32> -> vector<8x512xf32>
    %124 = arith.addf %121, %123 : vector<8x512xf32>
    %125 = vector.extract_strided_slice %124 {offsets = [0, 0], sizes = [8, 128], strides = [1, 1]} : vector<8x512xf32> to vector<8x128xf32>
    %126 = arith.negf %125 : vector<8x128xf32>
    %127 = math.exp %126 : vector<8x128xf32>
    %cst_46 = arith.constant 1.000000e+00 : f32
    %128 = vector.broadcast %cst_46 : f32 to vector<8x128xf32>
    %129 = arith.addf %128, %127 : vector<8x128xf32>
    %130 = arith.divf %128, %129 : vector<8x128xf32>
    %131 = vector.extract_strided_slice %124 {offsets = [0, 128], sizes = [8, 128], strides = [1, 1]} : vector<8x512xf32> to vector<8x128xf32>
    %132 = arith.negf %131 : vector<8x128xf32>
    %133 = math.exp %132 : vector<8x128xf32>
    %cst_47 = arith.constant 1.000000e+00 : f32
    %134 = vector.broadcast %cst_47 : f32 to vector<8x128xf32>
    %135 = arith.addf %134, %133 : vector<8x128xf32>
    %136 = arith.divf %134, %135 : vector<8x128xf32>
    %137 = vector.extract_strided_slice %124 {offsets = [0, 256], sizes = [8, 128], strides = [1, 1]} : vector<8x512xf32> to vector<8x128xf32>
    %138 = math.tanh %137 : vector<8x128xf32>
    %139 = vector.extract_strided_slice %124 {offsets = [0, 384], sizes = [8, 128], strides = [1, 1]} : vector<8x512xf32> to vector<8x128xf32>
    %140 = arith.negf %139 : vector<8x128xf32>
    %141 = math.exp %140 : vector<8x128xf32>
    %cst_48 = arith.constant 1.000000e+00 : f32
    %142 = vector.broadcast %cst_48 : f32 to vector<8x128xf32>
    %143 = arith.addf %142, %141 : vector<8x128xf32>
    %144 = arith.divf %142, %143 : vector<8x128xf32>
    %145 = arith.mulf %136, %118 : vector<8x128xf32>
    %146 = arith.mulf %130, %138 : vector<8x128xf32>
    %147 = arith.addf %145, %146 : vector<8x128xf32>
    %148 = math.tanh %147 : vector<8x128xf32>
    %149 = arith.mulf %144, %148 : vector<8x128xf32>
    %c8_i32_49 = arith.constant 8 : i32
    %150 = arith.muli %arg1, %c8_i32_49 : i32
    %c3_i32 = arith.constant 3 : i32
    %151 = arith.addi %150, %c3_i32 : i32
    %c13_i32_50 = arith.constant 13 : i32
    %152 = arith.cmpi slt, %151, %c13_i32_50 : i32
    %153 = arith.select %152, %147, %118 : vector<8x128xf32>
    %154 = arith.select %152, %149, %119 : vector<8x128xf32>
    %c24_51 = arith.constant 24 : index
    %c0_52 = arith.constant 0 : index
    %155 = vector.load %arg15[%c24_51, %c0_52] : memref<64x128xf32, #tpu.memory_space<vmem>>, vector<8x128xf32>
    tpu.vector_store %arg15[%c24_51, %c0_52], %154 {strides = array<i32>} : memref<64x128xf32, #tpu.memory_space<vmem>>, vector<8x128xf32>,
    %c32 = arith.constant 32 : index
    %c0_53 = arith.constant 0 : index
    %156 = vector.load %arg14[%c32, %c0_53] : memref<64x512xf32, #tpu.memory_space<vmem>>, vector<8x512xf32>
    %157 = arith.truncf %154 : vector<8x128xf32> to vector<8x128xbf16>
    %cst_54 = arith.constant dense<0.000000e+00> : vector<8x512xf32>
    %158 = tpu.matmul %157, %11, %cst_54 {dimension_numbers = #tpu.dot_dimension_numbers<[1], [0], [0], [1], [0, 0, 1, 1], [], []>} : vector<8x128xbf16>, vector<128x512xbf16>, vector<8x512xf32> -> vector<8x512xf32>
    %159 = arith.addf %156, %158 : vector<8x512xf32>
    %160 = vector.extract_strided_slice %159 {offsets = [0, 0], sizes = [8, 128], strides = [1, 1]} : vector<8x512xf32> to vector<8x128xf32>
    %161 = arith.negf %160 : vector<8x128xf32>
    %162 = math.exp %161 : vector<8x128xf32>
    %cst_55 = arith.constant 1.000000e+00 : f32
    %163 = vector.broadcast %cst_55 : f32 to vector<8x128xf32>
    %164 = arith.addf %163, %162 : vector<8x128xf32>
    %165 = arith.divf %163, %164 : vector<8x128xf32>
    %166 = vector.extract_strided_slice %159 {offsets = [0, 128], sizes = [8, 128], strides = [1, 1]} : vector<8x512xf32> to vector<8x128xf32>
    %167 = arith.negf %166 : vector<8x128xf32>
    %168 = math.exp %167 : vector<8x128xf32>
    %cst_56 = arith.constant 1.000000e+00 : f32
    %169 = vector.broadcast %cst_56 : f32 to vector<8x128xf32>
    %170 = arith.addf %169, %168 : vector<8x128xf32>
    %171 = arith.divf %169, %170 : vector<8x128xf32>
    %172 = vector.extract_strided_slice %159 {offsets = [0, 256], sizes = [8, 128], strides = [1, 1]} : vector<8x512xf32> to vector<8x128xf32>
    %173 = math.tanh %172 : vector<8x128xf32>
    %174 = vector.extract_strided_slice %159 {offsets = [0, 384], sizes = [8, 128], strides = [1, 1]} : vector<8x512xf32> to vector<8x128xf32>
    %175 = arith.negf %174 : vector<8x128xf32>
    %176 = math.exp %175 : vector<8x128xf32>
    %cst_57 = arith.constant 1.000000e+00 : f32
    %177 = vector.broadcast %cst_57 : f32 to vector<8x128xf32>
    %178 = arith.addf %177, %176 : vector<8x128xf32>
    %179 = arith.divf %177, %178 : vector<8x128xf32>
    %180 = arith.mulf %171, %153 : vector<8x128xf32>
    %181 = arith.mulf %165, %173 : vector<8x128xf32>
    %182 = arith.addf %180, %181 : vector<8x128xf32>
    %183 = math.tanh %182 : vector<8x128xf32>
    %184 = arith.mulf %179, %183 : vector<8x128xf32>
    %c8_i32_58 = arith.constant 8 : i32
    %185 = arith.muli %arg1, %c8_i32_58 : i32
    %c4_i32 = arith.constant 4 : i32
    %186 = arith.addi %185, %c4_i32 : i32
    %c13_i32_59 = arith.constant 13 : i32
    %187 = arith.cmpi slt, %186, %c13_i32_59 : i32
    %188 = arith.select %187, %182, %153 : vector<8x128xf32>
    %189 = arith.select %187, %184, %154 : vector<8x128xf32>
    %c32_60 = arith.constant 32 : index
    %c0_61 = arith.constant 0 : index
    %190 = vector.load %arg15[%c32_60, %c0_61] : memref<64x128xf32, #tpu.memory_space<vmem>>, vector<8x128xf32>
    tpu.vector_store %arg15[%c32_60, %c0_61], %189 {strides = array<i32>} : memref<64x128xf32, #tpu.memory_space<vmem>>, vector<8x128xf32>,
    %c40 = arith.constant 40 : index
    %c0_62 = arith.constant 0 : index
    %191 = vector.load %arg14[%c40, %c0_62] : memref<64x512xf32, #tpu.memory_space<vmem>>, vector<8x512xf32>
    %192 = arith.truncf %189 : vector<8x128xf32> to vector<8x128xbf16>
    %cst_63 = arith.constant dense<0.000000e+00> : vector<8x512xf32>
    %193 = tpu.matmul %192, %11, %cst_63 {dimension_numbers = #tpu.dot_dimension_numbers<[1], [0], [0], [1], [0, 0, 1, 1], [], []>} : vector<8x128xbf16>, vector<128x512xbf16>, vector<8x512xf32> -> vector<8x512xf32>
    %194 = arith.addf %191, %193 : vector<8x512xf32>
    %195 = vector.extract_strided_slice %194 {offsets = [0, 0], sizes = [8, 128], strides = [1, 1]} : vector<8x512xf32> to vector<8x128xf32>
    %196 = arith.negf %195 : vector<8x128xf32>
    %197 = math.exp %196 : vector<8x128xf32>
    %cst_64 = arith.constant 1.000000e+00 : f32
    %198 = vector.broadcast %cst_64 : f32 to vector<8x128xf32>
    %199 = arith.addf %198, %197 : vector<8x128xf32>
    %200 = arith.divf %198, %199 : vector<8x128xf32>
    %201 = vector.extract_strided_slice %194 {offsets = [0, 128], sizes = [8, 128], strides = [1, 1]} : vector<8x512xf32> to vector<8x128xf32>
    %202 = arith.negf %201 : vector<8x128xf32>
    %203 = math.exp %202 : vector<8x128xf32>
    %cst_65 = arith.constant 1.000000e+00 : f32
    %204 = vector.broadcast %cst_65 : f32 to vector<8x128xf32>
    %205 = arith.addf %204, %203 : vector<8x128xf32>
    %206 = arith.divf %204, %205 : vector<8x128xf32>
    %207 = vector.extract_strided_slice %194 {offsets = [0, 256], sizes = [8, 128], strides = [1, 1]} : vector<8x512xf32> to vector<8x128xf32>
    %208 = math.tanh %207 : vector<8x128xf32>
    %209 = vector.extract_strided_slice %194 {offsets = [0, 384], sizes = [8, 128], strides = [1, 1]} : vector<8x512xf32> to vector<8x128xf32>
    %210 = arith.negf %209 : vector<8x128xf32>
    %211 = math.exp %210 : vector<8x128xf32>
    %cst_66 = arith.constant 1.000000e+00 : f32
    %212 = vector.broadcast %cst_66 : f32 to vector<8x128xf32>
    %213 = arith.addf %212, %211 : vector<8x128xf32>
    %214 = arith.divf %212, %213 : vector<8x128xf32>
    %215 = arith.mulf %206, %188 : vector<8x128xf32>
    %216 = arith.mulf %200, %208 : vector<8x128xf32>
    %217 = arith.addf %215, %216 : vector<8x128xf32>
    %218 = math.tanh %217 : vector<8x128xf32>
    %219 = arith.mulf %214, %218 : vector<8x128xf32>
    %c8_i32_67 = arith.constant 8 : i32
    %220 = arith.muli %arg1, %c8_i32_67 : i32
    %c5_i32 = arith.constant 5 : i32
    %221 = arith.addi %220, %c5_i32 : i32
    %c13_i32_68 = arith.constant 13 : i32
    %222 = arith.cmpi slt, %221, %c13_i32_68 : i32
    %223 = arith.select %222, %217, %188 : vector<8x128xf32>
    %224 = arith.select %222, %219, %189 : vector<8x128xf32>
    %c40_69 = arith.constant 40 : index
    %c0_70 = arith.constant 0 : index
    %225 = vector.load %arg15[%c40_69, %c0_70] : memref<64x128xf32, #tpu.memory_space<vmem>>, vector<8x128xf32>
    tpu.vector_store %arg15[%c40_69, %c0_70], %224 {strides = array<i32>} : memref<64x128xf32, #tpu.memory_space<vmem>>, vector<8x128xf32>,
    %c48 = arith.constant 48 : index
    %c0_71 = arith.constant 0 : index
    %226 = vector.load %arg14[%c48, %c0_71] : memref<64x512xf32, #tpu.memory_space<vmem>>, vector<8x512xf32>
    %227 = arith.truncf %224 : vector<8x128xf32> to vector<8x128xbf16>
    %cst_72 = arith.constant dense<0.000000e+00> : vector<8x512xf32>
    %228 = tpu.matmul %227, %11, %cst_72 {dimension_numbers = #tpu.dot_dimension_numbers<[1], [0], [0], [1], [0, 0, 1, 1], [], []>} : vector<8x128xbf16>, vector<128x512xbf16>, vector<8x512xf32> -> vector<8x512xf32>
    %229 = arith.addf %226, %228 : vector<8x512xf32>
    %230 = vector.extract_strided_slice %229 {offsets = [0, 0], sizes = [8, 128], strides = [1, 1]} : vector<8x512xf32> to vector<8x128xf32>
    %231 = arith.negf %230 : vector<8x128xf32>
    %232 = math.exp %231 : vector<8x128xf32>
    %cst_73 = arith.constant 1.000000e+00 : f32
    %233 = vector.broadcast %cst_73 : f32 to vector<8x128xf32>
    %234 = arith.addf %233, %232 : vector<8x128xf32>
    %235 = arith.divf %233, %234 : vector<8x128xf32>
    %236 = vector.extract_strided_slice %229 {offsets = [0, 128], sizes = [8, 128], strides = [1, 1]} : vector<8x512xf32> to vector<8x128xf32>
    %237 = arith.negf %236 : vector<8x128xf32>
    %238 = math.exp %237 : vector<8x128xf32>
    %cst_74 = arith.constant 1.000000e+00 : f32
    %239 = vector.broadcast %cst_74 : f32 to vector<8x128xf32>
    %240 = arith.addf %239, %238 : vector<8x128xf32>
    %241 = arith.divf %239, %240 : vector<8x128xf32>
    %242 = vector.extract_strided_slice %229 {offsets = [0, 256], sizes = [8, 128], strides = [1, 1]} : vector<8x512xf32> to vector<8x128xf32>
    %243 = math.tanh %242 : vector<8x128xf32>
    %244 = vector.extract_strided_slice %229 {offsets = [0, 384], sizes = [8, 128], strides = [1, 1]} : vector<8x512xf32> to vector<8x128xf32>
    %245 = arith.negf %244 : vector<8x128xf32>
    %246 = math.exp %245 : vector<8x128xf32>
    %cst_75 = arith.constant 1.000000e+00 : f32
    %247 = vector.broadcast %cst_75 : f32 to vector<8x128xf32>
    %248 = arith.addf %247, %246 : vector<8x128xf32>
    %249 = arith.divf %247, %248 : vector<8x128xf32>
    %250 = arith.mulf %241, %223 : vector<8x128xf32>
    %251 = arith.mulf %235, %243 : vector<8x128xf32>
    %252 = arith.addf %250, %251 : vector<8x128xf32>
    %253 = math.tanh %252 : vector<8x128xf32>
    %254 = arith.mulf %249, %253 : vector<8x128xf32>
    %c8_i32_76 = arith.constant 8 : i32
    %255 = arith.muli %arg1, %c8_i32_76 : i32
    %c6_i32 = arith.constant 6 : i32
    %256 = arith.addi %255, %c6_i32 : i32
    %c13_i32_77 = arith.constant 13 : i32
    %257 = arith.cmpi slt, %256, %c13_i32_77 : i32
    %258 = arith.select %257, %252, %223 : vector<8x128xf32>
    %259 = arith.select %257, %254, %224 : vector<8x128xf32>
    %c48_78 = arith.constant 48 : index
    %c0_79 = arith.constant 0 : index
    %260 = vector.load %arg15[%c48_78, %c0_79] : memref<64x128xf32, #tpu.memory_space<vmem>>, vector<8x128xf32>
    tpu.vector_store %arg15[%c48_78, %c0_79], %259 {strides = array<i32>} : memref<64x128xf32, #tpu.memory_space<vmem>>, vector<8x128xf32>,
    %c56 = arith.constant 56 : index
    %c0_80 = arith.constant 0 : index
    %261 = vector.load %arg14[%c56, %c0_80] : memref<64x512xf32, #tpu.memory_space<vmem>>, vector<8x512xf32>
    %262 = arith.truncf %259 : vector<8x128xf32> to vector<8x128xbf16>
    %cst_81 = arith.constant dense<0.000000e+00> : vector<8x512xf32>
    %263 = tpu.matmul %262, %11, %cst_81 {dimension_numbers = #tpu.dot_dimension_numbers<[1], [0], [0], [1], [0, 0, 1, 1], [], []>} : vector<8x128xbf16>, vector<128x512xbf16>, vector<8x512xf32> -> vector<8x512xf32>
    %264 = arith.addf %261, %263 : vector<8x512xf32>
    %265 = vector.extract_strided_slice %264 {offsets = [0, 0], sizes = [8, 128], strides = [1, 1]} : vector<8x512xf32> to vector<8x128xf32>
    %266 = arith.negf %265 : vector<8x128xf32>
    %267 = math.exp %266 : vector<8x128xf32>
    %cst_82 = arith.constant 1.000000e+00 : f32
    %268 = vector.broadcast %cst_82 : f32 to vector<8x128xf32>
    %269 = arith.addf %268, %267 : vector<8x128xf32>
    %270 = arith.divf %268, %269 : vector<8x128xf32>
    %271 = vector.extract_strided_slice %264 {offsets = [0, 128], sizes = [8, 128], strides = [1, 1]} : vector<8x512xf32> to vector<8x128xf32>
    %272 = arith.negf %271 : vector<8x128xf32>
    %273 = math.exp %272 : vector<8x128xf32>
    %cst_83 = arith.constant 1.000000e+00 : f32
    %274 = vector.broadcast %cst_83 : f32 to vector<8x128xf32>
    %275 = arith.addf %274, %273 : vector<8x128xf32>
    %276 = arith.divf %274, %275 : vector<8x128xf32>
    %277 = vector.extract_strided_slice %264 {offsets = [0, 256], sizes = [8, 128], strides = [1, 1]} : vector<8x512xf32> to vector<8x128xf32>
    %278 = math.tanh %277 : vector<8x128xf32>
    %279 = vector.extract_strided_slice %264 {offsets = [0, 384], sizes = [8, 128], strides = [1, 1]} : vector<8x512xf32> to vector<8x128xf32>
    %280 = arith.negf %279 : vector<8x128xf32>
    %281 = math.exp %280 : vector<8x128xf32>
    %cst_84 = arith.constant 1.000000e+00 : f32
    %282 = vector.broadcast %cst_84 : f32 to vector<8x128xf32>
    %283 = arith.addf %282, %281 : vector<8x128xf32>
    %284 = arith.divf %282, %283 : vector<8x128xf32>
    %285 = arith.mulf %276, %258 : vector<8x128xf32>
    %286 = arith.mulf %270, %278 : vector<8x128xf32>
    %287 = arith.addf %285, %286 : vector<8x128xf32>
    %288 = math.tanh %287 : vector<8x128xf32>
    %289 = arith.mulf %284, %288 : vector<8x128xf32>
    %c8_i32_85 = arith.constant 8 : i32
    %290 = arith.muli %arg1, %c8_i32_85 : i32
    %c7_i32 = arith.constant 7 : i32
    %291 = arith.addi %290, %c7_i32 : i32
    %c13_i32_86 = arith.constant 13 : i32
    %292 = arith.cmpi slt, %291, %c13_i32_86 : i32
    %293 = arith.select %292, %287, %258 : vector<8x128xf32>
    %294 = arith.select %292, %289, %259 : vector<8x128xf32>
    %c56_87 = arith.constant 56 : index
    %c0_88 = arith.constant 0 : index
    %295 = vector.load %arg15[%c56_87, %c0_88] : memref<64x128xf32, #tpu.memory_space<vmem>>, vector<8x128xf32>
    tpu.vector_store %arg15[%c56_87, %c0_88], %294 {strides = array<i32>} : memref<64x128xf32, #tpu.memory_space<vmem>>, vector<8x128xf32>,
    %c0_89 = arith.constant 0 : index
    %c0_90 = arith.constant 0 : index
    %c0_91 = arith.constant 0 : index
    %296 = vector.load %arg12[%c0_89, %c0_90, %c0_91] : memref<2x8x128xf32, #tpu.memory_space<vmem>>, vector<1x8x128xf32>
    %297 = vector.shape_cast %296 : vector<1x8x128xf32> to vector<8x128xf32>
    %298 = vector.shape_cast %294 : vector<8x128xf32> to vector<1x8x128xf32>
    tpu.vector_store %arg12[%c0_89, %c0_90, %c0_91], %298 {strides = array<i32>} : memref<2x8x128xf32, #tpu.memory_space<vmem>>, vector<1x8x128xf32>,
    %c0_92 = arith.constant 0 : index
    %c0_93 = arith.constant 0 : index
    %c0_94 = arith.constant 0 : index
    %299 = vector.load %arg13[%c0_92, %c0_93, %c0_94] : memref<2x8x128xf32, #tpu.memory_space<vmem>>, vector<1x8x128xf32>
    %300 = vector.shape_cast %299 : vector<1x8x128xf32> to vector<8x128xf32>
    %301 = vector.shape_cast %293 : vector<8x128xf32> to vector<1x8x128xf32>
    tpu.vector_store %arg13[%c0_92, %c0_93, %c0_94], %301 {strides = array<i32>} : memref<2x8x128xf32, #tpu.memory_space<vmem>>, vector<1x8x128xf32>,
    %c0_95 = arith.constant 0 : index
    %c0_96 = arith.constant 0 : index
    %302 = vector.load %arg15[%c0_95, %c0_96] : memref<64x128xf32, #tpu.memory_space<vmem>>, vector<64x128xf32>
    %303 = arith.truncf %302 : vector<64x128xf32> to vector<64x128xbf16>
    %c0_97 = arith.constant 0 : index
    %c0_98 = arith.constant 0 : index
    %304 = vector.load %arg6[%c0_97, %c0_98] : memref<128x512xbf16, #tpu.memory_space<vmem>>, vector<128x512xbf16>
    %cst_99 = arith.constant dense<0.000000e+00> : vector<64x512xf32>
    %305 = tpu.matmul %303, %304, %cst_99 {dimension_numbers = #tpu.dot_dimension_numbers<[1], [0], [0], [1], [0, 0, 1, 1], [], []>} : vector<64x128xbf16>, vector<128x512xbf16>, vector<64x512xf32> -> vector<64x512xf32>
    %c0_100 = arith.constant 0 : index
    %c0_101 = arith.constant 0 : index
    %306 = vector.load %arg8[%c0_100, %c0_101] : memref<1x512xf32, #tpu.memory_space<vmem>>, vector<1x512xf32>
    %307 = vector.broadcast %306 : vector<1x512xf32> to vector<64x512xf32>
    %308 = arith.addf %305, %307 : vector<64x512xf32>
    %c0_102 = arith.constant 0 : index
    %c0_103 = arith.constant 0 : index
    %309 = vector.load %arg14[%c0_102, %c0_103] : memref<64x512xf32, #tpu.memory_space<vmem>>, vector<64x512xf32>
    tpu.vector_store %arg14[%c0_102, %c0_103], %308 {strides = array<i32>} : memref<64x512xf32, #tpu.memory_space<vmem>>, vector<64x512xf32>,
    %c0_104 = arith.constant 0 : index
    %c0_105 = arith.constant 0 : index
    %310 = vector.load %arg7[%c0_104, %c0_105] : memref<128x512xbf16, #tpu.memory_space<vmem>>, vector<128x512xbf16>
    %c1 = arith.constant 1 : index
    %c0_106 = arith.constant 0 : index
    %c0_107 = arith.constant 0 : index
    %311 = vector.load %arg12[%c1, %c0_106, %c0_107] : memref<2x8x128xf32, #tpu.memory_space<vmem>>, vector<1x8x128xf32>
    %312 = vector.shape_cast %311 : vector<1x8x128xf32> to vector<8x128xf32>
    %c1_108 = arith.constant 1 : index
    %c0_109 = arith.constant 0 : index
    %c0_110 = arith.constant 0 : index
    %313 = vector.load %arg13[%c1_108, %c0_109, %c0_110] : memref<2x8x128xf32, #tpu.memory_space<vmem>>, vector<1x8x128xf32>
    %314 = vector.shape_cast %313 : vector<1x8x128xf32> to vector<8x128xf32>
    %c0_111 = arith.constant 0 : index
    %c0_112 = arith.constant 0 : index
    %315 = vector.load %arg14[%c0_111, %c0_112] : memref<64x512xf32, #tpu.memory_space<vmem>>, vector<8x512xf32>
    %316 = arith.truncf %312 : vector<8x128xf32> to vector<8x128xbf16>
    %cst_113 = arith.constant dense<0.000000e+00> : vector<8x512xf32>
    %317 = tpu.matmul %316, %310, %cst_113 {dimension_numbers = #tpu.dot_dimension_numbers<[1], [0], [0], [1], [0, 0, 1, 1], [], []>} : vector<8x128xbf16>, vector<128x512xbf16>, vector<8x512xf32> -> vector<8x512xf32>
    %318 = arith.addf %315, %317 : vector<8x512xf32>
    %319 = vector.extract_strided_slice %318 {offsets = [0, 0], sizes = [8, 128], strides = [1, 1]} : vector<8x512xf32> to vector<8x128xf32>
    %320 = arith.negf %319 : vector<8x128xf32>
    %321 = math.exp %320 : vector<8x128xf32>
    %cst_114 = arith.constant 1.000000e+00 : f32
    %322 = vector.broadcast %cst_114 : f32 to vector<8x128xf32>
    %323 = arith.addf %322, %321 : vector<8x128xf32>
    %324 = arith.divf %322, %323 : vector<8x128xf32>
    %325 = vector.extract_strided_slice %318 {offsets = [0, 128], sizes = [8, 128], strides = [1, 1]} : vector<8x512xf32> to vector<8x128xf32>
    %326 = arith.negf %325 : vector<8x128xf32>
    %327 = math.exp %326 : vector<8x128xf32>
    %cst_115 = arith.constant 1.000000e+00 : f32
    %328 = vector.broadcast %cst_115 : f32 to vector<8x128xf32>
    %329 = arith.addf %328, %327 : vector<8x128xf32>
    %330 = arith.divf %328, %329 : vector<8x128xf32>
    %331 = vector.extract_strided_slice %318 {offsets = [0, 256], sizes = [8, 128], strides = [1, 1]} : vector<8x512xf32> to vector<8x128xf32>
    %332 = math.tanh %331 : vector<8x128xf32>
    %333 = vector.extract_strided_slice %318 {offsets = [0, 384], sizes = [8, 128], strides = [1, 1]} : vector<8x512xf32> to vector<8x128xf32>
    %334 = arith.negf %333 : vector<8x128xf32>
    %335 = math.exp %334 : vector<8x128xf32>
    %cst_116 = arith.constant 1.000000e+00 : f32
    %336 = vector.broadcast %cst_116 : f32 to vector<8x128xf32>
    %337 = arith.addf %336, %335 : vector<8x128xf32>
    %338 = arith.divf %336, %337 : vector<8x128xf32>
    %339 = arith.mulf %330, %314 : vector<8x128xf32>
    %340 = arith.mulf %324, %332 : vector<8x128xf32>
    %341 = arith.addf %339, %340 : vector<8x128xf32>
    %342 = math.tanh %341 : vector<8x128xf32>
    %343 = arith.mulf %338, %342 : vector<8x128xf32>
    %c8_i32_117 = arith.constant 8 : i32
    %344 = arith.muli %arg1, %c8_i32_117 : i32
    %c0_i32_118 = arith.constant 0 : i32
    %345 = arith.addi %344, %c0_i32_118 : i32
    %c13_i32_119 = arith.constant 13 : i32
    %346 = arith.cmpi slt, %345, %c13_i32_119 : i32
    %347 = arith.select %346, %341, %314 : vector<8x128xf32>
    %348 = arith.select %346, %343, %312 : vector<8x128xf32>
    %c8_120 = arith.constant 8 : index
    %c0_121 = arith.constant 0 : index
    %349 = vector.load %arg14[%c8_120, %c0_121] : memref<64x512xf32, #tpu.memory_space<vmem>>, vector<8x512xf32>
    %350 = arith.truncf %348 : vector<8x128xf32> to vector<8x128xbf16>
    %cst_122 = arith.constant dense<0.000000e+00> : vector<8x512xf32>
    %351 = tpu.matmul %350, %310, %cst_122 {dimension_numbers = #tpu.dot_dimension_numbers<[1], [0], [0], [1], [0, 0, 1, 1], [], []>} : vector<8x128xbf16>, vector<128x512xbf16>, vector<8x512xf32> -> vector<8x512xf32>
    %352 = arith.addf %349, %351 : vector<8x512xf32>
    %353 = vector.extract_strided_slice %352 {offsets = [0, 0], sizes = [8, 128], strides = [1, 1]} : vector<8x512xf32> to vector<8x128xf32>
    %354 = arith.negf %353 : vector<8x128xf32>
    %355 = math.exp %354 : vector<8x128xf32>
    %cst_123 = arith.constant 1.000000e+00 : f32
    %356 = vector.broadcast %cst_123 : f32 to vector<8x128xf32>
    %357 = arith.addf %356, %355 : vector<8x128xf32>
    %358 = arith.divf %356, %357 : vector<8x128xf32>
    %359 = vector.extract_strided_slice %352 {offsets = [0, 128], sizes = [8, 128], strides = [1, 1]} : vector<8x512xf32> to vector<8x128xf32>
    %360 = arith.negf %359 : vector<8x128xf32>
    %361 = math.exp %360 : vector<8x128xf32>
    %cst_124 = arith.constant 1.000000e+00 : f32
    %362 = vector.broadcast %cst_124 : f32 to vector<8x128xf32>
    %363 = arith.addf %362, %361 : vector<8x128xf32>
    %364 = arith.divf %362, %363 : vector<8x128xf32>
    %365 = vector.extract_strided_slice %352 {offsets = [0, 256], sizes = [8, 128], strides = [1, 1]} : vector<8x512xf32> to vector<8x128xf32>
    %366 = math.tanh %365 : vector<8x128xf32>
    %367 = vector.extract_strided_slice %352 {offsets = [0, 384], sizes = [8, 128], strides = [1, 1]} : vector<8x512xf32> to vector<8x128xf32>
    %368 = arith.negf %367 : vector<8x128xf32>
    %369 = math.exp %368 : vector<8x128xf32>
    %cst_125 = arith.constant 1.000000e+00 : f32
    %370 = vector.broadcast %cst_125 : f32 to vector<8x128xf32>
    %371 = arith.addf %370, %369 : vector<8x128xf32>
    %372 = arith.divf %370, %371 : vector<8x128xf32>
    %373 = arith.mulf %364, %347 : vector<8x128xf32>
    %374 = arith.mulf %358, %366 : vector<8x128xf32>
    %375 = arith.addf %373, %374 : vector<8x128xf32>
    %376 = math.tanh %375 : vector<8x128xf32>
    %377 = arith.mulf %372, %376 : vector<8x128xf32>
    %c8_i32_126 = arith.constant 8 : i32
    %378 = arith.muli %arg1, %c8_i32_126 : i32
    %c1_i32_127 = arith.constant 1 : i32
    %379 = arith.addi %378, %c1_i32_127 : i32
    %c13_i32_128 = arith.constant 13 : i32
    %380 = arith.cmpi slt, %379, %c13_i32_128 : i32
    %381 = arith.select %380, %375, %347 : vector<8x128xf32>
    %382 = arith.select %380, %377, %348 : vector<8x128xf32>
    %c16_129 = arith.constant 16 : index
    %c0_130 = arith.constant 0 : index
    %383 = vector.load %arg14[%c16_129, %c0_130] : memref<64x512xf32, #tpu.memory_space<vmem>>, vector<8x512xf32>
    %384 = arith.truncf %382 : vector<8x128xf32> to vector<8x128xbf16>
    %cst_131 = arith.constant dense<0.000000e+00> : vector<8x512xf32>
    %385 = tpu.matmul %384, %310, %cst_131 {dimension_numbers = #tpu.dot_dimension_numbers<[1], [0], [0], [1], [0, 0, 1, 1], [], []>} : vector<8x128xbf16>, vector<128x512xbf16>, vector<8x512xf32> -> vector<8x512xf32>
    %386 = arith.addf %383, %385 : vector<8x512xf32>
    %387 = vector.extract_strided_slice %386 {offsets = [0, 0], sizes = [8, 128], strides = [1, 1]} : vector<8x512xf32> to vector<8x128xf32>
    %388 = arith.negf %387 : vector<8x128xf32>
    %389 = math.exp %388 : vector<8x128xf32>
    %cst_132 = arith.constant 1.000000e+00 : f32
    %390 = vector.broadcast %cst_132 : f32 to vector<8x128xf32>
    %391 = arith.addf %390, %389 : vector<8x128xf32>
    %392 = arith.divf %390, %391 : vector<8x128xf32>
    %393 = vector.extract_strided_slice %386 {offsets = [0, 128], sizes = [8, 128], strides = [1, 1]} : vector<8x512xf32> to vector<8x128xf32>
    %394 = arith.negf %393 : vector<8x128xf32>
    %395 = math.exp %394 : vector<8x128xf32>
    %cst_133 = arith.constant 1.000000e+00 : f32
    %396 = vector.broadcast %cst_133 : f32 to vector<8x128xf32>
    %397 = arith.addf %396, %395 : vector<8x128xf32>
    %398 = arith.divf %396, %397 : vector<8x128xf32>
    %399 = vector.extract_strided_slice %386 {offsets = [0, 256], sizes = [8, 128], strides = [1, 1]} : vector<8x512xf32> to vector<8x128xf32>
    %400 = math.tanh %399 : vector<8x128xf32>
    %401 = vector.extract_strided_slice %386 {offsets = [0, 384], sizes = [8, 128], strides = [1, 1]} : vector<8x512xf32> to vector<8x128xf32>
    %402 = arith.negf %401 : vector<8x128xf32>
    %403 = math.exp %402 : vector<8x128xf32>
    %cst_134 = arith.constant 1.000000e+00 : f32
    %404 = vector.broadcast %cst_134 : f32 to vector<8x128xf32>
    %405 = arith.addf %404, %403 : vector<8x128xf32>
    %406 = arith.divf %404, %405 : vector<8x128xf32>
    %407 = arith.mulf %398, %381 : vector<8x128xf32>
    %408 = arith.mulf %392, %400 : vector<8x128xf32>
    %409 = arith.addf %407, %408 : vector<8x128xf32>
    %410 = math.tanh %409 : vector<8x128xf32>
    %411 = arith.mulf %406, %410 : vector<8x128xf32>
    %c8_i32_135 = arith.constant 8 : i32
    %412 = arith.muli %arg1, %c8_i32_135 : i32
    %c2_i32_136 = arith.constant 2 : i32
    %413 = arith.addi %412, %c2_i32_136 : i32
    %c13_i32_137 = arith.constant 13 : i32
    %414 = arith.cmpi slt, %413, %c13_i32_137 : i32
    %415 = arith.select %414, %409, %381 : vector<8x128xf32>
    %416 = arith.select %414, %411, %382 : vector<8x128xf32>
    %c24_138 = arith.constant 24 : index
    %c0_139 = arith.constant 0 : index
    %417 = vector.load %arg14[%c24_138, %c0_139] : memref<64x512xf32, #tpu.memory_space<vmem>>, vector<8x512xf32>
    %418 = arith.truncf %416 : vector<8x128xf32> to vector<8x128xbf16>
    %cst_140 = arith.constant dense<0.000000e+00> : vector<8x512xf32>
    %419 = tpu.matmul %418, %310, %cst_140 {dimension_numbers = #tpu.dot_dimension_numbers<[1], [0], [0], [1], [0, 0, 1, 1], [], []>} : vector<8x128xbf16>, vector<128x512xbf16>, vector<8x512xf32> -> vector<8x512xf32>
    %420 = arith.addf %417, %419 : vector<8x512xf32>
    %421 = vector.extract_strided_slice %420 {offsets = [0, 0], sizes = [8, 128], strides = [1, 1]} : vector<8x512xf32> to vector<8x128xf32>
    %422 = arith.negf %421 : vector<8x128xf32>
    %423 = math.exp %422 : vector<8x128xf32>
    %cst_141 = arith.constant 1.000000e+00 : f32
    %424 = vector.broadcast %cst_141 : f32 to vector<8x128xf32>
    %425 = arith.addf %424, %423 : vector<8x128xf32>
    %426 = arith.divf %424, %425 : vector<8x128xf32>
    %427 = vector.extract_strided_slice %420 {offsets = [0, 128], sizes = [8, 128], strides = [1, 1]} : vector<8x512xf32> to vector<8x128xf32>
    %428 = arith.negf %427 : vector<8x128xf32>
    %429 = math.exp %428 : vector<8x128xf32>
    %cst_142 = arith.constant 1.000000e+00 : f32
    %430 = vector.broadcast %cst_142 : f32 to vector<8x128xf32>
    %431 = arith.addf %430, %429 : vector<8x128xf32>
    %432 = arith.divf %430, %431 : vector<8x128xf32>
    %433 = vector.extract_strided_slice %420 {offsets = [0, 256], sizes = [8, 128], strides = [1, 1]} : vector<8x512xf32> to vector<8x128xf32>
    %434 = math.tanh %433 : vector<8x128xf32>
    %435 = vector.extract_strided_slice %420 {offsets = [0, 384], sizes = [8, 128], strides = [1, 1]} : vector<8x512xf32> to vector<8x128xf32>
    %436 = arith.negf %435 : vector<8x128xf32>
    %437 = math.exp %436 : vector<8x128xf32>
    %cst_143 = arith.constant 1.000000e+00 : f32
    %438 = vector.broadcast %cst_143 : f32 to vector<8x128xf32>
    %439 = arith.addf %438, %437 : vector<8x128xf32>
    %440 = arith.divf %438, %439 : vector<8x128xf32>
    %441 = arith.mulf %432, %415 : vector<8x128xf32>
    %442 = arith.mulf %426, %434 : vector<8x128xf32>
    %443 = arith.addf %441, %442 : vector<8x128xf32>
    %444 = math.tanh %443 : vector<8x128xf32>
    %445 = arith.mulf %440, %444 : vector<8x128xf32>
    %c8_i32_144 = arith.constant 8 : i32
    %446 = arith.muli %arg1, %c8_i32_144 : i32
    %c3_i32_145 = arith.constant 3 : i32
    %447 = arith.addi %446, %c3_i32_145 : i32
    %c13_i32_146 = arith.constant 13 : i32
    %448 = arith.cmpi slt, %447, %c13_i32_146 : i32
    %449 = arith.select %448, %443, %415 : vector<8x128xf32>
    %450 = arith.select %448, %445, %416 : vector<8x128xf32>
    %c32_147 = arith.constant 32 : index
    %c0_148 = arith.constant 0 : index
    %451 = vector.load %arg14[%c32_147, %c0_148] : memref<64x512xf32, #tpu.memory_space<vmem>>, vector<8x512xf32>
    %452 = arith.truncf %450 : vector<8x128xf32> to vector<8x128xbf16>
    %cst_149 = arith.constant dense<0.000000e+00> : vector<8x512xf32>
    %453 = tpu.matmul %452, %310, %cst_149 {dimension_numbers = #tpu.dot_dimension_numbers<[1], [0], [0], [1], [0, 0, 1, 1], [], []>} : vector<8x128xbf16>, vector<128x512xbf16>, vector<8x512xf32> -> vector<8x512xf32>
    %454 = arith.addf %451, %453 : vector<8x512xf32>
    %455 = vector.extract_strided_slice %454 {offsets = [0, 0], sizes = [8, 128], strides = [1, 1]} : vector<8x512xf32> to vector<8x128xf32>
    %456 = arith.negf %455 : vector<8x128xf32>
    %457 = math.exp %456 : vector<8x128xf32>
    %cst_150 = arith.constant 1.000000e+00 : f32
    %458 = vector.broadcast %cst_150 : f32 to vector<8x128xf32>
    %459 = arith.addf %458, %457 : vector<8x128xf32>
    %460 = arith.divf %458, %459 : vector<8x128xf32>
    %461 = vector.extract_strided_slice %454 {offsets = [0, 128], sizes = [8, 128], strides = [1, 1]} : vector<8x512xf32> to vector<8x128xf32>
    %462 = arith.negf %461 : vector<8x128xf32>
    %463 = math.exp %462 : vector<8x128xf32>
    %cst_151 = arith.constant 1.000000e+00 : f32
    %464 = vector.broadcast %cst_151 : f32 to vector<8x128xf32>
    %465 = arith.addf %464, %463 : vector<8x128xf32>
    %466 = arith.divf %464, %465 : vector<8x128xf32>
    %467 = vector.extract_strided_slice %454 {offsets = [0, 256], sizes = [8, 128], strides = [1, 1]} : vector<8x512xf32> to vector<8x128xf32>
    %468 = math.tanh %467 : vector<8x128xf32>
    %469 = vector.extract_strided_slice %454 {offsets = [0, 384], sizes = [8, 128], strides = [1, 1]} : vector<8x512xf32> to vector<8x128xf32>
    %470 = arith.negf %469 : vector<8x128xf32>
    %471 = math.exp %470 : vector<8x128xf32>
    %cst_152 = arith.constant 1.000000e+00 : f32
    %472 = vector.broadcast %cst_152 : f32 to vector<8x128xf32>
    %473 = arith.addf %472, %471 : vector<8x128xf32>
    %474 = arith.divf %472, %473 : vector<8x128xf32>
    %475 = arith.mulf %466, %449 : vector<8x128xf32>
    %476 = arith.mulf %460, %468 : vector<8x128xf32>
    %477 = arith.addf %475, %476 : vector<8x128xf32>
    %478 = math.tanh %477 : vector<8x128xf32>
    %479 = arith.mulf %474, %478 : vector<8x128xf32>
    %c8_i32_153 = arith.constant 8 : i32
    %480 = arith.muli %arg1, %c8_i32_153 : i32
    %c4_i32_154 = arith.constant 4 : i32
    %481 = arith.addi %480, %c4_i32_154 : i32
    %c13_i32_155 = arith.constant 13 : i32
    %482 = arith.cmpi slt, %481, %c13_i32_155 : i32
    %483 = arith.select %482, %477, %449 : vector<8x128xf32>
    %484 = arith.select %482, %479, %450 : vector<8x128xf32>
    %c40_156 = arith.constant 40 : index
    %c0_157 = arith.constant 0 : index
    %485 = vector.load %arg14[%c40_156, %c0_157] : memref<64x512xf32, #tpu.memory_space<vmem>>, vector<8x512xf32>
    %486 = arith.truncf %484 : vector<8x128xf32> to vector<8x128xbf16>
    %cst_158 = arith.constant dense<0.000000e+00> : vector<8x512xf32>
    %487 = tpu.matmul %486, %310, %cst_158 {dimension_numbers = #tpu.dot_dimension_numbers<[1], [0], [0], [1], [0, 0, 1, 1], [], []>} : vector<8x128xbf16>, vector<128x512xbf16>, vector<8x512xf32> -> vector<8x512xf32>
    %488 = arith.addf %485, %487 : vector<8x512xf32>
    %489 = vector.extract_strided_slice %488 {offsets = [0, 0], sizes = [8, 128], strides = [1, 1]} : vector<8x512xf32> to vector<8x128xf32>
    %490 = arith.negf %489 : vector<8x128xf32>
    %491 = math.exp %490 : vector<8x128xf32>
    %cst_159 = arith.constant 1.000000e+00 : f32
    %492 = vector.broadcast %cst_159 : f32 to vector<8x128xf32>
    %493 = arith.addf %492, %491 : vector<8x128xf32>
    %494 = arith.divf %492, %493 : vector<8x128xf32>
    %495 = vector.extract_strided_slice %488 {offsets = [0, 128], sizes = [8, 128], strides = [1, 1]} : vector<8x512xf32> to vector<8x128xf32>
    %496 = arith.negf %495 : vector<8x128xf32>
    %497 = math.exp %496 : vector<8x128xf32>
    %cst_160 = arith.constant 1.000000e+00 : f32
    %498 = vector.broadcast %cst_160 : f32 to vector<8x128xf32>
    %499 = arith.addf %498, %497 : vector<8x128xf32>
    %500 = arith.divf %498, %499 : vector<8x128xf32>
    %501 = vector.extract_strided_slice %488 {offsets = [0, 256], sizes = [8, 128], strides = [1, 1]} : vector<8x512xf32> to vector<8x128xf32>
    %502 = math.tanh %501 : vector<8x128xf32>
    %503 = vector.extract_strided_slice %488 {offsets = [0, 384], sizes = [8, 128], strides = [1, 1]} : vector<8x512xf32> to vector<8x128xf32>
    %504 = arith.negf %503 : vector<8x128xf32>
    %505 = math.exp %504 : vector<8x128xf32>
    %cst_161 = arith.constant 1.000000e+00 : f32
    %506 = vector.broadcast %cst_161 : f32 to vector<8x128xf32>
    %507 = arith.addf %506, %505 : vector<8x128xf32>
    %508 = arith.divf %506, %507 : vector<8x128xf32>
    %509 = arith.mulf %500, %483 : vector<8x128xf32>
    %510 = arith.mulf %494, %502 : vector<8x128xf32>
    %511 = arith.addf %509, %510 : vector<8x128xf32>
    %512 = math.tanh %511 : vector<8x128xf32>
    %513 = arith.mulf %508, %512 : vector<8x128xf32>
    %c8_i32_162 = arith.constant 8 : i32
    %514 = arith.muli %arg1, %c8_i32_162 : i32
    %c5_i32_163 = arith.constant 5 : i32
    %515 = arith.addi %514, %c5_i32_163 : i32
    %c13_i32_164 = arith.constant 13 : i32
    %516 = arith.cmpi slt, %515, %c13_i32_164 : i32
    %517 = arith.select %516, %511, %483 : vector<8x128xf32>
    %518 = arith.select %516, %513, %484 : vector<8x128xf32>
    %c48_165 = arith.constant 48 : index
    %c0_166 = arith.constant 0 : index
    %519 = vector.load %arg14[%c48_165, %c0_166] : memref<64x512xf32, #tpu.memory_space<vmem>>, vector<8x512xf32>
    %520 = arith.truncf %518 : vector<8x128xf32> to vector<8x128xbf16>
    %cst_167 = arith.constant dense<0.000000e+00> : vector<8x512xf32>
    %521 = tpu.matmul %520, %310, %cst_167 {dimension_numbers = #tpu.dot_dimension_numbers<[1], [0], [0], [1], [0, 0, 1, 1], [], []>} : vector<8x128xbf16>, vector<128x512xbf16>, vector<8x512xf32> -> vector<8x512xf32>
    %522 = arith.addf %519, %521 : vector<8x512xf32>
    %523 = vector.extract_strided_slice %522 {offsets = [0, 0], sizes = [8, 128], strides = [1, 1]} : vector<8x512xf32> to vector<8x128xf32>
    %524 = arith.negf %523 : vector<8x128xf32>
    %525 = math.exp %524 : vector<8x128xf32>
    %cst_168 = arith.constant 1.000000e+00 : f32
    %526 = vector.broadcast %cst_168 : f32 to vector<8x128xf32>
    %527 = arith.addf %526, %525 : vector<8x128xf32>
    %528 = arith.divf %526, %527 : vector<8x128xf32>
    %529 = vector.extract_strided_slice %522 {offsets = [0, 128], sizes = [8, 128], strides = [1, 1]} : vector<8x512xf32> to vector<8x128xf32>
    %530 = arith.negf %529 : vector<8x128xf32>
    %531 = math.exp %530 : vector<8x128xf32>
    %cst_169 = arith.constant 1.000000e+00 : f32
    %532 = vector.broadcast %cst_169 : f32 to vector<8x128xf32>
    %533 = arith.addf %532, %531 : vector<8x128xf32>
    %534 = arith.divf %532, %533 : vector<8x128xf32>
    %535 = vector.extract_strided_slice %522 {offsets = [0, 256], sizes = [8, 128], strides = [1, 1]} : vector<8x512xf32> to vector<8x128xf32>
    %536 = math.tanh %535 : vector<8x128xf32>
    %537 = vector.extract_strided_slice %522 {offsets = [0, 384], sizes = [8, 128], strides = [1, 1]} : vector<8x512xf32> to vector<8x128xf32>
    %538 = arith.negf %537 : vector<8x128xf32>
    %539 = math.exp %538 : vector<8x128xf32>
    %cst_170 = arith.constant 1.000000e+00 : f32
    %540 = vector.broadcast %cst_170 : f32 to vector<8x128xf32>
    %541 = arith.addf %540, %539 : vector<8x128xf32>
    %542 = arith.divf %540, %541 : vector<8x128xf32>
    %543 = arith.mulf %534, %517 : vector<8x128xf32>
    %544 = arith.mulf %528, %536 : vector<8x128xf32>
    %545 = arith.addf %543, %544 : vector<8x128xf32>
    %546 = math.tanh %545 : vector<8x128xf32>
    %547 = arith.mulf %542, %546 : vector<8x128xf32>
    %c8_i32_171 = arith.constant 8 : i32
    %548 = arith.muli %arg1, %c8_i32_171 : i32
    %c6_i32_172 = arith.constant 6 : i32
    %549 = arith.addi %548, %c6_i32_172 : i32
    %c13_i32_173 = arith.constant 13 : i32
    %550 = arith.cmpi slt, %549, %c13_i32_173 : i32
    %551 = arith.select %550, %545, %517 : vector<8x128xf32>
    %552 = arith.select %550, %547, %518 : vector<8x128xf32>
    %c56_174 = arith.constant 56 : index
    %c0_175 = arith.constant 0 : index
    %553 = vector.load %arg14[%c56_174, %c0_175] : memref<64x512xf32, #tpu.memory_space<vmem>>, vector<8x512xf32>
    %554 = arith.truncf %552 : vector<8x128xf32> to vector<8x128xbf16>
    %cst_176 = arith.constant dense<0.000000e+00> : vector<8x512xf32>
    %555 = tpu.matmul %554, %310, %cst_176 {dimension_numbers = #tpu.dot_dimension_numbers<[1], [0], [0], [1], [0, 0, 1, 1], [], []>} : vector<8x128xbf16>, vector<128x512xbf16>, vector<8x512xf32> -> vector<8x512xf32>
    %556 = arith.addf %553, %555 : vector<8x512xf32>
    %557 = vector.extract_strided_slice %556 {offsets = [0, 0], sizes = [8, 128], strides = [1, 1]} : vector<8x512xf32> to vector<8x128xf32>
    %558 = arith.negf %557 : vector<8x128xf32>
    %559 = math.exp %558 : vector<8x128xf32>
    %cst_177 = arith.constant 1.000000e+00 : f32
    %560 = vector.broadcast %cst_177 : f32 to vector<8x128xf32>
    %561 = arith.addf %560, %559 : vector<8x128xf32>
    %562 = arith.divf %560, %561 : vector<8x128xf32>
    %563 = vector.extract_strided_slice %556 {offsets = [0, 128], sizes = [8, 128], strides = [1, 1]} : vector<8x512xf32> to vector<8x128xf32>
    %564 = arith.negf %563 : vector<8x128xf32>
    %565 = math.exp %564 : vector<8x128xf32>
    %cst_178 = arith.constant 1.000000e+00 : f32
    %566 = vector.broadcast %cst_178 : f32 to vector<8x128xf32>
    %567 = arith.addf %566, %565 : vector<8x128xf32>
    %568 = arith.divf %566, %567 : vector<8x128xf32>
    %569 = vector.extract_strided_slice %556 {offsets = [0, 256], sizes = [8, 128], strides = [1, 1]} : vector<8x512xf32> to vector<8x128xf32>
    %570 = math.tanh %569 : vector<8x128xf32>
    %571 = vector.extract_strided_slice %556 {offsets = [0, 384], sizes = [8, 128], strides = [1, 1]} : vector<8x512xf32> to vector<8x128xf32>
    %572 = arith.negf %571 : vector<8x128xf32>
    %573 = math.exp %572 : vector<8x128xf32>
    %cst_179 = arith.constant 1.000000e+00 : f32
    %574 = vector.broadcast %cst_179 : f32 to vector<8x128xf32>
    %575 = arith.addf %574, %573 : vector<8x128xf32>
    %576 = arith.divf %574, %575 : vector<8x128xf32>
    %577 = arith.mulf %568, %551 : vector<8x128xf32>
    %578 = arith.mulf %562, %570 : vector<8x128xf32>
    %579 = arith.addf %577, %578 : vector<8x128xf32>
    %580 = math.tanh %579 : vector<8x128xf32>
    %581 = arith.mulf %576, %580 : vector<8x128xf32>
    %c8_i32_180 = arith.constant 8 : i32
    %582 = arith.muli %arg1, %c8_i32_180 : i32
    %c7_i32_181 = arith.constant 7 : i32
    %583 = arith.addi %582, %c7_i32_181 : i32
    %c13_i32_182 = arith.constant 13 : i32
    %584 = arith.cmpi slt, %583, %c13_i32_182 : i32
    %585 = arith.select %584, %579, %551 : vector<8x128xf32>
    %586 = arith.select %584, %581, %552 : vector<8x128xf32>
    %c1_183 = arith.constant 1 : index
    %c0_184 = arith.constant 0 : index
    %c0_185 = arith.constant 0 : index
    %587 = vector.load %arg12[%c1_183, %c0_184, %c0_185] : memref<2x8x128xf32, #tpu.memory_space<vmem>>, vector<1x8x128xf32>
    %588 = vector.shape_cast %587 : vector<1x8x128xf32> to vector<8x128xf32>
    %589 = vector.shape_cast %586 : vector<8x128xf32> to vector<1x8x128xf32>
    tpu.vector_store %arg12[%c1_183, %c0_184, %c0_185], %589 {strides = array<i32>} : memref<2x8x128xf32, #tpu.memory_space<vmem>>, vector<1x8x128xf32>,
    %c1_186 = arith.constant 1 : index
    %c0_187 = arith.constant 0 : index
    %c0_188 = arith.constant 0 : index
    %590 = vector.load %arg13[%c1_186, %c0_187, %c0_188] : memref<2x8x128xf32, #tpu.memory_space<vmem>>, vector<1x8x128xf32>
    %591 = vector.shape_cast %590 : vector<1x8x128xf32> to vector<8x128xf32>
    %592 = vector.shape_cast %585 : vector<8x128xf32> to vector<1x8x128xf32>
    tpu.vector_store %arg13[%c1_186, %c0_187, %c0_188], %592 {strides = array<i32>} : memref<2x8x128xf32, #tpu.memory_space<vmem>>, vector<1x8x128xf32>,
    %c1_i32_189 = arith.constant 1 : i32
    %593 = arith.cmpi eq, %arg1, %c1_i32_189 : i32
    %594 = arith.extui %593 : i1 to i32
    %c0_i32_190 = arith.constant 0 : i32
    %595 = arith.cmpi ne, %594, %c0_i32_190 : i32
    scf.if %595 {
      %596 = arith.truncf %586 : vector<8x128xf32> to vector<8x128xbf16>
      %c0_191 = arith.constant 0 : index
      %c0_192 = arith.constant 0 : index
      %597 = vector.load %arg9[%c0_191, %c0_192] : memref<128x128xbf16, #tpu.memory_space<vmem>>, vector<128x128xbf16>
      %cst_193 = arith.constant dense<0.000000e+00> : vector<8x128xf32>
      %598 = tpu.matmul %596, %597, %cst_193 {dimension_numbers = #tpu.dot_dimension_numbers<[1], [0], [0], [1], [0, 0, 1, 1], [], []>} : vector<8x128xbf16>, vector<128x128xbf16>, vector<8x128xf32> -> vector<8x128xf32>
      %c0_194 = arith.constant 0 : index
      %c0_195 = arith.constant 0 : index
      %599 = vector.load %arg10[%c0_194, %c0_195] : memref<1x128xf32, #tpu.memory_space<vmem>>, vector<1x128xf32>
      %600 = vector.broadcast %599 : vector<1x128xf32> to vector<8x128xf32>
      %601 = arith.addf %598, %600 : vector<8x128xf32>
      %c0_196 = arith.constant 0 : index
      %c0_197 = arith.constant 0 : index
      %c0_198 = arith.constant 0 : index
      %602 = vector.load %arg11[%c0_196, %c0_197, %c0_198] : memref<1x8x128xf32, #tpu.memory_space<vmem>>, vector<1x8x128xf32>
      %603 = vector.shape_cast %602 : vector<1x8x128xf32> to vector<8x128xf32>
      %604 = vector.shape_cast %601 : vector<8x128xf32> to vector<1x8x128xf32>
      tpu.vector_store %arg11[%c0_196, %c0_197, %c0_198], %604 {strides = array<i32>} : memref<1x8x128xf32, #tpu.memory_space<vmem>>, vector<1x8x128xf32>,
    } else {
    }
    return
  }
  func.func @transform_0(%arg0: i32, %arg1: i32) -> (i32, i32, i32) {
    %c0_i32 = arith.constant 0 : i32
    %c0_i32_0 = arith.constant 0 : i32
    return %arg0, %arg1, %c0_i32 : i32, i32, i32
  }
  func.func @transform_1(%arg0: i32, %arg1: i32) -> (i32, i32) {
    %c0_i32 = arith.constant 0 : i32
    %c0_i32_0 = arith.constant 0 : i32
    %c0_i32_1 = arith.constant 0 : i32
    return %c0_i32, %c0_i32_0 : i32, i32
  }
  func.func @transform_2(%arg0: i32, %arg1: i32) -> (i32, i32) {
    %c0_i32 = arith.constant 0 : i32
    %c0_i32_0 = arith.constant 0 : i32
    %c0_i32_1 = arith.constant 0 : i32
    return %c0_i32, %c0_i32_0 : i32, i32
  }
  func.func @transform_3(%arg0: i32, %arg1: i32) -> (i32, i32) {
    %c0_i32 = arith.constant 0 : i32
    %c0_i32_0 = arith.constant 0 : i32
    %c0_i32_1 = arith.constant 0 : i32
    return %c0_i32, %c0_i32_0 : i32, i32
  }
  func.func @transform_4(%arg0: i32, %arg1: i32) -> (i32, i32) {
    %c0_i32 = arith.constant 0 : i32
    %c0_i32_0 = arith.constant 0 : i32
    %c0_i32_1 = arith.constant 0 : i32
    return %c0_i32, %c0_i32_0 : i32, i32
  }
  func.func @transform_5(%arg0: i32, %arg1: i32) -> (i32, i32) {
    %c0_i32 = arith.constant 0 : i32
    %c0_i32_0 = arith.constant 0 : i32
    %c0_i32_1 = arith.constant 0 : i32
    return %c0_i32, %c0_i32_0 : i32, i32
  }
  func.func @transform_6(%arg0: i32, %arg1: i32) -> (i32, i32) {
    %c0_i32 = arith.constant 0 : i32
    %c0_i32_0 = arith.constant 0 : i32
    %c0_i32_1 = arith.constant 0 : i32
    return %c0_i32, %c0_i32_0 : i32, i32
  }
  func.func @transform_7(%arg0: i32, %arg1: i32) -> (i32, i32) {
    %c0_i32 = arith.constant 0 : i32
    %c0_i32_0 = arith.constant 0 : i32
    %c0_i32_1 = arith.constant 0 : i32
    return %c0_i32, %c0_i32_0 : i32, i32
  }
  func.func @transform_8(%arg0: i32, %arg1: i32) -> (i32, i32) {
    %c0_i32 = arith.constant 0 : i32
    %c0_i32_0 = arith.constant 0 : i32
    %c0_i32_1 = arith.constant 0 : i32
    return %c0_i32, %c0_i32_0 : i32, i32
  }
  func.func @transform_9(%arg0: i32, %arg1: i32) -> (i32, i32, i32) {
    %c0_i32 = arith.constant 0 : i32
    %c0_i32_0 = arith.constant 0 : i32
    %c0_i32_1 = arith.constant 0 : i32
    return %arg0, %c0_i32, %c0_i32_0 : i32, i32, i32
  }
}

module attributes {stable_mosaic.version = 11 : i64} {
  func.func @_timenet_kernel(%arg0: i32, %arg1: i32, %arg2: memref<1x64x16xbf16, #tpu.memory_space<vmem>>, %arg3: memref<16x512xbf16, #tpu.memory_space<vmem>>, %arg4: memref<128x512xbf16, #tpu.memory_space<vmem>>, %arg5: memref<1x512xf32, #tpu.memory_space<vmem>>, %arg6: memref<128x512xbf16, #tpu.memory_space<vmem>>, %arg7: memref<128x512xbf16, #tpu.memory_space<vmem>>, %arg8: memref<1x512xf32, #tpu.memory_space<vmem>>, %arg9: memref<128x128xbf16, #tpu.memory_space<vmem>>, %arg10: memref<1x128xf32, #tpu.memory_space<vmem>>, %arg11: memref<1x8x128xf32, #tpu.memory_space<vmem>>, %arg12: memref<2x8x128xf32, #tpu.memory_space<vmem>>, %arg13: memref<2x8x128xf32, #tpu.memory_space<vmem>>, %arg14: memref<64x512xf32, #tpu.memory_space<vmem>>, %arg15: memref<64x128xf32, #tpu.memory_space<vmem>>) attributes {dimension_semantics = [#tpu.dimension_semantics<parallel>, #tpu.dimension_semantics<arbitrary>], iteration_bounds = array<i64: 1, 2>, scalar_prefetch = 0 : i64, scratch_operands = 4 : i64, tpu.core_type = #tpu.core_type<tc>, window_params = [{transform_indices = @transform_0, window_bounds = array<i64: 1, 64, 16>}, {pipeline_mode = #tpu.pipeline_mode<synchronous>, transform_indices = @transform_1, window_bounds = array<i64: 16, 512>}, {pipeline_mode = #tpu.pipeline_mode<synchronous>, transform_indices = @transform_2, window_bounds = array<i64: 128, 512>}, {pipeline_mode = #tpu.pipeline_mode<synchronous>, transform_indices = @transform_3, window_bounds = array<i64: 1, 512>}, {pipeline_mode = #tpu.pipeline_mode<synchronous>, transform_indices = @transform_4, window_bounds = array<i64: 128, 512>}, {pipeline_mode = #tpu.pipeline_mode<synchronous>, transform_indices = @transform_5, window_bounds = array<i64: 128, 512>}, {pipeline_mode = #tpu.pipeline_mode<synchronous>, transform_indices = @transform_6, window_bounds = array<i64: 1, 512>}, {pipeline_mode = #tpu.pipeline_mode<synchronous>, transform_indices = @transform_7, window_bounds = array<i64: 128, 128>}, {pipeline_mode = #tpu.pipeline_mode<synchronous>, transform_indices = @transform_8, window_bounds = array<i64: 1, 128>}, {transform_indices = @transform_9, window_bounds = array<i64: 1, 8, 128>}]} {
    %c0_i32 = arith.constant 0 : i32
    %0 = arith.cmpi eq, %arg1, %c0_i32 : i32
    %1 = arith.extui %0 : i1 to i32
    %c0_i32_0 = arith.constant 0 : i32
    %2 = arith.cmpi ne, %1, %c0_i32_0 : i32
    scf.if %2 {
      %cst_191 = arith.constant 0.000000e+00 : f32
      %596 = vector.broadcast %cst_191 : f32 to vector<2x8x128xf32>
      %c0_192 = arith.constant 0 : index
      %c0_193 = arith.constant 0 : index
      %c0_194 = arith.constant 0 : index
      %597 = vector.load %arg12[%c0_192, %c0_193, %c0_194] : memref<2x8x128xf32, #tpu.memory_space<vmem>>, vector<2x8x128xf32>
      tpu.vector_store %arg12[%c0_192, %c0_193, %c0_194], %596 {strides = array<i32>} : memref<2x8x128xf32, #tpu.memory_space<vmem>>, vector<2x8x128xf32>,
      %cst_195 = arith.constant 0.000000e+00 : f32
      %598 = vector.broadcast %cst_195 : f32 to vector<2x8x128xf32>
      %c0_196 = arith.constant 0 : index
      %c0_197 = arith.constant 0 : index
      %c0_198 = arith.constant 0 : index
      %599 = vector.load %arg13[%c0_196, %c0_197, %c0_198] : memref<2x8x128xf32, #tpu.memory_space<vmem>>, vector<2x8x128xf32>
      tpu.vector_store %arg13[%c0_196, %c0_197, %c0_198], %598 {strides = array<i32>} : memref<2x8x128xf32, #tpu.memory_space<vmem>>, vector<2x8x128xf32>,
      %cst_199 = arith.constant 0.000000e+00 : f32
      %600 = vector.broadcast %cst_199 : f32 to vector<8x128xf32>
      %c0_200 = arith.constant 0 : index
      %c0_201 = arith.constant 0 : index
      %c0_202 = arith.constant 0 : index
      %601 = vector.load %arg11[%c0_200, %c0_201, %c0_202] : memref<1x8x128xf32, #tpu.memory_space<vmem>>, vector<1x8x128xf32>
      %602 = vector.shape_cast %601 : vector<1x8x128xf32> to vector<8x128xf32>
      %603 = vector.shape_cast %600 : vector<8x128xf32> to vector<1x8x128xf32>
      tpu.vector_store %arg11[%c0_200, %c0_201, %c0_202], %603 {strides = array<i32>} : memref<1x8x128xf32, #tpu.memory_space<vmem>>, vector<1x8x128xf32>,
    } else {
    }
    %c0 = arith.constant 0 : index
    %c0_1 = arith.constant 0 : index
    %c0_2 = arith.constant 0 : index
    %3 = vector.load %arg2[%c0, %c0_1, %c0_2] : memref<1x64x16xbf16, #tpu.memory_space<vmem>>, vector<1x64x16xbf16>
    %4 = vector.shape_cast %3 : vector<1x64x16xbf16> to vector<64x16xbf16>
    %c0_3 = arith.constant 0 : index
    %c0_4 = arith.constant 0 : index
    %5 = vector.load %arg3[%c0_3, %c0_4] : memref<16x512xbf16, #tpu.memory_space<vmem>>, vector<16x512xbf16>
    %cst = arith.constant dense<0.000000e+00> : vector<64x512xf32>
    %6 = tpu.matmul %4, %5, %cst {dimension_numbers = #tpu.dot_dimension_numbers<[1], [0], [0], [1], [0, 0, 1, 1], [], []>} : vector<64x16xbf16>, vector<16x512xbf16>, vector<64x512xf32> -> vector<64x512xf32>
    %c0_5 = arith.constant 0 : index
    %c0_6 = arith.constant 0 : index
    %7 = vector.load %arg5[%c0_5, %c0_6] : memref<1x512xf32, #tpu.memory_space<vmem>>, vector<1x512xf32>
    %8 = vector.broadcast %7 : vector<1x512xf32> to vector<64x512xf32>
    %9 = arith.addf %6, %8 : vector<64x512xf32>
    %c0_7 = arith.constant 0 : index
    %c0_8 = arith.constant 0 : index
    %10 = vector.load %arg14[%c0_7, %c0_8] : memref<64x512xf32, #tpu.memory_space<vmem>>, vector<64x512xf32>
    tpu.vector_store %arg14[%c0_7, %c0_8], %9 {strides = array<i32>} : memref<64x512xf32, #tpu.memory_space<vmem>>, vector<64x512xf32>,
    %c0_9 = arith.constant 0 : index
    %c0_10 = arith.constant 0 : index
    %11 = vector.load %arg4[%c0_9, %c0_10] : memref<128x512xbf16, #tpu.memory_space<vmem>>, vector<128x512xbf16>
    %c0_11 = arith.constant 0 : index
    %c0_12 = arith.constant 0 : index
    %c0_13 = arith.constant 0 : index
    %12 = vector.load %arg12[%c0_11, %c0_12, %c0_13] : memref<2x8x128xf32, #tpu.memory_space<vmem>>, vector<1x8x128xf32>
    %13 = vector.shape_cast %12 : vector<1x8x128xf32> to vector<8x128xf32>
    %c0_14 = arith.constant 0 : index
    %c0_15 = arith.constant 0 : index
    %c0_16 = arith.constant 0 : index
    %14 = vector.load %arg13[%c0_14, %c0_15, %c0_16] : memref<2x8x128xf32, #tpu.memory_space<vmem>>, vector<1x8x128xf32>
    %15 = vector.shape_cast %14 : vector<1x8x128xf32> to vector<8x128xf32>
    %c0_17 = arith.constant 0 : index
    %c0_18 = arith.constant 0 : index
    %16 = vector.load %arg14[%c0_17, %c0_18] : memref<64x512xf32, #tpu.memory_space<vmem>>, vector<8x512xf32>
    %17 = arith.truncf %13 : vector<8x128xf32> to vector<8x128xbf16>
    %cst_19 = arith.constant dense<0.000000e+00> : vector<8x512xf32>
    %18 = tpu.matmul %17, %11, %cst_19 {dimension_numbers = #tpu.dot_dimension_numbers<[1], [0], [0], [1], [0, 0, 1, 1], [], []>} : vector<8x128xbf16>, vector<128x512xbf16>, vector<8x512xf32> -> vector<8x512xf32>
    %19 = arith.addf %16, %18 : vector<8x512xf32>
    %20 = vector.extract_strided_slice %19 {offsets = [0, 0], sizes = [8, 128], strides = [1, 1]} : vector<8x512xf32> to vector<8x128xf32>
    %21 = arith.negf %20 : vector<8x128xf32>
    %22 = math.exp %21 : vector<8x128xf32>
    %cst_20 = arith.constant 1.000000e+00 : f32
    %23 = vector.broadcast %cst_20 : f32 to vector<8x128xf32>
    %24 = arith.addf %23, %22 : vector<8x128xf32>
    %25 = arith.divf %23, %24 : vector<8x128xf32>
    %26 = vector.extract_strided_slice %19 {offsets = [0, 128], sizes = [8, 128], strides = [1, 1]} : vector<8x512xf32> to vector<8x128xf32>
    %27 = arith.negf %26 : vector<8x128xf32>
    %28 = math.exp %27 : vector<8x128xf32>
    %cst_21 = arith.constant 1.000000e+00 : f32
    %29 = vector.broadcast %cst_21 : f32 to vector<8x128xf32>
    %30 = arith.addf %29, %28 : vector<8x128xf32>
    %31 = arith.divf %29, %30 : vector<8x128xf32>
    %32 = vector.extract_strided_slice %19 {offsets = [0, 256], sizes = [8, 128], strides = [1, 1]} : vector<8x512xf32> to vector<8x128xf32>
    %33 = math.tanh %32 : vector<8x128xf32>
    %34 = vector.extract_strided_slice %19 {offsets = [0, 384], sizes = [8, 128], strides = [1, 1]} : vector<8x512xf32> to vector<8x128xf32>
    %35 = arith.negf %34 : vector<8x128xf32>
    %36 = math.exp %35 : vector<8x128xf32>
    %cst_22 = arith.constant 1.000000e+00 : f32
    %37 = vector.broadcast %cst_22 : f32 to vector<8x128xf32>
    %38 = arith.addf %37, %36 : vector<8x128xf32>
    %39 = arith.divf %37, %38 : vector<8x128xf32>
    %40 = arith.mulf %31, %15 : vector<8x128xf32>
    %41 = arith.mulf %25, %33 : vector<8x128xf32>
    %42 = arith.addf %40, %41 : vector<8x128xf32>
    %43 = math.tanh %42 : vector<8x128xf32>
    %44 = arith.mulf %39, %43 : vector<8x128xf32>
    %c8_i32 = arith.constant 8 : i32
    %45 = arith.muli %arg1, %c8_i32 : i32
    %c0_i32_23 = arith.constant 0 : i32
    %46 = arith.addi %45, %c0_i32_23 : i32
    %c13_i32 = arith.constant 13 : i32
    %47 = arith.cmpi slt, %46, %c13_i32 : i32
    %48 = arith.select %47, %42, %15 : vector<8x128xf32>
    %49 = arith.select %47, %44, %13 : vector<8x128xf32>
    %c0_24 = arith.constant 0 : index
    %c0_25 = arith.constant 0 : index
    %50 = vector.load %arg15[%c0_24, %c0_25] : memref<64x128xf32, #tpu.memory_space<vmem>>, vector<8x128xf32>
    tpu.vector_store %arg15[%c0_24, %c0_25], %49 {strides = array<i32>} : memref<64x128xf32, #tpu.memory_space<vmem>>, vector<8x128xf32>,
    %c8 = arith.constant 8 : index
    %c0_26 = arith.constant 0 : index
    %51 = vector.load %arg14[%c8, %c0_26] : memref<64x512xf32, #tpu.memory_space<vmem>>, vector<8x512xf32>
    %52 = arith.truncf %49 : vector<8x128xf32> to vector<8x128xbf16>
    %cst_27 = arith.constant dense<0.000000e+00> : vector<8x512xf32>
    %53 = tpu.matmul %52, %11, %cst_27 {dimension_numbers = #tpu.dot_dimension_numbers<[1], [0], [0], [1], [0, 0, 1, 1], [], []>} : vector<8x128xbf16>, vector<128x512xbf16>, vector<8x512xf32> -> vector<8x512xf32>
    %54 = arith.addf %51, %53 : vector<8x512xf32>
    %55 = vector.extract_strided_slice %54 {offsets = [0, 0], sizes = [8, 128], strides = [1, 1]} : vector<8x512xf32> to vector<8x128xf32>
    %56 = arith.negf %55 : vector<8x128xf32>
    %57 = math.exp %56 : vector<8x128xf32>
    %cst_28 = arith.constant 1.000000e+00 : f32
    %58 = vector.broadcast %cst_28 : f32 to vector<8x128xf32>
    %59 = arith.addf %58, %57 : vector<8x128xf32>
    %60 = arith.divf %58, %59 : vector<8x128xf32>
    %61 = vector.extract_strided_slice %54 {offsets = [0, 128], sizes = [8, 128], strides = [1, 1]} : vector<8x512xf32> to vector<8x128xf32>
    %62 = arith.negf %61 : vector<8x128xf32>
    %63 = math.exp %62 : vector<8x128xf32>
    %cst_29 = arith.constant 1.000000e+00 : f32
    %64 = vector.broadcast %cst_29 : f32 to vector<8x128xf32>
    %65 = arith.addf %64, %63 : vector<8x128xf32>
    %66 = arith.divf %64, %65 : vector<8x128xf32>
    %67 = vector.extract_strided_slice %54 {offsets = [0, 256], sizes = [8, 128], strides = [1, 1]} : vector<8x512xf32> to vector<8x128xf32>
    %68 = math.tanh %67 : vector<8x128xf32>
    %69 = vector.extract_strided_slice %54 {offsets = [0, 384], sizes = [8, 128], strides = [1, 1]} : vector<8x512xf32> to vector<8x128xf32>
    %70 = arith.negf %69 : vector<8x128xf32>
    %71 = math.exp %70 : vector<8x128xf32>
    %cst_30 = arith.constant 1.000000e+00 : f32
    %72 = vector.broadcast %cst_30 : f32 to vector<8x128xf32>
    %73 = arith.addf %72, %71 : vector<8x128xf32>
    %74 = arith.divf %72, %73 : vector<8x128xf32>
    %75 = arith.mulf %66, %48 : vector<8x128xf32>
    %76 = arith.mulf %60, %68 : vector<8x128xf32>
    %77 = arith.addf %75, %76 : vector<8x128xf32>
    %78 = math.tanh %77 : vector<8x128xf32>
    %79 = arith.mulf %74, %78 : vector<8x128xf32>
    %c8_i32_31 = arith.constant 8 : i32
    %80 = arith.muli %arg1, %c8_i32_31 : i32
    %c1_i32 = arith.constant 1 : i32
    %81 = arith.addi %80, %c1_i32 : i32
    %c13_i32_32 = arith.constant 13 : i32
    %82 = arith.cmpi slt, %81, %c13_i32_32 : i32
    %83 = arith.select %82, %77, %48 : vector<8x128xf32>
    %84 = arith.select %82, %79, %49 : vector<8x128xf32>
    %c8_33 = arith.constant 8 : index
    %c0_34 = arith.constant 0 : index
    %85 = vector.load %arg15[%c8_33, %c0_34] : memref<64x128xf32, #tpu.memory_space<vmem>>, vector<8x128xf32>
    tpu.vector_store %arg15[%c8_33, %c0_34], %84 {strides = array<i32>} : memref<64x128xf32, #tpu.memory_space<vmem>>, vector<8x128xf32>,
    %c16 = arith.constant 16 : index
    %c0_35 = arith.constant 0 : index
    %86 = vector.load %arg14[%c16, %c0_35] : memref<64x512xf32, #tpu.memory_space<vmem>>, vector<8x512xf32>
    %87 = arith.truncf %84 : vector<8x128xf32> to vector<8x128xbf16>
    %cst_36 = arith.constant dense<0.000000e+00> : vector<8x512xf32>
    %88 = tpu.matmul %87, %11, %cst_36 {dimension_numbers = #tpu.dot_dimension_numbers<[1], [0], [0], [1], [0, 0, 1, 1], [], []>} : vector<8x128xbf16>, vector<128x512xbf16>, vector<8x512xf32> -> vector<8x512xf32>
    %89 = arith.addf %86, %88 : vector<8x512xf32>
    %90 = vector.extract_strided_slice %89 {offsets = [0, 0], sizes = [8, 128], strides = [1, 1]} : vector<8x512xf32> to vector<8x128xf32>
    %91 = arith.negf %90 : vector<8x128xf32>
    %92 = math.exp %91 : vector<8x128xf32>
    %cst_37 = arith.constant 1.000000e+00 : f32
    %93 = vector.broadcast %cst_37 : f32 to vector<8x128xf32>
    %94 = arith.addf %93, %92 : vector<8x128xf32>
    %95 = arith.divf %93, %94 : vector<8x128xf32>
    %96 = vector.extract_strided_slice %89 {offsets = [0, 128], sizes = [8, 128], strides = [1, 1]} : vector<8x512xf32> to vector<8x128xf32>
    %97 = arith.negf %96 : vector<8x128xf32>
    %98 = math.exp %97 : vector<8x128xf32>
    %cst_38 = arith.constant 1.000000e+00 : f32
    %99 = vector.broadcast %cst_38 : f32 to vector<8x128xf32>
    %100 = arith.addf %99, %98 : vector<8x128xf32>
    %101 = arith.divf %99, %100 : vector<8x128xf32>
    %102 = vector.extract_strided_slice %89 {offsets = [0, 256], sizes = [8, 128], strides = [1, 1]} : vector<8x512xf32> to vector<8x128xf32>
    %103 = math.tanh %102 : vector<8x128xf32>
    %104 = vector.extract_strided_slice %89 {offsets = [0, 384], sizes = [8, 128], strides = [1, 1]} : vector<8x512xf32> to vector<8x128xf32>
    %105 = arith.negf %104 : vector<8x128xf32>
    %106 = math.exp %105 : vector<8x128xf32>
    %cst_39 = arith.constant 1.000000e+00 : f32
    %107 = vector.broadcast %cst_39 : f32 to vector<8x128xf32>
    %108 = arith.addf %107, %106 : vector<8x128xf32>
    %109 = arith.divf %107, %108 : vector<8x128xf32>
    %110 = arith.mulf %101, %83 : vector<8x128xf32>
    %111 = arith.mulf %95, %103 : vector<8x128xf32>
    %112 = arith.addf %110, %111 : vector<8x128xf32>
    %113 = math.tanh %112 : vector<8x128xf32>
    %114 = arith.mulf %109, %113 : vector<8x128xf32>
    %c8_i32_40 = arith.constant 8 : i32
    %115 = arith.muli %arg1, %c8_i32_40 : i32
    %c2_i32 = arith.constant 2 : i32
    %116 = arith.addi %115, %c2_i32 : i32
    %c13_i32_41 = arith.constant 13 : i32
    %117 = arith.cmpi slt, %116, %c13_i32_41 : i32
    %118 = arith.select %117, %112, %83 : vector<8x128xf32>
    %119 = arith.select %117, %114, %84 : vector<8x128xf32>
    %c16_42 = arith.constant 16 : index
    %c0_43 = arith.constant 0 : index
    %120 = vector.load %arg15[%c16_42, %c0_43] : memref<64x128xf32, #tpu.memory_space<vmem>>, vector<8x128xf32>
    tpu.vector_store %arg15[%c16_42, %c0_43], %119 {strides = array<i32>} : memref<64x128xf32, #tpu.memory_space<vmem>>, vector<8x128xf32>,
    %c24 = arith.constant 24 : index
    %c0_44 = arith.constant 0 : index
    %121 = vector.load %arg14[%c24, %c0_44] : memref<64x512xf32, #tpu.memory_space<vmem>>, vector<8x512xf32>
    %122 = arith.truncf %119 : vector<8x128xf32> to vector<8x128xbf16>
    %cst_45 = arith.constant dense<0.000000e+00> : vector<8x512xf32>
    %123 = tpu.matmul %122, %11, %cst_45 {dimension_numbers = #tpu.dot_dimension_numbers<[1], [0], [0], [1], [0, 0, 1, 1], [], []>} : vector<8x128xbf16>, vector<128x512xbf16>, vector<8x512xf32> -> vector<8x512xf32>
    %124 = arith.addf %121, %123 : vector<8x512xf32>
    %125 = vector.extract_strided_slice %124 {offsets = [0, 0], sizes = [8, 128], strides = [1, 1]} : vector<8x512xf32> to vector<8x128xf32>
    %126 = arith.negf %125 : vector<8x128xf32>
    %127 = math.exp %126 : vector<8x128xf32>
    %cst_46 = arith.constant 1.000000e+00 : f32
    %128 = vector.broadcast %cst_46 : f32 to vector<8x128xf32>
    %129 = arith.addf %128, %127 : vector<8x128xf32>
    %130 = arith.divf %128, %129 : vector<8x128xf32>
    %131 = vector.extract_strided_slice %124 {offsets = [0, 128], sizes = [8, 128], strides = [1, 1]} : vector<8x512xf32> to vector<8x128xf32>
    %132 = arith.negf %131 : vector<8x128xf32>
    %133 = math.exp %132 : vector<8x128xf32>
    %cst_47 = arith.constant 1.000000e+00 : f32
    %134 = vector.broadcast %cst_47 : f32 to vector<8x128xf32>
    %135 = arith.addf %134, %133 : vector<8x128xf32>
    %136 = arith.divf %134, %135 : vector<8x128xf32>
    %137 = vector.extract_strided_slice %124 {offsets = [0, 256], sizes = [8, 128], strides = [1, 1]} : vector<8x512xf32> to vector<8x128xf32>
    %138 = math.tanh %137 : vector<8x128xf32>
    %139 = vector.extract_strided_slice %124 {offsets = [0, 384], sizes = [8, 128], strides = [1, 1]} : vector<8x512xf32> to vector<8x128xf32>
    %140 = arith.negf %139 : vector<8x128xf32>
    %141 = math.exp %140 : vector<8x128xf32>
    %cst_48 = arith.constant 1.000000e+00 : f32
    %142 = vector.broadcast %cst_48 : f32 to vector<8x128xf32>
    %143 = arith.addf %142, %141 : vector<8x128xf32>
    %144 = arith.divf %142, %143 : vector<8x128xf32>
    %145 = arith.mulf %136, %118 : vector<8x128xf32>
    %146 = arith.mulf %130, %138 : vector<8x128xf32>
    %147 = arith.addf %145, %146 : vector<8x128xf32>
    %148 = math.tanh %147 : vector<8x128xf32>
    %149 = arith.mulf %144, %148 : vector<8x128xf32>
    %c8_i32_49 = arith.constant 8 : i32
    %150 = arith.muli %arg1, %c8_i32_49 : i32
    %c3_i32 = arith.constant 3 : i32
    %151 = arith.addi %150, %c3_i32 : i32
    %c13_i32_50 = arith.constant 13 : i32
    %152 = arith.cmpi slt, %151, %c13_i32_50 : i32
    %153 = arith.select %152, %147, %118 : vector<8x128xf32>
    %154 = arith.select %152, %149, %119 : vector<8x128xf32>
    %c24_51 = arith.constant 24 : index
    %c0_52 = arith.constant 0 : index
    %155 = vector.load %arg15[%c24_51, %c0_52] : memref<64x128xf32, #tpu.memory_space<vmem>>, vector<8x128xf32>
    tpu.vector_store %arg15[%c24_51, %c0_52], %154 {strides = array<i32>} : memref<64x128xf32, #tpu.memory_space<vmem>>, vector<8x128xf32>,
    %c32 = arith.constant 32 : index
    %c0_53 = arith.constant 0 : index
    %156 = vector.load %arg14[%c32, %c0_53] : memref<64x512xf32, #tpu.memory_space<vmem>>, vector<8x512xf32>
    %157 = arith.truncf %154 : vector<8x128xf32> to vector<8x128xbf16>
    %cst_54 = arith.constant dense<0.000000e+00> : vector<8x512xf32>
    %158 = tpu.matmul %157, %11, %cst_54 {dimension_numbers = #tpu.dot_dimension_numbers<[1], [0], [0], [1], [0, 0, 1, 1], [], []>} : vector<8x128xbf16>, vector<128x512xbf16>, vector<8x512xf32> -> vector<8x512xf32>
    %159 = arith.addf %156, %158 : vector<8x512xf32>
    %160 = vector.extract_strided_slice %159 {offsets = [0, 0], sizes = [8, 128], strides = [1, 1]} : vector<8x512xf32> to vector<8x128xf32>
    %161 = arith.negf %160 : vector<8x128xf32>
    %162 = math.exp %161 : vector<8x128xf32>
    %cst_55 = arith.constant 1.000000e+00 : f32
    %163 = vector.broadcast %cst_55 : f32 to vector<8x128xf32>
    %164 = arith.addf %163, %162 : vector<8x128xf32>
    %165 = arith.divf %163, %164 : vector<8x128xf32>
    %166 = vector.extract_strided_slice %159 {offsets = [0, 128], sizes = [8, 128], strides = [1, 1]} : vector<8x512xf32> to vector<8x128xf32>
    %167 = arith.negf %166 : vector<8x128xf32>
    %168 = math.exp %167 : vector<8x128xf32>
    %cst_56 = arith.constant 1.000000e+00 : f32
    %169 = vector.broadcast %cst_56 : f32 to vector<8x128xf32>
    %170 = arith.addf %169, %168 : vector<8x128xf32>
    %171 = arith.divf %169, %170 : vector<8x128xf32>
    %172 = vector.extract_strided_slice %159 {offsets = [0, 256], sizes = [8, 128], strides = [1, 1]} : vector<8x512xf32> to vector<8x128xf32>
    %173 = math.tanh %172 : vector<8x128xf32>
    %174 = vector.extract_strided_slice %159 {offsets = [0, 384], sizes = [8, 128], strides = [1, 1]} : vector<8x512xf32> to vector<8x128xf32>
    %175 = arith.negf %174 : vector<8x128xf32>
    %176 = math.exp %175 : vector<8x128xf32>
    %cst_57 = arith.constant 1.000000e+00 : f32
    %177 = vector.broadcast %cst_57 : f32 to vector<8x128xf32>
    %178 = arith.addf %177, %176 : vector<8x128xf32>
    %179 = arith.divf %177, %178 : vector<8x128xf32>
    %180 = arith.mulf %171, %153 : vector<8x128xf32>
    %181 = arith.mulf %165, %173 : vector<8x128xf32>
    %182 = arith.addf %180, %181 : vector<8x128xf32>
    %183 = math.tanh %182 : vector<8x128xf32>
    %184 = arith.mulf %179, %183 : vector<8x128xf32>
    %c8_i32_58 = arith.constant 8 : i32
    %185 = arith.muli %arg1, %c8_i32_58 : i32
    %c4_i32 = arith.constant 4 : i32
    %186 = arith.addi %185, %c4_i32 : i32
    %c13_i32_59 = arith.constant 13 : i32
    %187 = arith.cmpi slt, %186, %c13_i32_59 : i32
    %188 = arith.select %187, %182, %153 : vector<8x128xf32>
    %189 = arith.select %187, %184, %154 : vector<8x128xf32>
    %c32_60 = arith.constant 32 : index
    %c0_61 = arith.constant 0 : index
    %190 = vector.load %arg15[%c32_60, %c0_61] : memref<64x128xf32, #tpu.memory_space<vmem>>, vector<8x128xf32>
    tpu.vector_store %arg15[%c32_60, %c0_61], %189 {strides = array<i32>} : memref<64x128xf32, #tpu.memory_space<vmem>>, vector<8x128xf32>,
    %c40 = arith.constant 40 : index
    %c0_62 = arith.constant 0 : index
    %191 = vector.load %arg14[%c40, %c0_62] : memref<64x512xf32, #tpu.memory_space<vmem>>, vector<8x512xf32>
    %192 = arith.truncf %189 : vector<8x128xf32> to vector<8x128xbf16>
    %cst_63 = arith.constant dense<0.000000e+00> : vector<8x512xf32>
    %193 = tpu.matmul %192, %11, %cst_63 {dimension_numbers = #tpu.dot_dimension_numbers<[1], [0], [0], [1], [0, 0, 1, 1], [], []>} : vector<8x128xbf16>, vector<128x512xbf16>, vector<8x512xf32> -> vector<8x512xf32>
    %194 = arith.addf %191, %193 : vector<8x512xf32>
    %195 = vector.extract_strided_slice %194 {offsets = [0, 0], sizes = [8, 128], strides = [1, 1]} : vector<8x512xf32> to vector<8x128xf32>
    %196 = arith.negf %195 : vector<8x128xf32>
    %197 = math.exp %196 : vector<8x128xf32>
    %cst_64 = arith.constant 1.000000e+00 : f32
    %198 = vector.broadcast %cst_64 : f32 to vector<8x128xf32>
    %199 = arith.addf %198, %197 : vector<8x128xf32>
    %200 = arith.divf %198, %199 : vector<8x128xf32>
    %201 = vector.extract_strided_slice %194 {offsets = [0, 128], sizes = [8, 128], strides = [1, 1]} : vector<8x512xf32> to vector<8x128xf32>
    %202 = arith.negf %201 : vector<8x128xf32>
    %203 = math.exp %202 : vector<8x128xf32>
    %cst_65 = arith.constant 1.000000e+00 : f32
    %204 = vector.broadcast %cst_65 : f32 to vector<8x128xf32>
    %205 = arith.addf %204, %203 : vector<8x128xf32>
    %206 = arith.divf %204, %205 : vector<8x128xf32>
    %207 = vector.extract_strided_slice %194 {offsets = [0, 256], sizes = [8, 128], strides = [1, 1]} : vector<8x512xf32> to vector<8x128xf32>
    %208 = math.tanh %207 : vector<8x128xf32>
    %209 = vector.extract_strided_slice %194 {offsets = [0, 384], sizes = [8, 128], strides = [1, 1]} : vector<8x512xf32> to vector<8x128xf32>
    %210 = arith.negf %209 : vector<8x128xf32>
    %211 = math.exp %210 : vector<8x128xf32>
    %cst_66 = arith.constant 1.000000e+00 : f32
    %212 = vector.broadcast %cst_66 : f32 to vector<8x128xf32>
    %213 = arith.addf %212, %211 : vector<8x128xf32>
    %214 = arith.divf %212, %213 : vector<8x128xf32>
    %215 = arith.mulf %206, %188 : vector<8x128xf32>
    %216 = arith.mulf %200, %208 : vector<8x128xf32>
    %217 = arith.addf %215, %216 : vector<8x128xf32>
    %218 = math.tanh %217 : vector<8x128xf32>
    %219 = arith.mulf %214, %218 : vector<8x128xf32>
    %c8_i32_67 = arith.constant 8 : i32
    %220 = arith.muli %arg1, %c8_i32_67 : i32
    %c5_i32 = arith.constant 5 : i32
    %221 = arith.addi %220, %c5_i32 : i32
    %c13_i32_68 = arith.constant 13 : i32
    %222 = arith.cmpi slt, %221, %c13_i32_68 : i32
    %223 = arith.select %222, %217, %188 : vector<8x128xf32>
    %224 = arith.select %222, %219, %189 : vector<8x128xf32>
    %c40_69 = arith.constant 40 : index
    %c0_70 = arith.constant 0 : index
    %225 = vector.load %arg15[%c40_69, %c0_70] : memref<64x128xf32, #tpu.memory_space<vmem>>, vector<8x128xf32>
    tpu.vector_store %arg15[%c40_69, %c0_70], %224 {strides = array<i32>} : memref<64x128xf32, #tpu.memory_space<vmem>>, vector<8x128xf32>,
    %c48 = arith.constant 48 : index
    %c0_71 = arith.constant 0 : index
    %226 = vector.load %arg14[%c48, %c0_71] : memref<64x512xf32, #tpu.memory_space<vmem>>, vector<8x512xf32>
    %227 = arith.truncf %224 : vector<8x128xf32> to vector<8x128xbf16>
    %cst_72 = arith.constant dense<0.000000e+00> : vector<8x512xf32>
    %228 = tpu.matmul %227, %11, %cst_72 {dimension_numbers = #tpu.dot_dimension_numbers<[1], [0], [0], [1], [0, 0, 1, 1], [], []>} : vector<8x128xbf16>, vector<128x512xbf16>, vector<8x512xf32> -> vector<8x512xf32>
    %229 = arith.addf %226, %228 : vector<8x512xf32>
    %230 = vector.extract_strided_slice %229 {offsets = [0, 0], sizes = [8, 128], strides = [1, 1]} : vector<8x512xf32> to vector<8x128xf32>
    %231 = arith.negf %230 : vector<8x128xf32>
    %232 = math.exp %231 : vector<8x128xf32>
    %cst_73 = arith.constant 1.000000e+00 : f32
    %233 = vector.broadcast %cst_73 : f32 to vector<8x128xf32>
    %234 = arith.addf %233, %232 : vector<8x128xf32>
    %235 = arith.divf %233, %234 : vector<8x128xf32>
    %236 = vector.extract_strided_slice %229 {offsets = [0, 128], sizes = [8, 128], strides = [1, 1]} : vector<8x512xf32> to vector<8x128xf32>
    %237 = arith.negf %236 : vector<8x128xf32>
    %238 = math.exp %237 : vector<8x128xf32>
    %cst_74 = arith.constant 1.000000e+00 : f32
    %239 = vector.broadcast %cst_74 : f32 to vector<8x128xf32>
    %240 = arith.addf %239, %238 : vector<8x128xf32>
    %241 = arith.divf %239, %240 : vector<8x128xf32>
    %242 = vector.extract_strided_slice %229 {offsets = [0, 256], sizes = [8, 128], strides = [1, 1]} : vector<8x512xf32> to vector<8x128xf32>
    %243 = math.tanh %242 : vector<8x128xf32>
    %244 = vector.extract_strided_slice %229 {offsets = [0, 384], sizes = [8, 128], strides = [1, 1]} : vector<8x512xf32> to vector<8x128xf32>
    %245 = arith.negf %244 : vector<8x128xf32>
    %246 = math.exp %245 : vector<8x128xf32>
    %cst_75 = arith.constant 1.000000e+00 : f32
    %247 = vector.broadcast %cst_75 : f32 to vector<8x128xf32>
    %248 = arith.addf %247, %246 : vector<8x128xf32>
    %249 = arith.divf %247, %248 : vector<8x128xf32>
    %250 = arith.mulf %241, %223 : vector<8x128xf32>
    %251 = arith.mulf %235, %243 : vector<8x128xf32>
    %252 = arith.addf %250, %251 : vector<8x128xf32>
    %253 = math.tanh %252 : vector<8x128xf32>
    %254 = arith.mulf %249, %253 : vector<8x128xf32>
    %c8_i32_76 = arith.constant 8 : i32
    %255 = arith.muli %arg1, %c8_i32_76 : i32
    %c6_i32 = arith.constant 6 : i32
    %256 = arith.addi %255, %c6_i32 : i32
    %c13_i32_77 = arith.constant 13 : i32
    %257 = arith.cmpi slt, %256, %c13_i32_77 : i32
    %258 = arith.select %257, %252, %223 : vector<8x128xf32>
    %259 = arith.select %257, %254, %224 : vector<8x128xf32>
    %c48_78 = arith.constant 48 : index
    %c0_79 = arith.constant 0 : index
    %260 = vector.load %arg15[%c48_78, %c0_79] : memref<64x128xf32, #tpu.memory_space<vmem>>, vector<8x128xf32>
    tpu.vector_store %arg15[%c48_78, %c0_79], %259 {strides = array<i32>} : memref<64x128xf32, #tpu.memory_space<vmem>>, vector<8x128xf32>,
    %c56 = arith.constant 56 : index
    %c0_80 = arith.constant 0 : index
    %261 = vector.load %arg14[%c56, %c0_80] : memref<64x512xf32, #tpu.memory_space<vmem>>, vector<8x512xf32>
    %262 = arith.truncf %259 : vector<8x128xf32> to vector<8x128xbf16>
    %cst_81 = arith.constant dense<0.000000e+00> : vector<8x512xf32>
    %263 = tpu.matmul %262, %11, %cst_81 {dimension_numbers = #tpu.dot_dimension_numbers<[1], [0], [0], [1], [0, 0, 1, 1], [], []>} : vector<8x128xbf16>, vector<128x512xbf16>, vector<8x512xf32> -> vector<8x512xf32>
    %264 = arith.addf %261, %263 : vector<8x512xf32>
    %265 = vector.extract_strided_slice %264 {offsets = [0, 0], sizes = [8, 128], strides = [1, 1]} : vector<8x512xf32> to vector<8x128xf32>
    %266 = arith.negf %265 : vector<8x128xf32>
    %267 = math.exp %266 : vector<8x128xf32>
    %cst_82 = arith.constant 1.000000e+00 : f32
    %268 = vector.broadcast %cst_82 : f32 to vector<8x128xf32>
    %269 = arith.addf %268, %267 : vector<8x128xf32>
    %270 = arith.divf %268, %269 : vector<8x128xf32>
    %271 = vector.extract_strided_slice %264 {offsets = [0, 128], sizes = [8, 128], strides = [1, 1]} : vector<8x512xf32> to vector<8x128xf32>
    %272 = arith.negf %271 : vector<8x128xf32>
    %273 = math.exp %272 : vector<8x128xf32>
    %cst_83 = arith.constant 1.000000e+00 : f32
    %274 = vector.broadcast %cst_83 : f32 to vector<8x128xf32>
    %275 = arith.addf %274, %273 : vector<8x128xf32>
    %276 = arith.divf %274, %275 : vector<8x128xf32>
    %277 = vector.extract_strided_slice %264 {offsets = [0, 256], sizes = [8, 128], strides = [1, 1]} : vector<8x512xf32> to vector<8x128xf32>
    %278 = math.tanh %277 : vector<8x128xf32>
    %279 = vector.extract_strided_slice %264 {offsets = [0, 384], sizes = [8, 128], strides = [1, 1]} : vector<8x512xf32> to vector<8x128xf32>
    %280 = arith.negf %279 : vector<8x128xf32>
    %281 = math.exp %280 : vector<8x128xf32>
    %cst_84 = arith.constant 1.000000e+00 : f32
    %282 = vector.broadcast %cst_84 : f32 to vector<8x128xf32>
    %283 = arith.addf %282, %281 : vector<8x128xf32>
    %284 = arith.divf %282, %283 : vector<8x128xf32>
    %285 = arith.mulf %276, %258 : vector<8x128xf32>
    %286 = arith.mulf %270, %278 : vector<8x128xf32>
    %287 = arith.addf %285, %286 : vector<8x128xf32>
    %288 = math.tanh %287 : vector<8x128xf32>
    %289 = arith.mulf %284, %288 : vector<8x128xf32>
    %c8_i32_85 = arith.constant 8 : i32
    %290 = arith.muli %arg1, %c8_i32_85 : i32
    %c7_i32 = arith.constant 7 : i32
    %291 = arith.addi %290, %c7_i32 : i32
    %c13_i32_86 = arith.constant 13 : i32
    %292 = arith.cmpi slt, %291, %c13_i32_86 : i32
    %293 = arith.select %292, %287, %258 : vector<8x128xf32>
    %294 = arith.select %292, %289, %259 : vector<8x128xf32>
    %c56_87 = arith.constant 56 : index
    %c0_88 = arith.constant 0 : index
    %295 = vector.load %arg15[%c56_87, %c0_88] : memref<64x128xf32, #tpu.memory_space<vmem>>, vector<8x128xf32>
    tpu.vector_store %arg15[%c56_87, %c0_88], %294 {strides = array<i32>} : memref<64x128xf32, #tpu.memory_space<vmem>>, vector<8x128xf32>,
    %c0_89 = arith.constant 0 : index
    %c0_90 = arith.constant 0 : index
    %c0_91 = arith.constant 0 : index
    %296 = vector.load %arg12[%c0_89, %c0_90, %c0_91] : memref<2x8x128xf32, #tpu.memory_space<vmem>>, vector<1x8x128xf32>
    %297 = vector.shape_cast %296 : vector<1x8x128xf32> to vector<8x128xf32>
    %298 = vector.shape_cast %294 : vector<8x128xf32> to vector<1x8x128xf32>
    tpu.vector_store %arg12[%c0_89, %c0_90, %c0_91], %298 {strides = array<i32>} : memref<2x8x128xf32, #tpu.memory_space<vmem>>, vector<1x8x128xf32>,
    %c0_92 = arith.constant 0 : index
    %c0_93 = arith.constant 0 : index
    %c0_94 = arith.constant 0 : index
    %299 = vector.load %arg13[%c0_92, %c0_93, %c0_94] : memref<2x8x128xf32, #tpu.memory_space<vmem>>, vector<1x8x128xf32>
    %300 = vector.shape_cast %299 : vector<1x8x128xf32> to vector<8x128xf32>
    %301 = vector.shape_cast %293 : vector<8x128xf32> to vector<1x8x128xf32>
    tpu.vector_store %arg13[%c0_92, %c0_93, %c0_94], %301 {strides = array<i32>} : memref<2x8x128xf32, #tpu.memory_space<vmem>>, vector<1x8x128xf32>,
    %c0_95 = arith.constant 0 : index
    %c0_96 = arith.constant 0 : index
    %302 = vector.load %arg15[%c0_95, %c0_96] : memref<64x128xf32, #tpu.memory_space<vmem>>, vector<64x128xf32>
    %303 = arith.truncf %302 : vector<64x128xf32> to vector<64x128xbf16>
    %c0_97 = arith.constant 0 : index
    %c0_98 = arith.constant 0 : index
    %304 = vector.load %arg6[%c0_97, %c0_98] : memref<128x512xbf16, #tpu.memory_space<vmem>>, vector<128x512xbf16>
    %cst_99 = arith.constant dense<0.000000e+00> : vector<64x512xf32>
    %305 = tpu.matmul %303, %304, %cst_99 {dimension_numbers = #tpu.dot_dimension_numbers<[1], [0], [0], [1], [0, 0, 1, 1], [], []>} : vector<64x128xbf16>, vector<128x512xbf16>, vector<64x512xf32> -> vector<64x512xf32>
    %c0_100 = arith.constant 0 : index
    %c0_101 = arith.constant 0 : index
    %306 = vector.load %arg8[%c0_100, %c0_101] : memref<1x512xf32, #tpu.memory_space<vmem>>, vector<1x512xf32>
    %307 = vector.broadcast %306 : vector<1x512xf32> to vector<64x512xf32>
    %308 = arith.addf %305, %307 : vector<64x512xf32>
    %c0_102 = arith.constant 0 : index
    %c0_103 = arith.constant 0 : index
    %309 = vector.load %arg14[%c0_102, %c0_103] : memref<64x512xf32, #tpu.memory_space<vmem>>, vector<64x512xf32>
    tpu.vector_store %arg14[%c0_102, %c0_103], %308 {strides = array<i32>} : memref<64x512xf32, #tpu.memory_space<vmem>>, vector<64x512xf32>,
    %c0_104 = arith.constant 0 : index
    %c0_105 = arith.constant 0 : index
    %310 = vector.load %arg7[%c0_104, %c0_105] : memref<128x512xbf16, #tpu.memory_space<vmem>>, vector<128x512xbf16>
    %c1 = arith.constant 1 : index
    %c0_106 = arith.constant 0 : index
    %c0_107 = arith.constant 0 : index
    %311 = vector.load %arg12[%c1, %c0_106, %c0_107] : memref<2x8x128xf32, #tpu.memory_space<vmem>>, vector<1x8x128xf32>
    %312 = vector.shape_cast %311 : vector<1x8x128xf32> to vector<8x128xf32>
    %c1_108 = arith.constant 1 : index
    %c0_109 = arith.constant 0 : index
    %c0_110 = arith.constant 0 : index
    %313 = vector.load %arg13[%c1_108, %c0_109, %c0_110] : memref<2x8x128xf32, #tpu.memory_space<vmem>>, vector<1x8x128xf32>
    %314 = vector.shape_cast %313 : vector<1x8x128xf32> to vector<8x128xf32>
    %c0_111 = arith.constant 0 : index
    %c0_112 = arith.constant 0 : index
    %315 = vector.load %arg14[%c0_111, %c0_112] : memref<64x512xf32, #tpu.memory_space<vmem>>, vector<8x512xf32>
    %316 = arith.truncf %312 : vector<8x128xf32> to vector<8x128xbf16>
    %cst_113 = arith.constant dense<0.000000e+00> : vector<8x512xf32>
    %317 = tpu.matmul %316, %310, %cst_113 {dimension_numbers = #tpu.dot_dimension_numbers<[1], [0], [0], [1], [0, 0, 1, 1], [], []>} : vector<8x128xbf16>, vector<128x512xbf16>, vector<8x512xf32> -> vector<8x512xf32>
    %318 = arith.addf %315, %317 : vector<8x512xf32>
    %319 = vector.extract_strided_slice %318 {offsets = [0, 0], sizes = [8, 128], strides = [1, 1]} : vector<8x512xf32> to vector<8x128xf32>
    %320 = arith.negf %319 : vector<8x128xf32>
    %321 = math.exp %320 : vector<8x128xf32>
    %cst_114 = arith.constant 1.000000e+00 : f32
    %322 = vector.broadcast %cst_114 : f32 to vector<8x128xf32>
    %323 = arith.addf %322, %321 : vector<8x128xf32>
    %324 = arith.divf %322, %323 : vector<8x128xf32>
    %325 = vector.extract_strided_slice %318 {offsets = [0, 128], sizes = [8, 128], strides = [1, 1]} : vector<8x512xf32> to vector<8x128xf32>
    %326 = arith.negf %325 : vector<8x128xf32>
    %327 = math.exp %326 : vector<8x128xf32>
    %cst_115 = arith.constant 1.000000e+00 : f32
    %328 = vector.broadcast %cst_115 : f32 to vector<8x128xf32>
    %329 = arith.addf %328, %327 : vector<8x128xf32>
    %330 = arith.divf %328, %329 : vector<8x128xf32>
    %331 = vector.extract_strided_slice %318 {offsets = [0, 256], sizes = [8, 128], strides = [1, 1]} : vector<8x512xf32> to vector<8x128xf32>
    %332 = math.tanh %331 : vector<8x128xf32>
    %333 = vector.extract_strided_slice %318 {offsets = [0, 384], sizes = [8, 128], strides = [1, 1]} : vector<8x512xf32> to vector<8x128xf32>
    %334 = arith.negf %333 : vector<8x128xf32>
    %335 = math.exp %334 : vector<8x128xf32>
    %cst_116 = arith.constant 1.000000e+00 : f32
    %336 = vector.broadcast %cst_116 : f32 to vector<8x128xf32>
    %337 = arith.addf %336, %335 : vector<8x128xf32>
    %338 = arith.divf %336, %337 : vector<8x128xf32>
    %339 = arith.mulf %330, %314 : vector<8x128xf32>
    %340 = arith.mulf %324, %332 : vector<8x128xf32>
    %341 = arith.addf %339, %340 : vector<8x128xf32>
    %342 = math.tanh %341 : vector<8x128xf32>
    %343 = arith.mulf %338, %342 : vector<8x128xf32>
    %c8_i32_117 = arith.constant 8 : i32
    %344 = arith.muli %arg1, %c8_i32_117 : i32
    %c0_i32_118 = arith.constant 0 : i32
    %345 = arith.addi %344, %c0_i32_118 : i32
    %c13_i32_119 = arith.constant 13 : i32
    %346 = arith.cmpi slt, %345, %c13_i32_119 : i32
    %347 = arith.select %346, %341, %314 : vector<8x128xf32>
    %348 = arith.select %346, %343, %312 : vector<8x128xf32>
    %c8_120 = arith.constant 8 : index
    %c0_121 = arith.constant 0 : index
    %349 = vector.load %arg14[%c8_120, %c0_121] : memref<64x512xf32, #tpu.memory_space<vmem>>, vector<8x512xf32>
    %350 = arith.truncf %348 : vector<8x128xf32> to vector<8x128xbf16>
    %cst_122 = arith.constant dense<0.000000e+00> : vector<8x512xf32>
    %351 = tpu.matmul %350, %310, %cst_122 {dimension_numbers = #tpu.dot_dimension_numbers<[1], [0], [0], [1], [0, 0, 1, 1], [], []>} : vector<8x128xbf16>, vector<128x512xbf16>, vector<8x512xf32> -> vector<8x512xf32>
    %352 = arith.addf %349, %351 : vector<8x512xf32>
    %353 = vector.extract_strided_slice %352 {offsets = [0, 0], sizes = [8, 128], strides = [1, 1]} : vector<8x512xf32> to vector<8x128xf32>
    %354 = arith.negf %353 : vector<8x128xf32>
    %355 = math.exp %354 : vector<8x128xf32>
    %cst_123 = arith.constant 1.000000e+00 : f32
    %356 = vector.broadcast %cst_123 : f32 to vector<8x128xf32>
    %357 = arith.addf %356, %355 : vector<8x128xf32>
    %358 = arith.divf %356, %357 : vector<8x128xf32>
    %359 = vector.extract_strided_slice %352 {offsets = [0, 128], sizes = [8, 128], strides = [1, 1]} : vector<8x512xf32> to vector<8x128xf32>
    %360 = arith.negf %359 : vector<8x128xf32>
    %361 = math.exp %360 : vector<8x128xf32>
    %cst_124 = arith.constant 1.000000e+00 : f32
    %362 = vector.broadcast %cst_124 : f32 to vector<8x128xf32>
    %363 = arith.addf %362, %361 : vector<8x128xf32>
    %364 = arith.divf %362, %363 : vector<8x128xf32>
    %365 = vector.extract_strided_slice %352 {offsets = [0, 256], sizes = [8, 128], strides = [1, 1]} : vector<8x512xf32> to vector<8x128xf32>
    %366 = math.tanh %365 : vector<8x128xf32>
    %367 = vector.extract_strided_slice %352 {offsets = [0, 384], sizes = [8, 128], strides = [1, 1]} : vector<8x512xf32> to vector<8x128xf32>
    %368 = arith.negf %367 : vector<8x128xf32>
    %369 = math.exp %368 : vector<8x128xf32>
    %cst_125 = arith.constant 1.000000e+00 : f32
    %370 = vector.broadcast %cst_125 : f32 to vector<8x128xf32>
    %371 = arith.addf %370, %369 : vector<8x128xf32>
    %372 = arith.divf %370, %371 : vector<8x128xf32>
    %373 = arith.mulf %364, %347 : vector<8x128xf32>
    %374 = arith.mulf %358, %366 : vector<8x128xf32>
    %375 = arith.addf %373, %374 : vector<8x128xf32>
    %376 = math.tanh %375 : vector<8x128xf32>
    %377 = arith.mulf %372, %376 : vector<8x128xf32>
    %c8_i32_126 = arith.constant 8 : i32
    %378 = arith.muli %arg1, %c8_i32_126 : i32
    %c1_i32_127 = arith.constant 1 : i32
    %379 = arith.addi %378, %c1_i32_127 : i32
    %c13_i32_128 = arith.constant 13 : i32
    %380 = arith.cmpi slt, %379, %c13_i32_128 : i32
    %381 = arith.select %380, %375, %347 : vector<8x128xf32>
    %382 = arith.select %380, %377, %348 : vector<8x128xf32>
    %c16_129 = arith.constant 16 : index
    %c0_130 = arith.constant 0 : index
    %383 = vector.load %arg14[%c16_129, %c0_130] : memref<64x512xf32, #tpu.memory_space<vmem>>, vector<8x512xf32>
    %384 = arith.truncf %382 : vector<8x128xf32> to vector<8x128xbf16>
    %cst_131 = arith.constant dense<0.000000e+00> : vector<8x512xf32>
    %385 = tpu.matmul %384, %310, %cst_131 {dimension_numbers = #tpu.dot_dimension_numbers<[1], [0], [0], [1], [0, 0, 1, 1], [], []>} : vector<8x128xbf16>, vector<128x512xbf16>, vector<8x512xf32> -> vector<8x512xf32>
    %386 = arith.addf %383, %385 : vector<8x512xf32>
    %387 = vector.extract_strided_slice %386 {offsets = [0, 0], sizes = [8, 128], strides = [1, 1]} : vector<8x512xf32> to vector<8x128xf32>
    %388 = arith.negf %387 : vector<8x128xf32>
    %389 = math.exp %388 : vector<8x128xf32>
    %cst_132 = arith.constant 1.000000e+00 : f32
    %390 = vector.broadcast %cst_132 : f32 to vector<8x128xf32>
    %391 = arith.addf %390, %389 : vector<8x128xf32>
    %392 = arith.divf %390, %391 : vector<8x128xf32>
    %393 = vector.extract_strided_slice %386 {offsets = [0, 128], sizes = [8, 128], strides = [1, 1]} : vector<8x512xf32> to vector<8x128xf32>
    %394 = arith.negf %393 : vector<8x128xf32>
    %395 = math.exp %394 : vector<8x128xf32>
    %cst_133 = arith.constant 1.000000e+00 : f32
    %396 = vector.broadcast %cst_133 : f32 to vector<8x128xf32>
    %397 = arith.addf %396, %395 : vector<8x128xf32>
    %398 = arith.divf %396, %397 : vector<8x128xf32>
    %399 = vector.extract_strided_slice %386 {offsets = [0, 256], sizes = [8, 128], strides = [1, 1]} : vector<8x512xf32> to vector<8x128xf32>
    %400 = math.tanh %399 : vector<8x128xf32>
    %401 = vector.extract_strided_slice %386 {offsets = [0, 384], sizes = [8, 128], strides = [1, 1]} : vector<8x512xf32> to vector<8x128xf32>
    %402 = arith.negf %401 : vector<8x128xf32>
    %403 = math.exp %402 : vector<8x128xf32>
    %cst_134 = arith.constant 1.000000e+00 : f32
    %404 = vector.broadcast %cst_134 : f32 to vector<8x128xf32>
    %405 = arith.addf %404, %403 : vector<8x128xf32>
    %406 = arith.divf %404, %405 : vector<8x128xf32>
    %407 = arith.mulf %398, %381 : vector<8x128xf32>
    %408 = arith.mulf %392, %400 : vector<8x128xf32>
    %409 = arith.addf %407, %408 : vector<8x128xf32>
    %410 = math.tanh %409 : vector<8x128xf32>
    %411 = arith.mulf %406, %410 : vector<8x128xf32>
    %c8_i32_135 = arith.constant 8 : i32
    %412 = arith.muli %arg1, %c8_i32_135 : i32
    %c2_i32_136 = arith.constant 2 : i32
    %413 = arith.addi %412, %c2_i32_136 : i32
    %c13_i32_137 = arith.constant 13 : i32
    %414 = arith.cmpi slt, %413, %c13_i32_137 : i32
    %415 = arith.select %414, %409, %381 : vector<8x128xf32>
    %416 = arith.select %414, %411, %382 : vector<8x128xf32>
    %c24_138 = arith.constant 24 : index
    %c0_139 = arith.constant 0 : index
    %417 = vector.load %arg14[%c24_138, %c0_139] : memref<64x512xf32, #tpu.memory_space<vmem>>, vector<8x512xf32>
    %418 = arith.truncf %416 : vector<8x128xf32> to vector<8x128xbf16>
    %cst_140 = arith.constant dense<0.000000e+00> : vector<8x512xf32>
    %419 = tpu.matmul %418, %310, %cst_140 {dimension_numbers = #tpu.dot_dimension_numbers<[1], [0], [0], [1], [0, 0, 1, 1], [], []>} : vector<8x128xbf16>, vector<128x512xbf16>, vector<8x512xf32> -> vector<8x512xf32>
    %420 = arith.addf %417, %419 : vector<8x512xf32>
    %421 = vector.extract_strided_slice %420 {offsets = [0, 0], sizes = [8, 128], strides = [1, 1]} : vector<8x512xf32> to vector<8x128xf32>
    %422 = arith.negf %421 : vector<8x128xf32>
    %423 = math.exp %422 : vector<8x128xf32>
    %cst_141 = arith.constant 1.000000e+00 : f32
    %424 = vector.broadcast %cst_141 : f32 to vector<8x128xf32>
    %425 = arith.addf %424, %423 : vector<8x128xf32>
    %426 = arith.divf %424, %425 : vector<8x128xf32>
    %427 = vector.extract_strided_slice %420 {offsets = [0, 128], sizes = [8, 128], strides = [1, 1]} : vector<8x512xf32> to vector<8x128xf32>
    %428 = arith.negf %427 : vector<8x128xf32>
    %429 = math.exp %428 : vector<8x128xf32>
    %cst_142 = arith.constant 1.000000e+00 : f32
    %430 = vector.broadcast %cst_142 : f32 to vector<8x128xf32>
    %431 = arith.addf %430, %429 : vector<8x128xf32>
    %432 = arith.divf %430, %431 : vector<8x128xf32>
    %433 = vector.extract_strided_slice %420 {offsets = [0, 256], sizes = [8, 128], strides = [1, 1]} : vector<8x512xf32> to vector<8x128xf32>
    %434 = math.tanh %433 : vector<8x128xf32>
    %435 = vector.extract_strided_slice %420 {offsets = [0, 384], sizes = [8, 128], strides = [1, 1]} : vector<8x512xf32> to vector<8x128xf32>
    %436 = arith.negf %435 : vector<8x128xf32>
    %437 = math.exp %436 : vector<8x128xf32>
    %cst_143 = arith.constant 1.000000e+00 : f32
    %438 = vector.broadcast %cst_143 : f32 to vector<8x128xf32>
    %439 = arith.addf %438, %437 : vector<8x128xf32>
    %440 = arith.divf %438, %439 : vector<8x128xf32>
    %441 = arith.mulf %432, %415 : vector<8x128xf32>
    %442 = arith.mulf %426, %434 : vector<8x128xf32>
    %443 = arith.addf %441, %442 : vector<8x128xf32>
    %444 = math.tanh %443 : vector<8x128xf32>
    %445 = arith.mulf %440, %444 : vector<8x128xf32>
    %c8_i32_144 = arith.constant 8 : i32
    %446 = arith.muli %arg1, %c8_i32_144 : i32
    %c3_i32_145 = arith.constant 3 : i32
    %447 = arith.addi %446, %c3_i32_145 : i32
    %c13_i32_146 = arith.constant 13 : i32
    %448 = arith.cmpi slt, %447, %c13_i32_146 : i32
    %449 = arith.select %448, %443, %415 : vector<8x128xf32>
    %450 = arith.select %448, %445, %416 : vector<8x128xf32>
    %c32_147 = arith.constant 32 : index
    %c0_148 = arith.constant 0 : index
    %451 = vector.load %arg14[%c32_147, %c0_148] : memref<64x512xf32, #tpu.memory_space<vmem>>, vector<8x512xf32>
    %452 = arith.truncf %450 : vector<8x128xf32> to vector<8x128xbf16>
    %cst_149 = arith.constant dense<0.000000e+00> : vector<8x512xf32>
    %453 = tpu.matmul %452, %310, %cst_149 {dimension_numbers = #tpu.dot_dimension_numbers<[1], [0], [0], [1], [0, 0, 1, 1], [], []>} : vector<8x128xbf16>, vector<128x512xbf16>, vector<8x512xf32> -> vector<8x512xf32>
    %454 = arith.addf %451, %453 : vector<8x512xf32>
    %455 = vector.extract_strided_slice %454 {offsets = [0, 0], sizes = [8, 128], strides = [1, 1]} : vector<8x512xf32> to vector<8x128xf32>
    %456 = arith.negf %455 : vector<8x128xf32>
    %457 = math.exp %456 : vector<8x128xf32>
    %cst_150 = arith.constant 1.000000e+00 : f32
    %458 = vector.broadcast %cst_150 : f32 to vector<8x128xf32>
    %459 = arith.addf %458, %457 : vector<8x128xf32>
    %460 = arith.divf %458, %459 : vector<8x128xf32>
    %461 = vector.extract_strided_slice %454 {offsets = [0, 128], sizes = [8, 128], strides = [1, 1]} : vector<8x512xf32> to vector<8x128xf32>
    %462 = arith.negf %461 : vector<8x128xf32>
    %463 = math.exp %462 : vector<8x128xf32>
    %cst_151 = arith.constant 1.000000e+00 : f32
    %464 = vector.broadcast %cst_151 : f32 to vector<8x128xf32>
    %465 = arith.addf %464, %463 : vector<8x128xf32>
    %466 = arith.divf %464, %465 : vector<8x128xf32>
    %467 = vector.extract_strided_slice %454 {offsets = [0, 256], sizes = [8, 128], strides = [1, 1]} : vector<8x512xf32> to vector<8x128xf32>
    %468 = math.tanh %467 : vector<8x128xf32>
    %469 = vector.extract_strided_slice %454 {offsets = [0, 384], sizes = [8, 128], strides = [1, 1]} : vector<8x512xf32> to vector<8x128xf32>
    %470 = arith.negf %469 : vector<8x128xf32>
    %471 = math.exp %470 : vector<8x128xf32>
    %cst_152 = arith.constant 1.000000e+00 : f32
    %472 = vector.broadcast %cst_152 : f32 to vector<8x128xf32>
    %473 = arith.addf %472, %471 : vector<8x128xf32>
    %474 = arith.divf %472, %473 : vector<8x128xf32>
    %475 = arith.mulf %466, %449 : vector<8x128xf32>
    %476 = arith.mulf %460, %468 : vector<8x128xf32>
    %477 = arith.addf %475, %476 : vector<8x128xf32>
    %478 = math.tanh %477 : vector<8x128xf32>
    %479 = arith.mulf %474, %478 : vector<8x128xf32>
    %c8_i32_153 = arith.constant 8 : i32
    %480 = arith.muli %arg1, %c8_i32_153 : i32
    %c4_i32_154 = arith.constant 4 : i32
    %481 = arith.addi %480, %c4_i32_154 : i32
    %c13_i32_155 = arith.constant 13 : i32
    %482 = arith.cmpi slt, %481, %c13_i32_155 : i32
    %483 = arith.select %482, %477, %449 : vector<8x128xf32>
    %484 = arith.select %482, %479, %450 : vector<8x128xf32>
    %c40_156 = arith.constant 40 : index
    %c0_157 = arith.constant 0 : index
    %485 = vector.load %arg14[%c40_156, %c0_157] : memref<64x512xf32, #tpu.memory_space<vmem>>, vector<8x512xf32>
    %486 = arith.truncf %484 : vector<8x128xf32> to vector<8x128xbf16>
    %cst_158 = arith.constant dense<0.000000e+00> : vector<8x512xf32>
    %487 = tpu.matmul %486, %310, %cst_158 {dimension_numbers = #tpu.dot_dimension_numbers<[1], [0], [0], [1], [0, 0, 1, 1], [], []>} : vector<8x128xbf16>, vector<128x512xbf16>, vector<8x512xf32> -> vector<8x512xf32>
    %488 = arith.addf %485, %487 : vector<8x512xf32>
    %489 = vector.extract_strided_slice %488 {offsets = [0, 0], sizes = [8, 128], strides = [1, 1]} : vector<8x512xf32> to vector<8x128xf32>
    %490 = arith.negf %489 : vector<8x128xf32>
    %491 = math.exp %490 : vector<8x128xf32>
    %cst_159 = arith.constant 1.000000e+00 : f32
    %492 = vector.broadcast %cst_159 : f32 to vector<8x128xf32>
    %493 = arith.addf %492, %491 : vector<8x128xf32>
    %494 = arith.divf %492, %493 : vector<8x128xf32>
    %495 = vector.extract_strided_slice %488 {offsets = [0, 128], sizes = [8, 128], strides = [1, 1]} : vector<8x512xf32> to vector<8x128xf32>
    %496 = arith.negf %495 : vector<8x128xf32>
    %497 = math.exp %496 : vector<8x128xf32>
    %cst_160 = arith.constant 1.000000e+00 : f32
    %498 = vector.broadcast %cst_160 : f32 to vector<8x128xf32>
    %499 = arith.addf %498, %497 : vector<8x128xf32>
    %500 = arith.divf %498, %499 : vector<8x128xf32>
    %501 = vector.extract_strided_slice %488 {offsets = [0, 256], sizes = [8, 128], strides = [1, 1]} : vector<8x512xf32> to vector<8x128xf32>
    %502 = math.tanh %501 : vector<8x128xf32>
    %503 = vector.extract_strided_slice %488 {offsets = [0, 384], sizes = [8, 128], strides = [1, 1]} : vector<8x512xf32> to vector<8x128xf32>
    %504 = arith.negf %503 : vector<8x128xf32>
    %505 = math.exp %504 : vector<8x128xf32>
    %cst_161 = arith.constant 1.000000e+00 : f32
    %506 = vector.broadcast %cst_161 : f32 to vector<8x128xf32>
    %507 = arith.addf %506, %505 : vector<8x128xf32>
    %508 = arith.divf %506, %507 : vector<8x128xf32>
    %509 = arith.mulf %500, %483 : vector<8x128xf32>
    %510 = arith.mulf %494, %502 : vector<8x128xf32>
    %511 = arith.addf %509, %510 : vector<8x128xf32>
    %512 = math.tanh %511 : vector<8x128xf32>
    %513 = arith.mulf %508, %512 : vector<8x128xf32>
    %c8_i32_162 = arith.constant 8 : i32
    %514 = arith.muli %arg1, %c8_i32_162 : i32
    %c5_i32_163 = arith.constant 5 : i32
    %515 = arith.addi %514, %c5_i32_163 : i32
    %c13_i32_164 = arith.constant 13 : i32
    %516 = arith.cmpi slt, %515, %c13_i32_164 : i32
    %517 = arith.select %516, %511, %483 : vector<8x128xf32>
    %518 = arith.select %516, %513, %484 : vector<8x128xf32>
    %c48_165 = arith.constant 48 : index
    %c0_166 = arith.constant 0 : index
    %519 = vector.load %arg14[%c48_165, %c0_166] : memref<64x512xf32, #tpu.memory_space<vmem>>, vector<8x512xf32>
    %520 = arith.truncf %518 : vector<8x128xf32> to vector<8x128xbf16>
    %cst_167 = arith.constant dense<0.000000e+00> : vector<8x512xf32>
    %521 = tpu.matmul %520, %310, %cst_167 {dimension_numbers = #tpu.dot_dimension_numbers<[1], [0], [0], [1], [0, 0, 1, 1], [], []>} : vector<8x128xbf16>, vector<128x512xbf16>, vector<8x512xf32> -> vector<8x512xf32>
    %522 = arith.addf %519, %521 : vector<8x512xf32>
    %523 = vector.extract_strided_slice %522 {offsets = [0, 0], sizes = [8, 128], strides = [1, 1]} : vector<8x512xf32> to vector<8x128xf32>
    %524 = arith.negf %523 : vector<8x128xf32>
    %525 = math.exp %524 : vector<8x128xf32>
    %cst_168 = arith.constant 1.000000e+00 : f32
    %526 = vector.broadcast %cst_168 : f32 to vector<8x128xf32>
    %527 = arith.addf %526, %525 : vector<8x128xf32>
    %528 = arith.divf %526, %527 : vector<8x128xf32>
    %529 = vector.extract_strided_slice %522 {offsets = [0, 128], sizes = [8, 128], strides = [1, 1]} : vector<8x512xf32> to vector<8x128xf32>
    %530 = arith.negf %529 : vector<8x128xf32>
    %531 = math.exp %530 : vector<8x128xf32>
    %cst_169 = arith.constant 1.000000e+00 : f32
    %532 = vector.broadcast %cst_169 : f32 to vector<8x128xf32>
    %533 = arith.addf %532, %531 : vector<8x128xf32>
    %534 = arith.divf %532, %533 : vector<8x128xf32>
    %535 = vector.extract_strided_slice %522 {offsets = [0, 256], sizes = [8, 128], strides = [1, 1]} : vector<8x512xf32> to vector<8x128xf32>
    %536 = math.tanh %535 : vector<8x128xf32>
    %537 = vector.extract_strided_slice %522 {offsets = [0, 384], sizes = [8, 128], strides = [1, 1]} : vector<8x512xf32> to vector<8x128xf32>
    %538 = arith.negf %537 : vector<8x128xf32>
    %539 = math.exp %538 : vector<8x128xf32>
    %cst_170 = arith.constant 1.000000e+00 : f32
    %540 = vector.broadcast %cst_170 : f32 to vector<8x128xf32>
    %541 = arith.addf %540, %539 : vector<8x128xf32>
    %542 = arith.divf %540, %541 : vector<8x128xf32>
    %543 = arith.mulf %534, %517 : vector<8x128xf32>
    %544 = arith.mulf %528, %536 : vector<8x128xf32>
    %545 = arith.addf %543, %544 : vector<8x128xf32>
    %546 = math.tanh %545 : vector<8x128xf32>
    %547 = arith.mulf %542, %546 : vector<8x128xf32>
    %c8_i32_171 = arith.constant 8 : i32
    %548 = arith.muli %arg1, %c8_i32_171 : i32
    %c6_i32_172 = arith.constant 6 : i32
    %549 = arith.addi %548, %c6_i32_172 : i32
    %c13_i32_173 = arith.constant 13 : i32
    %550 = arith.cmpi slt, %549, %c13_i32_173 : i32
    %551 = arith.select %550, %545, %517 : vector<8x128xf32>
    %552 = arith.select %550, %547, %518 : vector<8x128xf32>
    %c56_174 = arith.constant 56 : index
    %c0_175 = arith.constant 0 : index
    %553 = vector.load %arg14[%c56_174, %c0_175] : memref<64x512xf32, #tpu.memory_space<vmem>>, vector<8x512xf32>
    %554 = arith.truncf %552 : vector<8x128xf32> to vector<8x128xbf16>
    %cst_176 = arith.constant dense<0.000000e+00> : vector<8x512xf32>
    %555 = tpu.matmul %554, %310, %cst_176 {dimension_numbers = #tpu.dot_dimension_numbers<[1], [0], [0], [1], [0, 0, 1, 1], [], []>} : vector<8x128xbf16>, vector<128x512xbf16>, vector<8x512xf32> -> vector<8x512xf32>
    %556 = arith.addf %553, %555 : vector<8x512xf32>
    %557 = vector.extract_strided_slice %556 {offsets = [0, 0], sizes = [8, 128], strides = [1, 1]} : vector<8x512xf32> to vector<8x128xf32>
    %558 = arith.negf %557 : vector<8x128xf32>
    %559 = math.exp %558 : vector<8x128xf32>
    %cst_177 = arith.constant 1.000000e+00 : f32
    %560 = vector.broadcast %cst_177 : f32 to vector<8x128xf32>
    %561 = arith.addf %560, %559 : vector<8x128xf32>
    %562 = arith.divf %560, %561 : vector<8x128xf32>
    %563 = vector.extract_strided_slice %556 {offsets = [0, 128], sizes = [8, 128], strides = [1, 1]} : vector<8x512xf32> to vector<8x128xf32>
    %564 = arith.negf %563 : vector<8x128xf32>
    %565 = math.exp %564 : vector<8x128xf32>
    %cst_178 = arith.constant 1.000000e+00 : f32
    %566 = vector.broadcast %cst_178 : f32 to vector<8x128xf32>
    %567 = arith.addf %566, %565 : vector<8x128xf32>
    %568 = arith.divf %566, %567 : vector<8x128xf32>
    %569 = vector.extract_strided_slice %556 {offsets = [0, 256], sizes = [8, 128], strides = [1, 1]} : vector<8x512xf32> to vector<8x128xf32>
    %570 = math.tanh %569 : vector<8x128xf32>
    %571 = vector.extract_strided_slice %556 {offsets = [0, 384], sizes = [8, 128], strides = [1, 1]} : vector<8x512xf32> to vector<8x128xf32>
    %572 = arith.negf %571 : vector<8x128xf32>
    %573 = math.exp %572 : vector<8x128xf32>
    %cst_179 = arith.constant 1.000000e+00 : f32
    %574 = vector.broadcast %cst_179 : f32 to vector<8x128xf32>
    %575 = arith.addf %574, %573 : vector<8x128xf32>
    %576 = arith.divf %574, %575 : vector<8x128xf32>
    %577 = arith.mulf %568, %551 : vector<8x128xf32>
    %578 = arith.mulf %562, %570 : vector<8x128xf32>
    %579 = arith.addf %577, %578 : vector<8x128xf32>
    %580 = math.tanh %579 : vector<8x128xf32>
    %581 = arith.mulf %576, %580 : vector<8x128xf32>
    %c8_i32_180 = arith.constant 8 : i32
    %582 = arith.muli %arg1, %c8_i32_180 : i32
    %c7_i32_181 = arith.constant 7 : i32
    %583 = arith.addi %582, %c7_i32_181 : i32
    %c13_i32_182 = arith.constant 13 : i32
    %584 = arith.cmpi slt, %583, %c13_i32_182 : i32
    %585 = arith.select %584, %579, %551 : vector<8x128xf32>
    %586 = arith.select %584, %581, %552 : vector<8x128xf32>
    %c1_183 = arith.constant 1 : index
    %c0_184 = arith.constant 0 : index
    %c0_185 = arith.constant 0 : index
    %587 = vector.load %arg12[%c1_183, %c0_184, %c0_185] : memref<2x8x128xf32, #tpu.memory_space<vmem>>, vector<1x8x128xf32>
    %588 = vector.shape_cast %587 : vector<1x8x128xf32> to vector<8x128xf32>
    %589 = vector.shape_cast %586 : vector<8x128xf32> to vector<1x8x128xf32>
    tpu.vector_store %arg12[%c1_183, %c0_184, %c0_185], %589 {strides = array<i32>} : memref<2x8x128xf32, #tpu.memory_space<vmem>>, vector<1x8x128xf32>,
    %c1_186 = arith.constant 1 : index
    %c0_187 = arith.constant 0 : index
    %c0_188 = arith.constant 0 : index
    %590 = vector.load %arg13[%c1_186, %c0_187, %c0_188] : memref<2x8x128xf32, #tpu.memory_space<vmem>>, vector<1x8x128xf32>
    %591 = vector.shape_cast %590 : vector<1x8x128xf32> to vector<8x128xf32>
    %592 = vector.shape_cast %585 : vector<8x128xf32> to vector<1x8x128xf32>
    tpu.vector_store %arg13[%c1_186, %c0_187, %c0_188], %592 {strides = array<i32>} : memref<2x8x128xf32, #tpu.memory_space<vmem>>, vector<1x8x128xf32>,
    %c1_i32_189 = arith.constant 1 : i32
    %593 = arith.cmpi eq, %arg1, %c1_i32_189 : i32
    %594 = arith.extui %593 : i1 to i32
    %c0_i32_190 = arith.constant 0 : i32
    %595 = arith.cmpi ne, %594, %c0_i32_190 : i32
    scf.if %595 {
      %596 = arith.truncf %586 : vector<8x128xf32> to vector<8x128xbf16>
      %c0_191 = arith.constant 0 : index
      %c0_192 = arith.constant 0 : index
      %597 = vector.load %arg9[%c0_191, %c0_192] : memref<128x128xbf16, #tpu.memory_space<vmem>>, vector<128x128xbf16>
      %cst_193 = arith.constant dense<0.000000e+00> : vector<8x128xf32>
      %598 = tpu.matmul %596, %597, %cst_193 {dimension_numbers = #tpu.dot_dimension_numbers<[1], [0], [0], [1], [0, 0, 1, 1], [], []>} : vector<8x128xbf16>, vector<128x128xbf16>, vector<8x128xf32> -> vector<8x128xf32>
      %c0_194 = arith.constant 0 : index
      %c0_195 = arith.constant 0 : index
      %599 = vector.load %arg10[%c0_194, %c0_195] : memref<1x128xf32, #tpu.memory_space<vmem>>, vector<1x128xf32>
      %600 = vector.broadcast %599 : vector<1x128xf32> to vector<8x128xf32>
      %601 = arith.addf %598, %600 : vector<8x128xf32>
      %c0_196 = arith.constant 0 : index
      %c0_197 = arith.constant 0 : index
      %c0_198 = arith.constant 0 : index
      %602 = vector.load %arg11[%c0_196, %c0_197, %c0_198] : memref<1x8x128xf32, #tpu.memory_space<vmem>>, vector<1x8x128xf32>
      %603 = vector.shape_cast %602 : vector<1x8x128xf32> to vector<8x128xf32>
      %604 = vector.shape_cast %601 : vector<8x128xf32> to vector<1x8x128xf32>
      tpu.vector_store %arg11[%c0_196, %c0_197, %c0_198], %604 {strides = array<i32>} : memref<1x8x128xf32, #tpu.memory_space<vmem>>, vector<1x8x128xf32>,
    } else {
    }
    return
  }
  func.func @transform_0(%arg0: i32, %arg1: i32) -> (i32, i32, i32) {
    %c0_i32 = arith.constant 0 : i32
    %c0_i32_0 = arith.constant 0 : i32
    return %arg0, %arg1, %c0_i32 : i32, i32, i32
  }
  func.func @transform_1(%arg0: i32, %arg1: i32) -> (i32, i32) {
    %c0_i32 = arith.constant 0 : i32
    %c0_i32_0 = arith.constant 0 : i32
    %c0_i32_1 = arith.constant 0 : i32
    return %c0_i32, %c0_i32_0 : i32, i32
  }
  func.func @transform_2(%arg0: i32, %arg1: i32) -> (i32, i32) {
    %c0_i32 = arith.constant 0 : i32
    %c0_i32_0 = arith.constant 0 : i32
    %c0_i32_1 = arith.constant 0 : i32
    return %c0_i32, %c0_i32_0 : i32, i32
  }
  func.func @transform_3(%arg0: i32, %arg1: i32) -> (i32, i32) {
    %c0_i32 = arith.constant 0 : i32
    %c0_i32_0 = arith.constant 0 : i32
    %c0_i32_1 = arith.constant 0 : i32
    return %c0_i32, %c0_i32_0 : i32, i32
  }
  func.func @transform_4(%arg0: i32, %arg1: i32) -> (i32, i32) {
    %c0_i32 = arith.constant 0 : i32
    %c0_i32_0 = arith.constant 0 : i32
    %c0_i32_1 = arith.constant 0 : i32
    return %c0_i32, %c0_i32_0 : i32, i32
  }
  func.func @transform_5(%arg0: i32, %arg1: i32) -> (i32, i32) {
    %c0_i32 = arith.constant 0 : i32
    %c0_i32_0 = arith.constant 0 : i32
    %c0_i32_1 = arith.constant 0 : i32
    return %c0_i32, %c0_i32_0 : i32, i32
  }
  func.func @transform_6(%arg0: i32, %arg1: i32) -> (i32, i32) {
    %c0_i32 = arith.constant 0 : i32
    %c0_i32_0 = arith.constant 0 : i32
    %c0_i32_1 = arith.constant 0 : i32
    return %c0_i32, %c0_i32_0 : i32, i32
  }
  func.func @transform_7(%arg0: i32, %arg1: i32) -> (i32, i32) {
    %c0_i32 = arith.constant 0 : i32
    %c0_i32_0 = arith.constant 0 : i32
    %c0_i32_1 = arith.constant 0 : i32
    return %c0_i32, %c0_i32_0 : i32, i32
  }
  func.func @transform_8(%arg0: i32, %arg1: i32) -> (i32, i32) {
    %c0_i32 = arith.constant 0 : i32
    %c0_i32_0 = arith.constant 0 : i32
    %c0_i32_1 = arith.constant 0 : i32
    return %c0_i32, %c0_i32_0 : i32, i32
  }
  func.func @transform_9(%arg0: i32, %arg1: i32) -> (i32, i32, i32) {
    %c0_i32 = arith.constant 0 : i32
    %c0_i32_0 = arith.constant 0 : i32
    %c0_i32_1 = arith.constant 0 : i32
    return %arg0, %c0_i32, %c0_i32_0 : i32, i32, i32
  }
}

</mosaic_0001>

<llo_original>
// kernel: tpu_custom_call.1
$region0: #{tpu_custom_call.1}
  #allocation0 [shape = 'u32[]', space=smem, size = 0x4, offset = 0x4, fixed_abs, tag = 'smem constant byte address 0x4 - core index']
  #allocation1 [shape = 'u32[72,128]{1,0:T(1,128)}', space=vmem, size = 0x9000, scoped, tag = 'internal scratch']
  #allocation2 [shape = 'f32[2,8,128]{2,1,0:T(8,128)}', space=vmem, size = 0x2000, scoped, tag = 'scratch operand']
  #allocation3 [shape = 'f32[2,8,128]{2,1,0:T(8,128)}', space=vmem, size = 0x2000, scoped, tag = 'scratch operand']
  #allocation4 [shape = 'f32[64,512]{1,0:T(8,128)}', space=vmem, size = 0x20000, scoped, tag = 'scratch operand']
  #allocation5 [shape = 'f32[64,128]{1,0:T(8,128)}', space=vmem, size = 0x8000, scoped, tag = 'scratch operand']
  %s0 = inlined_call_operand.vmem [shape: bf16[1,128,16], index: 0, kind: input, shape index: {}]
  %s1 = inlined_call_operand.hbm [shape: bf16[16,512], index: 1, kind: input, shape index: {}]
  %s2 = inlined_call_operand.hbm [shape: bf16[128,512], index: 2, kind: input, shape index: {}]
  %s3 = inlined_call_operand.vmem [shape: f32[1,512], index: 3, kind: input, shape index: {}]
  %s4 = inlined_call_operand.hbm [shape: bf16[128,512], index: 4, kind: input, shape index: {}]
  %s5 = inlined_call_operand.hbm [shape: bf16[128,512], index: 5, kind: input, shape index: {}]
  %s6 = inlined_call_operand.vmem [shape: f32[1,512], index: 6, kind: input, shape index: {}]
  %s7 = inlined_call_operand.vmem [shape: bf16[128,128], index: 7, kind: input, shape index: {}]
  %s8 = inlined_call_operand.vmem [shape: f32[1,128], index: 8, kind: input, shape index: {}]
  %s9 = inlined_call_operand.hbm [shape: f32[1,8,128], index: 9, kind: output, shape index: {}]
  %s10 = sld [smem:[#allocation0]]
  $region93: #{tpu_custom_call.1} parent=0
    _
  %s12 = ssub.s32 1, %s10
  %s13 = scalar_select 0, %s12, %s10
  $region1: #{tpu_custom_call.1} parent=0
    #allocation6 [shape = 'u8[16384]{0}', space=vmem, size = 0x4000, scoped, tag = 'input window, operand 1, single buffered']
    #allocation7 [shape = 's32[2]{0}', space=sflag, size = 0x8, scoped, tag = 'scoped memory for tpu_custom_call.1']
    #allocation8 [shape = 's32[2]{0}', space=sflag, size = 0x8, scoped, tag = 'scoped memory for tpu_custom_call.1']
    #allocation9 [shape = 'u8[131072]{0}', space=vmem, size = 0x20000, scoped, tag = 'input window, operand 2, single buffered']
    #allocation10 [shape = 's32[1]{0}', space=sflag, size = 0x4, scoped, tag = 'scoped memory for tpu_custom_call.1']
    #allocation11 [shape = 'u8[131072]{0}', space=vmem, size = 0x20000, scoped, tag = 'input window, operand 4, single buffered']
    #allocation12 [shape = 'u8[131072]{0}', space=vmem, size = 0x20000, scoped, tag = 'input window, operand 5, single buffered']
    #allocation13 [shape = 's32[1]{0}', space=sflag, size = 0x4, scoped, tag = 'scoped memory for tpu_custom_call.1']
    #allocation14 [shape = 'u8[4096]{0}', space=vmem, size = 0x1000, scoped, tag = 'output window, operand 0, single buffered']
    %14 = vsyncpa [#allocation7], 0
    %15 = vsyncpa [#allocation10], 0
    %16 = vsyncpa [#allocation13], 0
    %17 = vsyncpa [#allocation8], 0
    loop: start=0, step=1, limit=4
    $region2: #{tpu_custom_call.1} parent=1 // loop_pre_header
      _
    $region3: #{tpu_custom_call.1} parent=1 // loop_header
      %s19 = sphi 0, %s23
      %p20 = scmp.ge.s32.totalorder %s19, 4
      %s26 = sphi 0, %s38
      %s27 = sphi 0, %s34
      %s28 = sphi 0, %s26
      %s29 = sphi 0, %s27
      %s30 = sphi 0, %s28
      %s31 = sphi 0, %s29
      %s43 = sphi 0, %s45
      %s46 = sphi 0, %s43
      %s47 = sphi 0, %s46
      %s63 = sphi 0, %s47
      %s67 = sphi 0, %s67
      %s69 = sphi 0, %s67
      %s70 = sphi 0, %s69
      %s84 = sphi 0, %s70
      %s88 = sphi 0, %s88
      %s90 = sphi 0, %s88
      %s91 = sphi 0, %s90
      %s105 = sphi 0, %s91
      %s109 = sphi 0, %s109
      %s111 = sphi 0, %s109
      %s112 = sphi 0, %s111
      %s126 = sphi 0, %s112
      %s130 = sphi 0, %s130
      %s132 = sphi 0, %s130
      %s133 = sphi 0, %s132
      %s147 = sphi 0, %s133
      %s151 = sphi 0, %s151
      %s153 = sphi 0, %s151
      %s154 = sphi 0, %s153
      %s168 = sphi 0, %s154
      %s172 = sphi 0, %s172
      %s174 = sphi 0, %s172
      %s175 = sphi 0, %s174
      %s189 = sphi 0, %s175
      %s193 = sphi 0, %s193
      %s195 = sphi 0, %s193
      %s196 = sphi 0, %s195
      %s210 = sphi 0, %s196
      %s214 = sphi 0, %s214
      %s216 = sphi 0, %s214
      %s217 = sphi 0, %s216
      %s231 = sphi 0, %s217
      %s237 = sphi 0, %s239
      %s240 = sphi 0, %s237
      %s241 = sphi 0, %s240
      %s257 = sphi 0, %s241
    $region4: #{tpu_custom_call.1} parent=1 // loop_header_branch
      %22 = sbr.rel (%p20) target = $region8
    $region5: #{tpu_custom_call.1} parent=1 // loop_body
      %s24 = ssub.s32 %s19, 1
      %s25 = ssub.s32 %s19, 2
      %s32 = sadd.s32 1, %s27
      %p33 = scmp.ge.s32.totalorder %s32, 2
      %s34 = scalar_select %p33, 0, %s32
      %s35 = sadd.s32 1, %s26
      %s36 = scalar_select %p33, %s35, %s26
      %p37 = scmp.ge.s32.totalorder %s36, 1
      %s38 = scalar_select %p37, 0, %s36
      %s39 = ssub.s32 %s26, %s38
      %s40 = ssub.s32 %s27, %s34
      %s41 = sor.u32 %s39, %s40
      %p42 = scmp.eq.s32.totalorder %s41, 0
      %s44 = sadd.s32 %s43, 1
      %s45 = scalar_select %p42, %s43, %s44
      %p48 = pneg %p42
      %p49 = scmp.eq.s32.totalorder %s19, 1
      %p50 = por %p48, %p49
      %p51 = scmp.ne.s32.totalorder %s43, %s46
      %p52 = scmp.eq.s32.totalorder %s19, 0
      %p53 = por %p51, %p52
      %p54 = scmp.ne.s32.totalorder %s43, %s46
      %p55 = scmp.eq.s32.totalorder %s24, 1
      %p56 = por %p54, %p55
      %p57 = scmp.ne.s32.totalorder %s46, %s47
      %p58 = scmp.eq.s32.totalorder %s24, 0
      %p59 = por %p57, %p58
      %p60 = scmp.ne.s32.totalorder %s46, %s47
      %p61 = scmp.eq.s32.totalorder %s25, 1
      %p62 = por %p60, %p61
      %p64 = scmp.ne.s32.totalorder %s47, %s63
      %p65 = scmp.eq.s32.totalorder %s25, 0
      %p66 = por %p64, %p65
      %s68 = sadd.s32 %s67, 1
      %p71 = scmp.eq.s32.totalorder %s19, 1
      %p72 = scmp.ne.s32.totalorder %s67, %s69
      %p73 = scmp.eq.s32.totalorder %s19, 0
      %p74 = por %p72, %p73
      %p75 = scmp.ne.s32.totalorder %s67, %s69
      %p76 = scmp.eq.s32.totalorder %s24, 1
      %p77 = por %p75, %p76
      %p78 = scmp.ne.s32.totalorder %s69, %s70
      %p79 = scmp.eq.s32.totalorder %s24, 0
      %p80 = por %p78, %p79
      %p81 = scmp.ne.s32.totalorder %s69, %s70
      %p82 = scmp.eq.s32.totalorder %s25, 1
      %p83 = por %p81, %p82
      %p85 = scmp.ne.s32.totalorder %s70, %s84
      %p86 = scmp.eq.s32.totalorder %s25, 0
      %p87 = por %p85, %p86
      %s89 = sadd.s32 %s88, 1
      %p92 = scmp.eq.s32.totalorder %s19, 1
      %p93 = scmp.ne.s32.totalorder %s88, %s90
      %p94 = scmp.eq.s32.totalorder %s19, 0
      %p95 = por %p93, %p94
      %p96 = scmp.ne.s32.totalorder %s88, %s90
      %p97 = scmp.eq.s32.totalorder %s24, 1
      %p98 = por %p96, %p97
      %p99 = scmp.ne.s32.totalorder %s90, %s91
      %p100 = scmp.eq.s32.totalorder %s24, 0
      %p101 = por %p99, %p100
      %p102 = scmp.ne.s32.totalorder %s90, %s91
      %p103 = scmp.eq.s32.totalorder %s25, 1
      %p104 = por %p102, %p103
      %p106 = scmp.ne.s32.totalorder %s91, %s105
      %p107 = scmp.eq.s32.totalorder %s25, 0
      %p108 = por %p106, %p107
      %s110 = sadd.s32 %s109, 1
      %p113 = scmp.eq.s32.totalorder %s19, 1
      %p114 = scmp.ne.s32.totalorder %s109, %s111
      %p115 = scmp.eq.s32.totalorder %s19, 0
      %p116 = por %p114, %p115
      %p117 = scmp.ne.s32.totalorder %s109, %s111
      %p118 = scmp.eq.s32.totalorder %s24, 1
      %p119 = por %p117, %p118
      %p120 = scmp.ne.s32.totalorder %s111, %s112
      %p121 = scmp.eq.s32.totalorder %s24, 0
      %p122 = por %p120, %p121
      %p123 = scmp.ne.s32.totalorder %s111, %s112
      %p124 = scmp.eq.s32.totalorder %s25, 1
      %p125 = por %p123, %p124
      %p127 = scmp.ne.s32.totalorder %s112, %s126
      %p128 = scmp.eq.s32.totalorder %s25, 0
      %p129 = por %p127, %p128
      %s131 = sadd.s32 %s130, 1
      %p134 = scmp.eq.s32.totalorder %s19, 1
      %p135 = scmp.ne.s32.totalorder %s130, %s132
      %p136 = scmp.eq.s32.totalorder %s19, 0
      %p137 = por %p135, %p136
      %p138 = scmp.ne.s32.totalorder %s130, %s132
      %p139 = scmp.eq.s32.totalorder %s24, 1
      %p140 = por %p138, %p139
      %p141 = scmp.ne.s32.totalorder %s132, %s133
      %p142 = scmp.eq.s32.totalorder %s24, 0
      %p143 = por %p141, %p142
      %p144 = scmp.ne.s32.totalorder %s132, %s133
      %p145 = scmp.eq.s32.totalorder %s25, 1
      %p146 = por %p144, %p145
      %p148 = scmp.ne.s32.totalorder %s133, %s147
      %p149 = scmp.eq.s32.totalorder %s25, 0
      %p150 = por %p148, %p149
      %s152 = sadd.s32 %s151, 1
      %p155 = scmp.eq.s32.totalorder %s19, 1
      %p156 = scmp.ne.s32.totalorder %s151, %s153
      %p157 = scmp.eq.s32.totalorder %s19, 0
      %p158 = por %p156, %p157
      %p159 = scmp.ne.s32.totalorder %s151, %s153
      %p160 = scmp.eq.s32.totalorder %s24, 1
      %p161 = por %p159, %p160
      %p162 = scmp.ne.s32.totalorder %s153, %s154
      %p163 = scmp.eq.s32.totalorder %s24, 0
      %p164 = por %p162, %p163
      %p165 = scmp.ne.s32.totalorder %s153, %s154
      %p166 = scmp.eq.s32.totalorder %s25, 1
      %p167 = por %p165, %p166
      %p169 = scmp.ne.s32.totalorder %s154, %s168
      %p170 = scmp.eq.s32.totalorder %s25, 0
      %p171 = por %p169, %p170
      %s173 = sadd.s32 %s172, 1
      %p176 = scmp.eq.s32.totalorder %s19, 1
      %p177 = scmp.ne.s32.totalorder %s172, %s174
      %p178 = scmp.eq.s32.totalorder %s19, 0
      %p179 = por %p177, %p178
      %p180 = scmp.ne.s32.totalorder %s172, %s174
      %p181 = scmp.eq.s32.totalorder %s24, 1
      %p182 = por %p180, %p181
      %p183 = scmp.ne.s32.totalorder %s174, %s175
      %p184 = scmp.eq.s32.totalorder %s24, 0
      %p185 = por %p183, %p184
      %p186 = scmp.ne.s32.totalorder %s174, %s175
      %p187 = scmp.eq.s32.totalorder %s25, 1
      %p188 = por %p186, %p187
      %p190 = scmp.ne.s32.totalorder %s175, %s189
      %p191 = scmp.eq.s32.totalorder %s25, 0
      %p192 = por %p190, %p191
      %s194 = sadd.s32 %s193, 1
      %p197 = scmp.eq.s32.totalorder %s19, 1
      %p198 = scmp.ne.s32.totalorder %s193, %s195
      %p199 = scmp.eq.s32.totalorder %s19, 0
      %p200 = por %p198, %p199
      %p201 = scmp.ne.s32.totalorder %s193, %s195
      %p202 = scmp.eq.s32.totalorder %s24, 1
      %p203 = por %p201, %p202
      %p204 = scmp.ne.s32.totalorder %s195, %s196
      %p205 = scmp.eq.s32.totalorder %s24, 0
      %p206 = por %p204, %p205
      %p207 = scmp.ne.s32.totalorder %s195, %s196
      %p208 = scmp.eq.s32.totalorder %s25, 1
      %p209 = por %p207, %p208
      %p211 = scmp.ne.s32.totalorder %s196, %s210
      %p212 = scmp.eq.s32.totalorder %s25, 0
      %p213 = por %p211, %p212
      %s215 = sadd.s32 %s214, 1
      %p218 = scmp.eq.s32.totalorder %s19, 1
      %p219 = scmp.ne.s32.totalorder %s214, %s216
      %p220 = scmp.eq.s32.totalorder %s19, 0
      %p221 = por %p219, %p220
      %p222 = scmp.ne.s32.totalorder %s214, %s216
      %p223 = scmp.eq.s32.totalorder %s24, 1
      %p224 = por %p222, %p223
      %p225 = scmp.ne.s32.totalorder %s216, %s217
      %p226 = scmp.eq.s32.totalorder %s24, 0
      %p227 = por %p225, %p226
      %p228 = scmp.ne.s32.totalorder %s216, %s217
      %p229 = scmp.eq.s32.totalorder %s25, 1
      %p230 = por %p228, %p229
      %p232 = scmp.ne.s32.totalorder %s217, %s231
      %p233 = scmp.eq.s32.totalorder %s25, 0
      %p234 = por %p232, %p233
      %s235 = ssub.s32 %s26, %s38
      %p236 = scmp.eq.s32.totalorder %s235, 0
      %s238 = sadd.s32 %s237, 1
      %s239 = scalar_select %p236, %s237, %s238
      %p242 = pneg %p236
      %p243 = scmp.eq.s32.totalorder %s19, 1
      %p244 = por %p242, %p243
      %p245 = scmp.ne.s32.totalorder %s237, %s240
      %p246 = scmp.eq.s32.totalorder %s19, 0
      %p247 = por %p245, %p246
      %p248 = scmp.ne.s32.totalorder %s237, %s240
      %p249 = scmp.eq.s32.totalorder %s24, 1
      %p250 = por %p248, %p249
      %p251 = scmp.ne.s32.totalorder %s240, %s241
      %p252 = scmp.eq.s32.totalorder %s24, 0
      %p253 = por %p251, %p252
      %p254 = scmp.ne.s32.totalorder %s240, %s241
      %p255 = scmp.eq.s32.totalorder %s25, 1
      %p256 = por %p254, %p255
      %p258 = scmp.ne.s32.totalorder %s241, %s257
      %p259 = scmp.eq.s32.totalorder %s25, 0
      %p260 = por %p258, %p259
      %p261 = scmp.le.s32.totalorder 1, %s19
      %p262 = scmp.lt.s32.totalorder %s19, 3
      %p263 = pnand %p261, %p262
      %p264 = pneg %p263
      // Predicated region
      $region9: #{tpu_custom_call.1} parent=5 // pred_check
        _
      $region10: #{tpu_custom_call.1} parent=5 // pred_check_branch
        %266 = sbr.rel (%p263) target = $region12
      $region11: #{tpu_custom_call.1} parent=5 // pred_region
        %s267 = ssub.s32 %s19, 1
        // Predicated region
        $region13: #{tpu_custom_call.1} parent=11 // pred_check
          %p268 = pneg %p80
        $region14: #{tpu_custom_call.1} parent=11 // pred_check_branch
          %270 = sbr.rel (%p268) target = $region16
        $region15: #{tpu_custom_call.1} parent=11 // pred_region
          %272 = vsyncadd [#allocation7], 0
          %s273 = sshll.u32 %s1, 4
          %s274 = int_to_ptr.hbm [resolvable:$true] %s273
          %s275 = sshll.u32 [#allocation6], 4
          %s276 = int_to_ptr.vmem [resolvable:$true] %s275
          %281 = dma.hbm_to_vmem [thread:$0]  %s274, 512, %s276, [#allocation7], 256, 256, 16
        $region16: #{tpu_custom_call.1} parent=11 // pred_fallthru
          _
        // Predicated region
        $region17: #{tpu_custom_call.1} parent=11 // pred_check
          %p282 = pneg %p101
        $region18: #{tpu_custom_call.1} parent=11 // pred_check_branch
          %284 = sbr.rel (%p282) target = $region20
        $region19: #{tpu_custom_call.1} parent=11 // pred_region
          %286 = vsyncadd [#allocation10], 0
          %s287 = sshll.u32 %s2, 4
          %s288 = int_to_ptr.hbm [resolvable:$true] %s287
          %s289 = sshll.u32 [#allocation9], 4
          %s290 = int_to_ptr.vmem [resolvable:$true] %s289
          %295 = dma.hbm_to_vmem [thread:$0]  %s288, 4096, %s290, [#allocation10], 256, 256, 16
        $region20: #{tpu_custom_call.1} parent=11 // pred_fallthru
          _
        // Predicated region
        $region21: #{tpu_custom_call.1} parent=11 // pred_check
          %p296 = pneg %p122
        $region22: #{tpu_custom_call.1} parent=11 // pred_check_branch
          %298 = sbr.rel (%p296) target = $region24
        $region23: #{tpu_custom_call.1} parent=11 // pred_region
          _
        $region24: #{tpu_custom_call.1} parent=11 // pred_fallthru
          _
        // Predicated region
        $region25: #{tpu_custom_call.1} parent=11 // pred_check
          %p299 = pneg %p143
        $region26: #{tpu_custom_call.1} parent=11 // pred_check_branch
          %301 = sbr.rel (%p299) target = $region28
        $region27: #{tpu_custom_call.1} parent=11 // pred_region
          %303 = vsyncadd [#allocation10], 0
          %s304 = sshll.u32 %s4, 4
          %s305 = int_to_ptr.hbm [resolvable:$true] %s304
          %s306 = sshll.u32 [#allocation11], 4
          %s307 = int_to_ptr.vmem [resolvable:$true] %s306
          %312 = dma.hbm_to_vmem [thread:$0]  %s305, 4096, %s307, [#allocation10], 256, 256, 16
        $region28: #{tpu_custom_call.1} parent=11 // pred_fallthru
          _
        // Predicated region
        $region29: #{tpu_custom_call.1} parent=11 // pred_check
          %p313 = pneg %p164
        $region30: #{tpu_custom_call.1} parent=11 // pred_check_branch
          %315 = sbr.rel (%p313) target = $region32
        $region31: #{tpu_custom_call.1} parent=11 // pred_region
          %317 = vsyncadd [#allocation13], 0
          %s318 = sshll.u32 %s5, 4
          %s319 = int_to_ptr.hbm [resolvable:$true] %s318
          %s320 = sshll.u32 [#allocation12], 4
          %s321 = int_to_ptr.vmem [resolvable:$true] %s320
          %326 = dma.hbm_to_vmem [thread:$0]  %s319, 4096, %s321, [#allocation13], 256, 256, 16
        $region32: #{tpu_custom_call.1} parent=11 // pred_fallthru
          _
        // Predicated region
        $region33: #{tpu_custom_call.1} parent=11 // pred_check
          %p327 = pneg %p185
        $region34: #{tpu_custom_call.1} parent=11 // pred_check_branch
          %329 = sbr.rel (%p327) target = $region36
        $region35: #{tpu_custom_call.1} parent=11 // pred_region
          _
        $region36: #{tpu_custom_call.1} parent=11 // pred_fallthru
          _
        // Predicated region
        $region37: #{tpu_custom_call.1} parent=11 // pred_check
          %p330 = pneg %p206
        $region38: #{tpu_custom_call.1} parent=11 // pred_check_branch
          %332 = sbr.rel (%p330) target = $region40
        $region39: #{tpu_custom_call.1} parent=11 // pred_region
          _
        $region40: #{tpu_custom_call.1} parent=11 // pred_fallthru
          _
        // Predicated region
        $region41: #{tpu_custom_call.1} parent=11 // pred_check
          %p333 = pneg %p227
        $region42: #{tpu_custom_call.1} parent=11 // pred_check_branch
          %335 = sbr.rel (%p333) target = $region44
        $region43: #{tpu_custom_call.1} parent=11 // pred_region
          _
        $region44: #{tpu_custom_call.1} parent=11 // pred_fallthru
          _
      $region12: #{tpu_custom_call.1} parent=5 // pred_fallthru
        _
      %p336 = scmp.lt.s32.totalorder %s19, 2
      // Predicated region
      $region45: #{tpu_custom_call.1} parent=5 // pred_check
        %p337 = pneg %p336
      $region46: #{tpu_custom_call.1} parent=5 // pred_check_branch
        %339 = sbr.rel (%p337) target = $region48
      $region47: #{tpu_custom_call.1} parent=5 // pred_region
        // Predicated region
        $region49: #{tpu_custom_call.1} parent=47 // pred_check
          %p340 = pneg %p53
        $region50: #{tpu_custom_call.1} parent=47 // pred_check_branch
          %342 = sbr.rel (%p340) target = $region52
        $region51: #{tpu_custom_call.1} parent=47 // pred_region
          %s343 = smul.u32 8, %s27
          %p344 = scmp.lt.s32.totalorder %s26, 0
          %s345 = scalar_select %p344, %s26, 0
          %p346 = scmp.lt.s32.totalorder %s343, 15
          %s347 = scalar_select %p346, %s343, 15
          %s348 = smul.addr %s345, 16
          %s349 = sadd.s32 %s347, %s348
          %s350 = smul.addr %s349, 4
          %s351 = scalar_lea.vmem %s0, %s350
          %s352 = smul.u32 8, %s27
        $region52: #{tpu_custom_call.1} parent=47 // pred_fallthru
          _
      $region48: #{tpu_custom_call.1} parent=5 // pred_fallthru
        _
      %p353 = scmp.le.s32.totalorder 1, %s19
      %p354 = scmp.lt.s32.totalorder %s19, 3
      %p355 = pnand %p353, %p354
      %p356 = pneg %p355
      // Predicated region
      $region53: #{tpu_custom_call.1} parent=5 // pred_check
        _
      $region54: #{tpu_custom_call.1} parent=5 // pred_check_branch
        %358 = sbr.rel (%p355) target = $region56
      $region55: #{tpu_custom_call.1} parent=5 // pred_region
        %s359 = ssub.s32 %s19, 1
        // Predicated region
        $region57: #{tpu_custom_call.1} parent=55 // pred_check
          %p360 = pneg %p80
        $region58: #{tpu_custom_call.1} parent=55 // pred_check_branch
          %362 = sbr.rel (%p360) target = $region60
        $region59: #{tpu_custom_call.1} parent=55 // pred_region
          %364 = dma.done [#allocation7], 512
        $region60: #{tpu_custom_call.1} parent=55 // pred_fallthru
          _
        // Predicated region
        $region61: #{tpu_custom_call.1} parent=55 // pred_check
          %p365 = pneg %p101
        $region62: #{tpu_custom_call.1} parent=55 // pred_check_branch
          %367 = sbr.rel (%p365) target = $region64
        $region63: #{tpu_custom_call.1} parent=55 // pred_region
          %369 = dma.done [#allocation10], 4096
        $region64: #{tpu_custom_call.1} parent=55 // pred_fallthru
          _
        // Predicated region
        $region65: #{tpu_custom_call.1} parent=55 // pred_check
          %p370 = pneg %p143
        $region66: #{tpu_custom_call.1} parent=55 // pred_check_branch
          %372 = sbr.rel (%p370) target = $region68
        $region67: #{tpu_custom_call.1} parent=55 // pred_region
          %374 = dma.done [#allocation10], 4096
        $region68: #{tpu_custom_call.1} parent=55 // pred_fallthru
          _
        // Predicated region
        $region69: #{tpu_custom_call.1} parent=55 // pred_check
          %p375 = pneg %p164
        $region70: #{tpu_custom_call.1} parent=55 // pred_check_branch
          %377 = sbr.rel (%p375) target = $region72
        $region71: #{tpu_custom_call.1} parent=55 // pred_region
          %379 = dma.done [#allocation13], 4096
        $region72: #{tpu_custom_call.1} parent=55 // pred_fallthru
          _
        %s380 = smul.u32 8, %s29
        %p381 = scmp.lt.s32.totalorder %s28, 0
        %s382 = scalar_select %p381, %s28, 0
        %p383 = scmp.lt.s32.totalorder %s380, 15
        %s384 = scalar_select %p383, %s380, 15
        %s385 = smul.addr %s382, 16
        %s386 = sadd.s32 %s384, %s385
        %s387 = smul.addr %s386, 4
        %s388 = scalar_lea.vmem %s0, %s387
        %p389 = pneg %p59
        %p390 = pneg %p56
        %p391 = pneg %p80
        %p392 = pneg %p77
        %p393 = pneg %p101
        %p394 = pneg %p98
        %p395 = pneg %p122
        %p396 = pneg %p119
        %p397 = pneg %p143
        %p398 = pneg %p140
        %p399 = pneg %p164
        %p400 = pneg %p161
        %p401 = pneg %p185
        %p402 = pneg %p182
        %p403 = pneg %p206
        %p404 = pneg %p203
        %p405 = pneg %p227
        %p406 = pneg %p224
        %p407 = pneg %p253
        %p408 = pneg %p250
        %s409 = smul.u32 8, %s29
        %p410 = scmp.lt.s32.totalorder %s28, 0
        %s411 = scalar_select %p410, %s28, 0
        %p412 = scmp.lt.s32.totalorder %s409, 15
        %s413 = scalar_select %p412, %s409, 15
        %s414 = smul.addr %s411, 16
        %s415 = sadd.s32 %s413, %s414
        %s416 = smul.addr %s415, 4
        %s417 = scalar_lea.vmem %s0, %s416
        %s418 = smul.u32 8, %s29
        %p420 = scmp.eq.s32.totalorder %s29, 0
        // Predicated region
        $region73: #{tpu_custom_call.1} parent=55 // pred_check
          %p421 = pneg %p420
        $region74: #{tpu_custom_call.1} parent=55 // pred_check_branch
          %423 = sbr.rel (%p421) target = $region76
        $region75: #{tpu_custom_call.1} parent=55 // pred_region
          %424 = vst [vmem:[#allocation2] sm:$0xff] 0.0
          %425 = vst [vmem:[#allocation2 + $0x8] sm:$0xff] 0.0
          %426 = vst [vmem:[#allocation3] sm:$0xff] 0.0
          %427 = vst [vmem:[#allocation3 + $0x8] sm:$0xff] 0.0
          %428 = vst [vmem:[#allocation14] sm:$0xff] 0.0
        $region76: #{tpu_custom_call.1} parent=55 // pred_fallthru
          _
        %v429 = vld [vmem:[%s417] sm:$0xf]
        %v430 = vld [vmem:[%s417 + $0x4] sm:$0xf]
        %v431 = vld [vmem:[%s417 + $0x8] sm:$0xf]
        %v432 = vld [vmem:[%s417 + $0xc] sm:$0xf]
        %v433 = vld [vmem:[%s417 + $0x10] sm:$0xf]
        %v434 = vld [vmem:[%s417 + $0x14] sm:$0xf]
        %v435 = vld [vmem:[%s417 + $0x18] sm:$0xf]
        %v436 = vld [vmem:[%s417 + $0x1c] sm:$0xf]
        %v437 = vld [vmem:[#allocation6] sm:$0xff]
        %v438 = vld [vmem:[#allocation6 + $0x8] sm:$0xff]
        %v439 = vld [vmem:[#allocation6 + $0x10] sm:$0xff]
        %v440 = vld [vmem:[#allocation6 + $0x18] sm:$0xff]
        %v441 = vld [vmem:[%s3] sm:$0xf]
        %v443 = vperm.slane %v441, 0
        %v444 = vperm.slane %v441, 1
        %v445 = vperm.slane %v441, 2
        %v446 = vperm.slane %v441, 3
        %v459 = vunpack.c.l.b16 %v429
        %v460 = vunpack.c.l.b16 %v430
        %v461 = vunpack.c.l.b16 %v431
        %v462 = vunpack.c.l.b16 %v432
        %v463 = vunpack.c.l.b16 %v433
        %v464 = vunpack.c.l.b16 %v434
        %v465 = vunpack.c.l.b16 %v435
        %v466 = vunpack.c.l.b16 %v436
        %v467 = vpack.c.b16 %v460, %v459
        %v468 = vpack.c.b16 %v462, %v461
        %v469 = vpack.c.b16 %v464, %v463
        %v470 = vpack.c.b16 %v466, %v465
        %v475 = vunpack.c.l.b16 %v437
        %v476 = vunpack.c.h.b16 %v437
        %v477 = vunpack.c.l.b16 %v438
        %v478 = vunpack.c.h.b16 %v438
        %v479 = vunpack.c.l.b16 %v439
        %v480 = vunpack.c.h.b16 %v439
        %v481 = vunpack.c.l.b16 %v440
        %v482 = vunpack.c.h.b16 %v440
        %v483 = vpack.c.b16 %v479, %v475
        %v484 = vpack.c.b16 %v480, %v476
        %v485 = vpack.c.b16 %v481, %v477
        %v486 = vpack.c.b16 %v482, %v478
        %vm491 = vcmask 130048
        %v493 = vsel %vm491, %v467, 0
        %v496 = vsel %vm491, %v468, 0
        %v499 = vsel %vm491, %v469, 0
        %v502 = vsel %vm491, %v470, 0
        %504 = vmatpush.bf16.msra.mxu0 0
        %505 = vmatpush.bf16.msra.mxu0 0
        %506 = vmatpush.bf16.msra.mxu0 0
        %507 = vmatpush.bf16.msra.mxu0 0
        %508 = vmatpush.bf16.msra.mxu0 0
        %509 = vmatpush.bf16.msra.mxu0 0
        %510 = vmatpush.bf16.msra.mxu0 0
        %511 = vmatpush.bf16.msra.mxu0 %v483
        %512 = vmatmul.bf16.gmra.mxu0 %v493
        %v513 = vpop.f32.mrf.mxu0
        %v514 = vadd.f32 %v443, %v513
        %v515 = vpop.f32.mrf.mxu0
        %v516 = vadd.f32 %v443, %v515
        %517 = vmatmul.bf16.gmra.mxu0 %v496
        %v518 = vpop.f32.mrf.mxu0
        %v519 = vadd.f32 %v443, %v518
        %v520 = vpop.f32.mrf.mxu0
        %v521 = vadd.f32 %v443, %v520
        %522 = vmatmul.bf16.gmra.mxu0 %v499
        %v523 = vpop.f32.mrf.mxu0
        %v524 = vadd.f32 %v443, %v523
        %v525 = vpop.f32.mrf.mxu0
        %v526 = vadd.f32 %v443, %v525
        %527 = vmatmul.bf16.gmra.mxu0 %v502
        %v528 = vpop.f32.mrf.mxu0
        %v529 = vadd.f32 %v443, %v528
        %v530 = vpop.f32.mrf.mxu0
        %v531 = vadd.f32 %v443, %v530
        %532 = vdwg.mxu0
        %533 = vmatpush.bf16.msra.mxu0 0
        %534 = vmatpush.bf16.msra.mxu0 0
        %535 = vmatpush.bf16.msra.mxu0 0
        %536 = vmatpush.bf16.msra.mxu0 0
        %537 = vmatpush.bf16.msra.mxu0 0
        %538 = vmatpush.bf16.msra.mxu0 0
        %539 = vmatpush.bf16.msra.mxu0 0
        %540 = vmatpush.bf16.msra.mxu0 %v484
        %541 = vmatmul.bf16.gmra.mxu0 %v493
        %v542 = vpop.f32.mrf.mxu0
        %v543 = vadd.f32 %v444, %v542
        %v544 = vpop.f32.mrf.mxu0
        %v545 = vadd.f32 %v444, %v544
        %546 = vmatmul.bf16.gmra.mxu0 %v496
        %v547 = vpop.f32.mrf.mxu0
        %v548 = vadd.f32 %v444, %v547
        %v549 = vpop.f32.mrf.mxu0
        %v550 = vadd.f32 %v444, %v549
        %551 = vmatmul.bf16.gmra.mxu0 %v499
        %v552 = vpop.f32.mrf.mxu0
        %v553 = vadd.f32 %v444, %v552
        %v554 = vpop.f32.mrf.mxu0
        %v555 = vadd.f32 %v444, %v554
        %556 = vmatmul.bf16.gmra.mxu0 %v502
        %v557 = vpop.f32.mrf.mxu0
        %v558 = vadd.f32 %v444, %v557
        %v559 = vpop.f32.mrf.mxu0
        %v560 = vadd.f32 %v444, %v559
        %561 = vdwg.mxu0
        %562 = vmatpush.bf16.msra.mxu0 0
        %563 = vmatpush.bf16.msra.mxu0 0
        %564 = vmatpush.bf16.msra.mxu0 0
        %565 = vmatpush.bf16.msra.mxu0 0
        %566 = vmatpush.bf16.msra.mxu0 0
        %567 = vmatpush.bf16.msra.mxu0 0
        %568 = vmatpush.bf16.msra.mxu0 0
        %569 = vmatpush.bf16.msra.mxu0 %v485
        %570 = vmatmul.bf16.gmra.mxu0 %v493
        %v571 = vpop.f32.mrf.mxu0
        %v572 = vadd.f32 %v445, %v571
        %v573 = vpop.f32.mrf.mxu0
        %v574 = vadd.f32 %v445, %v573
        %575 = vmatmul.bf16.gmra.mxu0 %v496
        %v576 = vpop.f32.mrf.mxu0
        %v577 = vadd.f32 %v445, %v576
        %v578 = vpop.f32.mrf.mxu0
        %v579 = vadd.f32 %v445, %v578
        %580 = vmatmul.bf16.gmra.mxu0 %v499
        %v581 = vpop.f32.mrf.mxu0
        %v582 = vadd.f32 %v445, %v581
        %v583 = vpop.f32.mrf.mxu0
        %v584 = vadd.f32 %v445, %v583
        %585 = vmatmul.bf16.gmra.mxu0 %v502
        %v586 = vpop.f32.mrf.mxu0
        %v587 = vadd.f32 %v445, %v586
        %v588 = vpop.f32.mrf.mxu0
        %v589 = vadd.f32 %v445, %v588
        %590 = vdwg.mxu0
        %591 = vmatpush.bf16.msra.mxu0 0
        %592 = vmatpush.bf16.msra.mxu0 0
        %593 = vmatpush.bf16.msra.mxu0 0
        %594 = vmatpush.bf16.msra.mxu0 0
        %595 = vmatpush.bf16.msra.mxu0 0
        %596 = vmatpush.bf16.msra.mxu0 0
        %597 = vmatpush.bf16.msra.mxu0 0
        %598 = vmatpush.bf16.msra.mxu0 %v486
        %599 = vmatmul.bf16.gmra.mxu0 %v493
        %v600 = vpop.f32.mrf.mxu0
        %v601 = vadd.f32 %v446, %v600
        %v602 = vpop.f32.mrf.mxu0
        %v603 = vadd.f32 %v446, %v602
        %604 = vmatmul.bf16.gmra.mxu0 %v496
        %v605 = vpop.f32.mrf.mxu0
        %v606 = vadd.f32 %v446, %v605
        %v607 = vpop.f32.mrf.mxu0
        %v608 = vadd.f32 %v446, %v607
        %609 = vmatmul.bf16.gmra.mxu0 %v499
        %v610 = vpop.f32.mrf.mxu0
        %v611 = vadd.f32 %v446, %v610
        %v612 = vpop.f32.mrf.mxu0
        %v613 = vadd.f32 %v446, %v612
        %614 = vmatmul.bf16.gmra.mxu0 %v502
        %v615 = vpop.f32.mrf.mxu0
        %v616 = vadd.f32 %v446, %v615
        %v617 = vpop.f32.mrf.mxu0
        %v618 = vadd.f32 %v446, %v617
        %619 = vdwg.mxu0
        %620 = vst [vmem:[#allocation4] sm:$0xff] %v514
        %621 = vst [vmem:[#allocation4 + $0x8] sm:$0xff] %v543
        %622 = vst [vmem:[#allocation4 + $0x10] sm:$0xff] %v572
        %623 = vst [vmem:[#allocation4 + $0x18] sm:$0xff] %v601
        %624 = vst [vmem:[#allocation4 + $0x20] sm:$0xff] %v516
        %625 = vst [vmem:[#allocation4 + $0x28] sm:$0xff] %v545
        %626 = vst [vmem:[#allocation4 + $0x30] sm:$0xff] %v574
        %627 = vst [vmem:[#allocation4 + $0x38] sm:$0xff] %v603
        %628 = vst [vmem:[#allocation4 + $0x40] sm:$0xff] %v519
        %629 = vst [vmem:[#allocation4 + $0x48] sm:$0xff] %v548
        %630 = vst [vmem:[#allocation4 + $0x50] sm:$0xff] %v577
        %631 = vst [vmem:[#allocation4 + $0x58] sm:$0xff] %v606
        %632 = vst [vmem:[#allocation4 + $0x60] sm:$0xff] %v521
        %633 = vst [vmem:[#allocation4 + $0x68] sm:$0xff] %v550
        %634 = vst [vmem:[#allocation4 + $0x70] sm:$0xff] %v579
        %635 = vst [vmem:[#allocation4 + $0x78] sm:$0xff] %v608
        %636 = vst [vmem:[#allocation4 + $0x80] sm:$0xff] %v524
        %637 = vst [vmem:[#allocation4 + $0x88] sm:$0xff] %v553
        %638 = vst [vmem:[#allocation4 + $0x90] sm:$0xff] %v582
        %639 = vst [vmem:[#allocation4 + $0x98] sm:$0xff] %v611
        %640 = vst [vmem:[#allocation4 + $0xa0] sm:$0xff] %v526
        %641 = vst [vmem:[#allocation4 + $0xa8] sm:$0xff] %v555
        %642 = vst [vmem:[#allocation4 + $0xb0] sm:$0xff] %v584
        %643 = vst [vmem:[#allocation4 + $0xb8] sm:$0xff] %v613
        %644 = vst [vmem:[#allocation4 + $0xc0] sm:$0xff] %v529
        %645 = vst [vmem:[#allocation4 + $0xc8] sm:$0xff] %v558
        %646 = vst [vmem:[#allocation4 + $0xd0] sm:$0xff] %v587
        %647 = vst [vmem:[#allocation4 + $0xd8] sm:$0xff] %v616
        %648 = vst [vmem:[#allocation4 + $0xe0] sm:$0xff] %v531
        %649 = vst [vmem:[#allocation4 + $0xe8] sm:$0xff] %v560
        %650 = vst [vmem:[#allocation4 + $0xf0] sm:$0xff] %v589
        %651 = vst [vmem:[#allocation4 + $0xf8] sm:$0xff] %v618
        %v652 = vld [vmem:[#allocation9] sm:$0xff]
        %v653 = vld [vmem:[#allocation9 + $0x8] sm:$0xff]
        %v654 = vld [vmem:[#allocation9 + $0x10] sm:$0xff]
        %v655 = vld [vmem:[#allocation9 + $0x18] sm:$0xff]
        %v656 = vld [vmem:[#allocation9 + $0x20] sm:$0xff]
        %v657 = vld [vmem:[#allocation9 + $0x28] sm:$0xff]
        %v658 = vld [vmem:[#allocation9 + $0x30] sm:$0xff]
        %v659 = vld [vmem:[#allocation9 + $0x38] sm:$0xff]
        %v660 = vld [vmem:[#allocation9 + $0x40] sm:$0xff]
        %v661 = vld [vmem:[#allocation9 + $0x48] sm:$0xff]
        %v662 = vld [vmem:[#allocation9 + $0x50] sm:$0xff]
        %v663 = vld [vmem:[#allocation9 + $0x58] sm:$0xff]
        %v664 = vld [vmem:[#allocation9 + $0x60] sm:$0xff]
        %v665 = vld [vmem:[#allocation9 + $0x68] sm:$0xff]
        %v666 = vld [vmem:[#allocation9 + $0x70] sm:$0xff]
        %v667 = vld [vmem:[#allocation9 + $0x78] sm:$0xff]
        %v668 = vld [vmem:[#allocation9 + $0x80] sm:$0xff]
        %v669 = vld [vmem:[#allocation9 + $0x88] sm:$0xff]
        %v670 = vld [vmem:[#allocation9 + $0x90] sm:$0xff]
        %v671 = vld [vmem:[#allocation9 + $0x98] sm:$0xff]
        %v672 = vld [vmem:[#allocation9 + $0xa0] sm:$0xff]
        %v673 = vld [vmem:[#allocation9 + $0xa8] sm:$0xff]
        %v674 = vld [vmem:[#allocation9 + $0xb0] sm:$0xff]
        %v675 = vld [vmem:[#allocation9 + $0xb8] sm:$0xff]
        %v676 = vld [vmem:[#allocation9 + $0xc0] sm:$0xff]
        %v677 = vld [vmem:[#allocation9 + $0xc8] sm:$0xff]
        %v678 = vld [vmem:[#allocation9 + $0xd0] sm:$0xff]
        %v679 = vld [vmem:[#allocation9 + $0xd8] sm:$0xff]
        %v680 = vld [vmem:[#allocation9 + $0xe0] sm:$0xff]
        %v681 = vld [vmem:[#allocation9 + $0xe8] sm:$0xff]
        %v682 = vld [vmem:[#allocation9 + $0xf0] sm:$0xff]
        %v683 = vld [vmem:[#allocation9 + $0xf8] sm:$0xff]
        %v684 = vld [vmem:[#allocation2] sm:$0xff]
        %v685 = vld [vmem:[#allocation3] sm:$0xff]
        %v686 = vld [vmem:[#allocation4] sm:$0xff]
        %v687 = vld [vmem:[#allocation4 + $0x8] sm:$0xff]
        %v688 = vld [vmem:[#allocation4 + $0x10] sm:$0xff]
        %v689 = vld [vmem:[#allocation4 + $0x18] sm:$0xff]
        %v690 = vpack.c.bf16 %v684, %v684
        %v723 = vunpack.c.l.b16 %v652
        %v724 = vunpack.c.h.b16 %v652
        %v725 = vunpack.c.l.b16 %v653
        %v726 = vunpack.c.h.b16 %v653
        %v727 = vunpack.c.l.b16 %v654
        %v728 = vunpack.c.h.b16 %v654
        %v729 = vunpack.c.l.b16 %v655
        %v730 = vunpack.c.h.b16 %v655
        %v731 = vunpack.c.l.b16 %v656
        %v732 = vunpack.c.h.b16 %v656
        %v733 = vunpack.c.l.b16 %v657
        %v734 = vunpack.c.h.b16 %v657
        %v735 = vunpack.c.l.b16 %v658
        %v736 = vunpack.c.h.b16 %v658
        %v737 = vunpack.c.l.b16 %v659
        %v738 = vunpack.c.h.b16 %v659
        %v739 = vunpack.c.l.b16 %v660
        %v740 = vunpack.c.h.b16 %v660
        %v741 = vunpack.c.l.b16 %v661
        %v742 = vunpack.c.h.b16 %v661
        %v743 = vunpack.c.l.b16 %v662
        %v744 = vunpack.c.h.b16 %v662
        %v745 = vunpack.c.l.b16 %v663
        %v746 = vunpack.c.h.b16 %v663
        %v747 = vunpack.c.l.b16 %v664
        %v748 = vunpack.c.h.b16 %v664
        %v749 = vunpack.c.l.b16 %v665
        %v750 = vunpack.c.h.b16 %v665
        %v751 = vunpack.c.l.b16 %v666
        %v752 = vunpack.c.h.b16 %v666
        %v753 = vunpack.c.l.b16 %v667
        %v754 = vunpack.c.h.b16 %v667
        %v755 = vunpack.c.l.b16 %v668
        %v756 = vunpack.c.h.b16 %v668
        %v757 = vunpack.c.l.b16 %v669
        %v758 = vunpack.c.h.b16 %v669
        %v759 = vunpack.c.l.b16 %v670
        %v760 = vunpack.c.h.b16 %v670
        %v761 = vunpack.c.l.b16 %v671
        %v762 = vunpack.c.h.b16 %v671
        %v763 = vunpack.c.l.b16 %v672
        %v764 = vunpack.c.h.b16 %v672
        %v765 = vunpack.c.l.b16 %v673
        %v766 = vunpack.c.h.b16 %v673
        %v767 = vunpack.c.l.b16 %v674
        %v768 = vunpack.c.h.b16 %v674
        %v769 = vunpack.c.l.b16 %v675
        %v770 = vunpack.c.h.b16 %v675
        %v771 = vunpack.c.l.b16 %v676
        %v772 = vunpack.c.h.b16 %v676
        %v773 = vunpack.c.l.b16 %v677
        %v774 = vunpack.c.h.b16 %v677
        %v775 = vunpack.c.l.b16 %v678
        %v776 = vunpack.c.h.b16 %v678
        %v777 = vunpack.c.l.b16 %v679
        %v778 = vunpack.c.h.b16 %v679
        %v779 = vunpack.c.l.b16 %v680
        %v780 = vunpack.c.h.b16 %v680
        %v781 = vunpack.c.l.b16 %v681
        %v782 = vunpack.c.h.b16 %v681
        %v783 = vunpack.c.l.b16 %v682
        %v784 = vunpack.c.h.b16 %v682
        %v785 = vunpack.c.l.b16 %v683
        %v786 = vunpack.c.h.b16 %v683
        %v787 = vpack.c.b16 %v727, %v723
        %v788 = vpack.c.b16 %v728, %v724
        %v789 = vpack.c.b16 %v729, %v725
        %v790 = vpack.c.b16 %v730, %v726
        %v791 = vpack.c.b16 %v735, %v731
        %v792 = vpack.c.b16 %v736, %v732
        %v793 = vpack.c.b16 %v737, %v733
        %v794 = vpack.c.b16 %v738, %v734
        %v795 = vpack.c.b16 %v743, %v739
        %v796 = vpack.c.b16 %v744, %v740
        %v797 = vpack.c.b16 %v745, %v741
        %v798 = vpack.c.b16 %v746, %v742
        %v799 = vpack.c.b16 %v751, %v747
        %v800 = vpack.c.b16 %v752, %v748
        %v801 = vpack.c.b16 %v753, %v749
        %v802 = vpack.c.b16 %v754, %v750
        %v803 = vpack.c.b16 %v759, %v755
        %v804 = vpack.c.b16 %v760, %v756
        %v805 = vpack.c.b16 %v761, %v757
        %v806 = vpack.c.b16 %v762, %v758
        %v807 = vpack.c.b16 %v767, %v763
        %v808 = vpack.c.b16 %v768, %v764
        %v809 = vpack.c.b16 %v769, %v765
        %v810 = vpack.c.b16 %v770, %v766
        %v811 = vpack.c.b16 %v775, %v771
        %v812 = vpack.c.b16 %v776, %v772
        %v813 = vpack.c.b16 %v777, %v773
        %v814 = vpack.c.b16 %v778, %v774
        %v815 = vpack.c.b16 %v783, %v779
        %v816 = vpack.c.b16 %v784, %v780
        %v817 = vpack.c.b16 %v785, %v781
        %v818 = vpack.c.b16 %v786, %v782
        %851 = vmatpush.bf16.msra.mxu0 %v815
        %852 = vmatpush.bf16.msra.mxu0 %v811
        %853 = vmatpush.bf16.msra.mxu0 %v807
        %854 = vmatpush.bf16.msra.mxu0 %v803
        %855 = vmatpush.bf16.msra.mxu0 %v799
        %856 = vmatpush.bf16.msra.mxu0 %v795
        %857 = vmatpush.bf16.msra.mxu0 %v791
        %858 = vmatpush.bf16.msra.mxu0 %v787
        %859 = vmatmul.bf16.gmra.mxu0 %v690
        %v860 = vpop.f32.mrf.mxu0
        %v861 = vadd.f32 0.0, %v860
        %v862 = vpop.f32.mrf.mxu0
        %863 = vdwg.mxu0
        %864 = vmatpush.bf16.msra.mxu0 %v816
        %865 = vmatpush.bf16.msra.mxu0 %v812
        %866 = vmatpush.bf16.msra.mxu0 %v808
        %867 = vmatpush.bf16.msra.mxu0 %v804
        %868 = vmatpush.bf16.msra.mxu0 %v800
        %869 = vmatpush.bf16.msra.mxu0 %v796
        %870 = vmatpush.bf16.msra.mxu0 %v792
        %871 = vmatpush.bf16.msra.mxu0 %v788
        %872 = vmatmul.bf16.gmra.mxu0 %v690
        %v873 = vpop.f32.mrf.mxu0
        %v874 = vadd.f32 0.0, %v873
        %v875 = vpop.f32.mrf.mxu0
        %876 = vdwg.mxu0
        %877 = vmatpush.bf16.msra.mxu0 %v817
        %878 = vmatpush.bf16.msra.mxu0 %v813
        %879 = vmatpush.bf16.msra.mxu0 %v809
        %880 = vmatpush.bf16.msra.mxu0 %v805
        %881 = vmatpush.bf16.msra.mxu0 %v801
        %882 = vmatpush.bf16.msra.mxu0 %v797
        %883 = vmatpush.bf16.msra.mxu0 %v793
        %884 = vmatpush.bf16.msra.mxu0 %v789
        %885 = vmatmul.bf16.gmra.mxu0 %v690
        %v886 = vpop.f32.mrf.mxu0
        %v887 = vadd.f32 0.0, %v886
        %v888 = vpop.f32.mrf.mxu0
        %889 = vdwg.mxu0
        %890 = vmatpush.bf16.msra.mxu0 %v818
        %891 = vmatpush.bf16.msra.mxu0 %v814
        %892 = vmatpush.bf16.msra.mxu0 %v810
        %893 = vmatpush.bf16.msra.mxu0 %v806
        %894 = vmatpush.bf16.msra.mxu0 %v802
        %895 = vmatpush.bf16.msra.mxu0 %v798
        %896 = vmatpush.bf16.msra.mxu0 %v794
        %897 = vmatpush.bf16.msra.mxu0 %v790
        %898 = vmatmul.bf16.gmra.mxu0 %v690
        %v899 = vpop.f32.mrf.mxu0
        %v900 = vadd.f32 0.0, %v899
        %v901 = vpop.f32.mrf.mxu0
        %902 = vdwg.mxu0
        %v903 = vadd.f32 %v686, %v861
        %v904 = vadd.f32 %v687, %v874
        %v905 = vadd.f32 %v688, %v887
        %v906 = vadd.f32 %v689, %v900
        %v907 = vxor.u32 %v903, 2147483648
        %v908 = vmul.f32 %v907, 1.442695
        %v909 = vpow.pop %v908
        %v910 = vadd.f32 %v909, 1.0
        %v911 = vrcp.pop %v910
        %v912 = vmul.f32 %v910, %v911
        %v913 = vsub.f32 1.0, %v912
        %v914 = vmul.f32 %v911, %v913
        %v915 = vadd.f32 %v911, %v914
        %vm916 = vweird.f32 %v910
        %vm917 = vweird.f32 %v911
        %vm918 = vmor %vm916, %vm917
        %v919 = vsel %vm918, %v911, %v915
        %v920 = vand.u32 2147483647, %v910
        %vm921 = vcmp.eq.f32.partialorder %v920, 8.507059e+37
        %v922 = vand.u32 %v910, 2147483648
        %v923 = vor.u32 1.1754944e-38, %v922
        %v924 = vsel %vm921, %v923, %v919
        %v925 = vmul.f32 1.0, %v924
        %v926 = vxor.u32 %v904, 2147483648
        %v927 = vmul.f32 %v926, 1.442695
        %v928 = vpow.pop %v927
        %v929 = vadd.f32 %v928, 1.0
        %v930 = vrcp.pop %v929
        %v931 = vmul.f32 %v929, %v930
        %v932 = vsub.f32 1.0, %v931
        %v933 = vmul.f32 %v930, %v932
        %v934 = vadd.f32 %v930, %v933
        %vm935 = vweird.f32 %v929
        %vm936 = vweird.f32 %v930
        %vm937 = vmor %vm935, %vm936
        %v938 = vsel %vm937, %v930, %v934
        %v939 = vand.u32 2147483647, %v929
        %vm940 = vcmp.eq.f32.partialorder %v939, 8.507059e+37
        %v941 = vand.u32 %v929, 2147483648
        %v942 = vor.u32 1.1754944e-38, %v941
        %v943 = vsel %vm940, %v942, %v938
        %v944 = vmul.f32 1.0, %v943
        %v945 = vtanh.pop %v905
        %v946 = vxor.u32 %v906, 2147483648
        %v947 = vmul.f32 %v946, 1.442695
        %v948 = vpow.pop %v947
        %v949 = vadd.f32 %v948, 1.0
        %v950 = vrcp.pop %v949
        %v951 = vmul.f32 %v949, %v950
        %v952 = vsub.f32 1.0, %v951
        %v953 = vmul.f32 %v950, %v952
        %v954 = vadd.f32 %v950, %v953
        %vm955 = vweird.f32 %v949
        %vm956 = vweird.f32 %v950
        %vm957 = vmor %vm955, %vm956
        %v958 = vsel %vm957, %v950, %v954
        %v959 = vand.u32 2147483647, %v949
        %vm960 = vcmp.eq.f32.partialorder %v959, 8.507059e+37
        %v961 = vand.u32 %v949, 2147483648
        %v962 = vor.u32 1.1754944e-38, %v961
        %v963 = vsel %vm960, %v962, %v958
        %v964 = vmul.f32 1.0, %v963
        %v965 = vmul.f32 %v944, %v685
        %v966 = vmul.f32 %v925, %v945
        %v967 = vadd.f32 %v965, %v966
        %v968 = vtanh.pop %v967
        %v969 = vmul.f32 %v964, %v968
        %s970 = smul.u32 %s29, 8
        %p971 = scmp.lt.s32.totalorder %s970, 13
        %s972 = scalar_select %p971, 1, 0
        %v973 = vstv %s972
        %vm974 = vcmp.eq.s32.totalorder %v973, 1
        %v975 = vsel %vm974, %v967, %v685
        %v976 = vsel %vm974, %v969, %v684
        %977 = vst [vmem:[#allocation5] sm:$0xff] %v976
        %v978 = vld [vmem:[#allocation4 + $0x20] sm:$0xff]
        %v979 = vld [vmem:[#allocation4 + $0x28] sm:$0xff]
        %v980 = vld [vmem:[#allocation4 + $0x30] sm:$0xff]
        %v981 = vld [vmem:[#allocation4 + $0x38] sm:$0xff]
        %v982 = vpack.c.bf16 %v976, %v976
        %983 = vmatpush.bf16.msra.mxu0 %v815
        %984 = vmatpush.bf16.msra.mxu0 %v811
        %985 = vmatpush.bf16.msra.mxu0 %v807
        %986 = vmatpush.bf16.msra.mxu0 %v803
        %987 = vmatpush.bf16.msra.mxu0 %v799
        %988 = vmatpush.bf16.msra.mxu0 %v795
        %989 = vmatpush.bf16.msra.mxu0 %v791
        %990 = vmatpush.bf16.msra.mxu0 %v787
        %991 = vmatmul.bf16.gmra.mxu0 %v982
        %v992 = vpop.f32.mrf.mxu0
        %v993 = vadd.f32 0.0, %v992
        %v994 = vpop.f32.mrf.mxu0
        %995 = vdwg.mxu0
        %996 = vmatpush.bf16.msra.mxu0 %v816
        %997 = vmatpush.bf16.msra.mxu0 %v812
        %998 = vmatpush.bf16.msra.mxu0 %v808
        %999 = vmatpush.bf16.msra.mxu0 %v804
        %1000 = vmatpush.bf16.msra.mxu0 %v800
        %1001 = vmatpush.bf16.msra.mxu0 %v796
        %1002 = vmatpush.bf16.msra.mxu0 %v792
        %1003 = vmatpush.bf16.msra.mxu0 %v788
        %1004 = vmatmul.bf16.gmra.mxu0 %v982
        %v1005 = vpop.f32.mrf.mxu0
        %v1006 = vadd.f32 0.0, %v1005
        %v1007 = vpop.f32.mrf.mxu0
        %1008 = vdwg.mxu0
        %1009 = vmatpush.bf16.msra.mxu0 %v817
        %1010 = vmatpush.bf16.msra.mxu0 %v813
        %1011 = vmatpush.bf16.msra.mxu0 %v809
        %1012 = vmatpush.bf16.msra.mxu0 %v805
        %1013 = vmatpush.bf16.msra.mxu0 %v801
        %1014 = vmatpush.bf16.msra.mxu0 %v797
        %1015 = vmatpush.bf16.msra.mxu0 %v793
        %1016 = vmatpush.bf16.msra.mxu0 %v789
        %1017 = vmatmul.bf16.gmra.mxu0 %v982
        %v1018 = vpop.f32.mrf.mxu0
        %v1019 = vadd.f32 0.0, %v1018
        %v1020 = vpop.f32.mrf.mxu0
        %1021 = vdwg.mxu0
        %1022 = vmatpush.bf16.msra.mxu0 %v818
        %1023 = vmatpush.bf16.msra.mxu0 %v814
        %1024 = vmatpush.bf16.msra.mxu0 %v810
        %1025 = vmatpush.bf16.msra.mxu0 %v806
        %1026 = vmatpush.bf16.msra.mxu0 %v802
        %1027 = vmatpush.bf16.msra.mxu0 %v798
        %1028 = vmatpush.bf16.msra.mxu0 %v794
        %1029 = vmatpush.bf16.msra.mxu0 %v790
        %1030 = vmatmul.bf16.gmra.mxu0 %v982
        %v1031 = vpop.f32.mrf.mxu0
        %v1032 = vadd.f32 0.0, %v1031
        %v1033 = vpop.f32.mrf.mxu0
        %1034 = vdwg.mxu0
        %v1035 = vadd.f32 %v978, %v993
        %v1036 = vadd.f32 %v979, %v1006
        %v1037 = vadd.f32 %v980, %v1019
        %v1038 = vadd.f32 %v981, %v1032
        %v1039 = vxor.u32 %v1035, 2147483648
        %v1040 = vmul.f32 %v1039, 1.442695
        %v1041 = vpow.pop %v1040
        %v1042 = vadd.f32 %v1041, 1.0
        %v1043 = vrcp.pop %v1042
        %v1044 = vmul.f32 %v1042, %v1043
        %v1045 = vsub.f32 1.0, %v1044
        %v1046 = vmul.f32 %v1043, %v1045
        %v1047 = vadd.f32 %v1043, %v1046
        %vm1048 = vweird.f32 %v1042
        %vm1049 = vweird.f32 %v1043
        %vm1050 = vmor %vm1048, %vm1049
        %v1051 = vsel %vm1050, %v1043, %v1047
        %v1052 = vand.u32 2147483647, %v1042
        %vm1053 = vcmp.eq.f32.partialorder %v1052, 8.507059e+37
        %v1054 = vand.u32 %v1042, 2147483648
        %v1055 = vor.u32 1.1754944e-38, %v1054
        %v1056 = vsel %vm1053, %v1055, %v1051
        %v1057 = vmul.f32 1.0, %v1056
        %v1058 = vxor.u32 %v1036, 2147483648
        %v1059 = vmul.f32 %v1058, 1.442695
        %v1060 = vpow.pop %v1059
        %v1061 = vadd.f32 %v1060, 1.0
        %v1062 = vrcp.pop %v1061
        %v1063 = vmul.f32 %v1061, %v1062
        %v1064 = vsub.f32 1.0, %v1063
        %v1065 = vmul.f32 %v1062, %v1064
        %v1066 = vadd.f32 %v1062, %v1065
        %vm1067 = vweird.f32 %v1061
        %vm1068 = vweird.f32 %v1062
        %vm1069 = vmor %vm1067, %vm1068
        %v1070 = vsel %vm1069, %v1062, %v1066
        %v1071 = vand.u32 2147483647, %v1061
        %vm1072 = vcmp.eq.f32.partialorder %v1071, 8.507059e+37
        %v1073 = vand.u32 %v1061, 2147483648
        %v1074 = vor.u32 1.1754944e-38, %v1073
        %v1075 = vsel %vm1072, %v1074, %v1070
        %v1076 = vmul.f32 1.0, %v1075
        %v1077 = vtanh.pop %v1037
        %v1078 = vxor.u32 %v1038, 2147483648
        %v1079 = vmul.f32 %v1078, 1.442695
        %v1080 = vpow.pop %v1079
        %v1081 = vadd.f32 %v1080, 1.0
        %v1082 = vrcp.pop %v1081
        %v1083 = vmul.f32 %v1081, %v1082
        %v1084 = vsub.f32 1.0, %v1083
        %v1085 = vmul.f32 %v1082, %v1084
        %v1086 = vadd.f32 %v1082, %v1085
        %vm1087 = vweird.f32 %v1081
        %vm1088 = vweird.f32 %v1082
        %vm1089 = vmor %vm1087, %vm1088
        %v1090 = vsel %vm1089, %v1082, %v1086
        %v1091 = vand.u32 2147483647, %v1081
        %vm1092 = vcmp.eq.f32.partialorder %v1091, 8.507059e+37
        %v1093 = vand.u32 %v1081, 2147483648
        %v1094 = vor.u32 1.1754944e-38, %v1093
        %v1095 = vsel %vm1092, %v1094, %v1090
        %v1096 = vmul.f32 1.0, %v1095
        %v1097 = vmul.f32 %v1076, %v975
        %v1098 = vmul.f32 %v1057, %v1077
        %v1099 = vadd.f32 %v1097, %v1098
        %v1100 = vtanh.pop %v1099
        %v1101 = vmul.f32 %v1096, %v1100
        %s1102 = sadd.s32 %s970, 1
        %p1103 = scmp.lt.s32.totalorder %s1102, 13
        %s1104 = scalar_select %p1103, 1, 0
        %v1105 = vstv %s1104
        %vm1106 = vcmp.eq.s32.totalorder %v1105, 1
        %v1107 = vsel %vm1106, %v1099, %v975
        %v1108 = vsel %vm1106, %v1101, %v976
        %1109 = vst [vmem:[#allocation5 + $0x8] sm:$0xff] %v1108
        %v1110 = vld [vmem:[#allocation4 + $0x40] sm:$0xff]
        %v1111 = vld [vmem:[#allocation4 + $0x48] sm:$0xff]
        %v1112 = vld [vmem:[#allocation4 + $0x50] sm:$0xff]
        %v1113 = vld [vmem:[#allocation4 + $0x58] sm:$0xff]
        %v1114 = vpack.c.bf16 %v1108, %v1108
        %1115 = vmatpush.bf16.msra.mxu0 %v815
        %1116 = vmatpush.bf16.msra.mxu0 %v811
        %1117 = vmatpush.bf16.msra.mxu0 %v807
        %1118 = vmatpush.bf16.msra.mxu0 %v803
        %1119 = vmatpush.bf16.msra.mxu0 %v799
        %1120 = vmatpush.bf16.msra.mxu0 %v795
        %1121 = vmatpush.bf16.msra.mxu0 %v791
        %1122 = vmatpush.bf16.msra.mxu0 %v787
        %1123 = vmatmul.bf16.gmra.mxu0 %v1114
        %v1124 = vpop.f32.mrf.mxu0
        %v1125 = vadd.f32 0.0, %v1124
        %v1126 = vpop.f32.mrf.mxu0
        %1127 = vdwg.mxu0
        %1128 = vmatpush.bf16.msra.mxu0 %v816
        %1129 = vmatpush.bf16.msra.mxu0 %v812
        %1130 = vmatpush.bf16.msra.mxu0 %v808
        %1131 = vmatpush.bf16.msra.mxu0 %v804
        %1132 = vmatpush.bf16.msra.mxu0 %v800
        %1133 = vmatpush.bf16.msra.mxu0 %v796
        %1134 = vmatpush.bf16.msra.mxu0 %v792
        %1135 = vmatpush.bf16.msra.mxu0 %v788
        %1136 = vmatmul.bf16.gmra.mxu0 %v1114
        %v1137 = vpop.f32.mrf.mxu0
        %v1138 = vadd.f32 0.0, %v1137
        %v1139 = vpop.f32.mrf.mxu0
        %1140 = vdwg.mxu0
        %1141 = vmatpush.bf16.msra.mxu0 %v817
        %1142 = vmatpush.bf16.msra.mxu0 %v813
        %1143 = vmatpush.bf16.msra.mxu0 %v809
        %1144 = vmatpush.bf16.msra.mxu0 %v805
        %1145 = vmatpush.bf16.msra.mxu0 %v801
        %1146 = vmatpush.bf16.msra.mxu0 %v797
        %1147 = vmatpush.bf16.msra.mxu0 %v793
        %1148 = vmatpush.bf16.msra.mxu0 %v789
        %1149 = vmatmul.bf16.gmra.mxu0 %v1114
        %v1150 = vpop.f32.mrf.mxu0
        %v1151 = vadd.f32 0.0, %v1150
        %v1152 = vpop.f32.mrf.mxu0
        %1153 = vdwg.mxu0
        %1154 = vmatpush.bf16.msra.mxu0 %v818
        %1155 = vmatpush.bf16.msra.mxu0 %v814
        %1156 = vmatpush.bf16.msra.mxu0 %v810
        %1157 = vmatpush.bf16.msra.mxu0 %v806
        %1158 = vmatpush.bf16.msra.mxu0 %v802
        %1159 = vmatpush.bf16.msra.mxu0 %v798
        %1160 = vmatpush.bf16.msra.mxu0 %v794
        %1161 = vmatpush.bf16.msra.mxu0 %v790
        %1162 = vmatmul.bf16.gmra.mxu0 %v1114
        %v1163 = vpop.f32.mrf.mxu0
        %v1164 = vadd.f32 0.0, %v1163
        %v1165 = vpop.f32.mrf.mxu0
        %1166 = vdwg.mxu0
        %v1167 = vadd.f32 %v1110, %v1125
        %v1168 = vadd.f32 %v1111, %v1138
        %v1169 = vadd.f32 %v1112, %v1151
        %v1170 = vadd.f32 %v1113, %v1164
        %v1171 = vxor.u32 %v1167, 2147483648
        %v1172 = vmul.f32 %v1171, 1.442695
        %v1173 = vpow.pop %v1172
        %v1174 = vadd.f32 %v1173, 1.0
        %v1175 = vrcp.pop %v1174
        %v1176 = vmul.f32 %v1174, %v1175
        %v1177 = vsub.f32 1.0, %v1176
        %v1178 = vmul.f32 %v1175, %v1177
        %v1179 = vadd.f32 %v1175, %v1178
        %vm1180 = vweird.f32 %v1174
        %vm1181 = vweird.f32 %v1175
        %vm1182 = vmor %vm1180, %vm1181
        %v1183 = vsel %vm1182, %v1175, %v1179
        %v1184 = vand.u32 2147483647, %v1174
        %vm1185 = vcmp.eq.f32.partialorder %v1184, 8.507059e+37
        %v1186 = vand.u32 %v1174, 2147483648
        %v1187 = vor.u32 1.1754944e-38, %v1186
        %v1188 = vsel %vm1185, %v1187, %v1183
        %v1189 = vmul.f32 1.0, %v1188
        %v1190 = vxor.u32 %v1168, 2147483648
        %v1191 = vmul.f32 %v1190, 1.442695
        %v1192 = vpow.pop %v1191
        %v1193 = vadd.f32 %v1192, 1.0
        %v1194 = vrcp.pop %v1193
        %v1195 = vmul.f32 %v1193, %v1194
        %v1196 = vsub.f32 1.0, %v1195
        %v1197 = vmul.f32 %v1194, %v1196
        %v1198 = vadd.f32 %v1194, %v1197
        %vm1199 = vweird.f32 %v1193
        %vm1200 = vweird.f32 %v1194
        %vm1201 = vmor %vm1199, %vm1200
        %v1202 = vsel %vm1201, %v1194, %v1198
        %v1203 = vand.u32 2147483647, %v1193
        %vm1204 = vcmp.eq.f32.partialorder %v1203, 8.507059e+37
        %v1205 = vand.u32 %v1193, 2147483648
        %v1206 = vor.u32 1.1754944e-38, %v1205
        %v1207 = vsel %vm1204, %v1206, %v1202
        %v1208 = vmul.f32 1.0, %v1207
        %v1209 = vtanh.pop %v1169
        %v1210 = vxor.u32 %v1170, 2147483648
        %v1211 = vmul.f32 %v1210, 1.442695
        %v1212 = vpow.pop %v1211
        %v1213 = vadd.f32 %v1212, 1.0
        %v1214 = vrcp.pop %v1213
        %v1215 = vmul.f32 %v1213, %v1214
        %v1216 = vsub.f32 1.0, %v1215
        %v1217 = vmul.f32 %v1214, %v1216
        %v1218 = vadd.f32 %v1214, %v1217
        %vm1219 = vweird.f32 %v1213
        %vm1220 = vweird.f32 %v1214
        %vm1221 = vmor %vm1219, %vm1220
        %v1222 = vsel %vm1221, %v1214, %v1218
        %v1223 = vand.u32 2147483647, %v1213
        %vm1224 = vcmp.eq.f32.partialorder %v1223, 8.507059e+37
        %v1225 = vand.u32 %v1213, 2147483648
        %v1226 = vor.u32 1.1754944e-38, %v1225
        %v1227 = vsel %vm1224, %v1226, %v1222
        %v1228 = vmul.f32 1.0, %v1227
        %v1229 = vmul.f32 %v1208, %v1107
        %v1230 = vmul.f32 %v1189, %v1209
        %v1231 = vadd.f32 %v1229, %v1230
        %v1232 = vtanh.pop %v1231
        %v1233 = vmul.f32 %v1228, %v1232
        %s1234 = sadd.s32 %s970, 2
        %p1235 = scmp.lt.s32.totalorder %s1234, 13
        %s1236 = scalar_select %p1235, 1, 0
        %v1237 = vstv %s1236
        %vm1238 = vcmp.eq.s32.totalorder %v1237, 1
        %v1239 = vsel %vm1238, %v1231, %v1107
        %v1240 = vsel %vm1238, %v1233, %v1108
        %1241 = vst [vmem:[#allocation5 + $0x10] sm:$0xff] %v1240
        %v1242 = vld [vmem:[#allocation4 + $0x60] sm:$0xff]
        %v1243 = vld [vmem:[#allocation4 + $0x68] sm:$0xff]
        %v1244 = vld [vmem:[#allocation4 + $0x70] sm:$0xff]
        %v1245 = vld [vmem:[#allocation4 + $0x78] sm:$0xff]
        %v1246 = vpack.c.bf16 %v1240, %v1240
        %1247 = vmatpush.bf16.msra.mxu0 %v815
        %1248 = vmatpush.bf16.msra.mxu0 %v811
        %1249 = vmatpush.bf16.msra.mxu0 %v807
        %1250 = vmatpush.bf16.msra.mxu0 %v803
        %1251 = vmatpush.bf16.msra.mxu0 %v799
        %1252 = vmatpush.bf16.msra.mxu0 %v795
        %1253 = vmatpush.bf16.msra.mxu0 %v791
        %1254 = vmatpush.bf16.msra.mxu0 %v787
        %1255 = vmatmul.bf16.gmra.mxu0 %v1246
        %v1256 = vpop.f32.mrf.mxu0
        %v1257 = vadd.f32 0.0, %v1256
        %v1258 = vpop.f32.mrf.mxu0
        %1259 = vdwg.mxu0
        %1260 = vmatpush.bf16.msra.mxu0 %v816
        %1261 = vmatpush.bf16.msra.mxu0 %v812
        %1262 = vmatpush.bf16.msra.mxu0 %v808
        %1263 = vmatpush.bf16.msra.mxu0 %v804
        %1264 = vmatpush.bf16.msra.mxu0 %v800
        %1265 = vmatpush.bf16.msra.mxu0 %v796
        %1266 = vmatpush.bf16.msra.mxu0 %v792
        %1267 = vmatpush.bf16.msra.mxu0 %v788
        %1268 = vmatmul.bf16.gmra.mxu0 %v1246
        %v1269 = vpop.f32.mrf.mxu0
        %v1270 = vadd.f32 0.0, %v1269
        %v1271 = vpop.f32.mrf.mxu0
        %1272 = vdwg.mxu0
        %1273 = vmatpush.bf16.msra.mxu0 %v817
        %1274 = vmatpush.bf16.msra.mxu0 %v813
        %1275 = vmatpush.bf16.msra.mxu0 %v809
        %1276 = vmatpush.bf16.msra.mxu0 %v805
        %1277 = vmatpush.bf16.msra.mxu0 %v801
        %1278 = vmatpush.bf16.msra.mxu0 %v797
        %1279 = vmatpush.bf16.msra.mxu0 %v793
        %1280 = vmatpush.bf16.msra.mxu0 %v789
        %1281 = vmatmul.bf16.gmra.mxu0 %v1246
        %v1282 = vpop.f32.mrf.mxu0
        %v1283 = vadd.f32 0.0, %v1282
        %v1284 = vpop.f32.mrf.mxu0
        %1285 = vdwg.mxu0
        %1286 = vmatpush.bf16.msra.mxu0 %v818
        %1287 = vmatpush.bf16.msra.mxu0 %v814
        %1288 = vmatpush.bf16.msra.mxu0 %v810
        %1289 = vmatpush.bf16.msra.mxu0 %v806
        %1290 = vmatpush.bf16.msra.mxu0 %v802
        %1291 = vmatpush.bf16.msra.mxu0 %v798
        %1292 = vmatpush.bf16.msra.mxu0 %v794
        %1293 = vmatpush.bf16.msra.mxu0 %v790
        %1294 = vmatmul.bf16.gmra.mxu0 %v1246
        %v1295 = vpop.f32.mrf.mxu0
        %v1296 = vadd.f32 0.0, %v1295
        %v1297 = vpop.f32.mrf.mxu0
        %1298 = vdwg.mxu0
        %v1299 = vadd.f32 %v1242, %v1257
        %v1300 = vadd.f32 %v1243, %v1270
        %v1301 = vadd.f32 %v1244, %v1283
        %v1302 = vadd.f32 %v1245, %v1296
        %v1303 = vxor.u32 %v1299, 2147483648
        %v1304 = vmul.f32 %v1303, 1.442695
        %v1305 = vpow.pop %v1304
        %v1306 = vadd.f32 %v1305, 1.0
        %v1307 = vrcp.pop %v1306
        %v1308 = vmul.f32 %v1306, %v1307
        %v1309 = vsub.f32 1.0, %v1308
        %v1310 = vmul.f32 %v1307, %v1309
        %v1311 = vadd.f32 %v1307, %v1310
        %vm1312 = vweird.f32 %v1306
        %vm1313 = vweird.f32 %v1307
        %vm1314 = vmor %vm1312, %vm1313
        %v1315 = vsel %vm1314, %v1307, %v1311
        %v1316 = vand.u32 2147483647, %v1306
        %vm1317 = vcmp.eq.f32.partialorder %v1316, 8.507059e+37
        %v1318 = vand.u32 %v1306, 2147483648
        %v1319 = vor.u32 1.1754944e-38, %v1318
        %v1320 = vsel %vm1317, %v1319, %v1315
        %v1321 = vmul.f32 1.0, %v1320
        %v1322 = vxor.u32 %v1300, 2147483648
        %v1323 = vmul.f32 %v1322, 1.442695
        %v1324 = vpow.pop %v1323
        %v1325 = vadd.f32 %v1324, 1.0
        %v1326 = vrcp.pop %v1325
        %v1327 = vmul.f32 %v1325, %v1326
        %v1328 = vsub.f32 1.0, %v1327
        %v1329 = vmul.f32 %v1326, %v1328
        %v1330 = vadd.f32 %v1326, %v1329
        %vm1331 = vweird.f32 %v1325
        %vm1332 = vweird.f32 %v1326
        %vm1333 = vmor %vm1331, %vm1332
        %v1334 = vsel %vm1333, %v1326, %v1330
        %v1335 = vand.u32 2147483647, %v1325
        %vm1336 = vcmp.eq.f32.partialorder %v1335, 8.507059e+37
        %v1337 = vand.u32 %v1325, 2147483648
        %v1338 = vor.u32 1.1754944e-38, %v1337
        %v1339 = vsel %vm1336, %v1338, %v1334
        %v1340 = vmul.f32 1.0, %v1339
        %v1341 = vtanh.pop %v1301
        %v1342 = vxor.u32 %v1302, 2147483648
        %v1343 = vmul.f32 %v1342, 1.442695
        %v1344 = vpow.pop %v1343
        %v1345 = vadd.f32 %v1344, 1.0
        %v1346 = vrcp.pop %v1345
        %v1347 = vmul.f32 %v1345, %v1346
        %v1348 = vsub.f32 1.0, %v1347
        %v1349 = vmul.f32 %v1346, %v1348
        %v1350 = vadd.f32 %v1346, %v1349
        %vm1351 = vweird.f32 %v1345
        %vm1352 = vweird.f32 %v1346
        %vm1353 = vmor %vm1351, %vm1352
        %v1354 = vsel %vm1353, %v1346, %v1350
        %v1355 = vand.u32 2147483647, %v1345
        %vm1356 = vcmp.eq.f32.partialorder %v1355, 8.507059e+37
        %v1357 = vand.u32 %v1345, 2147483648
        %v1358 = vor.u32 1.1754944e-38, %v1357
        %v1359 = vsel %vm1356, %v1358, %v1354
        %v1360 = vmul.f32 1.0, %v1359
        %v1361 = vmul.f32 %v1340, %v1239
        %v1362 = vmul.f32 %v1321, %v1341
        %v1363 = vadd.f32 %v1361, %v1362
        %v1364 = vtanh.pop %v1363
        %v1365 = vmul.f32 %v1360, %v1364
        %s1366 = sadd.s32 %s970, 3
        %p1367 = scmp.lt.s32.totalorder %s1366, 13
        %s1368 = scalar_select %p1367, 1, 0
        %v1369 = vstv %s1368
        %vm1370 = vcmp.eq.s32.totalorder %v1369, 1
        %v1371 = vsel %vm1370, %v1363, %v1239
        %v1372 = vsel %vm1370, %v1365, %v1240
        %1373 = vst [vmem:[#allocation5 + $0x18] sm:$0xff] %v1372
        %v1374 = vld [vmem:[#allocation4 + $0x80] sm:$0xff]
        %v1375 = vld [vmem:[#allocation4 + $0x88] sm:$0xff]
        %v1376 = vld [vmem:[#allocation4 + $0x90] sm:$0xff]
        %v1377 = vld [vmem:[#allocation4 + $0x98] sm:$0xff]
        %v1378 = vpack.c.bf16 %v1372, %v1372
        %1379 = vmatpush.bf16.msra.mxu0 %v815
        %1380 = vmatpush.bf16.msra.mxu0 %v811
        %1381 = vmatpush.bf16.msra.mxu0 %v807
        %1382 = vmatpush.bf16.msra.mxu0 %v803
        %1383 = vmatpush.bf16.msra.mxu0 %v799
        %1384 = vmatpush.bf16.msra.mxu0 %v795
        %1385 = vmatpush.bf16.msra.mxu0 %v791
        %1386 = vmatpush.bf16.msra.mxu0 %v787
        %1387 = vmatmul.bf16.gmra.mxu0 %v1378
        %v1388 = vpop.f32.mrf.mxu0
        %v1389 = vadd.f32 0.0, %v1388
        %v1390 = vpop.f32.mrf.mxu0
        %1391 = vdwg.mxu0
        %1392 = vmatpush.bf16.msra.mxu0 %v816
        %1393 = vmatpush.bf16.msra.mxu0 %v812
        %1394 = vmatpush.bf16.msra.mxu0 %v808
        %1395 = vmatpush.bf16.msra.mxu0 %v804
        %1396 = vmatpush.bf16.msra.mxu0 %v800
        %1397 = vmatpush.bf16.msra.mxu0 %v796
        %1398 = vmatpush.bf16.msra.mxu0 %v792
        %1399 = vmatpush.bf16.msra.mxu0 %v788
        %1400 = vmatmul.bf16.gmra.mxu0 %v1378
        %v1401 = vpop.f32.mrf.mxu0
        %v1402 = vadd.f32 0.0, %v1401
        %v1403 = vpop.f32.mrf.mxu0
        %1404 = vdwg.mxu0
        %1405 = vmatpush.bf16.msra.mxu0 %v817
        %1406 = vmatpush.bf16.msra.mxu0 %v813
        %1407 = vmatpush.bf16.msra.mxu0 %v809
        %1408 = vmatpush.bf16.msra.mxu0 %v805
        %1409 = vmatpush.bf16.msra.mxu0 %v801
        %1410 = vmatpush.bf16.msra.mxu0 %v797
        %1411 = vmatpush.bf16.msra.mxu0 %v793
        %1412 = vmatpush.bf16.msra.mxu0 %v789
        %1413 = vmatmul.bf16.gmra.mxu0 %v1378
        %v1414 = vpop.f32.mrf.mxu0
        %v1415 = vadd.f32 0.0, %v1414
        %v1416 = vpop.f32.mrf.mxu0
        %1417 = vdwg.mxu0
        %1418 = vmatpush.bf16.msra.mxu0 %v818
        %1419 = vmatpush.bf16.msra.mxu0 %v814
        %1420 = vmatpush.bf16.msra.mxu0 %v810
        %1421 = vmatpush.bf16.msra.mxu0 %v806
        %1422 = vmatpush.bf16.msra.mxu0 %v802
        %1423 = vmatpush.bf16.msra.mxu0 %v798
        %1424 = vmatpush.bf16.msra.mxu0 %v794
        %1425 = vmatpush.bf16.msra.mxu0 %v790
        %1426 = vmatmul.bf16.gmra.mxu0 %v1378
        %v1427 = vpop.f32.mrf.mxu0
        %v1428 = vadd.f32 0.0, %v1427
        %v1429 = vpop.f32.mrf.mxu0
        %1430 = vdwg.mxu0
        %v1431 = vadd.f32 %v1374, %v1389
        %v1432 = vadd.f32 %v1375, %v1402
        %v1433 = vadd.f32 %v1376, %v1415
        %v1434 = vadd.f32 %v1377, %v1428
        %v1435 = vxor.u32 %v1431, 2147483648
        %v1436 = vmul.f32 %v1435, 1.442695
        %v1437 = vpow.pop %v1436
        %v1438 = vadd.f32 %v1437, 1.0
        %v1439 = vrcp.pop %v1438
        %v1440 = vmul.f32 %v1438, %v1439
        %v1441 = vsub.f32 1.0, %v1440
        %v1442 = vmul.f32 %v1439, %v1441
        %v1443 = vadd.f32 %v1439, %v1442
        %vm1444 = vweird.f32 %v1438
        %vm1445 = vweird.f32 %v1439
        %vm1446 = vmor %vm1444, %vm1445
        %v1447 = vsel %vm1446, %v1439, %v1443
        %v1448 = vand.u32 2147483647, %v1438
        %vm1449 = vcmp.eq.f32.partialorder %v1448, 8.507059e+37
        %v1450 = vand.u32 %v1438, 2147483648
        %v1451 = vor.u32 1.1754944e-38, %v1450
        %v1452 = vsel %vm1449, %v1451, %v1447
        %v1453 = vmul.f32 1.0, %v1452
        %v1454 = vxor.u32 %v1432, 2147483648
        %v1455 = vmul.f32 %v1454, 1.442695
        %v1456 = vpow.pop %v1455
        %v1457 = vadd.f32 %v1456, 1.0
        %v1458 = vrcp.pop %v1457
        %v1459 = vmul.f32 %v1457, %v1458
        %v1460 = vsub.f32 1.0, %v1459
        %v1461 = vmul.f32 %v1458, %v1460
        %v1462 = vadd.f32 %v1458, %v1461
        %vm1463 = vweird.f32 %v1457
        %vm1464 = vweird.f32 %v1458
        %vm1465 = vmor %vm1463, %vm1464
        %v1466 = vsel %vm1465, %v1458, %v1462
        %v1467 = vand.u32 2147483647, %v1457
        %vm1468 = vcmp.eq.f32.partialorder %v1467, 8.507059e+37
        %v1469 = vand.u32 %v1457, 2147483648
        %v1470 = vor.u32 1.1754944e-38, %v1469
        %v1471 = vsel %vm1468, %v1470, %v1466
        %v1472 = vmul.f32 1.0, %v1471
        %v1473 = vtanh.pop %v1433
        %v1474 = vxor.u32 %v1434, 2147483648
        %v1475 = vmul.f32 %v1474, 1.442695
        %v1476 = vpow.pop %v1475
        %v1477 = vadd.f32 %v1476, 1.0
        %v1478 = vrcp.pop %v1477
        %v1479 = vmul.f32 %v1477, %v1478
        %v1480 = vsub.f32 1.0, %v1479
        %v1481 = vmul.f32 %v1478, %v1480
        %v1482 = vadd.f32 %v1478, %v1481
        %vm1483 = vweird.f32 %v1477
        %vm1484 = vweird.f32 %v1478
        %vm1485 = vmor %vm1483, %vm1484
        %v1486 = vsel %vm1485, %v1478, %v1482
        %v1487 = vand.u32 2147483647, %v1477
        %vm1488 = vcmp.eq.f32.partialorder %v1487, 8.507059e+37
        %v1489 = vand.u32 %v1477, 2147483648
        %v1490 = vor.u32 1.1754944e-38, %v1489
        %v1491 = vsel %vm1488, %v1490, %v1486
        %v1492 = vmul.f32 1.0, %v1491
        %v1493 = vmul.f32 %v1472, %v1371
        %v1494 = vmul.f32 %v1453, %v1473
        %v1495 = vadd.f32 %v1493, %v1494
        %v1496 = vtanh.pop %v1495
        %v1497 = vmul.f32 %v1492, %v1496
        %s1498 = sadd.s32 %s970, 4
        %p1499 = scmp.lt.s32.totalorder %s1498, 13
        %s1500 = scalar_select %p1499, 1, 0
        %v1501 = vstv %s1500
        %vm1502 = vcmp.eq.s32.totalorder %v1501, 1
        %v1503 = vsel %vm1502, %v1495, %v1371
        %v1504 = vsel %vm1502, %v1497, %v1372
        %1505 = vst [vmem:[#allocation5 + $0x20] sm:$0xff] %v1504
        %v1506 = vld [vmem:[#allocation4 + $0xa0] sm:$0xff]
        %v1507 = vld [vmem:[#allocation4 + $0xa8] sm:$0xff]
        %v1508 = vld [vmem:[#allocation4 + $0xb0] sm:$0xff]
        %v1509 = vld [vmem:[#allocation4 + $0xb8] sm:$0xff]
        %v1510 = vpack.c.bf16 %v1504, %v1504
        %1511 = vmatpush.bf16.msra.mxu0 %v815
        %1512 = vmatpush.bf16.msra.mxu0 %v811
        %1513 = vmatpush.bf16.msra.mxu0 %v807
        %1514 = vmatpush.bf16.msra.mxu0 %v803
        %1515 = vmatpush.bf16.msra.mxu0 %v799
        %1516 = vmatpush.bf16.msra.mxu0 %v795
        %1517 = vmatpush.bf16.msra.mxu0 %v791
        %1518 = vmatpush.bf16.msra.mxu0 %v787
        %1519 = vmatmul.bf16.gmra.mxu0 %v1510
        %v1520 = vpop.f32.mrf.mxu0
        %v1521 = vadd.f32 0.0, %v1520
        %v1522 = vpop.f32.mrf.mxu0
        %1523 = vdwg.mxu0
        %1524 = vmatpush.bf16.msra.mxu0 %v816
        %1525 = vmatpush.bf16.msra.mxu0 %v812
        %1526 = vmatpush.bf16.msra.mxu0 %v808
        %1527 = vmatpush.bf16.msra.mxu0 %v804
        %1528 = vmatpush.bf16.msra.mxu0 %v800
        %1529 = vmatpush.bf16.msra.mxu0 %v796
        %1530 = vmatpush.bf16.msra.mxu0 %v792
        %1531 = vmatpush.bf16.msra.mxu0 %v788
        %1532 = vmatmul.bf16.gmra.mxu0 %v1510
        %v1533 = vpop.f32.mrf.mxu0
        %v1534 = vadd.f32 0.0, %v1533
        %v1535 = vpop.f32.mrf.mxu0
        %1536 = vdwg.mxu0
        %1537 = vmatpush.bf16.msra.mxu0 %v817
        %1538 = vmatpush.bf16.msra.mxu0 %v813
        %1539 = vmatpush.bf16.msra.mxu0 %v809
        %1540 = vmatpush.bf16.msra.mxu0 %v805
        %1541 = vmatpush.bf16.msra.mxu0 %v801
        %1542 = vmatpush.bf16.msra.mxu0 %v797
        %1543 = vmatpush.bf16.msra.mxu0 %v793
        %1544 = vmatpush.bf16.msra.mxu0 %v789
        %1545 = vmatmul.bf16.gmra.mxu0 %v1510
        %v1546 = vpop.f32.mrf.mxu0
        %v1547 = vadd.f32 0.0, %v1546
        %v1548 = vpop.f32.mrf.mxu0
        %1549 = vdwg.mxu0
        %1550 = vmatpush.bf16.msra.mxu0 %v818
        %1551 = vmatpush.bf16.msra.mxu0 %v814
        %1552 = vmatpush.bf16.msra.mxu0 %v810
        %1553 = vmatpush.bf16.msra.mxu0 %v806
        %1554 = vmatpush.bf16.msra.mxu0 %v802
        %1555 = vmatpush.bf16.msra.mxu0 %v798
        %1556 = vmatpush.bf16.msra.mxu0 %v794
        %1557 = vmatpush.bf16.msra.mxu0 %v790
        %1558 = vmatmul.bf16.gmra.mxu0 %v1510
        %v1559 = vpop.f32.mrf.mxu0
        %v1560 = vadd.f32 0.0, %v1559
        %v1561 = vpop.f32.mrf.mxu0
        %1562 = vdwg.mxu0
        %v1563 = vadd.f32 %v1506, %v1521
        %v1564 = vadd.f32 %v1507, %v1534
        %v1565 = vadd.f32 %v1508, %v1547
        %v1566 = vadd.f32 %v1509, %v1560
        %v1567 = vxor.u32 %v1563, 2147483648
        %v1568 = vmul.f32 %v1567, 1.442695
        %v1569 = vpow.pop %v1568
        %v1570 = vadd.f32 %v1569, 1.0
        %v1571 = vrcp.pop %v1570
        %v1572 = vmul.f32 %v1570, %v1571
        %v1573 = vsub.f32 1.0, %v1572
        %v1574 = vmul.f32 %v1571, %v1573
        %v1575 = vadd.f32 %v1571, %v1574
        %vm1576 = vweird.f32 %v1570
        %vm1577 = vweird.f32 %v1571
        %vm1578 = vmor %vm1576, %vm1577
        %v1579 = vsel %vm1578, %v1571, %v1575
        %v1580 = vand.u32 2147483647, %v1570
        %vm1581 = vcmp.eq.f32.partialorder %v1580, 8.507059e+37
        %v1582 = vand.u32 %v1570, 2147483648
        %v1583 = vor.u32 1.1754944e-38, %v1582
        %v1584 = vsel %vm1581, %v1583, %v1579
        %v1585 = vmul.f32 1.0, %v1584
        %v1586 = vxor.u32 %v1564, 2147483648
        %v1587 = vmul.f32 %v1586, 1.442695
        %v1588 = vpow.pop %v1587
        %v1589 = vadd.f32 %v1588, 1.0
        %v1590 = vrcp.pop %v1589
        %v1591 = vmul.f32 %v1589, %v1590
        %v1592 = vsub.f32 1.0, %v1591
        %v1593 = vmul.f32 %v1590, %v1592
        %v1594 = vadd.f32 %v1590, %v1593
        %vm1595 = vweird.f32 %v1589
        %vm1596 = vweird.f32 %v1590
        %vm1597 = vmor %vm1595, %vm1596
        %v1598 = vsel %vm1597, %v1590, %v1594
        %v1599 = vand.u32 2147483647, %v1589
        %vm1600 = vcmp.eq.f32.partialorder %v1599, 8.507059e+37
        %v1601 = vand.u32 %v1589, 2147483648
        %v1602 = vor.u32 1.1754944e-38, %v1601
        %v1603 = vsel %vm1600, %v1602, %v1598
        %v1604 = vmul.f32 1.0, %v1603
        %v1605 = vtanh.pop %v1565
        %v1606 = vxor.u32 %v1566, 2147483648
        %v1607 = vmul.f32 %v1606, 1.442695
        %v1608 = vpow.pop %v1607
        %v1609 = vadd.f32 %v1608, 1.0
        %v1610 = vrcp.pop %v1609
        %v1611 = vmul.f32 %v1609, %v1610
        %v1612 = vsub.f32 1.0, %v1611
        %v1613 = vmul.f32 %v1610, %v1612
        %v1614 = vadd.f32 %v1610, %v1613
        %vm1615 = vweird.f32 %v1609
        %vm1616 = vweird.f32 %v1610
        %vm1617 = vmor %vm1615, %vm1616
        %v1618 = vsel %vm1617, %v1610, %v1614
        %v1619 = vand.u32 2147483647, %v1609
        %vm1620 = vcmp.eq.f32.partialorder %v1619, 8.507059e+37
        %v1621 = vand.u32 %v1609, 2147483648
        %v1622 = vor.u32 1.1754944e-38, %v1621
        %v1623 = vsel %vm1620, %v1622, %v1618
        %v1624 = vmul.f32 1.0, %v1623
        %v1625 = vmul.f32 %v1604, %v1503
        %v1626 = vmul.f32 %v1585, %v1605
        %v1627 = vadd.f32 %v1625, %v1626
        %v1628 = vtanh.pop %v1627
        %v1629 = vmul.f32 %v1624, %v1628
        %s1630 = sadd.s32 %s970, 5
        %p1631 = scmp.lt.s32.totalorder %s1630, 13
        %s1632 = scalar_select %p1631, 1, 0
        %v1633 = vstv %s1632
        %vm1634 = vcmp.eq.s32.totalorder %v1633, 1
        %v1635 = vsel %vm1634, %v1627, %v1503
        %v1636 = vsel %vm1634, %v1629, %v1504
        %1637 = vst [vmem:[#allocation5 + $0x28] sm:$0xff] %v1636
        %v1638 = vld [vmem:[#allocation4 + $0xc0] sm:$0xff]
        %v1639 = vld [vmem:[#allocation4 + $0xc8] sm:$0xff]
        %v1640 = vld [vmem:[#allocation4 + $0xd0] sm:$0xff]
        %v1641 = vld [vmem:[#allocation4 + $0xd8] sm:$0xff]
        %v1642 = vpack.c.bf16 %v1636, %v1636
        %1643 = vmatpush.bf16.msra.mxu0 %v815
        %1644 = vmatpush.bf16.msra.mxu0 %v811
        %1645 = vmatpush.bf16.msra.mxu0 %v807
        %1646 = vmatpush.bf16.msra.mxu0 %v803
        %1647 = vmatpush.bf16.msra.mxu0 %v799
        %1648 = vmatpush.bf16.msra.mxu0 %v795
        %1649 = vmatpush.bf16.msra.mxu0 %v791
        %1650 = vmatpush.bf16.msra.mxu0 %v787
        %1651 = vmatmul.bf16.gmra.mxu0 %v1642
        %v1652 = vpop.f32.mrf.mxu0
        %v1653 = vadd.f32 0.0, %v1652
        %v1654 = vpop.f32.mrf.mxu0
        %1655 = vdwg.mxu0
        %1656 = vmatpush.bf16.msra.mxu0 %v816
        %1657 = vmatpush.bf16.msra.mxu0 %v812
        %1658 = vmatpush.bf16.msra.mxu0 %v808
        %1659 = vmatpush.bf16.msra.mxu0 %v804
        %1660 = vmatpush.bf16.msra.mxu0 %v800
        %1661 = vmatpush.bf16.msra.mxu0 %v796
        %1662 = vmatpush.bf16.msra.mxu0 %v792
        %1663 = vmatpush.bf16.msra.mxu0 %v788
        %1664 = vmatmul.bf16.gmra.mxu0 %v1642
        %v1665 = vpop.f32.mrf.mxu0
        %v1666 = vadd.f32 0.0, %v1665
        %v1667 = vpop.f32.mrf.mxu0
        %1668 = vdwg.mxu0
        %1669 = vmatpush.bf16.msra.mxu0 %v817
        %1670 = vmatpush.bf16.msra.mxu0 %v813
        %1671 = vmatpush.bf16.msra.mxu0 %v809
        %1672 = vmatpush.bf16.msra.mxu0 %v805
        %1673 = vmatpush.bf16.msra.mxu0 %v801
        %1674 = vmatpush.bf16.msra.mxu0 %v797
        %1675 = vmatpush.bf16.msra.mxu0 %v793
        %1676 = vmatpush.bf16.msra.mxu0 %v789
        %1677 = vmatmul.bf16.gmra.mxu0 %v1642
        %v1678 = vpop.f32.mrf.mxu0
        %v1679 = vadd.f32 0.0, %v1678
        %v1680 = vpop.f32.mrf.mxu0
        %1681 = vdwg.mxu0
        %1682 = vmatpush.bf16.msra.mxu0 %v818
        %1683 = vmatpush.bf16.msra.mxu0 %v814
        %1684 = vmatpush.bf16.msra.mxu0 %v810
        %1685 = vmatpush.bf16.msra.mxu0 %v806
        %1686 = vmatpush.bf16.msra.mxu0 %v802
        %1687 = vmatpush.bf16.msra.mxu0 %v798
        %1688 = vmatpush.bf16.msra.mxu0 %v794
        %1689 = vmatpush.bf16.msra.mxu0 %v790
        %1690 = vmatmul.bf16.gmra.mxu0 %v1642
        %v1691 = vpop.f32.mrf.mxu0
        %v1692 = vadd.f32 0.0, %v1691
        %v1693 = vpop.f32.mrf.mxu0
        %1694 = vdwg.mxu0
        %v1695 = vadd.f32 %v1638, %v1653
        %v1696 = vadd.f32 %v1639, %v1666
        %v1697 = vadd.f32 %v1640, %v1679
        %v1698 = vadd.f32 %v1641, %v1692
        %v1699 = vxor.u32 %v1695, 2147483648
        %v1700 = vmul.f32 %v1699, 1.442695
        %v1701 = vpow.pop %v1700
        %v1702 = vadd.f32 %v1701, 1.0
        %v1703 = vrcp.pop %v1702
        %v1704 = vmul.f32 %v1702, %v1703
        %v1705 = vsub.f32 1.0, %v1704
        %v1706 = vmul.f32 %v1703, %v1705
        %v1707 = vadd.f32 %v1703, %v1706
        %vm1708 = vweird.f32 %v1702
        %vm1709 = vweird.f32 %v1703
        %vm1710 = vmor %vm1708, %vm1709
        %v1711 = vsel %vm1710, %v1703, %v1707
        %v1712 = vand.u32 2147483647, %v1702
        %vm1713 = vcmp.eq.f32.partialorder %v1712, 8.507059e+37
        %v1714 = vand.u32 %v1702, 2147483648
        %v1715 = vor.u32 1.1754944e-38, %v1714
        %v1716 = vsel %vm1713, %v1715, %v1711
        %v1717 = vmul.f32 1.0, %v1716
        %v1718 = vxor.u32 %v1696, 2147483648
        %v1719 = vmul.f32 %v1718, 1.442695
        %v1720 = vpow.pop %v1719
        %v1721 = vadd.f32 %v1720, 1.0
        %v1722 = vrcp.pop %v1721
        %v1723 = vmul.f32 %v1721, %v1722
        %v1724 = vsub.f32 1.0, %v1723
        %v1725 = vmul.f32 %v1722, %v1724
        %v1726 = vadd.f32 %v1722, %v1725
        %vm1727 = vweird.f32 %v1721
        %vm1728 = vweird.f32 %v1722
        %vm1729 = vmor %vm1727, %vm1728
        %v1730 = vsel %vm1729, %v1722, %v1726
        %v1731 = vand.u32 2147483647, %v1721
        %vm1732 = vcmp.eq.f32.partialorder %v1731, 8.507059e+37
        %v1733 = vand.u32 %v1721, 2147483648
        %v1734 = vor.u32 1.1754944e-38, %v1733
        %v1735 = vsel %vm1732, %v1734, %v1730
        %v1736 = vmul.f32 1.0, %v1735
        %v1737 = vtanh.pop %v1697
        %v1738 = vxor.u32 %v1698, 2147483648
        %v1739 = vmul.f32 %v1738, 1.442695
        %v1740 = vpow.pop %v1739
        %v1741 = vadd.f32 %v1740, 1.0
        %v1742 = vrcp.pop %v1741
        %v1743 = vmul.f32 %v1741, %v1742
        %v1744 = vsub.f32 1.0, %v1743
        %v1745 = vmul.f32 %v1742, %v1744
        %v1746 = vadd.f32 %v1742, %v1745
        %vm1747 = vweird.f32 %v1741
        %vm1748 = vweird.f32 %v1742
        %vm1749 = vmor %vm1747, %vm1748
        %v1750 = vsel %vm1749, %v1742, %v1746
        %v1751 = vand.u32 2147483647, %v1741
        %vm1752 = vcmp.eq.f32.partialorder %v1751, 8.507059e+37
        %v1753 = vand.u32 %v1741, 2147483648
        %v1754 = vor.u32 1.1754944e-38, %v1753
        %v1755 = vsel %vm1752, %v1754, %v1750
        %v1756 = vmul.f32 1.0, %v1755
        %v1757 = vmul.f32 %v1736, %v1635
        %v1758 = vmul.f32 %v1717, %v1737
        %v1759 = vadd.f32 %v1757, %v1758
        %v1760 = vtanh.pop %v1759
        %v1761 = vmul.f32 %v1756, %v1760
        %s1762 = sadd.s32 %s970, 6
        %p1763 = scmp.lt.s32.totalorder %s1762, 13
        %s1764 = scalar_select %p1763, 1, 0
        %v1765 = vstv %s1764
        %vm1766 = vcmp.eq.s32.totalorder %v1765, 1
        %v1767 = vsel %vm1766, %v1759, %v1635
        %v1768 = vsel %vm1766, %v1761, %v1636
        %1769 = vst [vmem:[#allocation5 + $0x30] sm:$0xff] %v1768
        %v1770 = vld [vmem:[#allocation4 + $0xe0] sm:$0xff]
        %v1771 = vld [vmem:[#allocation4 + $0xe8] sm:$0xff]
        %v1772 = vld [vmem:[#allocation4 + $0xf0] sm:$0xff]
        %v1773 = vld [vmem:[#allocation4 + $0xf8] sm:$0xff]
        %v1774 = vpack.c.bf16 %v1768, %v1768
        %1775 = vmatpush.bf16.msra.mxu0 %v815
        %1776 = vmatpush.bf16.msra.mxu0 %v811
        %1777 = vmatpush.bf16.msra.mxu0 %v807
        %1778 = vmatpush.bf16.msra.mxu0 %v803
        %1779 = vmatpush.bf16.msra.mxu0 %v799
        %1780 = vmatpush.bf16.msra.mxu0 %v795
        %1781 = vmatpush.bf16.msra.mxu0 %v791
        %1782 = vmatpush.bf16.msra.mxu0 %v787
        %1783 = vmatmul.bf16.gmra.mxu0 %v1774
        %v1784 = vpop.f32.mrf.mxu0
        %v1785 = vadd.f32 0.0, %v1784
        %v1786 = vpop.f32.mrf.mxu0
        %1787 = vdwg.mxu0
        %1788 = vmatpush.bf16.msra.mxu0 %v816
        %1789 = vmatpush.bf16.msra.mxu0 %v812
        %1790 = vmatpush.bf16.msra.mxu0 %v808
        %1791 = vmatpush.bf16.msra.mxu0 %v804
        %1792 = vmatpush.bf16.msra.mxu0 %v800
        %1793 = vmatpush.bf16.msra.mxu0 %v796
        %1794 = vmatpush.bf16.msra.mxu0 %v792
        %1795 = vmatpush.bf16.msra.mxu0 %v788
        %1796 = vmatmul.bf16.gmra.mxu0 %v1774
        %v1797 = vpop.f32.mrf.mxu0
        %v1798 = vadd.f32 0.0, %v1797
        %v1799 = vpop.f32.mrf.mxu0
        %1800 = vdwg.mxu0
        %1801 = vmatpush.bf16.msra.mxu0 %v817
        %1802 = vmatpush.bf16.msra.mxu0 %v813
        %1803 = vmatpush.bf16.msra.mxu0 %v809
        %1804 = vmatpush.bf16.msra.mxu0 %v805
        %1805 = vmatpush.bf16.msra.mxu0 %v801
        %1806 = vmatpush.bf16.msra.mxu0 %v797
        %1807 = vmatpush.bf16.msra.mxu0 %v793
        %1808 = vmatpush.bf16.msra.mxu0 %v789
        %1809 = vmatmul.bf16.gmra.mxu0 %v1774
        %v1810 = vpop.f32.mrf.mxu0
        %v1811 = vadd.f32 0.0, %v1810
        %v1812 = vpop.f32.mrf.mxu0
        %1813 = vdwg.mxu0
        %1814 = vmatpush.bf16.msra.mxu0 %v818
        %1815 = vmatpush.bf16.msra.mxu0 %v814
        %1816 = vmatpush.bf16.msra.mxu0 %v810
        %1817 = vmatpush.bf16.msra.mxu0 %v806
        %1818 = vmatpush.bf16.msra.mxu0 %v802
        %1819 = vmatpush.bf16.msra.mxu0 %v798
        %1820 = vmatpush.bf16.msra.mxu0 %v794
        %1821 = vmatpush.bf16.msra.mxu0 %v790
        %1822 = vmatmul.bf16.gmra.mxu0 %v1774
        %v1823 = vpop.f32.mrf.mxu0
        %v1824 = vadd.f32 0.0, %v1823
        %v1825 = vpop.f32.mrf.mxu0
        %1826 = vdwg.mxu0
        %v1827 = vadd.f32 %v1770, %v1785
        %v1828 = vadd.f32 %v1771, %v1798
        %v1829 = vadd.f32 %v1772, %v1811
        %v1830 = vadd.f32 %v1773, %v1824
        %v1831 = vxor.u32 %v1827, 2147483648
        %v1832 = vmul.f32 %v1831, 1.442695
        %v1833 = vpow.pop %v1832
        %v1834 = vadd.f32 %v1833, 1.0
        %v1835 = vrcp.pop %v1834
        %v1836 = vmul.f32 %v1834, %v1835
        %v1837 = vsub.f32 1.0, %v1836
        %v1838 = vmul.f32 %v1835, %v1837
        %v1839 = vadd.f32 %v1835, %v1838
        %vm1840 = vweird.f32 %v1834
        %vm1841 = vweird.f32 %v1835
        %vm1842 = vmor %vm1840, %vm1841
        %v1843 = vsel %vm1842, %v1835, %v1839
        %v1844 = vand.u32 2147483647, %v1834
        %vm1845 = vcmp.eq.f32.partialorder %v1844, 8.507059e+37
        %v1846 = vand.u32 %v1834, 2147483648
        %v1847 = vor.u32 1.1754944e-38, %v1846
        %v1848 = vsel %vm1845, %v1847, %v1843
        %v1849 = vmul.f32 1.0, %v1848
        %v1850 = vxor.u32 %v1828, 2147483648
        %v1851 = vmul.f32 %v1850, 1.442695
        %v1852 = vpow.pop %v1851
        %v1853 = vadd.f32 %v1852, 1.0
        %v1854 = vrcp.pop %v1853
        %v1855 = vmul.f32 %v1853, %v1854
        %v1856 = vsub.f32 1.0, %v1855
        %v1857 = vmul.f32 %v1854, %v1856
        %v1858 = vadd.f32 %v1854, %v1857
        %vm1859 = vweird.f32 %v1853
        %vm1860 = vweird.f32 %v1854
        %vm1861 = vmor %vm1859, %vm1860
        %v1862 = vsel %vm1861, %v1854, %v1858
        %v1863 = vand.u32 2147483647, %v1853
        %vm1864 = vcmp.eq.f32.partialorder %v1863, 8.507059e+37
        %v1865 = vand.u32 %v1853, 2147483648
        %v1866 = vor.u32 1.1754944e-38, %v1865
        %v1867 = vsel %vm1864, %v1866, %v1862
        %v1868 = vmul.f32 1.0, %v1867
        %v1869 = vtanh.pop %v1829
        %v1870 = vxor.u32 %v1830, 2147483648
        %v1871 = vmul.f32 %v1870, 1.442695
        %v1872 = vpow.pop %v1871
        %v1873 = vadd.f32 %v1872, 1.0
        %v1874 = vrcp.pop %v1873
        %v1875 = vmul.f32 %v1873, %v1874
        %v1876 = vsub.f32 1.0, %v1875
        %v1877 = vmul.f32 %v1874, %v1876
        %v1878 = vadd.f32 %v1874, %v1877
        %vm1879 = vweird.f32 %v1873
        %vm1880 = vweird.f32 %v1874
        %vm1881 = vmor %vm1879, %vm1880
        %v1882 = vsel %vm1881, %v1874, %v1878
        %v1883 = vand.u32 2147483647, %v1873
        %vm1884 = vcmp.eq.f32.partialorder %v1883, 8.507059e+37
        %v1885 = vand.u32 %v1873, 2147483648
        %v1886 = vor.u32 1.1754944e-38, %v1885
        %v1887 = vsel %vm1884, %v1886, %v1882
        %v1888 = vmul.f32 1.0, %v1887
        %v1889 = vmul.f32 %v1868, %v1767
        %v1890 = vmul.f32 %v1849, %v1869
        %v1891 = vadd.f32 %v1889, %v1890
        %v1892 = vtanh.pop %v1891
        %v1893 = vmul.f32 %v1888, %v1892
        %s1894 = sadd.s32 %s970, 7
        %p1895 = scmp.lt.s32.totalorder %s1894, 13
        %s1896 = scalar_select %p1895, 1, 0
        %v1897 = vstv %s1896
        %vm1898 = vcmp.eq.s32.totalorder %v1897, 1
        %v1899 = vsel %vm1898, %v1891, %v1767
        %v1900 = vsel %vm1898, %v1893, %v1768
        %1901 = vst [vmem:[#allocation5 + $0x38] sm:$0xff] %v1900
        %1902 = vst [vmem:[#allocation2] sm:$0xff] %v1900
        %1903 = vst [vmem:[#allocation3] sm:$0xff] %v1899
        %v1904 = vld [vmem:[#allocation5] sm:$0xff]
        %v1905 = vld [vmem:[#allocation5 + $0x8] sm:$0xff]
        %v1906 = vld [vmem:[#allocation5 + $0x10] sm:$0xff]
        %v1907 = vld [vmem:[#allocation5 + $0x18] sm:$0xff]
        %v1908 = vld [vmem:[#allocation5 + $0x20] sm:$0xff]
        %v1909 = vld [vmem:[#allocation5 + $0x28] sm:$0xff]
        %v1910 = vld [vmem:[#allocation5 + $0x30] sm:$0xff]
        %v1911 = vld [vmem:[#allocation5 + $0x38] sm:$0xff]
        %v1912 = vpack.c.bf16 %v1905, %v1904
        %v1913 = vpack.c.bf16 %v1907, %v1906
        %v1914 = vpack.c.bf16 %v1909, %v1908
        %v1915 = vpack.c.bf16 %v1911, %v1910
        %v1916 = vld [vmem:[#allocation11] sm:$0xff]
        %v1917 = vld [vmem:[#allocation11 + $0x8] sm:$0xff]
        %v1918 = vld [vmem:[#allocation11 + $0x10] sm:$0xff]
        %v1919 = vld [vmem:[#allocation11 + $0x18] sm:$0xff]
        %v1920 = vld [vmem:[#allocation11 + $0x20] sm:$0xff]
        %v1921 = vld [vmem:[#allocation11 + $0x28] sm:$0xff]
        %v1922 = vld [vmem:[#allocation11 + $0x30] sm:$0xff]
        %v1923 = vld [vmem:[#allocation11 + $0x38] sm:$0xff]
        %v1924 = vld [vmem:[#allocation11 + $0x40] sm:$0xff]
        %v1925 = vld [vmem:[#allocation11 + $0x48] sm:$0xff]
        %v1926 = vld [vmem:[#allocation11 + $0x50] sm:$0xff]
        %v1927 = vld [vmem:[#allocation11 + $0x58] sm:$0xff]
        %v1928 = vld [vmem:[#allocation11 + $0x60] sm:$0xff]
        %v1929 = vld [vmem:[#allocation11 + $0x68] sm:$0xff]
        %v1930 = vld [vmem:[#allocation11 + $0x70] sm:$0xff]
        %v1931 = vld [vmem:[#allocation11 + $0x78] sm:$0xff]
        %v1932 = vld [vmem:[#allocation11 + $0x80] sm:$0xff]
        %v1933 = vld [vmem:[#allocation11 + $0x88] sm:$0xff]
        %v1934 = vld [vmem:[#allocation11 + $0x90] sm:$0xff]
        %v1935 = vld [vmem:[#allocation11 + $0x98] sm:$0xff]
        %v1936 = vld [vmem:[#allocation11 + $0xa0] sm:$0xff]
        %v1937 = vld [vmem:[#allocation11 + $0xa8] sm:$0xff]
        %v1938 = vld [vmem:[#allocation11 + $0xb0] sm:$0xff]
        %v1939 = vld [vmem:[#allocation11 + $0xb8] sm:$0xff]
        %v1940 = vld [vmem:[#allocation11 + $0xc0] sm:$0xff]
        %v1941 = vld [vmem:[#allocation11 + $0xc8] sm:$0xff]
        %v1942 = vld [vmem:[#allocation11 + $0xd0] sm:$0xff]
        %v1943 = vld [vmem:[#allocation11 + $0xd8] sm:$0xff]
        %v1944 = vld [vmem:[#allocation11 + $0xe0] sm:$0xff]
        %v1945 = vld [vmem:[#allocation11 + $0xe8] sm:$0xff]
        %v1946 = vld [vmem:[#allocation11 + $0xf0] sm:$0xff]
        %v1947 = vld [vmem:[#allocation11 + $0xf8] sm:$0xff]
        %v1948 = vld [vmem:[%s6] sm:$0xf]
        %v1950 = vperm.slane %v1948, 0
        %v1951 = vperm.slane %v1948, 1
        %v1952 = vperm.slane %v1948, 2
        %v1953 = vperm.slane %v1948, 3
        %v1990 = vunpack.c.l.b16 %v1916
        %v1991 = vunpack.c.h.b16 %v1916
        %v1992 = vunpack.c.l.b16 %v1917
        %v1993 = vunpack.c.h.b16 %v1917
        %v1994 = vunpack.c.l.b16 %v1918
        %v1995 = vunpack.c.h.b16 %v1918
        %v1996 = vunpack.c.l.b16 %v1919
        %v1997 = vunpack.c.h.b16 %v1919
        %v1998 = vunpack.c.l.b16 %v1920
        %v1999 = vunpack.c.h.b16 %v1920
        %v2000 = vunpack.c.l.b16 %v1921
        %v2001 = vunpack.c.h.b16 %v1921
        %v2002 = vunpack.c.l.b16 %v1922
        %v2003 = vunpack.c.h.b16 %v1922
        %v2004 = vunpack.c.l.b16 %v1923
        %v2005 = vunpack.c.h.b16 %v1923
        %v2006 = vunpack.c.l.b16 %v1924
        %v2007 = vunpack.c.h.b16 %v1924
        %v2008 = vunpack.c.l.b16 %v1925
        %v2009 = vunpack.c.h.b16 %v1925
        %v2010 = vunpack.c.l.b16 %v1926
        %v2011 = vunpack.c.h.b16 %v1926
        %v2012 = vunpack.c.l.b16 %v1927
        %v2013 = vunpack.c.h.b16 %v1927
        %v2014 = vunpack.c.l.b16 %v1928
        %v2015 = vunpack.c.h.b16 %v1928
        %v2016 = vunpack.c.l.b16 %v1929
        %v2017 = vunpack.c.h.b16 %v1929
        %v2018 = vunpack.c.l.b16 %v1930
        %v2019 = vunpack.c.h.b16 %v1930
        %v2020 = vunpack.c.l.b16 %v1931
        %v2021 = vunpack.c.h.b16 %v1931
        %v2022 = vunpack.c.l.b16 %v1932
        %v2023 = vunpack.c.h.b16 %v1932
        %v2024 = vunpack.c.l.b16 %v1933
        %v2025 = vunpack.c.h.b16 %v1933
        %v2026 = vunpack.c.l.b16 %v1934
        %v2027 = vunpack.c.h.b16 %v1934
        %v2028 = vunpack.c.l.b16 %v1935
        %v2029 = vunpack.c.h.b16 %v1935
        %v2030 = vunpack.c.l.b16 %v1936
        %v2031 = vunpack.c.h.b16 %v1936
        %v2032 = vunpack.c.l.b16 %v1937
        %v2033 = vunpack.c.h.b16 %v1937
        %v2034 = vunpack.c.l.b16 %v1938
        %v2035 = vunpack.c.h.b16 %v1938
        %v2036 = vunpack.c.l.b16 %v1939
        %v2037 = vunpack.c.h.b16 %v1939
        %v2038 = vunpack.c.l.b16 %v1940
        %v2039 = vunpack.c.h.b16 %v1940
        %v2040 = vunpack.c.l.b16 %v1941
        %v2041 = vunpack.c.h.b16 %v1941
        %v2042 = vunpack.c.l.b16 %v1942
        %v2043 = vunpack.c.h.b16 %v1942
        %v2044 = vunpack.c.l.b16 %v1943
        %v2045 = vunpack.c.h.b16 %v1943
        %v2046 = vunpack.c.l.b16 %v1944
        %v2047 = vunpack.c.h.b16 %v1944
        %v2048 = vunpack.c.l.b16 %v1945
        %v2049 = vunpack.c.h.b16 %v1945
        %v2050 = vunpack.c.l.b16 %v1946
        %v2051 = vunpack.c.h.b16 %v1946
        %v2052 = vunpack.c.l.b16 %v1947
        %v2053 = vunpack.c.h.b16 %v1947
        %v2054 = vpack.c.b16 %v1994, %v1990
        %v2055 = vpack.c.b16 %v1995, %v1991
        %v2056 = vpack.c.b16 %v1996, %v1992
        %v2057 = vpack.c.b16 %v1997, %v1993
        %v2058 = vpack.c.b16 %v2002, %v1998
        %v2059 = vpack.c.b16 %v2003, %v1999
        %v2060 = vpack.c.b16 %v2004, %v2000
        %v2061 = vpack.c.b16 %v2005, %v2001
        %v2062 = vpack.c.b16 %v2010, %v2006
        %v2063 = vpack.c.b16 %v2011, %v2007
        %v2064 = vpack.c.b16 %v2012, %v2008
        %v2065 = vpack.c.b16 %v2013, %v2009
        %v2066 = vpack.c.b16 %v2018, %v2014
        %v2067 = vpack.c.b16 %v2019, %v2015
        %v2068 = vpack.c.b16 %v2020, %v2016
        %v2069 = vpack.c.b16 %v2021, %v2017
        %v2070 = vpack.c.b16 %v2026, %v2022
        %v2071 = vpack.c.b16 %v2027, %v2023
        %v2072 = vpack.c.b16 %v2028, %v2024
        %v2073 = vpack.c.b16 %v2029, %v2025
        %v2074 = vpack.c.b16 %v2034, %v2030
        %v2075 = vpack.c.b16 %v2035, %v2031
        %v2076 = vpack.c.b16 %v2036, %v2032
        %v2077 = vpack.c.b16 %v2037, %v2033
        %v2078 = vpack.c.b16 %v2042, %v2038
        %v2079 = vpack.c.b16 %v2043, %v2039
        %v2080 = vpack.c.b16 %v2044, %v2040
        %v2081 = vpack.c.b16 %v2045, %v2041
        %v2082 = vpack.c.b16 %v2050, %v2046
        %v2083 = vpack.c.b16 %v2051, %v2047
        %v2084 = vpack.c.b16 %v2052, %v2048
        %v2085 = vpack.c.b16 %v2053, %v2049
        %2118 = vmatpush.bf16.msra.mxu0 %v2082
        %2119 = vmatpush.bf16.msra.mxu0 %v2078
        %2120 = vmatpush.bf16.msra.mxu0 %v2074
        %2121 = vmatpush.bf16.msra.mxu0 %v2070
        %2122 = vmatpush.bf16.msra.mxu0 %v2066
        %2123 = vmatpush.bf16.msra.mxu0 %v2062
        %2124 = vmatpush.bf16.msra.mxu0 %v2058
        %2125 = vmatpush.bf16.msra.mxu0 %v2054
        %2126 = vmatmul.bf16.gmra.mxu0 %v1912
        %v2127 = vpop.f32.mrf.mxu0
        %v2128 = vadd.f32 %v1950, %v2127
        %v2129 = vpop.f32.mrf.mxu0
        %v2130 = vadd.f32 %v1950, %v2129
        %2131 = vmatmul.bf16.gmra.mxu0 %v1913
        %v2132 = vpop.f32.mrf.mxu0
        %v2133 = vadd.f32 %v1950, %v2132
        %v2134 = vpop.f32.mrf.mxu0
        %v2135 = vadd.f32 %v1950, %v2134
        %2136 = vmatmul.bf16.gmra.mxu0 %v1914
        %v2137 = vpop.f32.mrf.mxu0
        %v2138 = vadd.f32 %v1950, %v2137
        %v2139 = vpop.f32.mrf.mxu0
        %v2140 = vadd.f32 %v1950, %v2139
        %2141 = vmatmul.bf16.gmra.mxu0 %v1915
        %v2142 = vpop.f32.mrf.mxu0
        %v2143 = vadd.f32 %v1950, %v2142
        %v2144 = vpop.f32.mrf.mxu0
        %v2145 = vadd.f32 %v1950, %v2144
        %2146 = vdwg.mxu0
        %2147 = vmatpush.bf16.msra.mxu0 %v2083
        %2148 = vmatpush.bf16.msra.mxu0 %v2079
        %2149 = vmatpush.bf16.msra.mxu0 %v2075
        %2150 = vmatpush.bf16.msra.mxu0 %v2071
        %2151 = vmatpush.bf16.msra.mxu0 %v2067
        %2152 = vmatpush.bf16.msra.mxu0 %v2063
        %2153 = vmatpush.bf16.msra.mxu0 %v2059
        %2154 = vmatpush.bf16.msra.mxu0 %v2055
        %2155 = vmatmul.bf16.gmra.mxu0 %v1912
        %v2156 = vpop.f32.mrf.mxu0
        %v2157 = vadd.f32 %v1951, %v2156
        %v2158 = vpop.f32.mrf.mxu0
        %v2159 = vadd.f32 %v1951, %v2158
        %2160 = vmatmul.bf16.gmra.mxu0 %v1913
        %v2161 = vpop.f32.mrf.mxu0
        %v2162 = vadd.f32 %v1951, %v2161
        %v2163 = vpop.f32.mrf.mxu0
        %v2164 = vadd.f32 %v1951, %v2163
        %2165 = vmatmul.bf16.gmra.mxu0 %v1914
        %v2166 = vpop.f32.mrf.mxu0
        %v2167 = vadd.f32 %v1951, %v2166
        %v2168 = vpop.f32.mrf.mxu0
        %v2169 = vadd.f32 %v1951, %v2168
        %2170 = vmatmul.bf16.gmra.mxu0 %v1915
        %v2171 = vpop.f32.mrf.mxu0
        %v2172 = vadd.f32 %v1951, %v2171
        %v2173 = vpop.f32.mrf.mxu0
        %v2174 = vadd.f32 %v1951, %v2173
        %2175 = vdwg.mxu0
        %2176 = vmatpush.bf16.msra.mxu0 %v2084
        %2177 = vmatpush.bf16.msra.mxu0 %v2080
        %2178 = vmatpush.bf16.msra.mxu0 %v2076
        %2179 = vmatpush.bf16.msra.mxu0 %v2072
        %2180 = vmatpush.bf16.msra.mxu0 %v2068
        %2181 = vmatpush.bf16.msra.mxu0 %v2064
        %2182 = vmatpush.bf16.msra.mxu0 %v2060
        %2183 = vmatpush.bf16.msra.mxu0 %v2056
        %2184 = vmatmul.bf16.gmra.mxu0 %v1912
        %v2185 = vpop.f32.mrf.mxu0
        %v2186 = vadd.f32 %v1952, %v2185
        %v2187 = vpop.f32.mrf.mxu0
        %v2188 = vadd.f32 %v1952, %v2187
        %2189 = vmatmul.bf16.gmra.mxu0 %v1913
        %v2190 = vpop.f32.mrf.mxu0
        %v2191 = vadd.f32 %v1952, %v2190
        %v2192 = vpop.f32.mrf.mxu0
        %v2193 = vadd.f32 %v1952, %v2192
        %2194 = vmatmul.bf16.gmra.mxu0 %v1914
        %v2195 = vpop.f32.mrf.mxu0
        %v2196 = vadd.f32 %v1952, %v2195
        %v2197 = vpop.f32.mrf.mxu0
        %v2198 = vadd.f32 %v1952, %v2197
        %2199 = vmatmul.bf16.gmra.mxu0 %v1915
        %v2200 = vpop.f32.mrf.mxu0
        %v2201 = vadd.f32 %v1952, %v2200
        %v2202 = vpop.f32.mrf.mxu0
        %v2203 = vadd.f32 %v1952, %v2202
        %2204 = vdwg.mxu0
        %2205 = vmatpush.bf16.msra.mxu0 %v2085
        %2206 = vmatpush.bf16.msra.mxu0 %v2081
        %2207 = vmatpush.bf16.msra.mxu0 %v2077
        %2208 = vmatpush.bf16.msra.mxu0 %v2073
        %2209 = vmatpush.bf16.msra.mxu0 %v2069
        %2210 = vmatpush.bf16.msra.mxu0 %v2065
        %2211 = vmatpush.bf16.msra.mxu0 %v2061
        %2212 = vmatpush.bf16.msra.mxu0 %v2057
        %2213 = vmatmul.bf16.gmra.mxu0 %v1912
        %v2214 = vpop.f32.mrf.mxu0
        %v2215 = vadd.f32 %v1953, %v2214
        %v2216 = vpop.f32.mrf.mxu0
        %v2217 = vadd.f32 %v1953, %v2216
        %2218 = vmatmul.bf16.gmra.mxu0 %v1913
        %v2219 = vpop.f32.mrf.mxu0
        %v2220 = vadd.f32 %v1953, %v2219
        %v2221 = vpop.f32.mrf.mxu0
        %v2222 = vadd.f32 %v1953, %v2221
        %2223 = vmatmul.bf16.gmra.mxu0 %v1914
        %v2224 = vpop.f32.mrf.mxu0
        %v2225 = vadd.f32 %v1953, %v2224
        %v2226 = vpop.f32.mrf.mxu0
        %v2227 = vadd.f32 %v1953, %v2226
        %2228 = vmatmul.bf16.gmra.mxu0 %v1915
        %v2229 = vpop.f32.mrf.mxu0
        %v2230 = vadd.f32 %v1953, %v2229
        %v2231 = vpop.f32.mrf.mxu0
        %v2232 = vadd.f32 %v1953, %v2231
        %2233 = vdwg.mxu0
        %2234 = vst [vmem:[#allocation4] sm:$0xff] %v2128
        %2235 = vst [vmem:[#allocation4 + $0x8] sm:$0xff] %v2157
        %2236 = vst [vmem:[#allocation4 + $0x10] sm:$0xff] %v2186
        %2237 = vst [vmem:[#allocation4 + $0x18] sm:$0xff] %v2215
        %2238 = vst [vmem:[#allocation4 + $0x20] sm:$0xff] %v2130
        %2239 = vst [vmem:[#allocation4 + $0x28] sm:$0xff] %v2159
        %2240 = vst [vmem:[#allocation4 + $0x30] sm:$0xff] %v2188
        %2241 = vst [vmem:[#allocation4 + $0x38] sm:$0xff] %v2217
        %2242 = vst [vmem:[#allocation4 + $0x40] sm:$0xff] %v2133
        %2243 = vst [vmem:[#allocation4 + $0x48] sm:$0xff] %v2162
        %2244 = vst [vmem:[#allocation4 + $0x50] sm:$0xff] %v2191
        %2245 = vst [vmem:[#allocation4 + $0x58] sm:$0xff] %v2220
        %2246 = vst [vmem:[#allocation4 + $0x60] sm:$0xff] %v2135
        %2247 = vst [vmem:[#allocation4 + $0x68] sm:$0xff] %v2164
        %2248 = vst [vmem:[#allocation4 + $0x70] sm:$0xff] %v2193
        %2249 = vst [vmem:[#allocation4 + $0x78] sm:$0xff] %v2222
        %2250 = vst [vmem:[#allocation4 + $0x80] sm:$0xff] %v2138
        %2251 = vst [vmem:[#allocation4 + $0x88] sm:$0xff] %v2167
        %2252 = vst [vmem:[#allocation4 + $0x90] sm:$0xff] %v2196
        %2253 = vst [vmem:[#allocation4 + $0x98] sm:$0xff] %v2225
        %2254 = vst [vmem:[#allocation4 + $0xa0] sm:$0xff] %v2140
        %2255 = vst [vmem:[#allocation4 + $0xa8] sm:$0xff] %v2169
        %2256 = vst [vmem:[#allocation4 + $0xb0] sm:$0xff] %v2198
        %2257 = vst [vmem:[#allocation4 + $0xb8] sm:$0xff] %v2227
        %2258 = vst [vmem:[#allocation4 + $0xc0] sm:$0xff] %v2143
        %2259 = vst [vmem:[#allocation4 + $0xc8] sm:$0xff] %v2172
        %2260 = vst [vmem:[#allocation4 + $0xd0] sm:$0xff] %v2201
        %2261 = vst [vmem:[#allocation4 + $0xd8] sm:$0xff] %v2230
        %2262 = vst [vmem:[#allocation4 + $0xe0] sm:$0xff] %v2145
        %2263 = vst [vmem:[#allocation4 + $0xe8] sm:$0xff] %v2174
        %2264 = vst [vmem:[#allocation4 + $0xf0] sm:$0xff] %v2203
        %2265 = vst [vmem:[#allocation4 + $0xf8] sm:$0xff] %v2232
        %v2266 = vld [vmem:[#allocation12] sm:$0xff]
        %v2267 = vld [vmem:[#allocation12 + $0x8] sm:$0xff]
        %v2268 = vld [vmem:[#allocation12 + $0x10] sm:$0xff]
        %v2269 = vld [vmem:[#allocation12 + $0x18] sm:$0xff]
        %v2270 = vld [vmem:[#allocation12 + $0x20] sm:$0xff]
        %v2271 = vld [vmem:[#allocation12 + $0x28] sm:$0xff]
        %v2272 = vld [vmem:[#allocation12 + $0x30] sm:$0xff]
        %v2273 = vld [vmem:[#allocation12 + $0x38] sm:$0xff]
        %v2274 = vld [vmem:[#allocation12 + $0x40] sm:$0xff]
        %v2275 = vld [vmem:[#allocation12 + $0x48] sm:$0xff]
        %v2276 = vld [vmem:[#allocation12 + $0x50] sm:$0xff]
        %v2277 = vld [vmem:[#allocation12 + $0x58] sm:$0xff]
        %v2278 = vld [vmem:[#allocation12 + $0x60] sm:$0xff]
        %v2279 = vld [vmem:[#allocation12 + $0x68] sm:$0xff]
        %v2280 = vld [vmem:[#allocation12 + $0x70] sm:$0xff]
        %v2281 = vld [vmem:[#allocation12 + $0x78] sm:$0xff]
        %v2282 = vld [vmem:[#allocation12 + $0x80] sm:$0xff]
        %v2283 = vld [vmem:[#allocation12 + $0x88] sm:$0xff]
        %v2284 = vld [vmem:[#allocation12 + $0x90] sm:$0xff]
        %v2285 = vld [vmem:[#allocation12 + $0x98] sm:$0xff]
        %v2286 = vld [vmem:[#allocation12 + $0xa0] sm:$0xff]
        %v2287 = vld [vmem:[#allocation12 + $0xa8] sm:$0xff]
        %v2288 = vld [vmem:[#allocation12 + $0xb0] sm:$0xff]
        %v2289 = vld [vmem:[#allocation12 + $0xb8] sm:$0xff]
        %v2290 = vld [vmem:[#allocation12 + $0xc0] sm:$0xff]
        %v2291 = vld [vmem:[#allocation12 + $0xc8] sm:$0xff]
        %v2292 = vld [vmem:[#allocation12 + $0xd0] sm:$0xff]
        %v2293 = vld [vmem:[#allocation12 + $0xd8] sm:$0xff]
        %v2294 = vld [vmem:[#allocation12 + $0xe0] sm:$0xff]
        %v2295 = vld [vmem:[#allocation12 + $0xe8] sm:$0xff]
        %v2296 = vld [vmem:[#allocation12 + $0xf0] sm:$0xff]
        %v2297 = vld [vmem:[#allocation12 + $0xf8] sm:$0xff]
        %s2298 = scalar_lea.vmem [#allocation2], 8
        %v2299 = vld [vmem:[%s2298] sm:$0xff]
        %s2300 = scalar_lea.vmem [#allocation3], 8
        %v2301 = vld [vmem:[%s2300] sm:$0xff]
        %v2302 = vld [vmem:[#allocation4] sm:$0xff]
        %v2303 = vld [vmem:[#allocation4 + $0x8] sm:$0xff]
        %v2304 = vld [vmem:[#allocation4 + $0x10] sm:$0xff]
        %v2305 = vld [vmem:[#allocation4 + $0x18] sm:$0xff]
        %v2306 = vpack.c.bf16 %v2299, %v2299
        %v2339 = vunpack.c.l.b16 %v2266
        %v2340 = vunpack.c.h.b16 %v2266
        %v2341 = vunpack.c.l.b16 %v2267
        %v2342 = vunpack.c.h.b16 %v2267
        %v2343 = vunpack.c.l.b16 %v2268
        %v2344 = vunpack.c.h.b16 %v2268
        %v2345 = vunpack.c.l.b16 %v2269
        %v2346 = vunpack.c.h.b16 %v2269
        %v2347 = vunpack.c.l.b16 %v2270
        %v2348 = vunpack.c.h.b16 %v2270
        %v2349 = vunpack.c.l.b16 %v2271
        %v2350 = vunpack.c.h.b16 %v2271
        %v2351 = vunpack.c.l.b16 %v2272
        %v2352 = vunpack.c.h.b16 %v2272
        %v2353 = vunpack.c.l.b16 %v2273
        %v2354 = vunpack.c.h.b16 %v2273
        %v2355 = vunpack.c.l.b16 %v2274
        %v2356 = vunpack.c.h.b16 %v2274
        %v2357 = vunpack.c.l.b16 %v2275
        %v2358 = vunpack.c.h.b16 %v2275
        %v2359 = vunpack.c.l.b16 %v2276
        %v2360 = vunpack.c.h.b16 %v2276
        %v2361 = vunpack.c.l.b16 %v2277
        %v2362 = vunpack.c.h.b16 %v2277
        %v2363 = vunpack.c.l.b16 %v2278
        %v2364 = vunpack.c.h.b16 %v2278
        %v2365 = vunpack.c.l.b16 %v2279
        %v2366 = vunpack.c.h.b16 %v2279
        %v2367 = vunpack.c.l.b16 %v2280
        %v2368 = vunpack.c.h.b16 %v2280
        %v2369 = vunpack.c.l.b16 %v2281
        %v2370 = vunpack.c.h.b16 %v2281
        %v2371 = vunpack.c.l.b16 %v2282
        %v2372 = vunpack.c.h.b16 %v2282
        %v2373 = vunpack.c.l.b16 %v2283
        %v2374 = vunpack.c.h.b16 %v2283
        %v2375 = vunpack.c.l.b16 %v2284
        %v2376 = vunpack.c.h.b16 %v2284
        %v2377 = vunpack.c.l.b16 %v2285
        %v2378 = vunpack.c.h.b16 %v2285
        %v2379 = vunpack.c.l.b16 %v2286
        %v2380 = vunpack.c.h.b16 %v2286
        %v2381 = vunpack.c.l.b16 %v2287
        %v2382 = vunpack.c.h.b16 %v2287
        %v2383 = vunpack.c.l.b16 %v2288
        %v2384 = vunpack.c.h.b16 %v2288
        %v2385 = vunpack.c.l.b16 %v2289
        %v2386 = vunpack.c.h.b16 %v2289
        %v2387 = vunpack.c.l.b16 %v2290
        %v2388 = vunpack.c.h.b16 %v2290
        %v2389 = vunpack.c.l.b16 %v2291
        %v2390 = vunpack.c.h.b16 %v2291
        %v2391 = vunpack.c.l.b16 %v2292
        %v2392 = vunpack.c.h.b16 %v2292
        %v2393 = vunpack.c.l.b16 %v2293
        %v2394 = vunpack.c.h.b16 %v2293
        %v2395 = vunpack.c.l.b16 %v2294
        %v2396 = vunpack.c.h.b16 %v2294
        %v2397 = vunpack.c.l.b16 %v2295
        %v2398 = vunpack.c.h.b16 %v2295
        %v2399 = vunpack.c.l.b16 %v2296
        %v2400 = vunpack.c.h.b16 %v2296
        %v2401 = vunpack.c.l.b16 %v2297
        %v2402 = vunpack.c.h.b16 %v2297
        %v2403 = vpack.c.b16 %v2343, %v2339
        %v2404 = vpack.c.b16 %v2344, %v2340
        %v2405 = vpack.c.b16 %v2345, %v2341
        %v2406 = vpack.c.b16 %v2346, %v2342
        %v2407 = vpack.c.b16 %v2351, %v2347
        %v2408 = vpack.c.b16 %v2352, %v2348
        %v2409 = vpack.c.b16 %v2353, %v2349
        %v2410 = vpack.c.b16 %v2354, %v2350
        %v2411 = vpack.c.b16 %v2359, %v2355
        %v2412 = vpack.c.b16 %v2360, %v2356
        %v2413 = vpack.c.b16 %v2361, %v2357
        %v2414 = vpack.c.b16 %v2362, %v2358
        %v2415 = vpack.c.b16 %v2367, %v2363
        %v2416 = vpack.c.b16 %v2368, %v2364
        %v2417 = vpack.c.b16 %v2369, %v2365
        %v2418 = vpack.c.b16 %v2370, %v2366
        %v2419 = vpack.c.b16 %v2375, %v2371
        %v2420 = vpack.c.b16 %v2376, %v2372
        %v2421 = vpack.c.b16 %v2377, %v2373
        %v2422 = vpack.c.b16 %v2378, %v2374
        %v2423 = vpack.c.b16 %v2383, %v2379
        %v2424 = vpack.c.b16 %v2384, %v2380
        %v2425 = vpack.c.b16 %v2385, %v2381
        %v2426 = vpack.c.b16 %v2386, %v2382
        %v2427 = vpack.c.b16 %v2391, %v2387
        %v2428 = vpack.c.b16 %v2392, %v2388
        %v2429 = vpack.c.b16 %v2393, %v2389
        %v2430 = vpack.c.b16 %v2394, %v2390
        %v2431 = vpack.c.b16 %v2399, %v2395
        %v2432 = vpack.c.b16 %v2400, %v2396
        %v2433 = vpack.c.b16 %v2401, %v2397
        %v2434 = vpack.c.b16 %v2402, %v2398
        %2467 = vmatpush.bf16.msra.mxu0 %v2431
        %2468 = vmatpush.bf16.msra.mxu0 %v2427
        %2469 = vmatpush.bf16.msra.mxu0 %v2423
        %2470 = vmatpush.bf16.msra.mxu0 %v2419
        %2471 = vmatpush.bf16.msra.mxu0 %v2415
        %2472 = vmatpush.bf16.msra.mxu0 %v2411
        %2473 = vmatpush.bf16.msra.mxu0 %v2407
        %2474 = vmatpush.bf16.msra.mxu0 %v2403
        %2475 = vmatmul.bf16.gmra.mxu0 %v2306
        %v2476 = vpop.f32.mrf.mxu0
        %v2477 = vadd.f32 0.0, %v2476
        %v2478 = vpop.f32.mrf.mxu0
        %2479 = vdwg.mxu0
        %2480 = vmatpush.bf16.msra.mxu0 %v2432
        %2481 = vmatpush.bf16.msra.mxu0 %v2428
        %2482 = vmatpush.bf16.msra.mxu0 %v2424
        %2483 = vmatpush.bf16.msra.mxu0 %v2420
        %2484 = vmatpush.bf16.msra.mxu0 %v2416
        %2485 = vmatpush.bf16.msra.mxu0 %v2412
        %2486 = vmatpush.bf16.msra.mxu0 %v2408
        %2487 = vmatpush.bf16.msra.mxu0 %v2404
        %2488 = vmatmul.bf16.gmra.mxu0 %v2306
        %v2489 = vpop.f32.mrf.mxu0
        %v2490 = vadd.f32 0.0, %v2489
        %v2491 = vpop.f32.mrf.mxu0
        %2492 = vdwg.mxu0
        %2493 = vmatpush.bf16.msra.mxu0 %v2433
        %2494 = vmatpush.bf16.msra.mxu0 %v2429
        %2495 = vmatpush.bf16.msra.mxu0 %v2425
        %2496 = vmatpush.bf16.msra.mxu0 %v2421
        %2497 = vmatpush.bf16.msra.mxu0 %v2417
        %2498 = vmatpush.bf16.msra.mxu0 %v2413
        %2499 = vmatpush.bf16.msra.mxu0 %v2409
        %2500 = vmatpush.bf16.msra.mxu0 %v2405
        %2501 = vmatmul.bf16.gmra.mxu0 %v2306
        %v2502 = vpop.f32.mrf.mxu0
        %v2503 = vadd.f32 0.0, %v2502
        %v2504 = vpop.f32.mrf.mxu0
        %2505 = vdwg.mxu0
        %2506 = vmatpush.bf16.msra.mxu0 %v2434
        %2507 = vmatpush.bf16.msra.mxu0 %v2430
        %2508 = vmatpush.bf16.msra.mxu0 %v2426
        %2509 = vmatpush.bf16.msra.mxu0 %v2422
        %2510 = vmatpush.bf16.msra.mxu0 %v2418
        %2511 = vmatpush.bf16.msra.mxu0 %v2414
        %2512 = vmatpush.bf16.msra.mxu0 %v2410
        %2513 = vmatpush.bf16.msra.mxu0 %v2406
        %2514 = vmatmul.bf16.gmra.mxu0 %v2306
        %v2515 = vpop.f32.mrf.mxu0
        %v2516 = vadd.f32 0.0, %v2515
        %v2517 = vpop.f32.mrf.mxu0
        %2518 = vdwg.mxu0
        %v2519 = vadd.f32 %v2302, %v2477
        %v2520 = vadd.f32 %v2303, %v2490
        %v2521 = vadd.f32 %v2304, %v2503
        %v2522 = vadd.f32 %v2305, %v2516
        %v2523 = vxor.u32 %v2519, 2147483648
        %v2524 = vmul.f32 %v2523, 1.442695
        %v2525 = vpow.pop %v2524
        %v2526 = vadd.f32 %v2525, 1.0
        %v2527 = vrcp.pop %v2526
        %v2528 = vmul.f32 %v2526, %v2527
        %v2529 = vsub.f32 1.0, %v2528
        %v2530 = vmul.f32 %v2527, %v2529
        %v2531 = vadd.f32 %v2527, %v2530
        %vm2532 = vweird.f32 %v2526
        %vm2533 = vweird.f32 %v2527
        %vm2534 = vmor %vm2532, %vm2533
        %v2535 = vsel %vm2534, %v2527, %v2531
        %v2536 = vand.u32 2147483647, %v2526
        %vm2537 = vcmp.eq.f32.partialorder %v2536, 8.507059e+37
        %v2538 = vand.u32 %v2526, 2147483648
        %v2539 = vor.u32 1.1754944e-38, %v2538
        %v2540 = vsel %vm2537, %v2539, %v2535
        %v2541 = vmul.f32 1.0, %v2540
        %v2542 = vxor.u32 %v2520, 2147483648
        %v2543 = vmul.f32 %v2542, 1.442695
        %v2544 = vpow.pop %v2543
        %v2545 = vadd.f32 %v2544, 1.0
        %v2546 = vrcp.pop %v2545
        %v2547 = vmul.f32 %v2545, %v2546
        %v2548 = vsub.f32 1.0, %v2547
        %v2549 = vmul.f32 %v2546, %v2548
        %v2550 = vadd.f32 %v2546, %v2549
        %vm2551 = vweird.f32 %v2545
        %vm2552 = vweird.f32 %v2546
        %vm2553 = vmor %vm2551, %vm2552
        %v2554 = vsel %vm2553, %v2546, %v2550
        %v2555 = vand.u32 2147483647, %v2545
        %vm2556 = vcmp.eq.f32.partialorder %v2555, 8.507059e+37
        %v2557 = vand.u32 %v2545, 2147483648
        %v2558 = vor.u32 1.1754944e-38, %v2557
        %v2559 = vsel %vm2556, %v2558, %v2554
        %v2560 = vmul.f32 1.0, %v2559
        %v2561 = vtanh.pop %v2521
        %v2562 = vxor.u32 %v2522, 2147483648
        %v2563 = vmul.f32 %v2562, 1.442695
        %v2564 = vpow.pop %v2563
        %v2565 = vadd.f32 %v2564, 1.0
        %v2566 = vrcp.pop %v2565
        %v2567 = vmul.f32 %v2565, %v2566
        %v2568 = vsub.f32 1.0, %v2567
        %v2569 = vmul.f32 %v2566, %v2568
        %v2570 = vadd.f32 %v2566, %v2569
        %vm2571 = vweird.f32 %v2565
        %vm2572 = vweird.f32 %v2566
        %vm2573 = vmor %vm2571, %vm2572
        %v2574 = vsel %vm2573, %v2566, %v2570
        %v2575 = vand.u32 2147483647, %v2565
        %vm2576 = vcmp.eq.f32.partialorder %v2575, 8.507059e+37
        %v2577 = vand.u32 %v2565, 2147483648
        %v2578 = vor.u32 1.1754944e-38, %v2577
        %v2579 = vsel %vm2576, %v2578, %v2574
        %v2580 = vmul.f32 1.0, %v2579
        %v2581 = vmul.f32 %v2560, %v2301
        %v2582 = vmul.f32 %v2541, %v2561
        %v2583 = vadd.f32 %v2581, %v2582
        %v2584 = vtanh.pop %v2583
        %v2585 = vmul.f32 %v2580, %v2584
        %v2586 = vsel %vm974, %v2583, %v2301
        %v2587 = vsel %vm974, %v2585, %v2299
        %v2588 = vld [vmem:[#allocation4 + $0x20] sm:$0xff]
        %v2589 = vld [vmem:[#allocation4 + $0x28] sm:$0xff]
        %v2590 = vld [vmem:[#allocation4 + $0x30] sm:$0xff]
        %v2591 = vld [vmem:[#allocation4 + $0x38] sm:$0xff]
        %v2592 = vpack.c.bf16 %v2587, %v2587
        %2593 = vmatpush.bf16.msra.mxu0 %v2431
        %2594 = vmatpush.bf16.msra.mxu0 %v2427
        %2595 = vmatpush.bf16.msra.mxu0 %v2423
        %2596 = vmatpush.bf16.msra.mxu0 %v2419
        %2597 = vmatpush.bf16.msra.mxu0 %v2415
        %2598 = vmatpush.bf16.msra.mxu0 %v2411
        %2599 = vmatpush.bf16.msra.mxu0 %v2407
        %2600 = vmatpush.bf16.msra.mxu0 %v2403
        %2601 = vmatmul.bf16.gmra.mxu0 %v2592
        %v2602 = vpop.f32.mrf.mxu0
        %v2603 = vadd.f32 0.0, %v2602
        %v2604 = vpop.f32.mrf.mxu0
        %2605 = vdwg.mxu0
        %2606 = vmatpush.bf16.msra.mxu0 %v2432
        %2607 = vmatpush.bf16.msra.mxu0 %v2428
        %2608 = vmatpush.bf16.msra.mxu0 %v2424
        %2609 = vmatpush.bf16.msra.mxu0 %v2420
        %2610 = vmatpush.bf16.msra.mxu0 %v2416
        %2611 = vmatpush.bf16.msra.mxu0 %v2412
        %2612 = vmatpush.bf16.msra.mxu0 %v2408
        %2613 = vmatpush.bf16.msra.mxu0 %v2404
        %2614 = vmatmul.bf16.gmra.mxu0 %v2592
        %v2615 = vpop.f32.mrf.mxu0
        %v2616 = vadd.f32 0.0, %v2615
        %v2617 = vpop.f32.mrf.mxu0
        %2618 = vdwg.mxu0
        %2619 = vmatpush.bf16.msra.mxu0 %v2433
        %2620 = vmatpush.bf16.msra.mxu0 %v2429
        %2621 = vmatpush.bf16.msra.mxu0 %v2425
        %2622 = vmatpush.bf16.msra.mxu0 %v2421
        %2623 = vmatpush.bf16.msra.mxu0 %v2417
        %2624 = vmatpush.bf16.msra.mxu0 %v2413
        %2625 = vmatpush.bf16.msra.mxu0 %v2409
        %2626 = vmatpush.bf16.msra.mxu0 %v2405
        %2627 = vmatmul.bf16.gmra.mxu0 %v2592
        %v2628 = vpop.f32.mrf.mxu0
        %v2629 = vadd.f32 0.0, %v2628
        %v2630 = vpop.f32.mrf.mxu0
        %2631 = vdwg.mxu0
        %2632 = vmatpush.bf16.msra.mxu0 %v2434
        %2633 = vmatpush.bf16.msra.mxu0 %v2430
        %2634 = vmatpush.bf16.msra.mxu0 %v2426
        %2635 = vmatpush.bf16.msra.mxu0 %v2422
        %2636 = vmatpush.bf16.msra.mxu0 %v2418
        %2637 = vmatpush.bf16.msra.mxu0 %v2414
        %2638 = vmatpush.bf16.msra.mxu0 %v2410
        %2639 = vmatpush.bf16.msra.mxu0 %v2406
        %2640 = vmatmul.bf16.gmra.mxu0 %v2592
        %v2641 = vpop.f32.mrf.mxu0
        %v2642 = vadd.f32 0.0, %v2641
        %v2643 = vpop.f32.mrf.mxu0
        %2644 = vdwg.mxu0
        %v2645 = vadd.f32 %v2588, %v2603
        %v2646 = vadd.f32 %v2589, %v2616
        %v2647 = vadd.f32 %v2590, %v2629
        %v2648 = vadd.f32 %v2591, %v2642
        %v2649 = vxor.u32 %v2645, 2147483648
        %v2650 = vmul.f32 %v2649, 1.442695
        %v2651 = vpow.pop %v2650
        %v2652 = vadd.f32 %v2651, 1.0
        %v2653 = vrcp.pop %v2652
        %v2654 = vmul.f32 %v2652, %v2653
        %v2655 = vsub.f32 1.0, %v2654
        %v2656 = vmul.f32 %v2653, %v2655
        %v2657 = vadd.f32 %v2653, %v2656
        %vm2658 = vweird.f32 %v2652
        %vm2659 = vweird.f32 %v2653
        %vm2660 = vmor %vm2658, %vm2659
        %v2661 = vsel %vm2660, %v2653, %v2657
        %v2662 = vand.u32 2147483647, %v2652
        %vm2663 = vcmp.eq.f32.partialorder %v2662, 8.507059e+37
        %v2664 = vand.u32 %v2652, 2147483648
        %v2665 = vor.u32 1.1754944e-38, %v2664
        %v2666 = vsel %vm2663, %v2665, %v2661
        %v2667 = vmul.f32 1.0, %v2666
        %v2668 = vxor.u32 %v2646, 2147483648
        %v2669 = vmul.f32 %v2668, 1.442695
        %v2670 = vpow.pop %v2669
        %v2671 = vadd.f32 %v2670, 1.0
        %v2672 = vrcp.pop %v2671
        %v2673 = vmul.f32 %v2671, %v2672
        %v2674 = vsub.f32 1.0, %v2673
        %v2675 = vmul.f32 %v2672, %v2674
        %v2676 = vadd.f32 %v2672, %v2675
        %vm2677 = vweird.f32 %v2671
        %vm2678 = vweird.f32 %v2672
        %vm2679 = vmor %vm2677, %vm2678
        %v2680 = vsel %vm2679, %v2672, %v2676
        %v2681 = vand.u32 2147483647, %v2671
        %vm2682 = vcmp.eq.f32.partialorder %v2681, 8.507059e+37
        %v2683 = vand.u32 %v2671, 2147483648
        %v2684 = vor.u32 1.1754944e-38, %v2683
        %v2685 = vsel %vm2682, %v2684, %v2680
        %v2686 = vmul.f32 1.0, %v2685
        %v2687 = vtanh.pop %v2647
        %v2688 = vxor.u32 %v2648, 2147483648
        %v2689 = vmul.f32 %v2688, 1.442695
        %v2690 = vpow.pop %v2689
        %v2691 = vadd.f32 %v2690, 1.0
        %v2692 = vrcp.pop %v2691
        %v2693 = vmul.f32 %v2691, %v2692
        %v2694 = vsub.f32 1.0, %v2693
        %v2695 = vmul.f32 %v2692, %v2694
        %v2696 = vadd.f32 %v2692, %v2695
        %vm2697 = vweird.f32 %v2691
        %vm2698 = vweird.f32 %v2692
        %vm2699 = vmor %vm2697, %vm2698
        %v2700 = vsel %vm2699, %v2692, %v2696
        %v2701 = vand.u32 2147483647, %v2691
        %vm2702 = vcmp.eq.f32.partialorder %v2701, 8.507059e+37
        %v2703 = vand.u32 %v2691, 2147483648
        %v2704 = vor.u32 1.1754944e-38, %v2703
        %v2705 = vsel %vm2702, %v2704, %v2700
        %v2706 = vmul.f32 1.0, %v2705
        %v2707 = vmul.f32 %v2686, %v2586
        %v2708 = vmul.f32 %v2667, %v2687
        %v2709 = vadd.f32 %v2707, %v2708
        %v2710 = vtanh.pop %v2709
        %v2711 = vmul.f32 %v2706, %v2710
        %v2712 = vsel %vm1106, %v2709, %v2586
        %v2713 = vsel %vm1106, %v2711, %v2587
        %v2714 = vld [vmem:[#allocation4 + $0x40] sm:$0xff]
        %v2715 = vld [vmem:[#allocation4 + $0x48] sm:$0xff]
        %v2716 = vld [vmem:[#allocation4 + $0x50] sm:$0xff]
        %v2717 = vld [vmem:[#allocation4 + $0x58] sm:$0xff]
        %v2718 = vpack.c.bf16 %v2713, %v2713
        %2719 = vmatpush.bf16.msra.mxu0 %v2431
        %2720 = vmatpush.bf16.msra.mxu0 %v2427
        %2721 = vmatpush.bf16.msra.mxu0 %v2423
        %2722 = vmatpush.bf16.msra.mxu0 %v2419
        %2723 = vmatpush.bf16.msra.mxu0 %v2415
        %2724 = vmatpush.bf16.msra.mxu0 %v2411
        %2725 = vmatpush.bf16.msra.mxu0 %v2407
        %2726 = vmatpush.bf16.msra.mxu0 %v2403
        %2727 = vmatmul.bf16.gmra.mxu0 %v2718
        %v2728 = vpop.f32.mrf.mxu0
        %v2729 = vadd.f32 0.0, %v2728
        %v2730 = vpop.f32.mrf.mxu0
        %2731 = vdwg.mxu0
        %2732 = vmatpush.bf16.msra.mxu0 %v2432
        %2733 = vmatpush.bf16.msra.mxu0 %v2428
        %2734 = vmatpush.bf16.msra.mxu0 %v2424
        %2735 = vmatpush.bf16.msra.mxu0 %v2420
        %2736 = vmatpush.bf16.msra.mxu0 %v2416
        %2737 = vmatpush.bf16.msra.mxu0 %v2412
        %2738 = vmatpush.bf16.msra.mxu0 %v2408
        %2739 = vmatpush.bf16.msra.mxu0 %v2404
        %2740 = vmatmul.bf16.gmra.mxu0 %v2718
        %v2741 = vpop.f32.mrf.mxu0
        %v2742 = vadd.f32 0.0, %v2741
        %v2743 = vpop.f32.mrf.mxu0
        %2744 = vdwg.mxu0
        %2745 = vmatpush.bf16.msra.mxu0 %v2433
        %2746 = vmatpush.bf16.msra.mxu0 %v2429
        %2747 = vmatpush.bf16.msra.mxu0 %v2425
        %2748 = vmatpush.bf16.msra.mxu0 %v2421
        %2749 = vmatpush.bf16.msra.mxu0 %v2417
        %2750 = vmatpush.bf16.msra.mxu0 %v2413
        %2751 = vmatpush.bf16.msra.mxu0 %v2409
        %2752 = vmatpush.bf16.msra.mxu0 %v2405
        %2753 = vmatmul.bf16.gmra.mxu0 %v2718
        %v2754 = vpop.f32.mrf.mxu0
        %v2755 = vadd.f32 0.0, %v2754
        %v2756 = vpop.f32.mrf.mxu0
        %2757 = vdwg.mxu0
        %2758 = vmatpush.bf16.msra.mxu0 %v2434
        %2759 = vmatpush.bf16.msra.mxu0 %v2430
        %2760 = vmatpush.bf16.msra.mxu0 %v2426
        %2761 = vmatpush.bf16.msra.mxu0 %v2422
        %2762 = vmatpush.bf16.msra.mxu0 %v2418
        %2763 = vmatpush.bf16.msra.mxu0 %v2414
        %2764 = vmatpush.bf16.msra.mxu0 %v2410
        %2765 = vmatpush.bf16.msra.mxu0 %v2406
        %2766 = vmatmul.bf16.gmra.mxu0 %v2718
        %v2767 = vpop.f32.mrf.mxu0
        %v2768 = vadd.f32 0.0, %v2767
        %v2769 = vpop.f32.mrf.mxu0
        %2770 = vdwg.mxu0
        %v2771 = vadd.f32 %v2714, %v2729
        %v2772 = vadd.f32 %v2715, %v2742
        %v2773 = vadd.f32 %v2716, %v2755
        %v2774 = vadd.f32 %v2717, %v2768
        %v2775 = vxor.u32 %v2771, 2147483648
        %v2776 = vmul.f32 %v2775, 1.442695
        %v2777 = vpow.pop %v2776
        %v2778 = vadd.f32 %v2777, 1.0
        %v2779 = vrcp.pop %v2778
        %v2780 = vmul.f32 %v2778, %v2779
        %v2781 = vsub.f32 1.0, %v2780
        %v2782 = vmul.f32 %v2779, %v2781
        %v2783 = vadd.f32 %v2779, %v2782
        %vm2784 = vweird.f32 %v2778
        %vm2785 = vweird.f32 %v2779
        %vm2786 = vmor %vm2784, %vm2785
        %v2787 = vsel %vm2786, %v2779, %v2783
        %v2788 = vand.u32 2147483647, %v2778
        %vm2789 = vcmp.eq.f32.partialorder %v2788, 8.507059e+37
        %v2790 = vand.u32 %v2778, 2147483648
        %v2791 = vor.u32 1.1754944e-38, %v2790
        %v2792 = vsel %vm2789, %v2791, %v2787
        %v2793 = vmul.f32 1.0, %v2792
        %v2794 = vxor.u32 %v2772, 2147483648
        %v2795 = vmul.f32 %v2794, 1.442695
        %v2796 = vpow.pop %v2795
        %v2797 = vadd.f32 %v2796, 1.0
        %v2798 = vrcp.pop %v2797
        %v2799 = vmul.f32 %v2797, %v2798
        %v2800 = vsub.f32 1.0, %v2799
        %v2801 = vmul.f32 %v2798, %v2800
        %v2802 = vadd.f32 %v2798, %v2801
        %vm2803 = vweird.f32 %v2797
        %vm2804 = vweird.f32 %v2798
        %vm2805 = vmor %vm2803, %vm2804
        %v2806 = vsel %vm2805, %v2798, %v2802
        %v2807 = vand.u32 2147483647, %v2797
        %vm2808 = vcmp.eq.f32.partialorder %v2807, 8.507059e+37
        %v2809 = vand.u32 %v2797, 2147483648
        %v2810 = vor.u32 1.1754944e-38, %v2809
        %v2811 = vsel %vm2808, %v2810, %v2806
        %v2812 = vmul.f32 1.0, %v2811
        %v2813 = vtanh.pop %v2773
        %v2814 = vxor.u32 %v2774, 2147483648
        %v2815 = vmul.f32 %v2814, 1.442695
        %v2816 = vpow.pop %v2815
        %v2817 = vadd.f32 %v2816, 1.0
        %v2818 = vrcp.pop %v2817
        %v2819 = vmul.f32 %v2817, %v2818
        %v2820 = vsub.f32 1.0, %v2819
        %v2821 = vmul.f32 %v2818, %v2820
        %v2822 = vadd.f32 %v2818, %v2821
        %vm2823 = vweird.f32 %v2817
        %vm2824 = vweird.f32 %v2818
        %vm2825 = vmor %vm2823, %vm2824
        %v2826 = vsel %vm2825, %v2818, %v2822
        %v2827 = vand.u32 2147483647, %v2817
        %vm2828 = vcmp.eq.f32.partialorder %v2827, 8.507059e+37
        %v2829 = vand.u32 %v2817, 2147483648
        %v2830 = vor.u32 1.1754944e-38, %v2829
        %v2831 = vsel %vm2828, %v2830, %v2826
        %v2832 = vmul.f32 1.0, %v2831
        %v2833 = vmul.f32 %v2812, %v2712
        %v2834 = vmul.f32 %v2793, %v2813
        %v2835 = vadd.f32 %v2833, %v2834
        %v2836 = vtanh.pop %v2835
        %v2837 = vmul.f32 %v2832, %v2836
        %v2838 = vsel %vm1238, %v2835, %v2712
        %v2839 = vsel %vm1238, %v2837, %v2713
        %v2840 = vld [vmem:[#allocation4 + $0x60] sm:$0xff]
        %v2841 = vld [vmem:[#allocation4 + $0x68] sm:$0xff]
        %v2842 = vld [vmem:[#allocation4 + $0x70] sm:$0xff]
        %v2843 = vld [vmem:[#allocation4 + $0x78] sm:$0xff]
        %v2844 = vpack.c.bf16 %v2839, %v2839
        %2845 = vmatpush.bf16.msra.mxu0 %v2431
        %2846 = vmatpush.bf16.msra.mxu0 %v2427
        %2847 = vmatpush.bf16.msra.mxu0 %v2423
        %2848 = vmatpush.bf16.msra.mxu0 %v2419
        %2849 = vmatpush.bf16.msra.mxu0 %v2415
        %2850 = vmatpush.bf16.msra.mxu0 %v2411
        %2851 = vmatpush.bf16.msra.mxu0 %v2407
        %2852 = vmatpush.bf16.msra.mxu0 %v2403
        %2853 = vmatmul.bf16.gmra.mxu0 %v2844
        %v2854 = vpop.f32.mrf.mxu0
        %v2855 = vadd.f32 0.0, %v2854
        %v2856 = vpop.f32.mrf.mxu0
        %2857 = vdwg.mxu0
        %2858 = vmatpush.bf16.msra.mxu0 %v2432
        %2859 = vmatpush.bf16.msra.mxu0 %v2428
        %2860 = vmatpush.bf16.msra.mxu0 %v2424
        %2861 = vmatpush.bf16.msra.mxu0 %v2420
        %2862 = vmatpush.bf16.msra.mxu0 %v2416
        %2863 = vmatpush.bf16.msra.mxu0 %v2412
        %2864 = vmatpush.bf16.msra.mxu0 %v2408
        %2865 = vmatpush.bf16.msra.mxu0 %v2404
        %2866 = vmatmul.bf16.gmra.mxu0 %v2844
        %v2867 = vpop.f32.mrf.mxu0
        %v2868 = vadd.f32 0.0, %v2867
        %v2869 = vpop.f32.mrf.mxu0
        %2870 = vdwg.mxu0
        %2871 = vmatpush.bf16.msra.mxu0 %v2433
        %2872 = vmatpush.bf16.msra.mxu0 %v2429
        %2873 = vmatpush.bf16.msra.mxu0 %v2425
        %2874 = vmatpush.bf16.msra.mxu0 %v2421
        %2875 = vmatpush.bf16.msra.mxu0 %v2417
        %2876 = vmatpush.bf16.msra.mxu0 %v2413
        %2877 = vmatpush.bf16.msra.mxu0 %v2409
        %2878 = vmatpush.bf16.msra.mxu0 %v2405
        %2879 = vmatmul.bf16.gmra.mxu0 %v2844
        %v2880 = vpop.f32.mrf.mxu0
        %v2881 = vadd.f32 0.0, %v2880
        %v2882 = vpop.f32.mrf.mxu0
        %2883 = vdwg.mxu0
        %2884 = vmatpush.bf16.msra.mxu0 %v2434
        %2885 = vmatpush.bf16.msra.mxu0 %v2430
        %2886 = vmatpush.bf16.msra.mxu0 %v2426
        %2887 = vmatpush.bf16.msra.mxu0 %v2422
        %2888 = vmatpush.bf16.msra.mxu0 %v2418
        %2889 = vmatpush.bf16.msra.mxu0 %v2414
        %2890 = vmatpush.bf16.msra.mxu0 %v2410
        %2891 = vmatpush.bf16.msra.mxu0 %v2406
        %2892 = vmatmul.bf16.gmra.mxu0 %v2844
        %v2893 = vpop.f32.mrf.mxu0
        %v2894 = vadd.f32 0.0, %v2893
        %v2895 = vpop.f32.mrf.mxu0
        %2896 = vdwg.mxu0
        %v2897 = vadd.f32 %v2840, %v2855
        %v2898 = vadd.f32 %v2841, %v2868
        %v2899 = vadd.f32 %v2842, %v2881
        %v2900 = vadd.f32 %v2843, %v2894
        %v2901 = vxor.u32 %v2897, 2147483648
        %v2902 = vmul.f32 %v2901, 1.442695
        %v2903 = vpow.pop %v2902
        %v2904 = vadd.f32 %v2903, 1.0
        %v2905 = vrcp.pop %v2904
        %v2906 = vmul.f32 %v2904, %v2905
        %v2907 = vsub.f32 1.0, %v2906
        %v2908 = vmul.f32 %v2905, %v2907
        %v2909 = vadd.f32 %v2905, %v2908
        %vm2910 = vweird.f32 %v2904
        %vm2911 = vweird.f32 %v2905
        %vm2912 = vmor %vm2910, %vm2911
        %v2913 = vsel %vm2912, %v2905, %v2909
        %v2914 = vand.u32 2147483647, %v2904
        %vm2915 = vcmp.eq.f32.partialorder %v2914, 8.507059e+37
        %v2916 = vand.u32 %v2904, 2147483648
        %v2917 = vor.u32 1.1754944e-38, %v2916
        %v2918 = vsel %vm2915, %v2917, %v2913
        %v2919 = vmul.f32 1.0, %v2918
        %v2920 = vxor.u32 %v2898, 2147483648
        %v2921 = vmul.f32 %v2920, 1.442695
        %v2922 = vpow.pop %v2921
        %v2923 = vadd.f32 %v2922, 1.0
        %v2924 = vrcp.pop %v2923
        %v2925 = vmul.f32 %v2923, %v2924
        %v2926 = vsub.f32 1.0, %v2925
        %v2927 = vmul.f32 %v2924, %v2926
        %v2928 = vadd.f32 %v2924, %v2927
        %vm2929 = vweird.f32 %v2923
        %vm2930 = vweird.f32 %v2924
        %vm2931 = vmor %vm2929, %vm2930
        %v2932 = vsel %vm2931, %v2924, %v2928
        %v2933 = vand.u32 2147483647, %v2923
        %vm2934 = vcmp.eq.f32.partialorder %v2933, 8.507059e+37
        %v2935 = vand.u32 %v2923, 2147483648
        %v2936 = vor.u32 1.1754944e-38, %v2935
        %v2937 = vsel %vm2934, %v2936, %v2932
        %v2938 = vmul.f32 1.0, %v2937
        %v2939 = vtanh.pop %v2899
        %v2940 = vxor.u32 %v2900, 2147483648
        %v2941 = vmul.f32 %v2940, 1.442695
        %v2942 = vpow.pop %v2941
        %v2943 = vadd.f32 %v2942, 1.0
        %v2944 = vrcp.pop %v2943
        %v2945 = vmul.f32 %v2943, %v2944
        %v2946 = vsub.f32 1.0, %v2945
        %v2947 = vmul.f32 %v2944, %v2946
        %v2948 = vadd.f32 %v2944, %v2947
        %vm2949 = vweird.f32 %v2943
        %vm2950 = vweird.f32 %v2944
        %vm2951 = vmor %vm2949, %vm2950
        %v2952 = vsel %vm2951, %v2944, %v2948
        %v2953 = vand.u32 2147483647, %v2943
        %vm2954 = vcmp.eq.f32.partialorder %v2953, 8.507059e+37
        %v2955 = vand.u32 %v2943, 2147483648
        %v2956 = vor.u32 1.1754944e-38, %v2955
        %v2957 = vsel %vm2954, %v2956, %v2952
        %v2958 = vmul.f32 1.0, %v2957
        %v2959 = vmul.f32 %v2938, %v2838
        %v2960 = vmul.f32 %v2919, %v2939
        %v2961 = vadd.f32 %v2959, %v2960
        %v2962 = vtanh.pop %v2961
        %v2963 = vmul.f32 %v2958, %v2962
        %v2964 = vsel %vm1370, %v2961, %v2838
        %v2965 = vsel %vm1370, %v2963, %v2839
        %v2966 = vld [vmem:[#allocation4 + $0x80] sm:$0xff]
        %v2967 = vld [vmem:[#allocation4 + $0x88] sm:$0xff]
        %v2968 = vld [vmem:[#allocation4 + $0x90] sm:$0xff]
        %v2969 = vld [vmem:[#allocation4 + $0x98] sm:$0xff]
        %v2970 = vpack.c.bf16 %v2965, %v2965
        %2971 = vmatpush.bf16.msra.mxu0 %v2431
        %2972 = vmatpush.bf16.msra.mxu0 %v2427
        %2973 = vmatpush.bf16.msra.mxu0 %v2423
        %2974 = vmatpush.bf16.msra.mxu0 %v2419
        %2975 = vmatpush.bf16.msra.mxu0 %v2415
        %2976 = vmatpush.bf16.msra.mxu0 %v2411
        %2977 = vmatpush.bf16.msra.mxu0 %v2407
        %2978 = vmatpush.bf16.msra.mxu0 %v2403
        %2979 = vmatmul.bf16.gmra.mxu0 %v2970
        %v2980 = vpop.f32.mrf.mxu0
        %v2981 = vadd.f32 0.0, %v2980
        %v2982 = vpop.f32.mrf.mxu0
        %2983 = vdwg.mxu0
        %2984 = vmatpush.bf16.msra.mxu0 %v2432
        %2985 = vmatpush.bf16.msra.mxu0 %v2428
        %2986 = vmatpush.bf16.msra.mxu0 %v2424
        %2987 = vmatpush.bf16.msra.mxu0 %v2420
        %2988 = vmatpush.bf16.msra.mxu0 %v2416
        %2989 = vmatpush.bf16.msra.mxu0 %v2412
        %2990 = vmatpush.bf16.msra.mxu0 %v2408
        %2991 = vmatpush.bf16.msra.mxu0 %v2404
        %2992 = vmatmul.bf16.gmra.mxu0 %v2970
        %v2993 = vpop.f32.mrf.mxu0
        %v2994 = vadd.f32 0.0, %v2993
        %v2995 = vpop.f32.mrf.mxu0
        %2996 = vdwg.mxu0
        %2997 = vmatpush.bf16.msra.mxu0 %v2433
        %2998 = vmatpush.bf16.msra.mxu0 %v2429
        %2999 = vmatpush.bf16.msra.mxu0 %v2425
        %3000 = vmatpush.bf16.msra.mxu0 %v2421
        %3001 = vmatpush.bf16.msra.mxu0 %v2417
        %3002 = vmatpush.bf16.msra.mxu0 %v2413
        %3003 = vmatpush.bf16.msra.mxu0 %v2409
        %3004 = vmatpush.bf16.msra.mxu0 %v2405
        %3005 = vmatmul.bf16.gmra.mxu0 %v2970
        %v3006 = vpop.f32.mrf.mxu0
        %v3007 = vadd.f32 0.0, %v3006
        %v3008 = vpop.f32.mrf.mxu0
        %3009 = vdwg.mxu0
        %3010 = vmatpush.bf16.msra.mxu0 %v2434
        %3011 = vmatpush.bf16.msra.mxu0 %v2430
        %3012 = vmatpush.bf16.msra.mxu0 %v2426
        %3013 = vmatpush.bf16.msra.mxu0 %v2422
        %3014 = vmatpush.bf16.msra.mxu0 %v2418
        %3015 = vmatpush.bf16.msra.mxu0 %v2414
        %3016 = vmatpush.bf16.msra.mxu0 %v2410
        %3017 = vmatpush.bf16.msra.mxu0 %v2406
        %3018 = vmatmul.bf16.gmra.mxu0 %v2970
        %v3019 = vpop.f32.mrf.mxu0
        %v3020 = vadd.f32 0.0, %v3019
        %v3021 = vpop.f32.mrf.mxu0
        %3022 = vdwg.mxu0
        %v3023 = vadd.f32 %v2966, %v2981
        %v3024 = vadd.f32 %v2967, %v2994
        %v3025 = vadd.f32 %v2968, %v3007
        %v3026 = vadd.f32 %v2969, %v3020
        %v3027 = vxor.u32 %v3023, 2147483648
        %v3028 = vmul.f32 %v3027, 1.442695
        %v3029 = vpow.pop %v3028
        %v3030 = vadd.f32 %v3029, 1.0
        %v3031 = vrcp.pop %v3030
        %v3032 = vmul.f32 %v3030, %v3031
        %v3033 = vsub.f32 1.0, %v3032
        %v3034 = vmul.f32 %v3031, %v3033
        %v3035 = vadd.f32 %v3031, %v3034
        %vm3036 = vweird.f32 %v3030
        %vm3037 = vweird.f32 %v3031
        %vm3038 = vmor %vm3036, %vm3037
        %v3039 = vsel %vm3038, %v3031, %v3035
        %v3040 = vand.u32 2147483647, %v3030
        %vm3041 = vcmp.eq.f32.partialorder %v3040, 8.507059e+37
        %v3042 = vand.u32 %v3030, 2147483648
        %v3043 = vor.u32 1.1754944e-38, %v3042
        %v3044 = vsel %vm3041, %v3043, %v3039
        %v3045 = vmul.f32 1.0, %v3044
        %v3046 = vxor.u32 %v3024, 2147483648
        %v3047 = vmul.f32 %v3046, 1.442695
        %v3048 = vpow.pop %v3047
        %v3049 = vadd.f32 %v3048, 1.0
        %v3050 = vrcp.pop %v3049
        %v3051 = vmul.f32 %v3049, %v3050
        %v3052 = vsub.f32 1.0, %v3051
        %v3053 = vmul.f32 %v3050, %v3052
        %v3054 = vadd.f32 %v3050, %v3053
        %vm3055 = vweird.f32 %v3049
        %vm3056 = vweird.f32 %v3050
        %vm3057 = vmor %vm3055, %vm3056
        %v3058 = vsel %vm3057, %v3050, %v3054
        %v3059 = vand.u32 2147483647, %v3049
        %vm3060 = vcmp.eq.f32.partialorder %v3059, 8.507059e+37
        %v3061 = vand.u32 %v3049, 2147483648
        %v3062 = vor.u32 1.1754944e-38, %v3061
        %v3063 = vsel %vm3060, %v3062, %v3058
        %v3064 = vmul.f32 1.0, %v3063
        %v3065 = vtanh.pop %v3025
        %v3066 = vxor.u32 %v3026, 2147483648
        %v3067 = vmul.f32 %v3066, 1.442695
        %v3068 = vpow.pop %v3067
        %v3069 = vadd.f32 %v3068, 1.0
        %v3070 = vrcp.pop %v3069
        %v3071 = vmul.f32 %v3069, %v3070
        %v3072 = vsub.f32 1.0, %v3071
        %v3073 = vmul.f32 %v3070, %v3072
        %v3074 = vadd.f32 %v3070, %v3073
        %vm3075 = vweird.f32 %v3069
        %vm3076 = vweird.f32 %v3070
        %vm3077 = vmor %vm3075, %vm3076
        %v3078 = vsel %vm3077, %v3070, %v3074
        %v3079 = vand.u32 2147483647, %v3069
        %vm3080 = vcmp.eq.f32.partialorder %v3079, 8.507059e+37
        %v3081 = vand.u32 %v3069, 2147483648
        %v3082 = vor.u32 1.1754944e-38, %v3081
        %v3083 = vsel %vm3080, %v3082, %v3078
        %v3084 = vmul.f32 1.0, %v3083
        %v3085 = vmul.f32 %v3064, %v2964
        %v3086 = vmul.f32 %v3045, %v3065
        %v3087 = vadd.f32 %v3085, %v3086
        %v3088 = vtanh.pop %v3087
        %v3089 = vmul.f32 %v3084, %v3088
        %v3090 = vsel %vm1502, %v3087, %v2964
        %v3091 = vsel %vm1502, %v3089, %v2965
        %v3092 = vld [vmem:[#allocation4 + $0xa0] sm:$0xff]
        %v3093 = vld [vmem:[#allocation4 + $0xa8] sm:$0xff]
        %v3094 = vld [vmem:[#allocation4 + $0xb0] sm:$0xff]
        %v3095 = vld [vmem:[#allocation4 + $0xb8] sm:$0xff]
        %v3096 = vpack.c.bf16 %v3091, %v3091
        %3097 = vmatpush.bf16.msra.mxu0 %v2431
        %3098 = vmatpush.bf16.msra.mxu0 %v2427
        %3099 = vmatpush.bf16.msra.mxu0 %v2423
        %3100 = vmatpush.bf16.msra.mxu0 %v2419
        %3101 = vmatpush.bf16.msra.mxu0 %v2415
        %3102 = vmatpush.bf16.msra.mxu0 %v2411
        %3103 = vmatpush.bf16.msra.mxu0 %v2407
        %3104 = vmatpush.bf16.msra.mxu0 %v2403
        %3105 = vmatmul.bf16.gmra.mxu0 %v3096
        %v3106 = vpop.f32.mrf.mxu0
        %v3107 = vadd.f32 0.0, %v3106
        %v3108 = vpop.f32.mrf.mxu0
        %3109 = vdwg.mxu0
        %3110 = vmatpush.bf16.msra.mxu0 %v2432
        %3111 = vmatpush.bf16.msra.mxu0 %v2428
        %3112 = vmatpush.bf16.msra.mxu0 %v2424
        %3113 = vmatpush.bf16.msra.mxu0 %v2420
        %3114 = vmatpush.bf16.msra.mxu0 %v2416
        %3115 = vmatpush.bf16.msra.mxu0 %v2412
        %3116 = vmatpush.bf16.msra.mxu0 %v2408
        %3117 = vmatpush.bf16.msra.mxu0 %v2404
        %3118 = vmatmul.bf16.gmra.mxu0 %v3096
        %v3119 = vpop.f32.mrf.mxu0
        %v3120 = vadd.f32 0.0, %v3119
        %v3121 = vpop.f32.mrf.mxu0
        %3122 = vdwg.mxu0
        %3123 = vmatpush.bf16.msra.mxu0 %v2433
        %3124 = vmatpush.bf16.msra.mxu0 %v2429
        %3125 = vmatpush.bf16.msra.mxu0 %v2425
        %3126 = vmatpush.bf16.msra.mxu0 %v2421
        %3127 = vmatpush.bf16.msra.mxu0 %v2417
        %3128 = vmatpush.bf16.msra.mxu0 %v2413
        %3129 = vmatpush.bf16.msra.mxu0 %v2409
        %3130 = vmatpush.bf16.msra.mxu0 %v2405
        %3131 = vmatmul.bf16.gmra.mxu0 %v3096
        %v3132 = vpop.f32.mrf.mxu0
        %v3133 = vadd.f32 0.0, %v3132
        %v3134 = vpop.f32.mrf.mxu0
        %3135 = vdwg.mxu0
        %3136 = vmatpush.bf16.msra.mxu0 %v2434
        %3137 = vmatpush.bf16.msra.mxu0 %v2430
        %3138 = vmatpush.bf16.msra.mxu0 %v2426
        %3139 = vmatpush.bf16.msra.mxu0 %v2422
        %3140 = vmatpush.bf16.msra.mxu0 %v2418
        %3141 = vmatpush.bf16.msra.mxu0 %v2414
        %3142 = vmatpush.bf16.msra.mxu0 %v2410
        %3143 = vmatpush.bf16.msra.mxu0 %v2406
        %3144 = vmatmul.bf16.gmra.mxu0 %v3096
        %v3145 = vpop.f32.mrf.mxu0
        %v3146 = vadd.f32 0.0, %v3145
        %v3147 = vpop.f32.mrf.mxu0
        %3148 = vdwg.mxu0
        %v3149 = vadd.f32 %v3092, %v3107
        %v3150 = vadd.f32 %v3093, %v3120
        %v3151 = vadd.f32 %v3094, %v3133
        %v3152 = vadd.f32 %v3095, %v3146
        %v3153 = vxor.u32 %v3149, 2147483648
        %v3154 = vmul.f32 %v3153, 1.442695
        %v3155 = vpow.pop %v3154
        %v3156 = vadd.f32 %v3155, 1.0
        %v3157 = vrcp.pop %v3156
        %v3158 = vmul.f32 %v3156, %v3157
        %v3159 = vsub.f32 1.0, %v3158
        %v3160 = vmul.f32 %v3157, %v3159
        %v3161 = vadd.f32 %v3157, %v3160
        %vm3162 = vweird.f32 %v3156
        %vm3163 = vweird.f32 %v3157
        %vm3164 = vmor %vm3162, %vm3163
        %v3165 = vsel %vm3164, %v3157, %v3161
        %v3166 = vand.u32 2147483647, %v3156
        %vm3167 = vcmp.eq.f32.partialorder %v3166, 8.507059e+37
        %v3168 = vand.u32 %v3156, 2147483648
        %v3169 = vor.u32 1.1754944e-38, %v3168
        %v3170 = vsel %vm3167, %v3169, %v3165
        %v3171 = vmul.f32 1.0, %v3170
        %v3172 = vxor.u32 %v3150, 2147483648
        %v3173 = vmul.f32 %v3172, 1.442695
        %v3174 = vpow.pop %v3173
        %v3175 = vadd.f32 %v3174, 1.0
        %v3176 = vrcp.pop %v3175
        %v3177 = vmul.f32 %v3175, %v3176
        %v3178 = vsub.f32 1.0, %v3177
        %v3179 = vmul.f32 %v3176, %v3178
        %v3180 = vadd.f32 %v3176, %v3179
        %vm3181 = vweird.f32 %v3175
        %vm3182 = vweird.f32 %v3176
        %vm3183 = vmor %vm3181, %vm3182
        %v3184 = vsel %vm3183, %v3176, %v3180
        %v3185 = vand.u32 2147483647, %v3175
        %vm3186 = vcmp.eq.f32.partialorder %v3185, 8.507059e+37
        %v3187 = vand.u32 %v3175, 2147483648
        %v3188 = vor.u32 1.1754944e-38, %v3187
        %v3189 = vsel %vm3186, %v3188, %v3184
        %v3190 = vmul.f32 1.0, %v3189
        %v3191 = vtanh.pop %v3151
        %v3192 = vxor.u32 %v3152, 2147483648
        %v3193 = vmul.f32 %v3192, 1.442695
        %v3194 = vpow.pop %v3193
        %v3195 = vadd.f32 %v3194, 1.0
        %v3196 = vrcp.pop %v3195
        %v3197 = vmul.f32 %v3195, %v3196
        %v3198 = vsub.f32 1.0, %v3197
        %v3199 = vmul.f32 %v3196, %v3198
        %v3200 = vadd.f32 %v3196, %v3199
        %vm3201 = vweird.f32 %v3195
        %vm3202 = vweird.f32 %v3196
        %vm3203 = vmor %vm3201, %vm3202
        %v3204 = vsel %vm3203, %v3196, %v3200
        %v3205 = vand.u32 2147483647, %v3195
        %vm3206 = vcmp.eq.f32.partialorder %v3205, 8.507059e+37
        %v3207 = vand.u32 %v3195, 2147483648
        %v3208 = vor.u32 1.1754944e-38, %v3207
        %v3209 = vsel %vm3206, %v3208, %v3204
        %v3210 = vmul.f32 1.0, %v3209
        %v3211 = vmul.f32 %v3190, %v3090
        %v3212 = vmul.f32 %v3171, %v3191
        %v3213 = vadd.f32 %v3211, %v3212
        %v3214 = vtanh.pop %v3213
        %v3215 = vmul.f32 %v3210, %v3214
        %v3216 = vsel %vm1634, %v3213, %v3090
        %v3217 = vsel %vm1634, %v3215, %v3091
        %v3218 = vld [vmem:[#allocation4 + $0xc0] sm:$0xff]
        %v3219 = vld [vmem:[#allocation4 + $0xc8] sm:$0xff]
        %v3220 = vld [vmem:[#allocation4 + $0xd0] sm:$0xff]
        %v3221 = vld [vmem:[#allocation4 + $0xd8] sm:$0xff]
        %v3222 = vpack.c.bf16 %v3217, %v3217
        %3223 = vmatpush.bf16.msra.mxu0 %v2431
        %3224 = vmatpush.bf16.msra.mxu0 %v2427
        %3225 = vmatpush.bf16.msra.mxu0 %v2423
        %3226 = vmatpush.bf16.msra.mxu0 %v2419
        %3227 = vmatpush.bf16.msra.mxu0 %v2415
        %3228 = vmatpush.bf16.msra.mxu0 %v2411
        %3229 = vmatpush.bf16.msra.mxu0 %v2407
        %3230 = vmatpush.bf16.msra.mxu0 %v2403
        %3231 = vmatmul.bf16.gmra.mxu0 %v3222
        %v3232 = vpop.f32.mrf.mxu0
        %v3233 = vadd.f32 0.0, %v3232
        %v3234 = vpop.f32.mrf.mxu0
        %3235 = vdwg.mxu0
        %3236 = vmatpush.bf16.msra.mxu0 %v2432
        %3237 = vmatpush.bf16.msra.mxu0 %v2428
        %3238 = vmatpush.bf16.msra.mxu0 %v2424
        %3239 = vmatpush.bf16.msra.mxu0 %v2420
        %3240 = vmatpush.bf16.msra.mxu0 %v2416
        %3241 = vmatpush.bf16.msra.mxu0 %v2412
        %3242 = vmatpush.bf16.msra.mxu0 %v2408
        %3243 = vmatpush.bf16.msra.mxu0 %v2404
        %3244 = vmatmul.bf16.gmra.mxu0 %v3222
        %v3245 = vpop.f32.mrf.mxu0
        %v3246 = vadd.f32 0.0, %v3245
        %v3247 = vpop.f32.mrf.mxu0
        %3248 = vdwg.mxu0
        %3249 = vmatpush.bf16.msra.mxu0 %v2433
        %3250 = vmatpush.bf16.msra.mxu0 %v2429
        %3251 = vmatpush.bf16.msra.mxu0 %v2425
        %3252 = vmatpush.bf16.msra.mxu0 %v2421
        %3253 = vmatpush.bf16.msra.mxu0 %v2417
        %3254 = vmatpush.bf16.msra.mxu0 %v2413
        %3255 = vmatpush.bf16.msra.mxu0 %v2409
        %3256 = vmatpush.bf16.msra.mxu0 %v2405
        %3257 = vmatmul.bf16.gmra.mxu0 %v3222
        %v3258 = vpop.f32.mrf.mxu0
        %v3259 = vadd.f32 0.0, %v3258
        %v3260 = vpop.f32.mrf.mxu0
        %3261 = vdwg.mxu0
        %3262 = vmatpush.bf16.msra.mxu0 %v2434
        %3263 = vmatpush.bf16.msra.mxu0 %v2430
        %3264 = vmatpush.bf16.msra.mxu0 %v2426
        %3265 = vmatpush.bf16.msra.mxu0 %v2422
        %3266 = vmatpush.bf16.msra.mxu0 %v2418
        %3267 = vmatpush.bf16.msra.mxu0 %v2414
        %3268 = vmatpush.bf16.msra.mxu0 %v2410
        %3269 = vmatpush.bf16.msra.mxu0 %v2406
        %3270 = vmatmul.bf16.gmra.mxu0 %v3222
        %v3271 = vpop.f32.mrf.mxu0
        %v3272 = vadd.f32 0.0, %v3271
        %v3273 = vpop.f32.mrf.mxu0
        %3274 = vdwg.mxu0
        %v3275 = vadd.f32 %v3218, %v3233
        %v3276 = vadd.f32 %v3219, %v3246
        %v3277 = vadd.f32 %v3220, %v3259
        %v3278 = vadd.f32 %v3221, %v3272
        %v3279 = vxor.u32 %v3275, 2147483648
        %v3280 = vmul.f32 %v3279, 1.442695
        %v3281 = vpow.pop %v3280
        %v3282 = vadd.f32 %v3281, 1.0
        %v3283 = vrcp.pop %v3282
        %v3284 = vmul.f32 %v3282, %v3283
        %v3285 = vsub.f32 1.0, %v3284
        %v3286 = vmul.f32 %v3283, %v3285
        %v3287 = vadd.f32 %v3283, %v3286
        %vm3288 = vweird.f32 %v3282
        %vm3289 = vweird.f32 %v3283
        %vm3290 = vmor %vm3288, %vm3289
        %v3291 = vsel %vm3290, %v3283, %v3287
        %v3292 = vand.u32 2147483647, %v3282
        %vm3293 = vcmp.eq.f32.partialorder %v3292, 8.507059e+37
        %v3294 = vand.u32 %v3282, 2147483648
        %v3295 = vor.u32 1.1754944e-38, %v3294
        %v3296 = vsel %vm3293, %v3295, %v3291
        %v3297 = vmul.f32 1.0, %v3296
        %v3298 = vxor.u32 %v3276, 2147483648
        %v3299 = vmul.f32 %v3298, 1.442695
        %v3300 = vpow.pop %v3299
        %v3301 = vadd.f32 %v3300, 1.0
        %v3302 = vrcp.pop %v3301
        %v3303 = vmul.f32 %v3301, %v3302
        %v3304 = vsub.f32 1.0, %v3303
        %v3305 = vmul.f32 %v3302, %v3304
        %v3306 = vadd.f32 %v3302, %v3305
        %vm3307 = vweird.f32 %v3301
        %vm3308 = vweird.f32 %v3302
        %vm3309 = vmor %vm3307, %vm3308
        %v3310 = vsel %vm3309, %v3302, %v3306
        %v3311 = vand.u32 2147483647, %v3301
        %vm3312 = vcmp.eq.f32.partialorder %v3311, 8.507059e+37
        %v3313 = vand.u32 %v3301, 2147483648
        %v3314 = vor.u32 1.1754944e-38, %v3313
        %v3315 = vsel %vm3312, %v3314, %v3310
        %v3316 = vmul.f32 1.0, %v3315
        %v3317 = vtanh.pop %v3277
        %v3318 = vxor.u32 %v3278, 2147483648
        %v3319 = vmul.f32 %v3318, 1.442695
        %v3320 = vpow.pop %v3319
        %v3321 = vadd.f32 %v3320, 1.0
        %v3322 = vrcp.pop %v3321
        %v3323 = vmul.f32 %v3321, %v3322
        %v3324 = vsub.f32 1.0, %v3323
        %v3325 = vmul.f32 %v3322, %v3324
        %v3326 = vadd.f32 %v3322, %v3325
        %vm3327 = vweird.f32 %v3321
        %vm3328 = vweird.f32 %v3322
        %vm3329 = vmor %vm3327, %vm3328
        %v3330 = vsel %vm3329, %v3322, %v3326
        %v3331 = vand.u32 2147483647, %v3321
        %vm3332 = vcmp.eq.f32.partialorder %v3331, 8.507059e+37
        %v3333 = vand.u32 %v3321, 2147483648
        %v3334 = vor.u32 1.1754944e-38, %v3333
        %v3335 = vsel %vm3332, %v3334, %v3330
        %v3336 = vmul.f32 1.0, %v3335
        %v3337 = vmul.f32 %v3316, %v3216
        %v3338 = vmul.f32 %v3297, %v3317
        %v3339 = vadd.f32 %v3337, %v3338
        %v3340 = vtanh.pop %v3339
        %v3341 = vmul.f32 %v3336, %v3340
        %v3342 = vsel %vm1766, %v3339, %v3216
        %v3343 = vsel %vm1766, %v3341, %v3217
        %v3344 = vld [vmem:[#allocation4 + $0xe0] sm:$0xff]
        %v3345 = vld [vmem:[#allocation4 + $0xe8] sm:$0xff]
        %v3346 = vld [vmem:[#allocation4 + $0xf0] sm:$0xff]
        %v3347 = vld [vmem:[#allocation4 + $0xf8] sm:$0xff]
        %v3348 = vpack.c.bf16 %v3343, %v3343
        %3349 = vmatpush.bf16.msra.mxu0 %v2431
        %3350 = vmatpush.bf16.msra.mxu0 %v2427
        %3351 = vmatpush.bf16.msra.mxu0 %v2423
        %3352 = vmatpush.bf16.msra.mxu0 %v2419
        %3353 = vmatpush.bf16.msra.mxu0 %v2415
        %3354 = vmatpush.bf16.msra.mxu0 %v2411
        %3355 = vmatpush.bf16.msra.mxu0 %v2407
        %3356 = vmatpush.bf16.msra.mxu0 %v2403
        %3357 = vmatmul.bf16.gmra.mxu0 %v3348
        %v3358 = vpop.f32.mrf.mxu0
        %v3359 = vadd.f32 0.0, %v3358
        %v3360 = vpop.f32.mrf.mxu0
        %3361 = vdwg.mxu0
        %3362 = vmatpush.bf16.msra.mxu0 %v2432
        %3363 = vmatpush.bf16.msra.mxu0 %v2428
        %3364 = vmatpush.bf16.msra.mxu0 %v2424
        %3365 = vmatpush.bf16.msra.mxu0 %v2420
        %3366 = vmatpush.bf16.msra.mxu0 %v2416
        %3367 = vmatpush.bf16.msra.mxu0 %v2412
        %3368 = vmatpush.bf16.msra.mxu0 %v2408
        %3369 = vmatpush.bf16.msra.mxu0 %v2404
        %3370 = vmatmul.bf16.gmra.mxu0 %v3348
        %v3371 = vpop.f32.mrf.mxu0
        %v3372 = vadd.f32 0.0, %v3371
        %v3373 = vpop.f32.mrf.mxu0
        %3374 = vdwg.mxu0
        %3375 = vmatpush.bf16.msra.mxu0 %v2433
        %3376 = vmatpush.bf16.msra.mxu0 %v2429
        %3377 = vmatpush.bf16.msra.mxu0 %v2425
        %3378 = vmatpush.bf16.msra.mxu0 %v2421
        %3379 = vmatpush.bf16.msra.mxu0 %v2417
        %3380 = vmatpush.bf16.msra.mxu0 %v2413
        %3381 = vmatpush.bf16.msra.mxu0 %v2409
        %3382 = vmatpush.bf16.msra.mxu0 %v2405
        %3383 = vmatmul.bf16.gmra.mxu0 %v3348
        %v3384 = vpop.f32.mrf.mxu0
        %v3385 = vadd.f32 0.0, %v3384
        %v3386 = vpop.f32.mrf.mxu0
        %3387 = vdwg.mxu0
        %3388 = vmatpush.bf16.msra.mxu0 %v2434
        %3389 = vmatpush.bf16.msra.mxu0 %v2430
        %3390 = vmatpush.bf16.msra.mxu0 %v2426
        %3391 = vmatpush.bf16.msra.mxu0 %v2422
        %3392 = vmatpush.bf16.msra.mxu0 %v2418
        %3393 = vmatpush.bf16.msra.mxu0 %v2414
        %3394 = vmatpush.bf16.msra.mxu0 %v2410
        %3395 = vmatpush.bf16.msra.mxu0 %v2406
        %3396 = vmatmul.bf16.gmra.mxu0 %v3348
        %v3397 = vpop.f32.mrf.mxu0
        %v3398 = vadd.f32 0.0, %v3397
        %v3399 = vpop.f32.mrf.mxu0
        %3400 = vdwg.mxu0
        %v3401 = vadd.f32 %v3344, %v3359
        %v3402 = vadd.f32 %v3345, %v3372
        %v3403 = vadd.f32 %v3346, %v3385
        %v3404 = vadd.f32 %v3347, %v3398
        %v3405 = vxor.u32 %v3401, 2147483648
        %v3406 = vmul.f32 %v3405, 1.442695
        %v3407 = vpow.pop %v3406
        %v3408 = vadd.f32 %v3407, 1.0
        %v3409 = vrcp.pop %v3408
        %v3410 = vmul.f32 %v3408, %v3409
        %v3411 = vsub.f32 1.0, %v3410
        %v3412 = vmul.f32 %v3409, %v3411
        %v3413 = vadd.f32 %v3409, %v3412
        %vm3414 = vweird.f32 %v3408
        %vm3415 = vweird.f32 %v3409
        %vm3416 = vmor %vm3414, %vm3415
        %v3417 = vsel %vm3416, %v3409, %v3413
        %v3418 = vand.u32 2147483647, %v3408
        %vm3419 = vcmp.eq.f32.partialorder %v3418, 8.507059e+37
        %v3420 = vand.u32 %v3408, 2147483648
        %v3421 = vor.u32 1.1754944e-38, %v3420
        %v3422 = vsel %vm3419, %v3421, %v3417
        %v3423 = vmul.f32 1.0, %v3422
        %v3424 = vxor.u32 %v3402, 2147483648
        %v3425 = vmul.f32 %v3424, 1.442695
        %v3426 = vpow.pop %v3425
        %v3427 = vadd.f32 %v3426, 1.0
        %v3428 = vrcp.pop %v3427
        %v3429 = vmul.f32 %v3427, %v3428
        %v3430 = vsub.f32 1.0, %v3429
        %v3431 = vmul.f32 %v3428, %v3430
        %v3432 = vadd.f32 %v3428, %v3431
        %vm3433 = vweird.f32 %v3427
        %vm3434 = vweird.f32 %v3428
        %vm3435 = vmor %vm3433, %vm3434
        %v3436 = vsel %vm3435, %v3428, %v3432
        %v3437 = vand.u32 2147483647, %v3427
        %vm3438 = vcmp.eq.f32.partialorder %v3437, 8.507059e+37
        %v3439 = vand.u32 %v3427, 2147483648
        %v3440 = vor.u32 1.1754944e-38, %v3439
        %v3441 = vsel %vm3438, %v3440, %v3436
        %v3442 = vmul.f32 1.0, %v3441
        %v3443 = vtanh.pop %v3403
        %v3444 = vxor.u32 %v3404, 2147483648
        %v3445 = vmul.f32 %v3444, 1.442695
        %v3446 = vpow.pop %v3445
        %v3447 = vadd.f32 %v3446, 1.0
        %v3448 = vrcp.pop %v3447
        %v3449 = vmul.f32 %v3447, %v3448
        %v3450 = vsub.f32 1.0, %v3449
        %v3451 = vmul.f32 %v3448, %v3450
        %v3452 = vadd.f32 %v3448, %v3451
        %vm3453 = vweird.f32 %v3447
        %vm3454 = vweird.f32 %v3448
        %vm3455 = vmor %vm3453, %vm3454
        %v3456 = vsel %vm3455, %v3448, %v3452
        %v3457 = vand.u32 2147483647, %v3447
        %vm3458 = vcmp.eq.f32.partialorder %v3457, 8.507059e+37
        %v3459 = vand.u32 %v3447, 2147483648
        %v3460 = vor.u32 1.1754944e-38, %v3459
        %v3461 = vsel %vm3458, %v3460, %v3456
        %v3462 = vmul.f32 1.0, %v3461
        %v3463 = vmul.f32 %v3442, %v3342
        %v3464 = vmul.f32 %v3423, %v3443
        %v3465 = vadd.f32 %v3463, %v3464
        %v3466 = vtanh.pop %v3465
        %v3467 = vmul.f32 %v3462, %v3466
        %v3468 = vsel %vm1898, %v3465, %v3342
        %v3469 = vsel %vm1898, %v3467, %v3343
        %3470 = vst [vmem:[%s2298] sm:$0xff] %v3469
        %3471 = vst [vmem:[%s2300] sm:$0xff] %v3468
        %p3472 = scmp.eq.s32.totalorder %s29, 1
        // Predicated region
        $region77: #{tpu_custom_call.1} parent=55 // pred_check
          %p3473 = pneg %p3472
        $region78: #{tpu_custom_call.1} parent=55 // pred_check_branch
          %3475 = sbr.rel (%p3473) target = $region80
        $region79: #{tpu_custom_call.1} parent=55 // pred_region
          %v3476 = vpack.c.bf16 %v3469, %v3469
          %v3477 = vld [vmem:[%s7] sm:$0xf]
          %v3478 = vld [vmem:[%s7 + $0x4] sm:$0xf]
          %v3479 = vld [vmem:[%s7 + $0x8] sm:$0xf]
          %v3480 = vld [vmem:[%s7 + $0xc] sm:$0xf]
          %v3481 = vld [vmem:[%s7 + $0x10] sm:$0xf]
          %v3482 = vld [vmem:[%s7 + $0x14] sm:$0xf]
          %v3483 = vld [vmem:[%s7 + $0x18] sm:$0xf]
          %v3484 = vld [vmem:[%s7 + $0x1c] sm:$0xf]
          %v3485 = vld [vmem:[%s7 + $0x20] sm:$0xf]
          %v3486 = vld [vmem:[%s7 + $0x24] sm:$0xf]
          %v3487 = vld [vmem:[%s7 + $0x28] sm:$0xf]
          %v3488 = vld [vmem:[%s7 + $0x2c] sm:$0xf]
          %v3489 = vld [vmem:[%s7 + $0x30] sm:$0xf]
          %v3490 = vld [vmem:[%s7 + $0x34] sm:$0xf]
          %v3491 = vld [vmem:[%s7 + $0x38] sm:$0xf]
          %v3492 = vld [vmem:[%s7 + $0x3c] sm:$0xf]
          %v3493 = vld [vmem:[%s8] sm:$0x1]
          %v3495 = vperm.slane %v3493, 0
          %v3513 = vunpack.c.l.b16 %v3477
          %v3514 = vunpack.c.l.b16 %v3478
          %v3515 = vunpack.c.l.b16 %v3479
          %v3516 = vunpack.c.l.b16 %v3480
          %v3517 = vunpack.c.l.b16 %v3481
          %v3518 = vunpack.c.l.b16 %v3482
          %v3519 = vunpack.c.l.b16 %v3483
          %v3520 = vunpack.c.l.b16 %v3484
          %v3521 = vunpack.c.l.b16 %v3485
          %v3522 = vunpack.c.l.b16 %v3486
          %v3523 = vunpack.c.l.b16 %v3487
          %v3524 = vunpack.c.l.b16 %v3488
          %v3525 = vunpack.c.l.b16 %v3489
          %v3526 = vunpack.c.l.b16 %v3490
          %v3527 = vunpack.c.l.b16 %v3491
          %v3528 = vunpack.c.l.b16 %v3492
          %v3529 = vpack.c.b16 %v3514, %v3513
          %v3530 = vpack.c.b16 %v3516, %v3515
          %v3531 = vpack.c.b16 %v3518, %v3517
          %v3532 = vpack.c.b16 %v3520, %v3519
          %v3533 = vpack.c.b16 %v3522, %v3521
          %v3534 = vpack.c.b16 %v3524, %v3523
          %v3535 = vpack.c.b16 %v3526, %v3525
          %v3536 = vpack.c.b16 %v3528, %v3527
          %3545 = vmatpush.bf16.msra.mxu0 %v3536
          %3546 = vmatpush.bf16.msra.mxu0 %v3535
          %3547 = vmatpush.bf16.msra.mxu0 %v3534
          %3548 = vmatpush.bf16.msra.mxu0 %v3533
          %3549 = vmatpush.bf16.msra.mxu0 %v3532
          %3550 = vmatpush.bf16.msra.mxu0 %v3531
          %3551 = vmatpush.bf16.msra.mxu0 %v3530
          %3552 = vmatpush.bf16.msra.mxu0 %v3529
          %3553 = vmatmul.bf16.gmra.mxu0 %v3476
          %v3554 = vpop.f32.mrf.mxu0
          %v3555 = vadd.f32 %v3495, %v3554
          %v3556 = vpop.f32.mrf.mxu0
          %3557 = vdwg.mxu0
          %3558 = vst [vmem:[#allocation14] sm:$0xff] %v3555
        $region80: #{tpu_custom_call.1} parent=55 // pred_fallthru
          _
        // Predicated region
        $region81: #{tpu_custom_call.1} parent=55 // pred_check
          %p3559 = pneg %p250
        $region82: #{tpu_custom_call.1} parent=55 // pred_check_branch
          %3561 = sbr.rel (%p3559) target = $region84
        $region83: #{tpu_custom_call.1} parent=55 // pred_region
          %3563 = vsyncadd [#allocation8], 0
          %s3564 = smul.addr %s28, 8
          %s3565 = scalar_lea.hbm %s9, %s3564
          %s3567 = sshll.u32 [#allocation14], 4
          %s3568 = int_to_ptr.vmem [resolvable:$true] %s3567
          %s3569 = sshll.u32 %s3565, 4
          %s3570 = int_to_ptr.hbm [resolvable:$true] %s3569
          %3572 = dma.vmem_to_hbm [thread:$0]  %s3568, 128, %s3570, [#allocation8]
        $region84: #{tpu_custom_call.1} parent=55 // pred_fallthru
          _
        // Predicated region
        $region85: #{tpu_custom_call.1} parent=55 // pred_check
          %p3573 = pneg %p250
        $region86: #{tpu_custom_call.1} parent=55 // pred_check_branch
          %3575 = sbr.rel (%p3573) target = $region88
        $region87: #{tpu_custom_call.1} parent=55 // pred_region
          %3577 = dma.done [#allocation8], 128
        $region88: #{tpu_custom_call.1} parent=55 // pred_fallthru
          _
      $region56: #{tpu_custom_call.1} parent=5 // pred_fallthru
        _
      %p3578 = scmp.le.s32.totalorder 2, %s19
      // Predicated region
      $region89: #{tpu_custom_call.1} parent=5 // pred_check
        %p3579 = pneg %p3578
      $region90: #{tpu_custom_call.1} parent=5 // pred_check_branch
        %3581 = sbr.rel (%p3579) target = $region92
      $region91: #{tpu_custom_call.1} parent=5 // pred_region
        %s3582 = ssub.s32 %s19, 2
      $region92: #{tpu_custom_call.1} parent=5 // pred_fallthru
        _
    $region6: #{tpu_custom_call.1} parent=1 // loop_footer
      %s23 = sadd.s32 1, %s19
    $region7: #{tpu_custom_call.1} parent=1 // loop_footer_branch
      %18 = sbr.rel target = $region3
    $region8: #{tpu_custom_call.1} parent=1 // loop_exit
      _
    %3583 = vsyncpa [#allocation7], 1
    %s3584 = scalar_lea.sflag [#allocation7], 1
    %3585 = vsyncpa %s3584, 1
    %3586 = vsyncpa [#allocation10], 1
    %3587 = vsyncpa [#allocation13], 1
    %3588 = vsyncpa [#allocation8], 1
    %s3589 = scalar_lea.sflag [#allocation8], 1
    %3590 = vsyncpa %s3589, 1

// kernel: tpu_custom_call.1
$region0: #{tpu_custom_call.1}
  #allocation0 [shape = 'u32[]', space=smem, size = 0x4, offset = 0x4, fixed_abs, tag = 'smem constant byte address 0x4 - core index']
  #allocation1 [shape = 'u32[72,128]{1,0:T(1,128)}', space=vmem, size = 0x9000, scoped, tag = 'internal scratch']
  #allocation2 [shape = 'f32[2,8,128]{2,1,0:T(8,128)}', space=vmem, size = 0x2000, scoped, tag = 'scratch operand']
  #allocation3 [shape = 'f32[2,8,128]{2,1,0:T(8,128)}', space=vmem, size = 0x2000, scoped, tag = 'scratch operand']
  #allocation4 [shape = 'f32[64,512]{1,0:T(8,128)}', space=vmem, size = 0x20000, scoped, tag = 'scratch operand']
  #allocation5 [shape = 'f32[64,128]{1,0:T(8,128)}', space=vmem, size = 0x8000, scoped, tag = 'scratch operand']
  %s0 = inlined_call_operand.vmem [shape: bf16[1,128,16], index: 0, kind: input, shape index: {}]
  %s1 = inlined_call_operand.hbm [shape: bf16[16,512], index: 1, kind: input, shape index: {}]
  %s2 = inlined_call_operand.hbm [shape: bf16[128,512], index: 2, kind: input, shape index: {}]
  %s3 = inlined_call_operand.vmem [shape: f32[1,512], index: 3, kind: input, shape index: {}]
  %s4 = inlined_call_operand.hbm [shape: bf16[128,512], index: 4, kind: input, shape index: {}]
  %s5 = inlined_call_operand.hbm [shape: bf16[128,512], index: 5, kind: input, shape index: {}]
  %s6 = inlined_call_operand.vmem [shape: f32[1,512], index: 6, kind: input, shape index: {}]
  %s7 = inlined_call_operand.vmem [shape: bf16[128,128], index: 7, kind: input, shape index: {}]
  %s8 = inlined_call_operand.vmem [shape: f32[1,128], index: 8, kind: input, shape index: {}]
  %s9 = inlined_call_operand.hbm [shape: f32[1,8,128], index: 9, kind: output, shape index: {}]
  %s10 = sld [smem:[#allocation0]]
  $region93: #{tpu_custom_call.1} parent=0
    _
  %s12 = ssub.s32 1, %s10
  %s13 = scalar_select 0, %s12, %s10
  $region1: #{tpu_custom_call.1} parent=0
    #allocation6 [shape = 'u8[16384]{0}', space=vmem, size = 0x4000, scoped, tag = 'input window, operand 1, single buffered']
    #allocation7 [shape = 's32[2]{0}', space=sflag, size = 0x8, scoped, tag = 'scoped memory for tpu_custom_call.1']
    #allocation8 [shape = 's32[2]{0}', space=sflag, size = 0x8, scoped, tag = 'scoped memory for tpu_custom_call.1']
    #allocation9 [shape = 'u8[131072]{0}', space=vmem, size = 0x20000, scoped, tag = 'input window, operand 2, single buffered']
    #allocation10 [shape = 's32[1]{0}', space=sflag, size = 0x4, scoped, tag = 'scoped memory for tpu_custom_call.1']
    #allocation11 [shape = 'u8[131072]{0}', space=vmem, size = 0x20000, scoped, tag = 'input window, operand 4, single buffered']
    #allocation12 [shape = 'u8[131072]{0}', space=vmem, size = 0x20000, scoped, tag = 'input window, operand 5, single buffered']
    #allocation13 [shape = 's32[1]{0}', space=sflag, size = 0x4, scoped, tag = 'scoped memory for tpu_custom_call.1']
    #allocation14 [shape = 'u8[4096]{0}', space=vmem, size = 0x1000, scoped, tag = 'output window, operand 0, single buffered']
    %14 = vsyncpa [#allocation7], 0
    %15 = vsyncpa [#allocation10], 0
    %16 = vsyncpa [#allocation13], 0
    %17 = vsyncpa [#allocation8], 0
    loop: start=0, step=1, limit=4
    $region2: #{tpu_custom_call.1} parent=1 // loop_pre_header
      _
    $region3: #{tpu_custom_call.1} parent=1 // loop_header
      %s19 = sphi 0, %s23
      %p20 = scmp.ge.s32.totalorder %s19, 4
      %s26 = sphi 0, %s38
      %s27 = sphi 0, %s34
      %s28 = sphi 0, %s26
      %s29 = sphi 0, %s27
      %s30 = sphi 0, %s28
      %s31 = sphi 0, %s29
      %s43 = sphi 0, %s45
      %s46 = sphi 0, %s43
      %s47 = sphi 0, %s46
      %s63 = sphi 0, %s47
      %s67 = sphi 0, %s67
      %s69 = sphi 0, %s67
      %s70 = sphi 0, %s69
      %s84 = sphi 0, %s70
      %s88 = sphi 0, %s88
      %s90 = sphi 0, %s88
      %s91 = sphi 0, %s90
      %s105 = sphi 0, %s91
      %s109 = sphi 0, %s109
      %s111 = sphi 0, %s109
      %s112 = sphi 0, %s111
      %s126 = sphi 0, %s112
      %s130 = sphi 0, %s130
      %s132 = sphi 0, %s130
      %s133 = sphi 0, %s132
      %s147 = sphi 0, %s133
      %s151 = sphi 0, %s151
      %s153 = sphi 0, %s151
      %s154 = sphi 0, %s153
      %s168 = sphi 0, %s154
      %s172 = sphi 0, %s172
      %s174 = sphi 0, %s172
      %s175 = sphi 0, %s174
      %s189 = sphi 0, %s175
      %s193 = sphi 0, %s193
      %s195 = sphi 0, %s193
      %s196 = sphi 0, %s195
      %s210 = sphi 0, %s196
      %s214 = sphi 0, %s214
      %s216 = sphi 0, %s214
      %s217 = sphi 0, %s216
      %s231 = sphi 0, %s217
      %s237 = sphi 0, %s239
      %s240 = sphi 0, %s237
      %s241 = sphi 0, %s240
      %s257 = sphi 0, %s241
    $region4: #{tpu_custom_call.1} parent=1 // loop_header_branch
      %22 = sbr.rel (%p20) target = $region8
    $region5: #{tpu_custom_call.1} parent=1 // loop_body
      %s24 = ssub.s32 %s19, 1
      %s25 = ssub.s32 %s19, 2
      %s32 = sadd.s32 1, %s27
      %p33 = scmp.ge.s32.totalorder %s32, 2
      %s34 = scalar_select %p33, 0, %s32
      %s35 = sadd.s32 1, %s26
      %s36 = scalar_select %p33, %s35, %s26
      %p37 = scmp.ge.s32.totalorder %s36, 1
      %s38 = scalar_select %p37, 0, %s36
      %s39 = ssub.s32 %s26, %s38
      %s40 = ssub.s32 %s27, %s34
      %s41 = sor.u32 %s39, %s40
      %p42 = scmp.eq.s32.totalorder %s41, 0
      %s44 = sadd.s32 %s43, 1
      %s45 = scalar_select %p42, %s43, %s44
      %p48 = pneg %p42
      %p49 = scmp.eq.s32.totalorder %s19, 1
      %p50 = por %p48, %p49
      %p51 = scmp.ne.s32.totalorder %s43, %s46
      %p52 = scmp.eq.s32.totalorder %s19, 0
      %p53 = por %p51, %p52
      %p54 = scmp.ne.s32.totalorder %s43, %s46
      %p55 = scmp.eq.s32.totalorder %s24, 1
      %p56 = por %p54, %p55
      %p57 = scmp.ne.s32.totalorder %s46, %s47
      %p58 = scmp.eq.s32.totalorder %s24, 0
      %p59 = por %p57, %p58
      %p60 = scmp.ne.s32.totalorder %s46, %s47
      %p61 = scmp.eq.s32.totalorder %s25, 1
      %p62 = por %p60, %p61
      %p64 = scmp.ne.s32.totalorder %s47, %s63
      %p65 = scmp.eq.s32.totalorder %s25, 0
      %p66 = por %p64, %p65
      %s68 = sadd.s32 %s67, 1
      %p71 = scmp.eq.s32.totalorder %s19, 1
      %p72 = scmp.ne.s32.totalorder %s67, %s69
      %p73 = scmp.eq.s32.totalorder %s19, 0
      %p74 = por %p72, %p73
      %p75 = scmp.ne.s32.totalorder %s67, %s69
      %p76 = scmp.eq.s32.totalorder %s24, 1
      %p77 = por %p75, %p76
      %p78 = scmp.ne.s32.totalorder %s69, %s70
      %p79 = scmp.eq.s32.totalorder %s24, 0
      %p80 = por %p78, %p79
      %p81 = scmp.ne.s32.totalorder %s69, %s70
      %p82 = scmp.eq.s32.totalorder %s25, 1
      %p83 = por %p81, %p82
      %p85 = scmp.ne.s32.totalorder %s70, %s84
      %p86 = scmp.eq.s32.totalorder %s25, 0
      %p87 = por %p85, %p86
      %s89 = sadd.s32 %s88, 1
      %p92 = scmp.eq.s32.totalorder %s19, 1
      %p93 = scmp.ne.s32.totalorder %s88, %s90
      %p94 = scmp.eq.s32.totalorder %s19, 0
      %p95 = por %p93, %p94
      %p96 = scmp.ne.s32.totalorder %s88, %s90
      %p97 = scmp.eq.s32.totalorder %s24, 1
      %p98 = por %p96, %p97
      %p99 = scmp.ne.s32.totalorder %s90, %s91
      %p100 = scmp.eq.s32.totalorder %s24, 0
      %p101 = por %p99, %p100
      %p102 = scmp.ne.s32.totalorder %s90, %s91
      %p103 = scmp.eq.s32.totalorder %s25, 1
      %p104 = por %p102, %p103
      %p106 = scmp.ne.s32.totalorder %s91, %s105
      %p107 = scmp.eq.s32.totalorder %s25, 0
      %p108 = por %p106, %p107
      %s110 = sadd.s32 %s109, 1
      %p113 = scmp.eq.s32.totalorder %s19, 1
      %p114 = scmp.ne.s32.totalorder %s109, %s111
      %p115 = scmp.eq.s32.totalorder %s19, 0
      %p116 = por %p114, %p115
      %p117 = scmp.ne.s32.totalorder %s109, %s111
      %p118 = scmp.eq.s32.totalorder %s24, 1
      %p119 = por %p117, %p118
      %p120 = scmp.ne.s32.totalorder %s111, %s112
      %p121 = scmp.eq.s32.totalorder %s24, 0
      %p122 = por %p120, %p121
      %p123 = scmp.ne.s32.totalorder %s111, %s112
      %p124 = scmp.eq.s32.totalorder %s25, 1
      %p125 = por %p123, %p124
      %p127 = scmp.ne.s32.totalorder %s112, %s126
      %p128 = scmp.eq.s32.totalorder %s25, 0
      %p129 = por %p127, %p128
      %s131 = sadd.s32 %s130, 1
      %p134 = scmp.eq.s32.totalorder %s19, 1
      %p135 = scmp.ne.s32.totalorder %s130, %s132
      %p136 = scmp.eq.s32.totalorder %s19, 0
      %p137 = por %p135, %p136
      %p138 = scmp.ne.s32.totalorder %s130, %s132
      %p139 = scmp.eq.s32.totalorder %s24, 1
      %p140 = por %p138, %p139
      %p141 = scmp.ne.s32.totalorder %s132, %s133
      %p142 = scmp.eq.s32.totalorder %s24, 0
      %p143 = por %p141, %p142
      %p144 = scmp.ne.s32.totalorder %s132, %s133
      %p145 = scmp.eq.s32.totalorder %s25, 1
      %p146 = por %p144, %p145
      %p148 = scmp.ne.s32.totalorder %s133, %s147
      %p149 = scmp.eq.s32.totalorder %s25, 0
      %p150 = por %p148, %p149
      %s152 = sadd.s32 %s151, 1
      %p155 = scmp.eq.s32.totalorder %s19, 1
      %p156 = scmp.ne.s32.totalorder %s151, %s153
      %p157 = scmp.eq.s32.totalorder %s19, 0
      %p158 = por %p156, %p157
      %p159 = scmp.ne.s32.totalorder %s151, %s153
      %p160 = scmp.eq.s32.totalorder %s24, 1
      %p161 = por %p159, %p160
      %p162 = scmp.ne.s32.totalorder %s153, %s154
      %p163 = scmp.eq.s32.totalorder %s24, 0
      %p164 = por %p162, %p163
      %p165 = scmp.ne.s32.totalorder %s153, %s154
      %p166 = scmp.eq.s32.totalorder %s25, 1
      %p167 = por %p165, %p166
      %p169 = scmp.ne.s32.totalorder %s154, %s168
      %p170 = scmp.eq.s32.totalorder %s25, 0
      %p171 = por %p169, %p170
      %s173 = sadd.s32 %s172, 1
      %p176 = scmp.eq.s32.totalorder %s19, 1
      %p177 = scmp.ne.s32.totalorder %s172, %s174
      %p178 = scmp.eq.s32.totalorder %s19, 0
      %p179 = por %p177, %p178
      %p180 = scmp.ne.s32.totalorder %s172, %s174
      %p181 = scmp.eq.s32.totalorder %s24, 1
      %p182 = por %p180, %p181
      %p183 = scmp.ne.s32.totalorder %s174, %s175
      %p184 = scmp.eq.s32.totalorder %s24, 0
      %p185 = por %p183, %p184
      %p186 = scmp.ne.s32.totalorder %s174, %s175
      %p187 = scmp.eq.s32.totalorder %s25, 1
      %p188 = por %p186, %p187
      %p190 = scmp.ne.s32.totalorder %s175, %s189
      %p191 = scmp.eq.s32.totalorder %s25, 0
      %p192 = por %p190, %p191
      %s194 = sadd.s32 %s193, 1
      %p197 = scmp.eq.s32.totalorder %s19, 1
      %p198 = scmp.ne.s32.totalorder %s193, %s195
      %p199 = scmp.eq.s32.totalorder %s19, 0
      %p200 = por %p198, %p199
      %p201 = scmp.ne.s32.totalorder %s193, %s195
      %p202 = scmp.eq.s32.totalorder %s24, 1
      %p203 = por %p201, %p202
      %p204 = scmp.ne.s32.totalorder %s195, %s196
      %p205 = scmp.eq.s32.totalorder %s24, 0
      %p206 = por %p204, %p205
      %p207 = scmp.ne.s32.totalorder %s195, %s196
      %p208 = scmp.eq.s32.totalorder %s25, 1
      %p209 = por %p207, %p208
      %p211 = scmp.ne.s32.totalorder %s196, %s210
      %p212 = scmp.eq.s32.totalorder %s25, 0
      %p213 = por %p211, %p212
      %s215 = sadd.s32 %s214, 1
      %p218 = scmp.eq.s32.totalorder %s19, 1
      %p219 = scmp.ne.s32.totalorder %s214, %s216
      %p220 = scmp.eq.s32.totalorder %s19, 0
      %p221 = por %p219, %p220
      %p222 = scmp.ne.s32.totalorder %s214, %s216
      %p223 = scmp.eq.s32.totalorder %s24, 1
      %p224 = por %p222, %p223
      %p225 = scmp.ne.s32.totalorder %s216, %s217
      %p226 = scmp.eq.s32.totalorder %s24, 0
      %p227 = por %p225, %p226
      %p228 = scmp.ne.s32.totalorder %s216, %s217
      %p229 = scmp.eq.s32.totalorder %s25, 1
      %p230 = por %p228, %p229
      %p232 = scmp.ne.s32.totalorder %s217, %s231
      %p233 = scmp.eq.s32.totalorder %s25, 0
      %p234 = por %p232, %p233
      %s235 = ssub.s32 %s26, %s38
      %p236 = scmp.eq.s32.totalorder %s235, 0
      %s238 = sadd.s32 %s237, 1
      %s239 = scalar_select %p236, %s237, %s238
      %p242 = pneg %p236
      %p243 = scmp.eq.s32.totalorder %s19, 1
      %p244 = por %p242, %p243
      %p245 = scmp.ne.s32.totalorder %s237, %s240
      %p246 = scmp.eq.s32.totalorder %s19, 0
      %p247 = por %p245, %p246
      %p248 = scmp.ne.s32.totalorder %s237, %s240
      %p249 = scmp.eq.s32.totalorder %s24, 1
      %p250 = por %p248, %p249
      %p251 = scmp.ne.s32.totalorder %s240, %s241
      %p252 = scmp.eq.s32.totalorder %s24, 0
      %p253 = por %p251, %p252
      %p254 = scmp.ne.s32.totalorder %s240, %s241
      %p255 = scmp.eq.s32.totalorder %s25, 1
      %p256 = por %p254, %p255
      %p258 = scmp.ne.s32.totalorder %s241, %s257
      %p259 = scmp.eq.s32.totalorder %s25, 0
      %p260 = por %p258, %p259
      %p261 = scmp.le.s32.totalorder 1, %s19
      %p262 = scmp.lt.s32.totalorder %s19, 3
      %p263 = pnand %p261, %p262
      %p264 = pneg %p263
      // Predicated region
      $region9: #{tpu_custom_call.1} parent=5 // pred_check
        _
      $region10: #{tpu_custom_call.1} parent=5 // pred_check_branch
        %266 = sbr.rel (%p263) target = $region12
      $region11: #{tpu_custom_call.1} parent=5 // pred_region
        %s267 = ssub.s32 %s19, 1
        // Predicated region
        $region13: #{tpu_custom_call.1} parent=11 // pred_check
          %p268 = pneg %p80
        $region14: #{tpu_custom_call.1} parent=11 // pred_check_branch
          %270 = sbr.rel (%p268) target = $region16
        $region15: #{tpu_custom_call.1} parent=11 // pred_region
          %272 = vsyncadd [#allocation7], 0
          %s273 = sshll.u32 %s1, 4
          %s274 = int_to_ptr.hbm [resolvable:$true] %s273
          %s275 = sshll.u32 [#allocation6], 4
          %s276 = int_to_ptr.vmem [resolvable:$true] %s275
          %281 = dma.hbm_to_vmem [thread:$0]  %s274, 512, %s276, [#allocation7], 256, 256, 16
        $region16: #{tpu_custom_call.1} parent=11 // pred_fallthru
          _
        // Predicated region
        $region17: #{tpu_custom_call.1} parent=11 // pred_check
          %p282 = pneg %p101
        $region18: #{tpu_custom_call.1} parent=11 // pred_check_branch
          %284 = sbr.rel (%p282) target = $region20
        $region19: #{tpu_custom_call.1} parent=11 // pred_region
          %286 = vsyncadd [#allocation10], 0
          %s287 = sshll.u32 %s2, 4
          %s288 = int_to_ptr.hbm [resolvable:$true] %s287
          %s289 = sshll.u32 [#allocation9], 4
          %s290 = int_to_ptr.vmem [resolvable:$true] %s289
          %295 = dma.hbm_to_vmem [thread:$0]  %s288, 4096, %s290, [#allocation10], 256, 256, 16
        $region20: #{tpu_custom_call.1} parent=11 // pred_fallthru
          _
        // Predicated region
        $region21: #{tpu_custom_call.1} parent=11 // pred_check
          %p296 = pneg %p122
        $region22: #{tpu_custom_call.1} parent=11 // pred_check_branch
          %298 = sbr.rel (%p296) target = $region24
        $region23: #{tpu_custom_call.1} parent=11 // pred_region
          _
        $region24: #{tpu_custom_call.1} parent=11 // pred_fallthru
          _
        // Predicated region
        $region25: #{tpu_custom_call.1} parent=11 // pred_check
          %p299 = pneg %p143
        $region26: #{tpu_custom_call.1} parent=11 // pred_check_branch
          %301 = sbr.rel (%p299) target = $region28
        $region27: #{tpu_custom_call.1} parent=11 // pred_region
          %303 = vsyncadd [#allocation10], 0
          %s304 = sshll.u32 %s4, 4
          %s305 = int_to_ptr.hbm [resolvable:$true] %s304
          %s306 = sshll.u32 [#allocation11], 4
          %s307 = int_to_ptr.vmem [resolvable:$true] %s306
          %312 = dma.hbm_to_vmem [thread:$0]  %s305, 4096, %s307, [#allocation10], 256, 256, 16
        $region28: #{tpu_custom_call.1} parent=11 // pred_fallthru
          _
        // Predicated region
        $region29: #{tpu_custom_call.1} parent=11 // pred_check
          %p313 = pneg %p164
        $region30: #{tpu_custom_call.1} parent=11 // pred_check_branch
          %315 = sbr.rel (%p313) target = $region32
        $region31: #{tpu_custom_call.1} parent=11 // pred_region
          %317 = vsyncadd [#allocation13], 0
          %s318 = sshll.u32 %s5, 4
          %s319 = int_to_ptr.hbm [resolvable:$true] %s318
          %s320 = sshll.u32 [#allocation12], 4
          %s321 = int_to_ptr.vmem [resolvable:$true] %s320
          %326 = dma.hbm_to_vmem [thread:$0]  %s319, 4096, %s321, [#allocation13], 256, 256, 16
        $region32: #{tpu_custom_call.1} parent=11 // pred_fallthru
          _
        // Predicated region
        $region33: #{tpu_custom_call.1} parent=11 // pred_check
          %p327 = pneg %p185
        $region34: #{tpu_custom_call.1} parent=11 // pred_check_branch
          %329 = sbr.rel (%p327) target = $region36
        $region35: #{tpu_custom_call.1} parent=11 // pred_region
          _
        $region36: #{tpu_custom_call.1} parent=11 // pred_fallthru
          _
        // Predicated region
        $region37: #{tpu_custom_call.1} parent=11 // pred_check
          %p330 = pneg %p206
        $region38: #{tpu_custom_call.1} parent=11 // pred_check_branch
          %332 = sbr.rel (%p330) target = $region40
        $region39: #{tpu_custom_call.1} parent=11 // pred_region
          _
        $region40: #{tpu_custom_call.1} parent=11 // pred_fallthru
          _
        // Predicated region
        $region41: #{tpu_custom_call.1} parent=11 // pred_check
          %p333 = pneg %p227
        $region42: #{tpu_custom_call.1} parent=11 // pred_check_branch
          %335 = sbr.rel (%p333) target = $region44
        $region43: #{tpu_custom_call.1} parent=11 // pred_region
          _
        $region44: #{tpu_custom_call.1} parent=11 // pred_fallthru
          _
      $region12: #{tpu_custom_call.1} parent=5 // pred_fallthru
        _
      %p336 = scmp.lt.s32.totalorder %s19, 2
      // Predicated region
      $region45: #{tpu_custom_call.1} parent=5 // pred_check
        %p337 = pneg %p336
      $region46: #{tpu_custom_call.1} parent=5 // pred_check_branch
        %339 = sbr.rel (%p337) target = $region48
      $region47: #{tpu_custom_call.1} parent=5 // pred_region
        // Predicated region
        $region49: #{tpu_custom_call.1} parent=47 // pred_check
          %p340 = pneg %p53
        $region50: #{tpu_custom_call.1} parent=47 // pred_check_branch
          %342 = sbr.rel (%p340) target = $region52
        $region51: #{tpu_custom_call.1} parent=47 // pred_region
          %s343 = smul.u32 8, %s27
          %p344 = scmp.lt.s32.totalorder %s26, 0
          %s345 = scalar_select %p344, %s26, 0
          %p346 = scmp.lt.s32.totalorder %s343, 15
          %s347 = scalar_select %p346, %s343, 15
          %s348 = smul.addr %s345, 16
          %s349 = sadd.s32 %s347, %s348
          %s350 = smul.addr %s349, 4
          %s351 = scalar_lea.vmem %s0, %s350
          %s352 = smul.u32 8, %s27
        $region52: #{tpu_custom_call.1} parent=47 // pred_fallthru
          _
      $region48: #{tpu_custom_call.1} parent=5 // pred_fallthru
        _
      %p353 = scmp.le.s32.totalorder 1, %s19
      %p354 = scmp.lt.s32.totalorder %s19, 3
      %p355 = pnand %p353, %p354
      %p356 = pneg %p355
      // Predicated region
      $region53: #{tpu_custom_call.1} parent=5 // pred_check
        _
      $region54: #{tpu_custom_call.1} parent=5 // pred_check_branch
        %358 = sbr.rel (%p355) target = $region56
      $region55: #{tpu_custom_call.1} parent=5 // pred_region
        %s359 = ssub.s32 %s19, 1
        // Predicated region
        $region57: #{tpu_custom_call.1} parent=55 // pred_check
          %p360 = pneg %p80
        $region58: #{tpu_custom_call.1} parent=55 // pred_check_branch
          %362 = sbr.rel (%p360) target = $region60
        $region59: #{tpu_custom_call.1} parent=55 // pred_region
          %364 = dma.done [#allocation7], 512
        $region60: #{tpu_custom_call.1} parent=55 // pred_fallthru
          _
        // Predicated region
        $region61: #{tpu_custom_call.1} parent=55 // pred_check
          %p365 = pneg %p101
        $region62: #{tpu_custom_call.1} parent=55 // pred_check_branch
          %367 = sbr.rel (%p365) target = $region64
        $region63: #{tpu_custom_call.1} parent=55 // pred_region
          %369 = dma.done [#allocation10], 4096
        $region64: #{tpu_custom_call.1} parent=55 // pred_fallthru
          _
        // Predicated region
        $region65: #{tpu_custom_call.1} parent=55 // pred_check
          %p370 = pneg %p143
        $region66: #{tpu_custom_call.1} parent=55 // pred_check_branch
          %372 = sbr.rel (%p370) target = $region68
        $region67: #{tpu_custom_call.1} parent=55 // pred_region
          %374 = dma.done [#allocation10], 4096
        $region68: #{tpu_custom_call.1} parent=55 // pred_fallthru
          _
        // Predicated region
        $region69: #{tpu_custom_call.1} parent=55 // pred_check
          %p375 = pneg %p164
        $region70: #{tpu_custom_call.1} parent=55 // pred_check_branch
          %377 = sbr.rel (%p375) target = $region72
        $region71: #{tpu_custom_call.1} parent=55 // pred_region
          %379 = dma.done [#allocation13], 4096
        $region72: #{tpu_custom_call.1} parent=55 // pred_fallthru
          _
        %s380 = smul.u32 8, %s29
        %p381 = scmp.lt.s32.totalorder %s28, 0
        %s382 = scalar_select %p381, %s28, 0
        %p383 = scmp.lt.s32.totalorder %s380, 15
        %s384 = scalar_select %p383, %s380, 15
        %s385 = smul.addr %s382, 16
        %s386 = sadd.s32 %s384, %s385
        %s387 = smul.addr %s386, 4
        %s388 = scalar_lea.vmem %s0, %s387
        %p389 = pneg %p59
        %p390 = pneg %p56
        %p391 = pneg %p80
        %p392 = pneg %p77
        %p393 = pneg %p101
        %p394 = pneg %p98
        %p395 = pneg %p122
        %p396 = pneg %p119
        %p397 = pneg %p143
        %p398 = pneg %p140
        %p399 = pneg %p164
        %p400 = pneg %p161
        %p401 = pneg %p185
        %p402 = pneg %p182
        %p403 = pneg %p206
        %p404 = pneg %p203
        %p405 = pneg %p227
        %p406 = pneg %p224
        %p407 = pneg %p253
        %p408 = pneg %p250
        %s409 = smul.u32 8, %s29
        %p410 = scmp.lt.s32.totalorder %s28, 0
        %s411 = scalar_select %p410, %s28, 0
        %p412 = scmp.lt.s32.totalorder %s409, 15
        %s413 = scalar_select %p412, %s409, 15
        %s414 = smul.addr %s411, 16
        %s415 = sadd.s32 %s413, %s414
        %s416 = smul.addr %s415, 4
        %s417 = scalar_lea.vmem %s0, %s416
        %s418 = smul.u32 8, %s29
        %p420 = scmp.eq.s32.totalorder %s29, 0
        // Predicated region
        $region73: #{tpu_custom_call.1} parent=55 // pred_check
          %p421 = pneg %p420
        $region74: #{tpu_custom_call.1} parent=55 // pred_check_branch
          %423 = sbr.rel (%p421) target = $region76
        $region75: #{tpu_custom_call.1} parent=55 // pred_region
          %424 = vst [vmem:[#allocation2] sm:$0xff] 0.0
          %425 = vst [vmem:[#allocation2 + $0x8] sm:$0xff] 0.0
          %426 = vst [vmem:[#allocation3] sm:$0xff] 0.0
          %427 = vst [vmem:[#allocation3 + $0x8] sm:$0xff] 0.0
          %428 = vst [vmem:[#allocation14] sm:$0xff] 0.0
        $region76: #{tpu_custom_call.1} parent=55 // pred_fallthru
          _
        %v429 = vld [vmem:[%s417] sm:$0xf]
        %v430 = vld [vmem:[%s417 + $0x4] sm:$0xf]
        %v431 = vld [vmem:[%s417 + $0x8] sm:$0xf]
        %v432 = vld [vmem:[%s417 + $0xc] sm:$0xf]
        %v433 = vld [vmem:[%s417 + $0x10] sm:$0xf]
        %v434 = vld [vmem:[%s417 + $0x14] sm:$0xf]
        %v435 = vld [vmem:[%s417 + $0x18] sm:$0xf]
        %v436 = vld [vmem:[%s417 + $0x1c] sm:$0xf]
        %v437 = vld [vmem:[#allocation6] sm:$0xff]
        %v438 = vld [vmem:[#allocation6 + $0x8] sm:$0xff]
        %v439 = vld [vmem:[#allocation6 + $0x10] sm:$0xff]
        %v440 = vld [vmem:[#allocation6 + $0x18] sm:$0xff]
        %v441 = vld [vmem:[%s3] sm:$0xf]
        %v443 = vperm.slane %v441, 0
        %v444 = vperm.slane %v441, 1
        %v445 = vperm.slane %v441, 2
        %v446 = vperm.slane %v441, 3
        %v459 = vunpack.c.l.b16 %v429
        %v460 = vunpack.c.l.b16 %v430
        %v461 = vunpack.c.l.b16 %v431
        %v462 = vunpack.c.l.b16 %v432
        %v463 = vunpack.c.l.b16 %v433
        %v464 = vunpack.c.l.b16 %v434
        %v465 = vunpack.c.l.b16 %v435
        %v466 = vunpack.c.l.b16 %v436
        %v467 = vpack.c.b16 %v460, %v459
        %v468 = vpack.c.b16 %v462, %v461
        %v469 = vpack.c.b16 %v464, %v463
        %v470 = vpack.c.b16 %v466, %v465
        %v475 = vunpack.c.l.b16 %v437
        %v476 = vunpack.c.h.b16 %v437
        %v477 = vunpack.c.l.b16 %v438
        %v478 = vunpack.c.h.b16 %v438
        %v479 = vunpack.c.l.b16 %v439
        %v480 = vunpack.c.h.b16 %v439
        %v481 = vunpack.c.l.b16 %v440
        %v482 = vunpack.c.h.b16 %v440
        %v483 = vpack.c.b16 %v479, %v475
        %v484 = vpack.c.b16 %v480, %v476
        %v485 = vpack.c.b16 %v481, %v477
        %v486 = vpack.c.b16 %v482, %v478
        %vm491 = vcmask 130048
        %v493 = vsel %vm491, %v467, 0
        %v496 = vsel %vm491, %v468, 0
        %v499 = vsel %vm491, %v469, 0
        %v502 = vsel %vm491, %v470, 0
        %504 = vmatpush.bf16.msra.mxu0 0
        %505 = vmatpush.bf16.msra.mxu0 0
        %506 = vmatpush.bf16.msra.mxu0 0
        %507 = vmatpush.bf16.msra.mxu0 0
        %508 = vmatpush.bf16.msra.mxu0 0
        %509 = vmatpush.bf16.msra.mxu0 0
        %510 = vmatpush.bf16.msra.mxu0 0
        %511 = vmatpush.bf16.msra.mxu0 %v483
        %512 = vmatmul.bf16.gmra.mxu0 %v493
        %v513 = vpop.f32.mrf.mxu0
        %v514 = vadd.f32 %v443, %v513
        %v515 = vpop.f32.mrf.mxu0
        %v516 = vadd.f32 %v443, %v515
        %517 = vmatmul.bf16.gmra.mxu0 %v496
        %v518 = vpop.f32.mrf.mxu0
        %v519 = vadd.f32 %v443, %v518
        %v520 = vpop.f32.mrf.mxu0
        %v521 = vadd.f32 %v443, %v520
        %522 = vmatmul.bf16.gmra.mxu0 %v499
        %v523 = vpop.f32.mrf.mxu0
        %v524 = vadd.f32 %v443, %v523
        %v525 = vpop.f32.mrf.mxu0
        %v526 = vadd.f32 %v443, %v525
        %527 = vmatmul.bf16.gmra.mxu0 %v502
        %v528 = vpop.f32.mrf.mxu0
        %v529 = vadd.f32 %v443, %v528
        %v530 = vpop.f32.mrf.mxu0
        %v531 = vadd.f32 %v443, %v530
        %532 = vdwg.mxu0
        %533 = vmatpush.bf16.msra.mxu0 0
        %534 = vmatpush.bf16.msra.mxu0 0
        %535 = vmatpush.bf16.msra.mxu0 0
        %536 = vmatpush.bf16.msra.mxu0 0
        %537 = vmatpush.bf16.msra.mxu0 0
        %538 = vmatpush.bf16.msra.mxu0 0
        %539 = vmatpush.bf16.msra.mxu0 0
        %540 = vmatpush.bf16.msra.mxu0 %v484
        %541 = vmatmul.bf16.gmra.mxu0 %v493
        %v542 = vpop.f32.mrf.mxu0
        %v543 = vadd.f32 %v444, %v542
        %v544 = vpop.f32.mrf.mxu0
        %v545 = vadd.f32 %v444, %v544
        %546 = vmatmul.bf16.gmra.mxu0 %v496
        %v547 = vpop.f32.mrf.mxu0
        %v548 = vadd.f32 %v444, %v547
        %v549 = vpop.f32.mrf.mxu0
        %v550 = vadd.f32 %v444, %v549
        %551 = vmatmul.bf16.gmra.mxu0 %v499
        %v552 = vpop.f32.mrf.mxu0
        %v553 = vadd.f32 %v444, %v552
        %v554 = vpop.f32.mrf.mxu0
        %v555 = vadd.f32 %v444, %v554
        %556 = vmatmul.bf16.gmra.mxu0 %v502
        %v557 = vpop.f32.mrf.mxu0
        %v558 = vadd.f32 %v444, %v557
        %v559 = vpop.f32.mrf.mxu0
        %v560 = vadd.f32 %v444, %v559
        %561 = vdwg.mxu0
        %562 = vmatpush.bf16.msra.mxu0 0
        %563 = vmatpush.bf16.msra.mxu0 0
        %564 = vmatpush.bf16.msra.mxu0 0
        %565 = vmatpush.bf16.msra.mxu0 0
        %566 = vmatpush.bf16.msra.mxu0 0
        %567 = vmatpush.bf16.msra.mxu0 0
        %568 = vmatpush.bf16.msra.mxu0 0
        %569 = vmatpush.bf16.msra.mxu0 %v485
        %570 = vmatmul.bf16.gmra.mxu0 %v493
        %v571 = vpop.f32.mrf.mxu0
        %v572 = vadd.f32 %v445, %v571
        %v573 = vpop.f32.mrf.mxu0
        %v574 = vadd.f32 %v445, %v573
        %575 = vmatmul.bf16.gmra.mxu0 %v496
        %v576 = vpop.f32.mrf.mxu0
        %v577 = vadd.f32 %v445, %v576
        %v578 = vpop.f32.mrf.mxu0
        %v579 = vadd.f32 %v445, %v578
        %580 = vmatmul.bf16.gmra.mxu0 %v499
        %v581 = vpop.f32.mrf.mxu0
        %v582 = vadd.f32 %v445, %v581
        %v583 = vpop.f32.mrf.mxu0
        %v584 = vadd.f32 %v445, %v583
        %585 = vmatmul.bf16.gmra.mxu0 %v502
        %v586 = vpop.f32.mrf.mxu0
        %v587 = vadd.f32 %v445, %v586
        %v588 = vpop.f32.mrf.mxu0
        %v589 = vadd.f32 %v445, %v588
        %590 = vdwg.mxu0
        %591 = vmatpush.bf16.msra.mxu0 0
        %592 = vmatpush.bf16.msra.mxu0 0
        %593 = vmatpush.bf16.msra.mxu0 0
        %594 = vmatpush.bf16.msra.mxu0 0
        %595 = vmatpush.bf16.msra.mxu0 0
        %596 = vmatpush.bf16.msra.mxu0 0
        %597 = vmatpush.bf16.msra.mxu0 0
        %598 = vmatpush.bf16.msra.mxu0 %v486
        %599 = vmatmul.bf16.gmra.mxu0 %v493
        %v600 = vpop.f32.mrf.mxu0
        %v601 = vadd.f32 %v446, %v600
        %v602 = vpop.f32.mrf.mxu0
        %v603 = vadd.f32 %v446, %v602
        %604 = vmatmul.bf16.gmra.mxu0 %v496
        %v605 = vpop.f32.mrf.mxu0
        %v606 = vadd.f32 %v446, %v605
        %v607 = vpop.f32.mrf.mxu0
        %v608 = vadd.f32 %v446, %v607
        %609 = vmatmul.bf16.gmra.mxu0 %v499
        %v610 = vpop.f32.mrf.mxu0
        %v611 = vadd.f32 %v446, %v610
        %v612 = vpop.f32.mrf.mxu0
        %v613 = vadd.f32 %v446, %v612
        %614 = vmatmul.bf16.gmra.mxu0 %v502
        %v615 = vpop.f32.mrf.mxu0
        %v616 = vadd.f32 %v446, %v615
        %v617 = vpop.f32.mrf.mxu0
        %v618 = vadd.f32 %v446, %v617
        %619 = vdwg.mxu0
        %620 = vst [vmem:[#allocation4] sm:$0xff] %v514
        %621 = vst [vmem:[#allocation4 + $0x8] sm:$0xff] %v543
        %622 = vst [vmem:[#allocation4 + $0x10] sm:$0xff] %v572
        %623 = vst [vmem:[#allocation4 + $0x18] sm:$0xff] %v601
        %624 = vst [vmem:[#allocation4 + $0x20] sm:$0xff] %v516
        %625 = vst [vmem:[#allocation4 + $0x28] sm:$0xff] %v545
        %626 = vst [vmem:[#allocation4 + $0x30] sm:$0xff] %v574
        %627 = vst [vmem:[#allocation4 + $0x38] sm:$0xff] %v603
        %628 = vst [vmem:[#allocation4 + $0x40] sm:$0xff] %v519
        %629 = vst [vmem:[#allocation4 + $0x48] sm:$0xff] %v548
        %630 = vst [vmem:[#allocation4 + $0x50] sm:$0xff] %v577
        %631 = vst [vmem:[#allocation4 + $0x58] sm:$0xff] %v606
        %632 = vst [vmem:[#allocation4 + $0x60] sm:$0xff] %v521
        %633 = vst [vmem:[#allocation4 + $0x68] sm:$0xff] %v550
        %634 = vst [vmem:[#allocation4 + $0x70] sm:$0xff] %v579
        %635 = vst [vmem:[#allocation4 + $0x78] sm:$0xff] %v608
        %636 = vst [vmem:[#allocation4 + $0x80] sm:$0xff] %v524
        %637 = vst [vmem:[#allocation4 + $0x88] sm:$0xff] %v553
        %638 = vst [vmem:[#allocation4 + $0x90] sm:$0xff] %v582
        %639 = vst [vmem:[#allocation4 + $0x98] sm:$0xff] %v611
        %640 = vst [vmem:[#allocation4 + $0xa0] sm:$0xff] %v526
        %641 = vst [vmem:[#allocation4 + $0xa8] sm:$0xff] %v555
        %642 = vst [vmem:[#allocation4 + $0xb0] sm:$0xff] %v584
        %643 = vst [vmem:[#allocation4 + $0xb8] sm:$0xff] %v613
        %644 = vst [vmem:[#allocation4 + $0xc0] sm:$0xff] %v529
        %645 = vst [vmem:[#allocation4 + $0xc8] sm:$0xff] %v558
        %646 = vst [vmem:[#allocation4 + $0xd0] sm:$0xff] %v587
        %647 = vst [vmem:[#allocation4 + $0xd8] sm:$0xff] %v616
        %648 = vst [vmem:[#allocation4 + $0xe0] sm:$0xff] %v531
        %649 = vst [vmem:[#allocation4 + $0xe8] sm:$0xff] %v560
        %650 = vst [vmem:[#allocation4 + $0xf0] sm:$0xff] %v589
        %651 = vst [vmem:[#allocation4 + $0xf8] sm:$0xff] %v618
        %v652 = vld [vmem:[#allocation9] sm:$0xff]
        %v653 = vld [vmem:[#allocation9 + $0x8] sm:$0xff]
        %v654 = vld [vmem:[#allocation9 + $0x10] sm:$0xff]
        %v655 = vld [vmem:[#allocation9 + $0x18] sm:$0xff]
        %v656 = vld [vmem:[#allocation9 + $0x20] sm:$0xff]
        %v657 = vld [vmem:[#allocation9 + $0x28] sm:$0xff]
        %v658 = vld [vmem:[#allocation9 + $0x30] sm:$0xff]
        %v659 = vld [vmem:[#allocation9 + $0x38] sm:$0xff]
        %v660 = vld [vmem:[#allocation9 + $0x40] sm:$0xff]
        %v661 = vld [vmem:[#allocation9 + $0x48] sm:$0xff]
        %v662 = vld [vmem:[#allocation9 + $0x50] sm:$0xff]
        %v663 = vld [vmem:[#allocation9 + $0x58] sm:$0xff]
        %v664 = vld [vmem:[#allocation9 + $0x60] sm:$0xff]
        %v665 = vld [vmem:[#allocation9 + $0x68] sm:$0xff]
        %v666 = vld [vmem:[#allocation9 + $0x70] sm:$0xff]
        %v667 = vld [vmem:[#allocation9 + $0x78] sm:$0xff]
        %v668 = vld [vmem:[#allocation9 + $0x80] sm:$0xff]
        %v669 = vld [vmem:[#allocation9 + $0x88] sm:$0xff]
        %v670 = vld [vmem:[#allocation9 + $0x90] sm:$0xff]
        %v671 = vld [vmem:[#allocation9 + $0x98] sm:$0xff]
        %v672 = vld [vmem:[#allocation9 + $0xa0] sm:$0xff]
        %v673 = vld [vmem:[#allocation9 + $0xa8] sm:$0xff]
        %v674 = vld [vmem:[#allocation9 + $0xb0] sm:$0xff]
        %v675 = vld [vmem:[#allocation9 + $0xb8] sm:$0xff]
        %v676 = vld [vmem:[#allocation9 + $0xc0] sm:$0xff]
        %v677 = vld [vmem:[#allocation9 + $0xc8] sm:$0xff]
        %v678 = vld [vmem:[#allocation9 + $0xd0] sm:$0xff]
        %v679 = vld [vmem:[#allocation9 + $0xd8] sm:$0xff]
        %v680 = vld [vmem:[#allocation9 + $0xe0] sm:$0xff]
        %v681 = vld [vmem:[#allocation9 + $0xe8] sm:$0xff]
        %v682 = vld [vmem:[#allocation9 + $0xf0] sm:$0xff]
        %v683 = vld [vmem:[#allocation9 + $0xf8] sm:$0xff]
        %v684 = vld [vmem:[#allocation2] sm:$0xff]
        %v685 = vld [vmem:[#allocation3] sm:$0xff]
        %v686 = vld [vmem:[#allocation4] sm:$0xff]
        %v687 = vld [vmem:[#allocation4 + $0x8] sm:$0xff]
        %v688 = vld [vmem:[#allocation4 + $0x10] sm:$0xff]
        %v689 = vld [vmem:[#allocation4 + $0x18] sm:$0xff]
        %v690 = vpack.c.bf16 %v684, %v684
        %v723 = vunpack.c.l.b16 %v652
        %v724 = vunpack.c.h.b16 %v652
        %v725 = vunpack.c.l.b16 %v653
        %v726 = vunpack.c.h.b16 %v653
        %v727 = vunpack.c.l.b16 %v654
        %v728 = vunpack.c.h.b16 %v654
        %v729 = vunpack.c.l.b16 %v655
        %v730 = vunpack.c.h.b16 %v655
        %v731 = vunpack.c.l.b16 %v656
        %v732 = vunpack.c.h.b16 %v656
        %v733 = vunpack.c.l.b16 %v657
        %v734 = vunpack.c.h.b16 %v657
        %v735 = vunpack.c.l.b16 %v658
        %v736 = vunpack.c.h.b16 %v658
        %v737 = vunpack.c.l.b16 %v659
        %v738 = vunpack.c.h.b16 %v659
        %v739 = vunpack.c.l.b16 %v660
        %v740 = vunpack.c.h.b16 %v660
        %v741 = vunpack.c.l.b16 %v661
        %v742 = vunpack.c.h.b16 %v661
        %v743 = vunpack.c.l.b16 %v662
        %v744 = vunpack.c.h.b16 %v662
        %v745 = vunpack.c.l.b16 %v663
        %v746 = vunpack.c.h.b16 %v663
        %v747 = vunpack.c.l.b16 %v664
        %v748 = vunpack.c.h.b16 %v664
        %v749 = vunpack.c.l.b16 %v665
        %v750 = vunpack.c.h.b16 %v665
        %v751 = vunpack.c.l.b16 %v666
        %v752 = vunpack.c.h.b16 %v666
        %v753 = vunpack.c.l.b16 %v667
        %v754 = vunpack.c.h.b16 %v667
        %v755 = vunpack.c.l.b16 %v668
        %v756 = vunpack.c.h.b16 %v668
        %v757 = vunpack.c.l.b16 %v669
        %v758 = vunpack.c.h.b16 %v669
        %v759 = vunpack.c.l.b16 %v670
        %v760 = vunpack.c.h.b16 %v670
        %v761 = vunpack.c.l.b16 %v671
        %v762 = vunpack.c.h.b16 %v671
        %v763 = vunpack.c.l.b16 %v672
        %v764 = vunpack.c.h.b16 %v672
        %v765 = vunpack.c.l.b16 %v673
        %v766 = vunpack.c.h.b16 %v673
        %v767 = vunpack.c.l.b16 %v674
        %v768 = vunpack.c.h.b16 %v674
        %v769 = vunpack.c.l.b16 %v675
        %v770 = vunpack.c.h.b16 %v675
        %v771 = vunpack.c.l.b16 %v676
        %v772 = vunpack.c.h.b16 %v676
        %v773 = vunpack.c.l.b16 %v677
        %v774 = vunpack.c.h.b16 %v677
        %v775 = vunpack.c.l.b16 %v678
        %v776 = vunpack.c.h.b16 %v678
        %v777 = vunpack.c.l.b16 %v679
        %v778 = vunpack.c.h.b16 %v679
        %v779 = vunpack.c.l.b16 %v680
        %v780 = vunpack.c.h.b16 %v680
        %v781 = vunpack.c.l.b16 %v681
        %v782 = vunpack.c.h.b16 %v681
        %v783 = vunpack.c.l.b16 %v682
        %v784 = vunpack.c.h.b16 %v682
        %v785 = vunpack.c.l.b16 %v683
        %v786 = vunpack.c.h.b16 %v683
        %v787 = vpack.c.b16 %v727, %v723
        %v788 = vpack.c.b16 %v728, %v724
        %v789 = vpack.c.b16 %v729, %v725
        %v790 = vpack.c.b16 %v730, %v726
        %v791 = vpack.c.b16 %v735, %v731
        %v792 = vpack.c.b16 %v736, %v732
        %v793 = vpack.c.b16 %v737, %v733
        %v794 = vpack.c.b16 %v738, %v734
        %v795 = vpack.c.b16 %v743, %v739
        %v796 = vpack.c.b16 %v744, %v740
        %v797 = vpack.c.b16 %v745, %v741
        %v798 = vpack.c.b16 %v746, %v742
        %v799 = vpack.c.b16 %v751, %v747
        %v800 = vpack.c.b16 %v752, %v748
        %v801 = vpack.c.b16 %v753, %v749
        %v802 = vpack.c.b16 %v754, %v750
        %v803 = vpack.c.b16 %v759, %v755
        %v804 = vpack.c.b16 %v760, %v756
        %v805 = vpack.c.b16 %v761, %v757
        %v806 = vpack.c.b16 %v762, %v758
        %v807 = vpack.c.b16 %v767, %v763
        %v808 = vpack.c.b16 %v768, %v764
        %v809 = vpack.c.b16 %v769, %v765
        %v810 = vpack.c.b16 %v770, %v766
        %v811 = vpack.c.b16 %v775, %v771
        %v812 = vpack.c.b16 %v776, %v772
        %v813 = vpack.c.b16 %v777, %v773
        %v814 = vpack.c.b16 %v778, %v774
        %v815 = vpack.c.b16 %v783, %v779
        %v816 = vpack.c.b16 %v784, %v780
        %v817 = vpack.c.b16 %v785, %v781
        %v818 = vpack.c.b16 %v786, %v782
        %851 = vmatpush.bf16.msra.mxu0 %v815
        %852 = vmatpush.bf16.msra.mxu0 %v811
        %853 = vmatpush.bf16.msra.mxu0 %v807
        %854 = vmatpush.bf16.msra.mxu0 %v803
        %855 = vmatpush.bf16.msra.mxu0 %v799
        %856 = vmatpush.bf16.msra.mxu0 %v795
        %857 = vmatpush.bf16.msra.mxu0 %v791
        %858 = vmatpush.bf16.msra.mxu0 %v787
        %859 = vmatmul.bf16.gmra.mxu0 %v690
        %v860 = vpop.f32.mrf.mxu0
        %v861 = vadd.f32 0.0, %v860
        %v862 = vpop.f32.mrf.mxu0
        %863 = vdwg.mxu0
        %864 = vmatpush.bf16.msra.mxu0 %v816
        %865 = vmatpush.bf16.msra.mxu0 %v812
        %866 = vmatpush.bf16.msra.mxu0 %v808
        %867 = vmatpush.bf16.msra.mxu0 %v804
        %868 = vmatpush.bf16.msra.mxu0 %v800
        %869 = vmatpush.bf16.msra.mxu0 %v796
        %870 = vmatpush.bf16.msra.mxu0 %v792
        %871 = vmatpush.bf16.msra.mxu0 %v788
        %872 = vmatmul.bf16.gmra.mxu0 %v690
        %v873 = vpop.f32.mrf.mxu0
        %v874 = vadd.f32 0.0, %v873
        %v875 = vpop.f32.mrf.mxu0
        %876 = vdwg.mxu0
        %877 = vmatpush.bf16.msra.mxu0 %v817
        %878 = vmatpush.bf16.msra.mxu0 %v813
        %879 = vmatpush.bf16.msra.mxu0 %v809
        %880 = vmatpush.bf16.msra.mxu0 %v805
        %881 = vmatpush.bf16.msra.mxu0 %v801
        %882 = vmatpush.bf16.msra.mxu0 %v797
        %883 = vmatpush.bf16.msra.mxu0 %v793
        %884 = vmatpush.bf16.msra.mxu0 %v789
        %885 = vmatmul.bf16.gmra.mxu0 %v690
        %v886 = vpop.f32.mrf.mxu0
        %v887 = vadd.f32 0.0, %v886
        %v888 = vpop.f32.mrf.mxu0
        %889 = vdwg.mxu0
        %890 = vmatpush.bf16.msra.mxu0 %v818
        %891 = vmatpush.bf16.msra.mxu0 %v814
        %892 = vmatpush.bf16.msra.mxu0 %v810
        %893 = vmatpush.bf16.msra.mxu0 %v806
        %894 = vmatpush.bf16.msra.mxu0 %v802
        %895 = vmatpush.bf16.msra.mxu0 %v798
        %896 = vmatpush.bf16.msra.mxu0 %v794
        %897 = vmatpush.bf16.msra.mxu0 %v790
        %898 = vmatmul.bf16.gmra.mxu0 %v690
        %v899 = vpop.f32.mrf.mxu0
        %v900 = vadd.f32 0.0, %v899
        %v901 = vpop.f32.mrf.mxu0
        %902 = vdwg.mxu0
        %v903 = vadd.f32 %v686, %v861
        %v904 = vadd.f32 %v687, %v874
        %v905 = vadd.f32 %v688, %v887
        %v906 = vadd.f32 %v689, %v900
        %v907 = vxor.u32 %v903, 2147483648
        %v908 = vmul.f32 %v907, 1.442695
        %v909 = vpow.pop %v908
        %v910 = vadd.f32 %v909, 1.0
        %v911 = vrcp.pop %v910
        %v912 = vmul.f32 %v910, %v911
        %v913 = vsub.f32 1.0, %v912
        %v914 = vmul.f32 %v911, %v913
        %v915 = vadd.f32 %v911, %v914
        %vm916 = vweird.f32 %v910
        %vm917 = vweird.f32 %v911
        %vm918 = vmor %vm916, %vm917
        %v919 = vsel %vm918, %v911, %v915
        %v920 = vand.u32 2147483647, %v910
        %vm921 = vcmp.eq.f32.partialorder %v920, 8.507059e+37
        %v922 = vand.u32 %v910, 2147483648
        %v923 = vor.u32 1.1754944e-38, %v922
        %v924 = vsel %vm921, %v923, %v919
        %v925 = vmul.f32 1.0, %v924
        %v926 = vxor.u32 %v904, 2147483648
        %v927 = vmul.f32 %v926, 1.442695
        %v928 = vpow.pop %v927
        %v929 = vadd.f32 %v928, 1.0
        %v930 = vrcp.pop %v929
        %v931 = vmul.f32 %v929, %v930
        %v932 = vsub.f32 1.0, %v931
        %v933 = vmul.f32 %v930, %v932
        %v934 = vadd.f32 %v930, %v933
        %vm935 = vweird.f32 %v929
        %vm936 = vweird.f32 %v930
        %vm937 = vmor %vm935, %vm936
        %v938 = vsel %vm937, %v930, %v934
        %v939 = vand.u32 2147483647, %v929
        %vm940 = vcmp.eq.f32.partialorder %v939, 8.507059e+37
        %v941 = vand.u32 %v929, 2147483648
        %v942 = vor.u32 1.1754944e-38, %v941
        %v943 = vsel %vm940, %v942, %v938
        %v944 = vmul.f32 1.0, %v943
        %v945 = vtanh.pop %v905
        %v946 = vxor.u32 %v906, 2147483648
        %v947 = vmul.f32 %v946, 1.442695
        %v948 = vpow.pop %v947
        %v949 = vadd.f32 %v948, 1.0
        %v950 = vrcp.pop %v949
        %v951 = vmul.f32 %v949, %v950
        %v952 = vsub.f32 1.0, %v951
        %v953 = vmul.f32 %v950, %v952
        %v954 = vadd.f32 %v950, %v953
        %vm955 = vweird.f32 %v949
        %vm956 = vweird.f32 %v950
        %vm957 = vmor %vm955, %vm956
        %v958 = vsel %vm957, %v950, %v954
        %v959 = vand.u32 2147483647, %v949
        %vm960 = vcmp.eq.f32.partialorder %v959, 8.507059e+37
        %v961 = vand.u32 %v949, 2147483648
        %v962 = vor.u32 1.1754944e-38, %v961
        %v963 = vsel %vm960, %v962, %v958
        %v964 = vmul.f32 1.0, %v963
        %v965 = vmul.f32 %v944, %v685
        %v966 = vmul.f32 %v925, %v945
        %v967 = vadd.f32 %v965, %v966
        %v968 = vtanh.pop %v967
        %v969 = vmul.f32 %v964, %v968
        %s970 = smul.u32 %s29, 8
        %p971 = scmp.lt.s32.totalorder %s970, 13
        %s972 = scalar_select %p971, 1, 0
        %v973 = vstv %s972
        %vm974 = vcmp.eq.s32.totalorder %v973, 1
        %v975 = vsel %vm974, %v967, %v685
        %v976 = vsel %vm974, %v969, %v684
        %977 = vst [vmem:[#allocation5] sm:$0xff] %v976
        %v978 = vld [vmem:[#allocation4 + $0x20] sm:$0xff]
        %v979 = vld [vmem:[#allocation4 + $0x28] sm:$0xff]
        %v980 = vld [vmem:[#allocation4 + $0x30] sm:$0xff]
        %v981 = vld [vmem:[#allocation4 + $0x38] sm:$0xff]
        %v982 = vpack.c.bf16 %v976, %v976
        %983 = vmatpush.bf16.msra.mxu0 %v815
        %984 = vmatpush.bf16.msra.mxu0 %v811
        %985 = vmatpush.bf16.msra.mxu0 %v807
        %986 = vmatpush.bf16.msra.mxu0 %v803
        %987 = vmatpush.bf16.msra.mxu0 %v799
        %988 = vmatpush.bf16.msra.mxu0 %v795
        %989 = vmatpush.bf16.msra.mxu0 %v791
        %990 = vmatpush.bf16.msra.mxu0 %v787
        %991 = vmatmul.bf16.gmra.mxu0 %v982
        %v992 = vpop.f32.mrf.mxu0
        %v993 = vadd.f32 0.0, %v992
        %v994 = vpop.f32.mrf.mxu0
        %995 = vdwg.mxu0
        %996 = vmatpush.bf16.msra.mxu0 %v816
        %997 = vmatpush.bf16.msra.mxu0 %v812
        %998 = vmatpush.bf16.msra.mxu0 %v808
        %999 = vmatpush.bf16.msra.mxu0 %v804
        %1000 = vmatpush.bf16.msra.mxu0 %v800
        %1001 = vmatpush.bf16.msra.mxu0 %v796
        %1002 = vmatpush.bf16.msra.mxu0 %v792
        %1003 = vmatpush.bf16.msra.mxu0 %v788
        %1004 = vmatmul.bf16.gmra.mxu0 %v982
        %v1005 = vpop.f32.mrf.mxu0
        %v1006 = vadd.f32 0.0, %v1005
        %v1007 = vpop.f32.mrf.mxu0
        %1008 = vdwg.mxu0
        %1009 = vmatpush.bf16.msra.mxu0 %v817
        %1010 = vmatpush.bf16.msra.mxu0 %v813
        %1011 = vmatpush.bf16.msra.mxu0 %v809
        %1012 = vmatpush.bf16.msra.mxu0 %v805
        %1013 = vmatpush.bf16.msra.mxu0 %v801
        %1014 = vmatpush.bf16.msra.mxu0 %v797
        %1015 = vmatpush.bf16.msra.mxu0 %v793
        %1016 = vmatpush.bf16.msra.mxu0 %v789
        %1017 = vmatmul.bf16.gmra.mxu0 %v982
        %v1018 = vpop.f32.mrf.mxu0
        %v1019 = vadd.f32 0.0, %v1018
        %v1020 = vpop.f32.mrf.mxu0
        %1021 = vdwg.mxu0
        %1022 = vmatpush.bf16.msra.mxu0 %v818
        %1023 = vmatpush.bf16.msra.mxu0 %v814
        %1024 = vmatpush.bf16.msra.mxu0 %v810
        %1025 = vmatpush.bf16.msra.mxu0 %v806
        %1026 = vmatpush.bf16.msra.mxu0 %v802
        %1027 = vmatpush.bf16.msra.mxu0 %v798
        %1028 = vmatpush.bf16.msra.mxu0 %v794
        %1029 = vmatpush.bf16.msra.mxu0 %v790
        %1030 = vmatmul.bf16.gmra.mxu0 %v982
        %v1031 = vpop.f32.mrf.mxu0
        %v1032 = vadd.f32 0.0, %v1031
        %v1033 = vpop.f32.mrf.mxu0
        %1034 = vdwg.mxu0
        %v1035 = vadd.f32 %v978, %v993
        %v1036 = vadd.f32 %v979, %v1006
        %v1037 = vadd.f32 %v980, %v1019
        %v1038 = vadd.f32 %v981, %v1032
        %v1039 = vxor.u32 %v1035, 2147483648
        %v1040 = vmul.f32 %v1039, 1.442695
        %v1041 = vpow.pop %v1040
        %v1042 = vadd.f32 %v1041, 1.0
        %v1043 = vrcp.pop %v1042
        %v1044 = vmul.f32 %v1042, %v1043
        %v1045 = vsub.f32 1.0, %v1044
        %v1046 = vmul.f32 %v1043, %v1045
        %v1047 = vadd.f32 %v1043, %v1046
        %vm1048 = vweird.f32 %v1042
        %vm1049 = vweird.f32 %v1043
        %vm1050 = vmor %vm1048, %vm1049
        %v1051 = vsel %vm1050, %v1043, %v1047
        %v1052 = vand.u32 2147483647, %v1042
        %vm1053 = vcmp.eq.f32.partialorder %v1052, 8.507059e+37
        %v1054 = vand.u32 %v1042, 2147483648
        %v1055 = vor.u32 1.1754944e-38, %v1054
        %v1056 = vsel %vm1053, %v1055, %v1051
        %v1057 = vmul.f32 1.0, %v1056
        %v1058 = vxor.u32 %v1036, 2147483648
        %v1059 = vmul.f32 %v1058, 1.442695
        %v1060 = vpow.pop %v1059
        %v1061 = vadd.f32 %v1060, 1.0
        %v1062 = vrcp.pop %v1061
        %v1063 = vmul.f32 %v1061, %v1062
        %v1064 = vsub.f32 1.0, %v1063
        %v1065 = vmul.f32 %v1062, %v1064
        %v1066 = vadd.f32 %v1062, %v1065
        %vm1067 = vweird.f32 %v1061
        %vm1068 = vweird.f32 %v1062
        %vm1069 = vmor %vm1067, %vm1068
        %v1070 = vsel %vm1069, %v1062, %v1066
        %v1071 = vand.u32 2147483647, %v1061
        %vm1072 = vcmp.eq.f32.partialorder %v1071, 8.507059e+37
        %v1073 = vand.u32 %v1061, 2147483648
        %v1074 = vor.u32 1.1754944e-38, %v1073
        %v1075 = vsel %vm1072, %v1074, %v1070
        %v1076 = vmul.f32 1.0, %v1075
        %v1077 = vtanh.pop %v1037
        %v1078 = vxor.u32 %v1038, 2147483648
        %v1079 = vmul.f32 %v1078, 1.442695
        %v1080 = vpow.pop %v1079
        %v1081 = vadd.f32 %v1080, 1.0
        %v1082 = vrcp.pop %v1081
        %v1083 = vmul.f32 %v1081, %v1082
        %v1084 = vsub.f32 1.0, %v1083
        %v1085 = vmul.f32 %v1082, %v1084
        %v1086 = vadd.f32 %v1082, %v1085
        %vm1087 = vweird.f32 %v1081
        %vm1088 = vweird.f32 %v1082
        %vm1089 = vmor %vm1087, %vm1088
        %v1090 = vsel %vm1089, %v1082, %v1086
        %v1091 = vand.u32 2147483647, %v1081
        %vm1092 = vcmp.eq.f32.partialorder %v1091, 8.507059e+37
        %v1093 = vand.u32 %v1081, 2147483648
        %v1094 = vor.u32 1.1754944e-38, %v1093
        %v1095 = vsel %vm1092, %v1094, %v1090
        %v1096 = vmul.f32 1.0, %v1095
        %v1097 = vmul.f32 %v1076, %v975
        %v1098 = vmul.f32 %v1057, %v1077
        %v1099 = vadd.f32 %v1097, %v1098
        %v1100 = vtanh.pop %v1099
        %v1101 = vmul.f32 %v1096, %v1100
        %s1102 = sadd.s32 %s970, 1
        %p1103 = scmp.lt.s32.totalorder %s1102, 13
        %s1104 = scalar_select %p1103, 1, 0
        %v1105 = vstv %s1104
        %vm1106 = vcmp.eq.s32.totalorder %v1105, 1
        %v1107 = vsel %vm1106, %v1099, %v975
        %v1108 = vsel %vm1106, %v1101, %v976
        %1109 = vst [vmem:[#allocation5 + $0x8] sm:$0xff] %v1108
        %v1110 = vld [vmem:[#allocation4 + $0x40] sm:$0xff]
        %v1111 = vld [vmem:[#allocation4 + $0x48] sm:$0xff]
        %v1112 = vld [vmem:[#allocation4 + $0x50] sm:$0xff]
        %v1113 = vld [vmem:[#allocation4 + $0x58] sm:$0xff]
        %v1114 = vpack.c.bf16 %v1108, %v1108
        %1115 = vmatpush.bf16.msra.mxu0 %v815
        %1116 = vmatpush.bf16.msra.mxu0 %v811
        %1117 = vmatpush.bf16.msra.mxu0 %v807
        %1118 = vmatpush.bf16.msra.mxu0 %v803
        %1119 = vmatpush.bf16.msra.mxu0 %v799
        %1120 = vmatpush.bf16.msra.mxu0 %v795
        %1121 = vmatpush.bf16.msra.mxu0 %v791
        %1122 = vmatpush.bf16.msra.mxu0 %v787
        %1123 = vmatmul.bf16.gmra.mxu0 %v1114
        %v1124 = vpop.f32.mrf.mxu0
        %v1125 = vadd.f32 0.0, %v1124
        %v1126 = vpop.f32.mrf.mxu0
        %1127 = vdwg.mxu0
        %1128 = vmatpush.bf16.msra.mxu0 %v816
        %1129 = vmatpush.bf16.msra.mxu0 %v812
        %1130 = vmatpush.bf16.msra.mxu0 %v808
        %1131 = vmatpush.bf16.msra.mxu0 %v804
        %1132 = vmatpush.bf16.msra.mxu0 %v800
        %1133 = vmatpush.bf16.msra.mxu0 %v796
        %1134 = vmatpush.bf16.msra.mxu0 %v792
        %1135 = vmatpush.bf16.msra.mxu0 %v788
        %1136 = vmatmul.bf16.gmra.mxu0 %v1114
        %v1137 = vpop.f32.mrf.mxu0
        %v1138 = vadd.f32 0.0, %v1137
        %v1139 = vpop.f32.mrf.mxu0
        %1140 = vdwg.mxu0
        %1141 = vmatpush.bf16.msra.mxu0 %v817
        %1142 = vmatpush.bf16.msra.mxu0 %v813
        %1143 = vmatpush.bf16.msra.mxu0 %v809
        %1144 = vmatpush.bf16.msra.mxu0 %v805
        %1145 = vmatpush.bf16.msra.mxu0 %v801
        %1146 = vmatpush.bf16.msra.mxu0 %v797
        %1147 = vmatpush.bf16.msra.mxu0 %v793
        %1148 = vmatpush.bf16.msra.mxu0 %v789
        %1149 = vmatmul.bf16.gmra.mxu0 %v1114
        %v1150 = vpop.f32.mrf.mxu0
        %v1151 = vadd.f32 0.0, %v1150
        %v1152 = vpop.f32.mrf.mxu0
        %1153 = vdwg.mxu0
        %1154 = vmatpush.bf16.msra.mxu0 %v818
        %1155 = vmatpush.bf16.msra.mxu0 %v814
        %1156 = vmatpush.bf16.msra.mxu0 %v810
        %1157 = vmatpush.bf16.msra.mxu0 %v806
        %1158 = vmatpush.bf16.msra.mxu0 %v802
        %1159 = vmatpush.bf16.msra.mxu0 %v798
        %1160 = vmatpush.bf16.msra.mxu0 %v794
        %1161 = vmatpush.bf16.msra.mxu0 %v790
        %1162 = vmatmul.bf16.gmra.mxu0 %v1114
        %v1163 = vpop.f32.mrf.mxu0
        %v1164 = vadd.f32 0.0, %v1163
        %v1165 = vpop.f32.mrf.mxu0
        %1166 = vdwg.mxu0
        %v1167 = vadd.f32 %v1110, %v1125
        %v1168 = vadd.f32 %v1111, %v1138
        %v1169 = vadd.f32 %v1112, %v1151
        %v1170 = vadd.f32 %v1113, %v1164
        %v1171 = vxor.u32 %v1167, 2147483648
        %v1172 = vmul.f32 %v1171, 1.442695
        %v1173 = vpow.pop %v1172
        %v1174 = vadd.f32 %v1173, 1.0
        %v1175 = vrcp.pop %v1174
        %v1176 = vmul.f32 %v1174, %v1175
        %v1177 = vsub.f32 1.0, %v1176
        %v1178 = vmul.f32 %v1175, %v1177
        %v1179 = vadd.f32 %v1175, %v1178
        %vm1180 = vweird.f32 %v1174
        %vm1181 = vweird.f32 %v1175
        %vm1182 = vmor %vm1180, %vm1181
        %v1183 = vsel %vm1182, %v1175, %v1179
        %v1184 = vand.u32 2147483647, %v1174
        %vm1185 = vcmp.eq.f32.partialorder %v1184, 8.507059e+37
        %v1186 = vand.u32 %v1174, 2147483648
        %v1187 = vor.u32 1.1754944e-38, %v1186
        %v1188 = vsel %vm1185, %v1187, %v1183
        %v1189 = vmul.f32 1.0, %v1188
        %v1190 = vxor.u32 %v1168, 2147483648
        %v1191 = vmul.f32 %v1190, 1.442695
        %v1192 = vpow.pop %v1191
        %v1193 = vadd.f32 %v1192, 1.0
        %v1194 = vrcp.pop %v1193
        %v1195 = vmul.f32 %v1193, %v1194
        %v1196 = vsub.f32 1.0, %v1195
        %v1197 = vmul.f32 %v1194, %v1196
        %v1198 = vadd.f32 %v1194, %v1197
        %vm1199 = vweird.f32 %v1193
        %vm1200 = vweird.f32 %v1194
        %vm1201 = vmor %vm1199, %vm1200
        %v1202 = vsel %vm1201, %v1194, %v1198
        %v1203 = vand.u32 2147483647, %v1193
        %vm1204 = vcmp.eq.f32.partialorder %v1203, 8.507059e+37
        %v1205 = vand.u32 %v1193, 2147483648
        %v1206 = vor.u32 1.1754944e-38, %v1205
        %v1207 = vsel %vm1204, %v1206, %v1202
        %v1208 = vmul.f32 1.0, %v1207
        %v1209 = vtanh.pop %v1169
        %v1210 = vxor.u32 %v1170, 2147483648
        %v1211 = vmul.f32 %v1210, 1.442695
        %v1212 = vpow.pop %v1211
        %v1213 = vadd.f32 %v1212, 1.0
        %v1214 = vrcp.pop %v1213
        %v1215 = vmul.f32 %v1213, %v1214
        %v1216 = vsub.f32 1.0, %v1215
        %v1217 = vmul.f32 %v1214, %v1216
        %v1218 = vadd.f32 %v1214, %v1217
        %vm1219 = vweird.f32 %v1213
        %vm1220 = vweird.f32 %v1214
        %vm1221 = vmor %vm1219, %vm1220
        %v1222 = vsel %vm1221, %v1214, %v1218
        %v1223 = vand.u32 2147483647, %v1213
        %vm1224 = vcmp.eq.f32.partialorder %v1223, 8.507059e+37
        %v1225 = vand.u32 %v1213, 2147483648
        %v1226 = vor.u32 1.1754944e-38, %v1225
        %v1227 = vsel %vm1224, %v1226, %v1222
        %v1228 = vmul.f32 1.0, %v1227
        %v1229 = vmul.f32 %v1208, %v1107
        %v1230 = vmul.f32 %v1189, %v1209
        %v1231 = vadd.f32 %v1229, %v1230
        %v1232 = vtanh.pop %v1231
        %v1233 = vmul.f32 %v1228, %v1232
        %s1234 = sadd.s32 %s970, 2
        %p1235 = scmp.lt.s32.totalorder %s1234, 13
        %s1236 = scalar_select %p1235, 1, 0
        %v1237 = vstv %s1236
        %vm1238 = vcmp.eq.s32.totalorder %v1237, 1
        %v1239 = vsel %vm1238, %v1231, %v1107
        %v1240 = vsel %vm1238, %v1233, %v1108
        %1241 = vst [vmem:[#allocation5 + $0x10] sm:$0xff] %v1240
        %v1242 = vld [vmem:[#allocation4 + $0x60] sm:$0xff]
        %v1243 = vld [vmem:[#allocation4 + $0x68] sm:$0xff]
        %v1244 = vld [vmem:[#allocation4 + $0x70] sm:$0xff]
        %v1245 = vld [vmem:[#allocation4 + $0x78] sm:$0xff]
        %v1246 = vpack.c.bf16 %v1240, %v1240
        %1247 = vmatpush.bf16.msra.mxu0 %v815
        %1248 = vmatpush.bf16.msra.mxu0 %v811
        %1249 = vmatpush.bf16.msra.mxu0 %v807
        %1250 = vmatpush.bf16.msra.mxu0 %v803
        %1251 = vmatpush.bf16.msra.mxu0 %v799
        %1252 = vmatpush.bf16.msra.mxu0 %v795
        %1253 = vmatpush.bf16.msra.mxu0 %v791
        %1254 = vmatpush.bf16.msra.mxu0 %v787
        %1255 = vmatmul.bf16.gmra.mxu0 %v1246
        %v1256 = vpop.f32.mrf.mxu0
        %v1257 = vadd.f32 0.0, %v1256
        %v1258 = vpop.f32.mrf.mxu0
        %1259 = vdwg.mxu0
        %1260 = vmatpush.bf16.msra.mxu0 %v816
        %1261 = vmatpush.bf16.msra.mxu0 %v812
        %1262 = vmatpush.bf16.msra.mxu0 %v808
        %1263 = vmatpush.bf16.msra.mxu0 %v804
        %1264 = vmatpush.bf16.msra.mxu0 %v800
        %1265 = vmatpush.bf16.msra.mxu0 %v796
        %1266 = vmatpush.bf16.msra.mxu0 %v792
        %1267 = vmatpush.bf16.msra.mxu0 %v788
        %1268 = vmatmul.bf16.gmra.mxu0 %v1246
        %v1269 = vpop.f32.mrf.mxu0
        %v1270 = vadd.f32 0.0, %v1269
        %v1271 = vpop.f32.mrf.mxu0
        %1272 = vdwg.mxu0
        %1273 = vmatpush.bf16.msra.mxu0 %v817
        %1274 = vmatpush.bf16.msra.mxu0 %v813
        %1275 = vmatpush.bf16.msra.mxu0 %v809
        %1276 = vmatpush.bf16.msra.mxu0 %v805
        %1277 = vmatpush.bf16.msra.mxu0 %v801
        %1278 = vmatpush.bf16.msra.mxu0 %v797
        %1279 = vmatpush.bf16.msra.mxu0 %v793
        %1280 = vmatpush.bf16.msra.mxu0 %v789
        %1281 = vmatmul.bf16.gmra.mxu0 %v1246
        %v1282 = vpop.f32.mrf.mxu0
        %v1283 = vadd.f32 0.0, %v1282
        %v1284 = vpop.f32.mrf.mxu0
        %1285 = vdwg.mxu0
        %1286 = vmatpush.bf16.msra.mxu0 %v818
        %1287 = vmatpush.bf16.msra.mxu0 %v814
        %1288 = vmatpush.bf16.msra.mxu0 %v810
        %1289 = vmatpush.bf16.msra.mxu0 %v806
        %1290 = vmatpush.bf16.msra.mxu0 %v802
        %1291 = vmatpush.bf16.msra.mxu0 %v798
        %1292 = vmatpush.bf16.msra.mxu0 %v794
        %1293 = vmatpush.bf16.msra.mxu0 %v790
        %1294 = vmatmul.bf16.gmra.mxu0 %v1246
        %v1295 = vpop.f32.mrf.mxu0
        %v1296 = vadd.f32 0.0, %v1295
        %v1297 = vpop.f32.mrf.mxu0
        %1298 = vdwg.mxu0
        %v1299 = vadd.f32 %v1242, %v1257
        %v1300 = vadd.f32 %v1243, %v1270
        %v1301 = vadd.f32 %v1244, %v1283
        %v1302 = vadd.f32 %v1245, %v1296
        %v1303 = vxor.u32 %v1299, 2147483648
        %v1304 = vmul.f32 %v1303, 1.442695
        %v1305 = vpow.pop %v1304
        %v1306 = vadd.f32 %v1305, 1.0
        %v1307 = vrcp.pop %v1306
        %v1308 = vmul.f32 %v1306, %v1307
        %v1309 = vsub.f32 1.0, %v1308
        %v1310 = vmul.f32 %v1307, %v1309
        %v1311 = vadd.f32 %v1307, %v1310
        %vm1312 = vweird.f32 %v1306
        %vm1313 = vweird.f32 %v1307
        %vm1314 = vmor %vm1312, %vm1313
        %v1315 = vsel %vm1314, %v1307, %v1311
        %v1316 = vand.u32 2147483647, %v1306
        %vm1317 = vcmp.eq.f32.partialorder %v1316, 8.507059e+37
        %v1318 = vand.u32 %v1306, 2147483648
        %v1319 = vor.u32 1.1754944e-38, %v1318
        %v1320 = vsel %vm1317, %v1319, %v1315
        %v1321 = vmul.f32 1.0, %v1320
        %v1322 = vxor.u32 %v1300, 2147483648
        %v1323 = vmul.f32 %v1322, 1.442695
        %v1324 = vpow.pop %v1323
        %v1325 = vadd.f32 %v1324, 1.0
        %v1326 = vrcp.pop %v1325
        %v1327 = vmul.f32 %v1325, %v1326
        %v1328 = vsub.f32 1.0, %v1327
        %v1329 = vmul.f32 %v1326, %v1328
        %v1330 = vadd.f32 %v1326, %v1329
        %vm1331 = vweird.f32 %v1325
        %vm1332 = vweird.f32 %v1326
        %vm1333 = vmor %vm1331, %vm1332
        %v1334 = vsel %vm1333, %v1326, %v1330
        %v1335 = vand.u32 2147483647, %v1325
        %vm1336 = vcmp.eq.f32.partialorder %v1335, 8.507059e+37
        %v1337 = vand.u32 %v1325, 2147483648
        %v1338 = vor.u32 1.1754944e-38, %v1337
        %v1339 = vsel %vm1336, %v1338, %v1334
        %v1340 = vmul.f32 1.0, %v1339
        %v1341 = vtanh.pop %v1301
        %v1342 = vxor.u32 %v1302, 2147483648
        %v1343 = vmul.f32 %v1342, 1.442695
        %v1344 = vpow.pop %v1343
        %v1345 = vadd.f32 %v1344, 1.0
        %v1346 = vrcp.pop %v1345
        %v1347 = vmul.f32 %v1345, %v1346
        %v1348 = vsub.f32 1.0, %v1347
        %v1349 = vmul.f32 %v1346, %v1348
        %v1350 = vadd.f32 %v1346, %v1349
        %vm1351 = vweird.f32 %v1345
        %vm1352 = vweird.f32 %v1346
        %vm1353 = vmor %vm1351, %vm1352
        %v1354 = vsel %vm1353, %v1346, %v1350
        %v1355 = vand.u32 2147483647, %v1345
        %vm1356 = vcmp.eq.f32.partialorder %v1355, 8.507059e+37
        %v1357 = vand.u32 %v1345, 2147483648
        %v1358 = vor.u32 1.1754944e-38, %v1357
        %v1359 = vsel %vm1356, %v1358, %v1354
        %v1360 = vmul.f32 1.0, %v1359
        %v1361 = vmul.f32 %v1340, %v1239
        %v1362 = vmul.f32 %v1321, %v1341
        %v1363 = vadd.f32 %v1361, %v1362
        %v1364 = vtanh.pop %v1363
        %v1365 = vmul.f32 %v1360, %v1364
        %s1366 = sadd.s32 %s970, 3
        %p1367 = scmp.lt.s32.totalorder %s1366, 13
        %s1368 = scalar_select %p1367, 1, 0
        %v1369 = vstv %s1368
        %vm1370 = vcmp.eq.s32.totalorder %v1369, 1
        %v1371 = vsel %vm1370, %v1363, %v1239
        %v1372 = vsel %vm1370, %v1365, %v1240
        %1373 = vst [vmem:[#allocation5 + $0x18] sm:$0xff] %v1372
        %v1374 = vld [vmem:[#allocation4 + $0x80] sm:$0xff]
        %v1375 = vld [vmem:[#allocation4 + $0x88] sm:$0xff]
        %v1376 = vld [vmem:[#allocation4 + $0x90] sm:$0xff]
        %v1377 = vld [vmem:[#allocation4 + $0x98] sm:$0xff]
        %v1378 = vpack.c.bf16 %v1372, %v1372
        %1379 = vmatpush.bf16.msra.mxu0 %v815
        %1380 = vmatpush.bf16.msra.mxu0 %v811
        %1381 = vmatpush.bf16.msra.mxu0 %v807
        %1382 = vmatpush.bf16.msra.mxu0 %v803
        %1383 = vmatpush.bf16.msra.mxu0 %v799
        %1384 = vmatpush.bf16.msra.mxu0 %v795
        %1385 = vmatpush.bf16.msra.mxu0 %v791
        %1386 = vmatpush.bf16.msra.mxu0 %v787
        %1387 = vmatmul.bf16.gmra.mxu0 %v1378
        %v1388 = vpop.f32.mrf.mxu0
        %v1389 = vadd.f32 0.0, %v1388
        %v1390 = vpop.f32.mrf.mxu0
        %1391 = vdwg.mxu0
        %1392 = vmatpush.bf16.msra.mxu0 %v816
        %1393 = vmatpush.bf16.msra.mxu0 %v812
        %1394 = vmatpush.bf16.msra.mxu0 %v808
        %1395 = vmatpush.bf16.msra.mxu0 %v804
        %1396 = vmatpush.bf16.msra.mxu0 %v800
        %1397 = vmatpush.bf16.msra.mxu0 %v796
        %1398 = vmatpush.bf16.msra.mxu0 %v792
        %1399 = vmatpush.bf16.msra.mxu0 %v788
        %1400 = vmatmul.bf16.gmra.mxu0 %v1378
        %v1401 = vpop.f32.mrf.mxu0
        %v1402 = vadd.f32 0.0, %v1401
        %v1403 = vpop.f32.mrf.mxu0
        %1404 = vdwg.mxu0
        %1405 = vmatpush.bf16.msra.mxu0 %v817
        %1406 = vmatpush.bf16.msra.mxu0 %v813
        %1407 = vmatpush.bf16.msra.mxu0 %v809
        %1408 = vmatpush.bf16.msra.mxu0 %v805
        %1409 = vmatpush.bf16.msra.mxu0 %v801
        %1410 = vmatpush.bf16.msra.mxu0 %v797
        %1411 = vmatpush.bf16.msra.mxu0 %v793
        %1412 = vmatpush.bf16.msra.mxu0 %v789
        %1413 = vmatmul.bf16.gmra.mxu0 %v1378
        %v1414 = vpop.f32.mrf.mxu0
        %v1415 = vadd.f32 0.0, %v1414
        %v1416 = vpop.f32.mrf.mxu0
        %1417 = vdwg.mxu0
        %1418 = vmatpush.bf16.msra.mxu0 %v818
        %1419 = vmatpush.bf16.msra.mxu0 %v814
        %1420 = vmatpush.bf16.msra.mxu0 %v810
        %1421 = vmatpush.bf16.msra.mxu0 %v806
        %1422 = vmatpush.bf16.msra.mxu0 %v802
        %1423 = vmatpush.bf16.msra.mxu0 %v798
        %1424 = vmatpush.bf16.msra.mxu0 %v794
        %1425 = vmatpush.bf16.msra.mxu0 %v790
        %1426 = vmatmul.bf16.gmra.mxu0 %v1378
        %v1427 = vpop.f32.mrf.mxu0
        %v1428 = vadd.f32 0.0, %v1427
        %v1429 = vpop.f32.mrf.mxu0
        %1430 = vdwg.mxu0
        %v1431 = vadd.f32 %v1374, %v1389
        %v1432 = vadd.f32 %v1375, %v1402
        %v1433 = vadd.f32 %v1376, %v1415
        %v1434 = vadd.f32 %v1377, %v1428
        %v1435 = vxor.u32 %v1431, 2147483648
        %v1436 = vmul.f32 %v1435, 1.442695
        %v1437 = vpow.pop %v1436
        %v1438 = vadd.f32 %v1437, 1.0
        %v1439 = vrcp.pop %v1438
        %v1440 = vmul.f32 %v1438, %v1439
        %v1441 = vsub.f32 1.0, %v1440
        %v1442 = vmul.f32 %v1439, %v1441
        %v1443 = vadd.f32 %v1439, %v1442
        %vm1444 = vweird.f32 %v1438
        %vm1445 = vweird.f32 %v1439
        %vm1446 = vmor %vm1444, %vm1445
        %v1447 = vsel %vm1446, %v1439, %v1443
        %v1448 = vand.u32 2147483647, %v1438
        %vm1449 = vcmp.eq.f32.partialorder %v1448, 8.507059e+37
        %v1450 = vand.u32 %v1438, 2147483648
        %v1451 = vor.u32 1.1754944e-38, %v1450
        %v1452 = vsel %vm1449, %v1451, %v1447
        %v1453 = vmul.f32 1.0, %v1452
        %v1454 = vxor.u32 %v1432, 2147483648
        %v1455 = vmul.f32 %v1454, 1.442695
        %v1456 = vpow.pop %v1455
        %v1457 = vadd.f32 %v1456, 1.0
        %v1458 = vrcp.pop %v1457
        %v1459 = vmul.f32 %v1457, %v1458
        %v1460 = vsub.f32 1.0, %v1459
        %v1461 = vmul.f32 %v1458, %v1460
        %v1462 = vadd.f32 %v1458, %v1461
        %vm1463 = vweird.f32 %v1457
        %vm1464 = vweird.f32 %v1458
        %vm1465 = vmor %vm1463, %vm1464
        %v1466 = vsel %vm1465, %v1458, %v1462
        %v1467 = vand.u32 2147483647, %v1457
        %vm1468 = vcmp.eq.f32.partialorder %v1467, 8.507059e+37
        %v1469 = vand.u32 %v1457, 2147483648
        %v1470 = vor.u32 1.1754944e-38, %v1469
        %v1471 = vsel %vm1468, %v1470, %v1466
        %v1472 = vmul.f32 1.0, %v1471
        %v1473 = vtanh.pop %v1433
        %v1474 = vxor.u32 %v1434, 2147483648
        %v1475 = vmul.f32 %v1474, 1.442695
        %v1476 = vpow.pop %v1475
        %v1477 = vadd.f32 %v1476, 1.0
        %v1478 = vrcp.pop %v1477
        %v1479 = vmul.f32 %v1477, %v1478
        %v1480 = vsub.f32 1.0, %v1479
        %v1481 = vmul.f32 %v1478, %v1480
        %v1482 = vadd.f32 %v1478, %v1481
        %vm1483 = vweird.f32 %v1477
        %vm1484 = vweird.f32 %v1478
        %vm1485 = vmor %vm1483, %vm1484
        %v1486 = vsel %vm1485, %v1478, %v1482
        %v1487 = vand.u32 2147483647, %v1477
        %vm1488 = vcmp.eq.f32.partialorder %v1487, 8.507059e+37
        %v1489 = vand.u32 %v1477, 2147483648
        %v1490 = vor.u32 1.1754944e-38, %v1489
        %v1491 = vsel %vm1488, %v1490, %v1486
        %v1492 = vmul.f32 1.0, %v1491
        %v1493 = vmul.f32 %v1472, %v1371
        %v1494 = vmul.f32 %v1453, %v1473
        %v1495 = vadd.f32 %v1493, %v1494
        %v1496 = vtanh.pop %v1495
        %v1497 = vmul.f32 %v1492, %v1496
        %s1498 = sadd.s32 %s970, 4
        %p1499 = scmp.lt.s32.totalorder %s1498, 13
        %s1500 = scalar_select %p1499, 1, 0
        %v1501 = vstv %s1500
        %vm1502 = vcmp.eq.s32.totalorder %v1501, 1
        %v1503 = vsel %vm1502, %v1495, %v1371
        %v1504 = vsel %vm1502, %v1497, %v1372
        %1505 = vst [vmem:[#allocation5 + $0x20] sm:$0xff] %v1504
        %v1506 = vld [vmem:[#allocation4 + $0xa0] sm:$0xff]
        %v1507 = vld [vmem:[#allocation4 + $0xa8] sm:$0xff]
        %v1508 = vld [vmem:[#allocation4 + $0xb0] sm:$0xff]
        %v1509 = vld [vmem:[#allocation4 + $0xb8] sm:$0xff]
        %v1510 = vpack.c.bf16 %v1504, %v1504
        %1511 = vmatpush.bf16.msra.mxu0 %v815
        %1512 = vmatpush.bf16.msra.mxu0 %v811
        %1513 = vmatpush.bf16.msra.mxu0 %v807
        %1514 = vmatpush.bf16.msra.mxu0 %v803
        %1515 = vmatpush.bf16.msra.mxu0 %v799
        %1516 = vmatpush.bf16.msra.mxu0 %v795
        %1517 = vmatpush.bf16.msra.mxu0 %v791
        %1518 = vmatpush.bf16.msra.mxu0 %v787
        %1519 = vmatmul.bf16.gmra.mxu0 %v1510
        %v1520 = vpop.f32.mrf.mxu0
        %v1521 = vadd.f32 0.0, %v1520
        %v1522 = vpop.f32.mrf.mxu0
        %1523 = vdwg.mxu0
        %1524 = vmatpush.bf16.msra.mxu0 %v816
        %1525 = vmatpush.bf16.msra.mxu0 %v812
        %1526 = vmatpush.bf16.msra.mxu0 %v808
        %1527 = vmatpush.bf16.msra.mxu0 %v804
        %1528 = vmatpush.bf16.msra.mxu0 %v800
        %1529 = vmatpush.bf16.msra.mxu0 %v796
        %1530 = vmatpush.bf16.msra.mxu0 %v792
        %1531 = vmatpush.bf16.msra.mxu0 %v788
        %1532 = vmatmul.bf16.gmra.mxu0 %v1510
        %v1533 = vpop.f32.mrf.mxu0
        %v1534 = vadd.f32 0.0, %v1533
        %v1535 = vpop.f32.mrf.mxu0
        %1536 = vdwg.mxu0
        %1537 = vmatpush.bf16.msra.mxu0 %v817
        %1538 = vmatpush.bf16.msra.mxu0 %v813
        %1539 = vmatpush.bf16.msra.mxu0 %v809
        %1540 = vmatpush.bf16.msra.mxu0 %v805
        %1541 = vmatpush.bf16.msra.mxu0 %v801
        %1542 = vmatpush.bf16.msra.mxu0 %v797
        %1543 = vmatpush.bf16.msra.mxu0 %v793
        %1544 = vmatpush.bf16.msra.mxu0 %v789
        %1545 = vmatmul.bf16.gmra.mxu0 %v1510
        %v1546 = vpop.f32.mrf.mxu0
        %v1547 = vadd.f32 0.0, %v1546
        %v1548 = vpop.f32.mrf.mxu0
        %1549 = vdwg.mxu0
        %1550 = vmatpush.bf16.msra.mxu0 %v818
        %1551 = vmatpush.bf16.msra.mxu0 %v814
        %1552 = vmatpush.bf16.msra.mxu0 %v810
        %1553 = vmatpush.bf16.msra.mxu0 %v806
        %1554 = vmatpush.bf16.msra.mxu0 %v802
        %1555 = vmatpush.bf16.msra.mxu0 %v798
        %1556 = vmatpush.bf16.msra.mxu0 %v794
        %1557 = vmatpush.bf16.msra.mxu0 %v790
        %1558 = vmatmul.bf16.gmra.mxu0 %v1510
        %v1559 = vpop.f32.mrf.mxu0
        %v1560 = vadd.f32 0.0, %v1559
        %v1561 = vpop.f32.mrf.mxu0
        %1562 = vdwg.mxu0
        %v1563 = vadd.f32 %v1506, %v1521
        %v1564 = vadd.f32 %v1507, %v1534
        %v1565 = vadd.f32 %v1508, %v1547
        %v1566 = vadd.f32 %v1509, %v1560
        %v1567 = vxor.u32 %v1563, 2147483648
        %v1568 = vmul.f32 %v1567, 1.442695
        %v1569 = vpow.pop %v1568
        %v1570 = vadd.f32 %v1569, 1.0
        %v1571 = vrcp.pop %v1570
        %v1572 = vmul.f32 %v1570, %v1571
        %v1573 = vsub.f32 1.0, %v1572
        %v1574 = vmul.f32 %v1571, %v1573
        %v1575 = vadd.f32 %v1571, %v1574
        %vm1576 = vweird.f32 %v1570
        %vm1577 = vweird.f32 %v1571
        %vm1578 = vmor %vm1576, %vm1577
        %v1579 = vsel %vm1578, %v1571, %v1575
        %v1580 = vand.u32 2147483647, %v1570
        %vm1581 = vcmp.eq.f32.partialorder %v1580, 8.507059e+37
        %v1582 = vand.u32 %v1570, 2147483648
        %v1583 = vor.u32 1.1754944e-38, %v1582
        %v1584 = vsel %vm1581, %v1583, %v1579
        %v1585 = vmul.f32 1.0, %v1584
        %v1586 = vxor.u32 %v1564, 2147483648
        %v1587 = vmul.f32 %v1586, 1.442695
        %v1588 = vpow.pop %v1587
        %v1589 = vadd.f32 %v1588, 1.0
        %v1590 = vrcp.pop %v1589
        %v1591 = vmul.f32 %v1589, %v1590
        %v1592 = vsub.f32 1.0, %v1591
        %v1593 = vmul.f32 %v1590, %v1592
        %v1594 = vadd.f32 %v1590, %v1593
        %vm1595 = vweird.f32 %v1589
        %vm1596 = vweird.f32 %v1590
        %vm1597 = vmor %vm1595, %vm1596
        %v1598 = vsel %vm1597, %v1590, %v1594
        %v1599 = vand.u32 2147483647, %v1589
        %vm1600 = vcmp.eq.f32.partialorder %v1599, 8.507059e+37
        %v1601 = vand.u32 %v1589, 2147483648
        %v1602 = vor.u32 1.1754944e-38, %v1601
        %v1603 = vsel %vm1600, %v1602, %v1598
        %v1604 = vmul.f32 1.0, %v1603
        %v1605 = vtanh.pop %v1565
        %v1606 = vxor.u32 %v1566, 2147483648
        %v1607 = vmul.f32 %v1606, 1.442695
        %v1608 = vpow.pop %v1607
        %v1609 = vadd.f32 %v1608, 1.0
        %v1610 = vrcp.pop %v1609
        %v1611 = vmul.f32 %v1609, %v1610
        %v1612 = vsub.f32 1.0, %v1611
        %v1613 = vmul.f32 %v1610, %v1612
        %v1614 = vadd.f32 %v1610, %v1613
        %vm1615 = vweird.f32 %v1609
        %vm1616 = vweird.f32 %v1610
        %vm1617 = vmor %vm1615, %vm1616
        %v1618 = vsel %vm1617, %v1610, %v1614
        %v1619 = vand.u32 2147483647, %v1609
        %vm1620 = vcmp.eq.f32.partialorder %v1619, 8.507059e+37
        %v1621 = vand.u32 %v1609, 2147483648
        %v1622 = vor.u32 1.1754944e-38, %v1621
        %v1623 = vsel %vm1620, %v1622, %v1618
        %v1624 = vmul.f32 1.0, %v1623
        %v1625 = vmul.f32 %v1604, %v1503
        %v1626 = vmul.f32 %v1585, %v1605
        %v1627 = vadd.f32 %v1625, %v1626
        %v1628 = vtanh.pop %v1627
        %v1629 = vmul.f32 %v1624, %v1628
        %s1630 = sadd.s32 %s970, 5
        %p1631 = scmp.lt.s32.totalorder %s1630, 13
        %s1632 = scalar_select %p1631, 1, 0
        %v1633 = vstv %s1632
        %vm1634 = vcmp.eq.s32.totalorder %v1633, 1
        %v1635 = vsel %vm1634, %v1627, %v1503
        %v1636 = vsel %vm1634, %v1629, %v1504
        %1637 = vst [vmem:[#allocation5 + $0x28] sm:$0xff] %v1636
        %v1638 = vld [vmem:[#allocation4 + $0xc0] sm:$0xff]
        %v1639 = vld [vmem:[#allocation4 + $0xc8] sm:$0xff]
        %v1640 = vld [vmem:[#allocation4 + $0xd0] sm:$0xff]
        %v1641 = vld [vmem:[#allocation4 + $0xd8] sm:$0xff]
        %v1642 = vpack.c.bf16 %v1636, %v1636
        %1643 = vmatpush.bf16.msra.mxu0 %v815
        %1644 = vmatpush.bf16.msra.mxu0 %v811
        %1645 = vmatpush.bf16.msra.mxu0 %v807
        %1646 = vmatpush.bf16.msra.mxu0 %v803
        %1647 = vmatpush.bf16.msra.mxu0 %v799
        %1648 = vmatpush.bf16.msra.mxu0 %v795
        %1649 = vmatpush.bf16.msra.mxu0 %v791
        %1650 = vmatpush.bf16.msra.mxu0 %v787
        %1651 = vmatmul.bf16.gmra.mxu0 %v1642
        %v1652 = vpop.f32.mrf.mxu0
        %v1653 = vadd.f32 0.0, %v1652
        %v1654 = vpop.f32.mrf.mxu0
        %1655 = vdwg.mxu0
        %1656 = vmatpush.bf16.msra.mxu0 %v816
        %1657 = vmatpush.bf16.msra.mxu0 %v812
        %1658 = vmatpush.bf16.msra.mxu0 %v808
        %1659 = vmatpush.bf16.msra.mxu0 %v804
        %1660 = vmatpush.bf16.msra.mxu0 %v800
        %1661 = vmatpush.bf16.msra.mxu0 %v796
        %1662 = vmatpush.bf16.msra.mxu0 %v792
        %1663 = vmatpush.bf16.msra.mxu0 %v788
        %1664 = vmatmul.bf16.gmra.mxu0 %v1642
        %v1665 = vpop.f32.mrf.mxu0
        %v1666 = vadd.f32 0.0, %v1665
        %v1667 = vpop.f32.mrf.mxu0
        %1668 = vdwg.mxu0
        %1669 = vmatpush.bf16.msra.mxu0 %v817
        %1670 = vmatpush.bf16.msra.mxu0 %v813
        %1671 = vmatpush.bf16.msra.mxu0 %v809
        %1672 = vmatpush.bf16.msra.mxu0 %v805
        %1673 = vmatpush.bf16.msra.mxu0 %v801
        %1674 = vmatpush.bf16.msra.mxu0 %v797
        %1675 = vmatpush.bf16.msra.mxu0 %v793
        %1676 = vmatpush.bf16.msra.mxu0 %v789
        %1677 = vmatmul.bf16.gmra.mxu0 %v1642
        %v1678 = vpop.f32.mrf.mxu0
        %v1679 = vadd.f32 0.0, %v1678
        %v1680 = vpop.f32.mrf.mxu0
        %1681 = vdwg.mxu0
        %1682 = vmatpush.bf16.msra.mxu0 %v818
        %1683 = vmatpush.bf16.msra.mxu0 %v814
        %1684 = vmatpush.bf16.msra.mxu0 %v810
        %1685 = vmatpush.bf16.msra.mxu0 %v806
        %1686 = vmatpush.bf16.msra.mxu0 %v802
        %1687 = vmatpush.bf16.msra.mxu0 %v798
        %1688 = vmatpush.bf16.msra.mxu0 %v794
        %1689 = vmatpush.bf16.msra.mxu0 %v790
        %1690 = vmatmul.bf16.gmra.mxu0 %v1642
        %v1691 = vpop.f32.mrf.mxu0
        %v1692 = vadd.f32 0.0, %v1691
        %v1693 = vpop.f32.mrf.mxu0
        %1694 = vdwg.mxu0
        %v1695 = vadd.f32 %v1638, %v1653
        %v1696 = vadd.f32 %v1639, %v1666
        %v1697 = vadd.f32 %v1640, %v1679
        %v1698 = vadd.f32 %v1641, %v1692
        %v1699 = vxor.u32 %v1695, 2147483648
        %v1700 = vmul.f32 %v1699, 1.442695
        %v1701 = vpow.pop %v1700
        %v1702 = vadd.f32 %v1701, 1.0
        %v1703 = vrcp.pop %v1702
        %v1704 = vmul.f32 %v1702, %v1703
        %v1705 = vsub.f32 1.0, %v1704
        %v1706 = vmul.f32 %v1703, %v1705
        %v1707 = vadd.f32 %v1703, %v1706
        %vm1708 = vweird.f32 %v1702
        %vm1709 = vweird.f32 %v1703
        %vm1710 = vmor %vm1708, %vm1709
        %v1711 = vsel %vm1710, %v1703, %v1707
        %v1712 = vand.u32 2147483647, %v1702
        %vm1713 = vcmp.eq.f32.partialorder %v1712, 8.507059e+37
        %v1714 = vand.u32 %v1702, 2147483648
        %v1715 = vor.u32 1.1754944e-38, %v1714
        %v1716 = vsel %vm1713, %v1715, %v1711
        %v1717 = vmul.f32 1.0, %v1716
        %v1718 = vxor.u32 %v1696, 2147483648
        %v1719 = vmul.f32 %v1718, 1.442695
        %v1720 = vpow.pop %v1719
        %v1721 = vadd.f32 %v1720, 1.0
        %v1722 = vrcp.pop %v1721
        %v1723 = vmul.f32 %v1721, %v1722
        %v1724 = vsub.f32 1.0, %v1723
        %v1725 = vmul.f32 %v1722, %v1724
        %v1726 = vadd.f32 %v1722, %v1725
        %vm1727 = vweird.f32 %v1721
        %vm1728 = vweird.f32 %v1722
        %vm1729 = vmor %vm1727, %vm1728
        %v1730 = vsel %vm1729, %v1722, %v1726
        %v1731 = vand.u32 2147483647, %v1721
        %vm1732 = vcmp.eq.f32.partialorder %v1731, 8.507059e+37
        %v1733 = vand.u32 %v1721, 2147483648
        %v1734 = vor.u32 1.1754944e-38, %v1733
        %v1735 = vsel %vm1732, %v1734, %v1730
        %v1736 = vmul.f32 1.0, %v1735
        %v1737 = vtanh.pop %v1697
        %v1738 = vxor.u32 %v1698, 2147483648
        %v1739 = vmul.f32 %v1738, 1.442695
        %v1740 = vpow.pop %v1739
        %v1741 = vadd.f32 %v1740, 1.0
        %v1742 = vrcp.pop %v1741
        %v1743 = vmul.f32 %v1741, %v1742
        %v1744 = vsub.f32 1.0, %v1743
        %v1745 = vmul.f32 %v1742, %v1744
        %v1746 = vadd.f32 %v1742, %v1745
        %vm1747 = vweird.f32 %v1741
        %vm1748 = vweird.f32 %v1742
        %vm1749 = vmor %vm1747, %vm1748
        %v1750 = vsel %vm1749, %v1742, %v1746
        %v1751 = vand.u32 2147483647, %v1741
        %vm1752 = vcmp.eq.f32.partialorder %v1751, 8.507059e+37
        %v1753 = vand.u32 %v1741, 2147483648
        %v1754 = vor.u32 1.1754944e-38, %v1753
        %v1755 = vsel %vm1752, %v1754, %v1750
        %v1756 = vmul.f32 1.0, %v1755
        %v1757 = vmul.f32 %v1736, %v1635
        %v1758 = vmul.f32 %v1717, %v1737
        %v1759 = vadd.f32 %v1757, %v1758
        %v1760 = vtanh.pop %v1759
        %v1761 = vmul.f32 %v1756, %v1760
        %s1762 = sadd.s32 %s970, 6
        %p1763 = scmp.lt.s32.totalorder %s1762, 13
        %s1764 = scalar_select %p1763, 1, 0
        %v1765 = vstv %s1764
        %vm1766 = vcmp.eq.s32.totalorder %v1765, 1
        %v1767 = vsel %vm1766, %v1759, %v1635
        %v1768 = vsel %vm1766, %v1761, %v1636
        %1769 = vst [vmem:[#allocation5 + $0x30] sm:$0xff] %v1768
        %v1770 = vld [vmem:[#allocation4 + $0xe0] sm:$0xff]
        %v1771 = vld [vmem:[#allocation4 + $0xe8] sm:$0xff]
        %v1772 = vld [vmem:[#allocation4 + $0xf0] sm:$0xff]
        %v1773 = vld [vmem:[#allocation4 + $0xf8] sm:$0xff]
        %v1774 = vpack.c.bf16 %v1768, %v1768
        %1775 = vmatpush.bf16.msra.mxu0 %v815
        %1776 = vmatpush.bf16.msra.mxu0 %v811
        %1777 = vmatpush.bf16.msra.mxu0 %v807
        %1778 = vmatpush.bf16.msra.mxu0 %v803
        %1779 = vmatpush.bf16.msra.mxu0 %v799
        %1780 = vmatpush.bf16.msra.mxu0 %v795
        %1781 = vmatpush.bf16.msra.mxu0 %v791
        %1782 = vmatpush.bf16.msra.mxu0 %v787
        %1783 = vmatmul.bf16.gmra.mxu0 %v1774
        %v1784 = vpop.f32.mrf.mxu0
        %v1785 = vadd.f32 0.0, %v1784
        %v1786 = vpop.f32.mrf.mxu0
        %1787 = vdwg.mxu0
        %1788 = vmatpush.bf16.msra.mxu0 %v816
        %1789 = vmatpush.bf16.msra.mxu0 %v812
        %1790 = vmatpush.bf16.msra.mxu0 %v808
        %1791 = vmatpush.bf16.msra.mxu0 %v804
        %1792 = vmatpush.bf16.msra.mxu0 %v800
        %1793 = vmatpush.bf16.msra.mxu0 %v796
        %1794 = vmatpush.bf16.msra.mxu0 %v792
        %1795 = vmatpush.bf16.msra.mxu0 %v788
        %1796 = vmatmul.bf16.gmra.mxu0 %v1774
        %v1797 = vpop.f32.mrf.mxu0
        %v1798 = vadd.f32 0.0, %v1797
        %v1799 = vpop.f32.mrf.mxu0
        %1800 = vdwg.mxu0
        %1801 = vmatpush.bf16.msra.mxu0 %v817
        %1802 = vmatpush.bf16.msra.mxu0 %v813
        %1803 = vmatpush.bf16.msra.mxu0 %v809
        %1804 = vmatpush.bf16.msra.mxu0 %v805
        %1805 = vmatpush.bf16.msra.mxu0 %v801
        %1806 = vmatpush.bf16.msra.mxu0 %v797
        %1807 = vmatpush.bf16.msra.mxu0 %v793
        %1808 = vmatpush.bf16.msra.mxu0 %v789
        %1809 = vmatmul.bf16.gmra.mxu0 %v1774
        %v1810 = vpop.f32.mrf.mxu0
        %v1811 = vadd.f32 0.0, %v1810
        %v1812 = vpop.f32.mrf.mxu0
        %1813 = vdwg.mxu0
        %1814 = vmatpush.bf16.msra.mxu0 %v818
        %1815 = vmatpush.bf16.msra.mxu0 %v814
        %1816 = vmatpush.bf16.msra.mxu0 %v810
        %1817 = vmatpush.bf16.msra.mxu0 %v806
        %1818 = vmatpush.bf16.msra.mxu0 %v802
        %1819 = vmatpush.bf16.msra.mxu0 %v798
        %1820 = vmatpush.bf16.msra.mxu0 %v794
        %1821 = vmatpush.bf16.msra.mxu0 %v790
        %1822 = vmatmul.bf16.gmra.mxu0 %v1774
        %v1823 = vpop.f32.mrf.mxu0
        %v1824 = vadd.f32 0.0, %v1823
        %v1825 = vpop.f32.mrf.mxu0
        %1826 = vdwg.mxu0
        %v1827 = vadd.f32 %v1770, %v1785
        %v1828 = vadd.f32 %v1771, %v1798
        %v1829 = vadd.f32 %v1772, %v1811
        %v1830 = vadd.f32 %v1773, %v1824
        %v1831 = vxor.u32 %v1827, 2147483648
        %v1832 = vmul.f32 %v1831, 1.442695
        %v1833 = vpow.pop %v1832
        %v1834 = vadd.f32 %v1833, 1.0
        %v1835 = vrcp.pop %v1834
        %v1836 = vmul.f32 %v1834, %v1835
        %v1837 = vsub.f32 1.0, %v1836
        %v1838 = vmul.f32 %v1835, %v1837
        %v1839 = vadd.f32 %v1835, %v1838
        %vm1840 = vweird.f32 %v1834
        %vm1841 = vweird.f32 %v1835
        %vm1842 = vmor %vm1840, %vm1841
        %v1843 = vsel %vm1842, %v1835, %v1839
        %v1844 = vand.u32 2147483647, %v1834
        %vm1845 = vcmp.eq.f32.partialorder %v1844, 8.507059e+37
        %v1846 = vand.u32 %v1834, 2147483648
        %v1847 = vor.u32 1.1754944e-38, %v1846
        %v1848 = vsel %vm1845, %v1847, %v1843
        %v1849 = vmul.f32 1.0, %v1848
        %v1850 = vxor.u32 %v1828, 2147483648
        %v1851 = vmul.f32 %v1850, 1.442695
        %v1852 = vpow.pop %v1851
        %v1853 = vadd.f32 %v1852, 1.0
        %v1854 = vrcp.pop %v1853
        %v1855 = vmul.f32 %v1853, %v1854
        %v1856 = vsub.f32 1.0, %v1855
        %v1857 = vmul.f32 %v1854, %v1856
        %v1858 = vadd.f32 %v1854, %v1857
        %vm1859 = vweird.f32 %v1853
        %vm1860 = vweird.f32 %v1854
        %vm1861 = vmor %vm1859, %vm1860
        %v1862 = vsel %vm1861, %v1854, %v1858
        %v1863 = vand.u32 2147483647, %v1853
        %vm1864 = vcmp.eq.f32.partialorder %v1863, 8.507059e+37
        %v1865 = vand.u32 %v1853, 2147483648
        %v1866 = vor.u32 1.1754944e-38, %v1865
        %v1867 = vsel %vm1864, %v1866, %v1862
        %v1868 = vmul.f32 1.0, %v1867
        %v1869 = vtanh.pop %v1829
        %v1870 = vxor.u32 %v1830, 2147483648
        %v1871 = vmul.f32 %v1870, 1.442695
        %v1872 = vpow.pop %v1871
        %v1873 = vadd.f32 %v1872, 1.0
        %v1874 = vrcp.pop %v1873
        %v1875 = vmul.f32 %v1873, %v1874
        %v1876 = vsub.f32 1.0, %v1875
        %v1877 = vmul.f32 %v1874, %v1876
        %v1878 = vadd.f32 %v1874, %v1877
        %vm1879 = vweird.f32 %v1873
        %vm1880 = vweird.f32 %v1874
        %vm1881 = vmor %vm1879, %vm1880
        %v1882 = vsel %vm1881, %v1874, %v1878
        %v1883 = vand.u32 2147483647, %v1873
        %vm1884 = vcmp.eq.f32.partialorder %v1883, 8.507059e+37
        %v1885 = vand.u32 %v1873, 2147483648
        %v1886 = vor.u32 1.1754944e-38, %v1885
        %v1887 = vsel %vm1884, %v1886, %v1882
        %v1888 = vmul.f32 1.0, %v1887
        %v1889 = vmul.f32 %v1868, %v1767
        %v1890 = vmul.f32 %v1849, %v1869
        %v1891 = vadd.f32 %v1889, %v1890
        %v1892 = vtanh.pop %v1891
        %v1893 = vmul.f32 %v1888, %v1892
        %s1894 = sadd.s32 %s970, 7
        %p1895 = scmp.lt.s32.totalorder %s1894, 13
        %s1896 = scalar_select %p1895, 1, 0
        %v1897 = vstv %s1896
        %vm1898 = vcmp.eq.s32.totalorder %v1897, 1
        %v1899 = vsel %vm1898, %v1891, %v1767
        %v1900 = vsel %vm1898, %v1893, %v1768
        %1901 = vst [vmem:[#allocation5 + $0x38] sm:$0xff] %v1900
        %1902 = vst [vmem:[#allocation2] sm:$0xff] %v1900
        %1903 = vst [vmem:[#allocation3] sm:$0xff] %v1899
        %v1904 = vld [vmem:[#allocation5] sm:$0xff]
        %v1905 = vld [vmem:[#allocation5 + $0x8] sm:$0xff]
        %v1906 = vld [vmem:[#allocation5 + $0x10] sm:$0xff]
        %v1907 = vld [vmem:[#allocation5 + $0x18] sm:$0xff]
        %v1908 = vld [vmem:[#allocation5 + $0x20] sm:$0xff]
        %v1909 = vld [vmem:[#allocation5 + $0x28] sm:$0xff]
        %v1910 = vld [vmem:[#allocation5 + $0x30] sm:$0xff]
        %v1911 = vld [vmem:[#allocation5 + $0x38] sm:$0xff]
        %v1912 = vpack.c.bf16 %v1905, %v1904
        %v1913 = vpack.c.bf16 %v1907, %v1906
        %v1914 = vpack.c.bf16 %v1909, %v1908
        %v1915 = vpack.c.bf16 %v1911, %v1910
        %v1916 = vld [vmem:[#allocation11] sm:$0xff]
        %v1917 = vld [vmem:[#allocation11 + $0x8] sm:$0xff]
        %v1918 = vld [vmem:[#allocation11 + $0x10] sm:$0xff]
        %v1919 = vld [vmem:[#allocation11 + $0x18] sm:$0xff]
        %v1920 = vld [vmem:[#allocation11 + $0x20] sm:$0xff]
        %v1921 = vld [vmem:[#allocation11 + $0x28] sm:$0xff]
        %v1922 = vld [vmem:[#allocation11 + $0x30] sm:$0xff]
        %v1923 = vld [vmem:[#allocation11 + $0x38] sm:$0xff]
        %v1924 = vld [vmem:[#allocation11 + $0x40] sm:$0xff]
        %v1925 = vld [vmem:[#allocation11 + $0x48] sm:$0xff]
        %v1926 = vld [vmem:[#allocation11 + $0x50] sm:$0xff]
        %v1927 = vld [vmem:[#allocation11 + $0x58] sm:$0xff]
        %v1928 = vld [vmem:[#allocation11 + $0x60] sm:$0xff]
        %v1929 = vld [vmem:[#allocation11 + $0x68] sm:$0xff]
        %v1930 = vld [vmem:[#allocation11 + $0x70] sm:$0xff]
        %v1931 = vld [vmem:[#allocation11 + $0x78] sm:$0xff]
        %v1932 = vld [vmem:[#allocation11 + $0x80] sm:$0xff]
        %v1933 = vld [vmem:[#allocation11 + $0x88] sm:$0xff]
        %v1934 = vld [vmem:[#allocation11 + $0x90] sm:$0xff]
        %v1935 = vld [vmem:[#allocation11 + $0x98] sm:$0xff]
        %v1936 = vld [vmem:[#allocation11 + $0xa0] sm:$0xff]
        %v1937 = vld [vmem:[#allocation11 + $0xa8] sm:$0xff]
        %v1938 = vld [vmem:[#allocation11 + $0xb0] sm:$0xff]
        %v1939 = vld [vmem:[#allocation11 + $0xb8] sm:$0xff]
        %v1940 = vld [vmem:[#allocation11 + $0xc0] sm:$0xff]
        %v1941 = vld [vmem:[#allocation11 + $0xc8] sm:$0xff]
        %v1942 = vld [vmem:[#allocation11 + $0xd0] sm:$0xff]
        %v1943 = vld [vmem:[#allocation11 + $0xd8] sm:$0xff]
        %v1944 = vld [vmem:[#allocation11 + $0xe0] sm:$0xff]
        %v1945 = vld [vmem:[#allocation11 + $0xe8] sm:$0xff]
        %v1946 = vld [vmem:[#allocation11 + $0xf0] sm:$0xff]
        %v1947 = vld [vmem:[#allocation11 + $0xf8] sm:$0xff]
        %v1948 = vld [vmem:[%s6] sm:$0xf]
        %v1950 = vperm.slane %v1948, 0
        %v1951 = vperm.slane %v1948, 1
        %v1952 = vperm.slane %v1948, 2
        %v1953 = vperm.slane %v1948, 3
        %v1990 = vunpack.c.l.b16 %v1916
        %v1991 = vunpack.c.h.b16 %v1916
        %v1992 = vunpack.c.l.b16 %v1917
        %v1993 = vunpack.c.h.b16 %v1917
        %v1994 = vunpack.c.l.b16 %v1918
        %v1995 = vunpack.c.h.b16 %v1918
        %v1996 = vunpack.c.l.b16 %v1919
        %v1997 = vunpack.c.h.b16 %v1919
        %v1998 = vunpack.c.l.b16 %v1920
        %v1999 = vunpack.c.h.b16 %v1920
        %v2000 = vunpack.c.l.b16 %v1921
        %v2001 = vunpack.c.h.b16 %v1921
        %v2002 = vunpack.c.l.b16 %v1922
        %v2003 = vunpack.c.h.b16 %v1922
        %v2004 = vunpack.c.l.b16 %v1923
        %v2005 = vunpack.c.h.b16 %v1923
        %v2006 = vunpack.c.l.b16 %v1924
        %v2007 = vunpack.c.h.b16 %v1924
        %v2008 = vunpack.c.l.b16 %v1925
        %v2009 = vunpack.c.h.b16 %v1925
        %v2010 = vunpack.c.l.b16 %v1926
        %v2011 = vunpack.c.h.b16 %v1926
        %v2012 = vunpack.c.l.b16 %v1927
        %v2013 = vunpack.c.h.b16 %v1927
        %v2014 = vunpack.c.l.b16 %v1928
        %v2015 = vunpack.c.h.b16 %v1928
        %v2016 = vunpack.c.l.b16 %v1929
        %v2017 = vunpack.c.h.b16 %v1929
        %v2018 = vunpack.c.l.b16 %v1930
        %v2019 = vunpack.c.h.b16 %v1930
        %v2020 = vunpack.c.l.b16 %v1931
        %v2021 = vunpack.c.h.b16 %v1931
        %v2022 = vunpack.c.l.b16 %v1932
        %v2023 = vunpack.c.h.b16 %v1932
        %v2024 = vunpack.c.l.b16 %v1933
        %v2025 = vunpack.c.h.b16 %v1933
        %v2026 = vunpack.c.l.b16 %v1934
        %v2027 = vunpack.c.h.b16 %v1934
        %v2028 = vunpack.c.l.b16 %v1935
        %v2029 = vunpack.c.h.b16 %v1935
        %v2030 = vunpack.c.l.b16 %v1936
        %v2031 = vunpack.c.h.b16 %v1936
        %v2032 = vunpack.c.l.b16 %v1937
        %v2033 = vunpack.c.h.b16 %v1937
        %v2034 = vunpack.c.l.b16 %v1938
        %v2035 = vunpack.c.h.b16 %v1938
        %v2036 = vunpack.c.l.b16 %v1939
        %v2037 = vunpack.c.h.b16 %v1939
        %v2038 = vunpack.c.l.b16 %v1940
        %v2039 = vunpack.c.h.b16 %v1940
        %v2040 = vunpack.c.l.b16 %v1941
        %v2041 = vunpack.c.h.b16 %v1941
        %v2042 = vunpack.c.l.b16 %v1942
        %v2043 = vunpack.c.h.b16 %v1942
        %v2044 = vunpack.c.l.b16 %v1943
        %v2045 = vunpack.c.h.b16 %v1943
        %v2046 = vunpack.c.l.b16 %v1944
        %v2047 = vunpack.c.h.b16 %v1944
        %v2048 = vunpack.c.l.b16 %v1945
        %v2049 = vunpack.c.h.b16 %v1945
        %v2050 = vunpack.c.l.b16 %v1946
        %v2051 = vunpack.c.h.b16 %v1946
        %v2052 = vunpack.c.l.b16 %v1947
        %v2053 = vunpack.c.h.b16 %v1947
        %v2054 = vpack.c.b16 %v1994, %v1990
        %v2055 = vpack.c.b16 %v1995, %v1991
        %v2056 = vpack.c.b16 %v1996, %v1992
        %v2057 = vpack.c.b16 %v1997, %v1993
        %v2058 = vpack.c.b16 %v2002, %v1998
        %v2059 = vpack.c.b16 %v2003, %v1999
        %v2060 = vpack.c.b16 %v2004, %v2000
        %v2061 = vpack.c.b16 %v2005, %v2001
        %v2062 = vpack.c.b16 %v2010, %v2006
        %v2063 = vpack.c.b16 %v2011, %v2007
        %v2064 = vpack.c.b16 %v2012, %v2008
        %v2065 = vpack.c.b16 %v2013, %v2009
        %v2066 = vpack.c.b16 %v2018, %v2014
        %v2067 = vpack.c.b16 %v2019, %v2015
        %v2068 = vpack.c.b16 %v2020, %v2016
        %v2069 = vpack.c.b16 %v2021, %v2017
        %v2070 = vpack.c.b16 %v2026, %v2022
        %v2071 = vpack.c.b16 %v2027, %v2023
        %v2072 = vpack.c.b16 %v2028, %v2024
        %v2073 = vpack.c.b16 %v2029, %v2025
        %v2074 = vpack.c.b16 %v2034, %v2030
        %v2075 = vpack.c.b16 %v2035, %v2031
        %v2076 = vpack.c.b16 %v2036, %v2032
        %v2077 = vpack.c.b16 %v2037, %v2033
        %v2078 = vpack.c.b16 %v2042, %v2038
        %v2079 = vpack.c.b16 %v2043, %v2039
        %v2080 = vpack.c.b16 %v2044, %v2040
        %v2081 = vpack.c.b16 %v2045, %v2041
        %v2082 = vpack.c.b16 %v2050, %v2046
        %v2083 = vpack.c.b16 %v2051, %v2047
        %v2084 = vpack.c.b16 %v2052, %v2048
        %v2085 = vpack.c.b16 %v2053, %v2049
        %2118 = vmatpush.bf16.msra.mxu0 %v2082
        %2119 = vmatpush.bf16.msra.mxu0 %v2078
        %2120 = vmatpush.bf16.msra.mxu0 %v2074
        %2121 = vmatpush.bf16.msra.mxu0 %v2070
        %2122 = vmatpush.bf16.msra.mxu0 %v2066
        %2123 = vmatpush.bf16.msra.mxu0 %v2062
        %2124 = vmatpush.bf16.msra.mxu0 %v2058
        %2125 = vmatpush.bf16.msra.mxu0 %v2054
        %2126 = vmatmul.bf16.gmra.mxu0 %v1912
        %v2127 = vpop.f32.mrf.mxu0
        %v2128 = vadd.f32 %v1950, %v2127
        %v2129 = vpop.f32.mrf.mxu0
        %v2130 = vadd.f32 %v1950, %v2129
        %2131 = vmatmul.bf16.gmra.mxu0 %v1913
        %v2132 = vpop.f32.mrf.mxu0
        %v2133 = vadd.f32 %v1950, %v2132
        %v2134 = vpop.f32.mrf.mxu0
        %v2135 = vadd.f32 %v1950, %v2134
        %2136 = vmatmul.bf16.gmra.mxu0 %v1914
        %v2137 = vpop.f32.mrf.mxu0
        %v2138 = vadd.f32 %v1950, %v2137
        %v2139 = vpop.f32.mrf.mxu0
        %v2140 = vadd.f32 %v1950, %v2139
        %2141 = vmatmul.bf16.gmra.mxu0 %v1915
        %v2142 = vpop.f32.mrf.mxu0
        %v2143 = vadd.f32 %v1950, %v2142
        %v2144 = vpop.f32.mrf.mxu0
        %v2145 = vadd.f32 %v1950, %v2144
        %2146 = vdwg.mxu0
        %2147 = vmatpush.bf16.msra.mxu0 %v2083
        %2148 = vmatpush.bf16.msra.mxu0 %v2079
        %2149 = vmatpush.bf16.msra.mxu0 %v2075
        %2150 = vmatpush.bf16.msra.mxu0 %v2071
        %2151 = vmatpush.bf16.msra.mxu0 %v2067
        %2152 = vmatpush.bf16.msra.mxu0 %v2063
        %2153 = vmatpush.bf16.msra.mxu0 %v2059
        %2154 = vmatpush.bf16.msra.mxu0 %v2055
        %2155 = vmatmul.bf16.gmra.mxu0 %v1912
        %v2156 = vpop.f32.mrf.mxu0
        %v2157 = vadd.f32 %v1951, %v2156
        %v2158 = vpop.f32.mrf.mxu0
        %v2159 = vadd.f32 %v1951, %v2158
        %2160 = vmatmul.bf16.gmra.mxu0 %v1913
        %v2161 = vpop.f32.mrf.mxu0
        %v2162 = vadd.f32 %v1951, %v2161
        %v2163 = vpop.f32.mrf.mxu0
        %v2164 = vadd.f32 %v1951, %v2163
        %2165 = vmatmul.bf16.gmra.mxu0 %v1914
        %v2166 = vpop.f32.mrf.mxu0
        %v2167 = vadd.f32 %v1951, %v2166
        %v2168 = vpop.f32.mrf.mxu0
        %v2169 = vadd.f32 %v1951, %v2168
        %2170 = vmatmul.bf16.gmra.mxu0 %v1915
        %v2171 = vpop.f32.mrf.mxu0
        %v2172 = vadd.f32 %v1951, %v2171
        %v2173 = vpop.f32.mrf.mxu0
        %v2174 = vadd.f32 %v1951, %v2173
        %2175 = vdwg.mxu0
        %2176 = vmatpush.bf16.msra.mxu0 %v2084
        %2177 = vmatpush.bf16.msra.mxu0 %v2080
        %2178 = vmatpush.bf16.msra.mxu0 %v2076
        %2179 = vmatpush.bf16.msra.mxu0 %v2072
        %2180 = vmatpush.bf16.msra.mxu0 %v2068
        %2181 = vmatpush.bf16.msra.mxu0 %v2064
        %2182 = vmatpush.bf16.msra.mxu0 %v2060
        %2183 = vmatpush.bf16.msra.mxu0 %v2056
        %2184 = vmatmul.bf16.gmra.mxu0 %v1912
        %v2185 = vpop.f32.mrf.mxu0
        %v2186 = vadd.f32 %v1952, %v2185
        %v2187 = vpop.f32.mrf.mxu0
        %v2188 = vadd.f32 %v1952, %v2187
        %2189 = vmatmul.bf16.gmra.mxu0 %v1913
        %v2190 = vpop.f32.mrf.mxu0
        %v2191 = vadd.f32 %v1952, %v2190
        %v2192 = vpop.f32.mrf.mxu0
        %v2193 = vadd.f32 %v1952, %v2192
        %2194 = vmatmul.bf16.gmra.mxu0 %v1914
        %v2195 = vpop.f32.mrf.mxu0
        %v2196 = vadd.f32 %v1952, %v2195
        %v2197 = vpop.f32.mrf.mxu0
        %v2198 = vadd.f32 %v1952, %v2197
        %2199 = vmatmul.bf16.gmra.mxu0 %v1915
        %v2200 = vpop.f32.mrf.mxu0
        %v2201 = vadd.f32 %v1952, %v2200
        %v2202 = vpop.f32.mrf.mxu0
        %v2203 = vadd.f32 %v1952, %v2202
        %2204 = vdwg.mxu0
        %2205 = vmatpush.bf16.msra.mxu0 %v2085
        %2206 = vmatpush.bf16.msra.mxu0 %v2081
        %2207 = vmatpush.bf16.msra.mxu0 %v2077
        %2208 = vmatpush.bf16.msra.mxu0 %v2073
        %2209 = vmatpush.bf16.msra.mxu0 %v2069
        %2210 = vmatpush.bf16.msra.mxu0 %v2065
        %2211 = vmatpush.bf16.msra.mxu0 %v2061
        %2212 = vmatpush.bf16.msra.mxu0 %v2057
        %2213 = vmatmul.bf16.gmra.mxu0 %v1912
        %v2214 = vpop.f32.mrf.mxu0
        %v2215 = vadd.f32 %v1953, %v2214
        %v2216 = vpop.f32.mrf.mxu0
        %v2217 = vadd.f32 %v1953, %v2216
        %2218 = vmatmul.bf16.gmra.mxu0 %v1913
        %v2219 = vpop.f32.mrf.mxu0
        %v2220 = vadd.f32 %v1953, %v2219
        %v2221 = vpop.f32.mrf.mxu0
        %v2222 = vadd.f32 %v1953, %v2221
        %2223 = vmatmul.bf16.gmra.mxu0 %v1914
        %v2224 = vpop.f32.mrf.mxu0
        %v2225 = vadd.f32 %v1953, %v2224
        %v2226 = vpop.f32.mrf.mxu0
        %v2227 = vadd.f32 %v1953, %v2226
        %2228 = vmatmul.bf16.gmra.mxu0 %v1915
        %v2229 = vpop.f32.mrf.mxu0
        %v2230 = vadd.f32 %v1953, %v2229
        %v2231 = vpop.f32.mrf.mxu0
        %v2232 = vadd.f32 %v1953, %v2231
        %2233 = vdwg.mxu0
        %2234 = vst [vmem:[#allocation4] sm:$0xff] %v2128
        %2235 = vst [vmem:[#allocation4 + $0x8] sm:$0xff] %v2157
        %2236 = vst [vmem:[#allocation4 + $0x10] sm:$0xff] %v2186
        %2237 = vst [vmem:[#allocation4 + $0x18] sm:$0xff] %v2215
        %2238 = vst [vmem:[#allocation4 + $0x20] sm:$0xff] %v2130
        %2239 = vst [vmem:[#allocation4 + $0x28] sm:$0xff] %v2159
        %2240 = vst [vmem:[#allocation4 + $0x30] sm:$0xff] %v2188
        %2241 = vst [vmem:[#allocation4 + $0x38] sm:$0xff] %v2217
        %2242 = vst [vmem:[#allocation4 + $0x40] sm:$0xff] %v2133
        %2243 = vst [vmem:[#allocation4 + $0x48] sm:$0xff] %v2162
        %2244 = vst [vmem:[#allocation4 + $0x50] sm:$0xff] %v2191
        %2245 = vst [vmem:[#allocation4 + $0x58] sm:$0xff] %v2220
        %2246 = vst [vmem:[#allocation4 + $0x60] sm:$0xff] %v2135
        %2247 = vst [vmem:[#allocation4 + $0x68] sm:$0xff] %v2164
        %2248 = vst [vmem:[#allocation4 + $0x70] sm:$0xff] %v2193
        %2249 = vst [vmem:[#allocation4 + $0x78] sm:$0xff] %v2222
        %2250 = vst [vmem:[#allocation4 + $0x80] sm:$0xff] %v2138
        %2251 = vst [vmem:[#allocation4 + $0x88] sm:$0xff] %v2167
        %2252 = vst [vmem:[#allocation4 + $0x90] sm:$0xff] %v2196
        %2253 = vst [vmem:[#allocation4 + $0x98] sm:$0xff] %v2225
        %2254 = vst [vmem:[#allocation4 + $0xa0] sm:$0xff] %v2140
        %2255 = vst [vmem:[#allocation4 + $0xa8] sm:$0xff] %v2169
        %2256 = vst [vmem:[#allocation4 + $0xb0] sm:$0xff] %v2198
        %2257 = vst [vmem:[#allocation4 + $0xb8] sm:$0xff] %v2227
        %2258 = vst [vmem:[#allocation4 + $0xc0] sm:$0xff] %v2143
        %2259 = vst [vmem:[#allocation4 + $0xc8] sm:$0xff] %v2172
        %2260 = vst [vmem:[#allocation4 + $0xd0] sm:$0xff] %v2201
        %2261 = vst [vmem:[#allocation4 + $0xd8] sm:$0xff] %v2230
        %2262 = vst [vmem:[#allocation4 + $0xe0] sm:$0xff] %v2145
        %2263 = vst [vmem:[#allocation4 + $0xe8] sm:$0xff] %v2174
        %2264 = vst [vmem:[#allocation4 + $0xf0] sm:$0xff] %v2203
        %2265 = vst [vmem:[#allocation4 + $0xf8] sm:$0xff] %v2232
        %v2266 = vld [vmem:[#allocation12] sm:$0xff]
        %v2267 = vld [vmem:[#allocation12 + $0x8] sm:$0xff]
        %v2268 = vld [vmem:[#allocation12 + $0x10] sm:$0xff]
        %v2269 = vld [vmem:[#allocation12 + $0x18] sm:$0xff]
        %v2270 = vld [vmem:[#allocation12 + $0x20] sm:$0xff]
        %v2271 = vld [vmem:[#allocation12 + $0x28] sm:$0xff]
        %v2272 = vld [vmem:[#allocation12 + $0x30] sm:$0xff]
        %v2273 = vld [vmem:[#allocation12 + $0x38] sm:$0xff]
        %v2274 = vld [vmem:[#allocation12 + $0x40] sm:$0xff]
        %v2275 = vld [vmem:[#allocation12 + $0x48] sm:$0xff]
        %v2276 = vld [vmem:[#allocation12 + $0x50] sm:$0xff]
        %v2277 = vld [vmem:[#allocation12 + $0x58] sm:$0xff]
        %v2278 = vld [vmem:[#allocation12 + $0x60] sm:$0xff]
        %v2279 = vld [vmem:[#allocation12 + $0x68] sm:$0xff]
        %v2280 = vld [vmem:[#allocation12 + $0x70] sm:$0xff]
        %v2281 = vld [vmem:[#allocation12 + $0x78] sm:$0xff]
        %v2282 = vld [vmem:[#allocation12 + $0x80] sm:$0xff]
        %v2283 = vld [vmem:[#allocation12 + $0x88] sm:$0xff]
        %v2284 = vld [vmem:[#allocation12 + $0x90] sm:$0xff]
        %v2285 = vld [vmem:[#allocation12 + $0x98] sm:$0xff]
        %v2286 = vld [vmem:[#allocation12 + $0xa0] sm:$0xff]
        %v2287 = vld [vmem:[#allocation12 + $0xa8] sm:$0xff]
        %v2288 = vld [vmem:[#allocation12 + $0xb0] sm:$0xff]
        %v2289 = vld [vmem:[#allocation12 + $0xb8] sm:$0xff]
        %v2290 = vld [vmem:[#allocation12 + $0xc0] sm:$0xff]
        %v2291 = vld [vmem:[#allocation12 + $0xc8] sm:$0xff]
        %v2292 = vld [vmem:[#allocation12 + $0xd0] sm:$0xff]
        %v2293 = vld [vmem:[#allocation12 + $0xd8] sm:$0xff]
        %v2294 = vld [vmem:[#allocation12 + $0xe0] sm:$0xff]
        %v2295 = vld [vmem:[#allocation12 + $0xe8] sm:$0xff]
        %v2296 = vld [vmem:[#allocation12 + $0xf0] sm:$0xff]
        %v2297 = vld [vmem:[#allocation12 + $0xf8] sm:$0xff]
        %s2298 = scalar_lea.vmem [#allocation2], 8
        %v2299 = vld [vmem:[%s2298] sm:$0xff]
        %s2300 = scalar_lea.vmem [#allocation3], 8
        %v2301 = vld [vmem:[%s2300] sm:$0xff]
        %v2302 = vld [vmem:[#allocation4] sm:$0xff]
        %v2303 = vld [vmem:[#allocation4 + $0x8] sm:$0xff]
        %v2304 = vld [vmem:[#allocation4 + $0x10] sm:$0xff]
        %v2305 = vld [vmem:[#allocation4 + $0x18] sm:$0xff]
        %v2306 = vpack.c.bf16 %v2299, %v2299
        %v2339 = vunpack.c.l.b16 %v2266
        %v2340 = vunpack.c.h.b16 %v2266
        %v2341 = vunpack.c.l.b16 %v2267
        %v2342 = vunpack.c.h.b16 %v2267
        %v2343 = vunpack.c.l.b16 %v2268
        %v2344 = vunpack.c.h.b16 %v2268
        %v2345 = vunpack.c.l.b16 %v2269
        %v2346 = vunpack.c.h.b16 %v2269
        %v2347 = vunpack.c.l.b16 %v2270
        %v2348 = vunpack.c.h.b16 %v2270
        %v2349 = vunpack.c.l.b16 %v2271
        %v2350 = vunpack.c.h.b16 %v2271
        %v2351 = vunpack.c.l.b16 %v2272
        %v2352 = vunpack.c.h.b16 %v2272
        %v2353 = vunpack.c.l.b16 %v2273
        %v2354 = vunpack.c.h.b16 %v2273
        %v2355 = vunpack.c.l.b16 %v2274
        %v2356 = vunpack.c.h.b16 %v2274
        %v2357 = vunpack.c.l.b16 %v2275
        %v2358 = vunpack.c.h.b16 %v2275
        %v2359 = vunpack.c.l.b16 %v2276
        %v2360 = vunpack.c.h.b16 %v2276
        %v2361 = vunpack.c.l.b16 %v2277
        %v2362 = vunpack.c.h.b16 %v2277
        %v2363 = vunpack.c.l.b16 %v2278
        %v2364 = vunpack.c.h.b16 %v2278
        %v2365 = vunpack.c.l.b16 %v2279
        %v2366 = vunpack.c.h.b16 %v2279
        %v2367 = vunpack.c.l.b16 %v2280
        %v2368 = vunpack.c.h.b16 %v2280
        %v2369 = vunpack.c.l.b16 %v2281
        %v2370 = vunpack.c.h.b16 %v2281
        %v2371 = vunpack.c.l.b16 %v2282
        %v2372 = vunpack.c.h.b16 %v2282
        %v2373 = vunpack.c.l.b16 %v2283
        %v2374 = vunpack.c.h.b16 %v2283
        %v2375 = vunpack.c.l.b16 %v2284
        %v2376 = vunpack.c.h.b16 %v2284
        %v2377 = vunpack.c.l.b16 %v2285
        %v2378 = vunpack.c.h.b16 %v2285
        %v2379 = vunpack.c.l.b16 %v2286
        %v2380 = vunpack.c.h.b16 %v2286
        %v2381 = vunpack.c.l.b16 %v2287
        %v2382 = vunpack.c.h.b16 %v2287
        %v2383 = vunpack.c.l.b16 %v2288
        %v2384 = vunpack.c.h.b16 %v2288
        %v2385 = vunpack.c.l.b16 %v2289
        %v2386 = vunpack.c.h.b16 %v2289
        %v2387 = vunpack.c.l.b16 %v2290
        %v2388 = vunpack.c.h.b16 %v2290
        %v2389 = vunpack.c.l.b16 %v2291
        %v2390 = vunpack.c.h.b16 %v2291
        %v2391 = vunpack.c.l.b16 %v2292
        %v2392 = vunpack.c.h.b16 %v2292
        %v2393 = vunpack.c.l.b16 %v2293
        %v2394 = vunpack.c.h.b16 %v2293
        %v2395 = vunpack.c.l.b16 %v2294
        %v2396 = vunpack.c.h.b16 %v2294
        %v2397 = vunpack.c.l.b16 %v2295
        %v2398 = vunpack.c.h.b16 %v2295
        %v2399 = vunpack.c.l.b16 %v2296
        %v2400 = vunpack.c.h.b16 %v2296
        %v2401 = vunpack.c.l.b16 %v2297
        %v2402 = vunpack.c.h.b16 %v2297
        %v2403 = vpack.c.b16 %v2343, %v2339
        %v2404 = vpack.c.b16 %v2344, %v2340
        %v2405 = vpack.c.b16 %v2345, %v2341
        %v2406 = vpack.c.b16 %v2346, %v2342
        %v2407 = vpack.c.b16 %v2351, %v2347
        %v2408 = vpack.c.b16 %v2352, %v2348
        %v2409 = vpack.c.b16 %v2353, %v2349
        %v2410 = vpack.c.b16 %v2354, %v2350
        %v2411 = vpack.c.b16 %v2359, %v2355
        %v2412 = vpack.c.b16 %v2360, %v2356
        %v2413 = vpack.c.b16 %v2361, %v2357
        %v2414 = vpack.c.b16 %v2362, %v2358
        %v2415 = vpack.c.b16 %v2367, %v2363
        %v2416 = vpack.c.b16 %v2368, %v2364
        %v2417 = vpack.c.b16 %v2369, %v2365
        %v2418 = vpack.c.b16 %v2370, %v2366
        %v2419 = vpack.c.b16 %v2375, %v2371
        %v2420 = vpack.c.b16 %v2376, %v2372
        %v2421 = vpack.c.b16 %v2377, %v2373
        %v2422 = vpack.c.b16 %v2378, %v2374
        %v2423 = vpack.c.b16 %v2383, %v2379
        %v2424 = vpack.c.b16 %v2384, %v2380
        %v2425 = vpack.c.b16 %v2385, %v2381
        %v2426 = vpack.c.b16 %v2386, %v2382
        %v2427 = vpack.c.b16 %v2391, %v2387
        %v2428 = vpack.c.b16 %v2392, %v2388
        %v2429 = vpack.c.b16 %v2393, %v2389
        %v2430 = vpack.c.b16 %v2394, %v2390
        %v2431 = vpack.c.b16 %v2399, %v2395
        %v2432 = vpack.c.b16 %v2400, %v2396
        %v2433 = vpack.c.b16 %v2401, %v2397
        %v2434 = vpack.c.b16 %v2402, %v2398
        %2467 = vmatpush.bf16.msra.mxu0 %v2431
        %2468 = vmatpush.bf16.msra.mxu0 %v2427
        %2469 = vmatpush.bf16.msra.mxu0 %v2423
        %2470 = vmatpush.bf16.msra.mxu0 %v2419
        %2471 = vmatpush.bf16.msra.mxu0 %v2415
        %2472 = vmatpush.bf16.msra.mxu0 %v2411
        %2473 = vmatpush.bf16.msra.mxu0 %v2407
        %2474 = vmatpush.bf16.msra.mxu0 %v2403
        %2475 = vmatmul.bf16.gmra.mxu0 %v2306
        %v2476 = vpop.f32.mrf.mxu0
        %v2477 = vadd.f32 0.0, %v2476
        %v2478 = vpop.f32.mrf.mxu0
        %2479 = vdwg.mxu0
        %2480 = vmatpush.bf16.msra.mxu0 %v2432
        %2481 = vmatpush.bf16.msra.mxu0 %v2428
        %2482 = vmatpush.bf16.msra.mxu0 %v2424
        %2483 = vmatpush.bf16.msra.mxu0 %v2420
        %2484 = vmatpush.bf16.msra.mxu0 %v2416
        %2485 = vmatpush.bf16.msra.mxu0 %v2412
        %2486 = vmatpush.bf16.msra.mxu0 %v2408
        %2487 = vmatpush.bf16.msra.mxu0 %v2404
        %2488 = vmatmul.bf16.gmra.mxu0 %v2306
        %v2489 = vpop.f32.mrf.mxu0
        %v2490 = vadd.f32 0.0, %v2489
        %v2491 = vpop.f32.mrf.mxu0
        %2492 = vdwg.mxu0
        %2493 = vmatpush.bf16.msra.mxu0 %v2433
        %2494 = vmatpush.bf16.msra.mxu0 %v2429
        %2495 = vmatpush.bf16.msra.mxu0 %v2425
        %2496 = vmatpush.bf16.msra.mxu0 %v2421
        %2497 = vmatpush.bf16.msra.mxu0 %v2417
        %2498 = vmatpush.bf16.msra.mxu0 %v2413
        %2499 = vmatpush.bf16.msra.mxu0 %v2409
        %2500 = vmatpush.bf16.msra.mxu0 %v2405
        %2501 = vmatmul.bf16.gmra.mxu0 %v2306
        %v2502 = vpop.f32.mrf.mxu0
        %v2503 = vadd.f32 0.0, %v2502
        %v2504 = vpop.f32.mrf.mxu0
        %2505 = vdwg.mxu0
        %2506 = vmatpush.bf16.msra.mxu0 %v2434
        %2507 = vmatpush.bf16.msra.mxu0 %v2430
        %2508 = vmatpush.bf16.msra.mxu0 %v2426
        %2509 = vmatpush.bf16.msra.mxu0 %v2422
        %2510 = vmatpush.bf16.msra.mxu0 %v2418
        %2511 = vmatpush.bf16.msra.mxu0 %v2414
        %2512 = vmatpush.bf16.msra.mxu0 %v2410
        %2513 = vmatpush.bf16.msra.mxu0 %v2406
        %2514 = vmatmul.bf16.gmra.mxu0 %v2306
        %v2515 = vpop.f32.mrf.mxu0
        %v2516 = vadd.f32 0.0, %v2515
        %v2517 = vpop.f32.mrf.mxu0
        %2518 = vdwg.mxu0
        %v2519 = vadd.f32 %v2302, %v2477
        %v2520 = vadd.f32 %v2303, %v2490
        %v2521 = vadd.f32 %v2304, %v2503
        %v2522 = vadd.f32 %v2305, %v2516
        %v2523 = vxor.u32 %v2519, 2147483648
        %v2524 = vmul.f32 %v2523, 1.442695
        %v2525 = vpow.pop %v2524
        %v2526 = vadd.f32 %v2525, 1.0
        %v2527 = vrcp.pop %v2526
        %v2528 = vmul.f32 %v2526, %v2527
        %v2529 = vsub.f32 1.0, %v2528
        %v2530 = vmul.f32 %v2527, %v2529
        %v2531 = vadd.f32 %v2527, %v2530
        %vm2532 = vweird.f32 %v2526
        %vm2533 = vweird.f32 %v2527
        %vm2534 = vmor %vm2532, %vm2533
        %v2535 = vsel %vm2534, %v2527, %v2531
        %v2536 = vand.u32 2147483647, %v2526
        %vm2537 = vcmp.eq.f32.partialorder %v2536, 8.507059e+37
        %v2538 = vand.u32 %v2526, 2147483648
        %v2539 = vor.u32 1.1754944e-38, %v2538
        %v2540 = vsel %vm2537, %v2539, %v2535
        %v2541 = vmul.f32 1.0, %v2540
        %v2542 = vxor.u32 %v2520, 2147483648
        %v2543 = vmul.f32 %v2542, 1.442695
        %v2544 = vpow.pop %v2543
        %v2545 = vadd.f32 %v2544, 1.0
        %v2546 = vrcp.pop %v2545
        %v2547 = vmul.f32 %v2545, %v2546
        %v2548 = vsub.f32 1.0, %v2547
        %v2549 = vmul.f32 %v2546, %v2548
        %v2550 = vadd.f32 %v2546, %v2549
        %vm2551 = vweird.f32 %v2545
        %vm2552 = vweird.f32 %v2546
        %vm2553 = vmor %vm2551, %vm2552
        %v2554 = vsel %vm2553, %v2546, %v2550
        %v2555 = vand.u32 2147483647, %v2545
        %vm2556 = vcmp.eq.f32.partialorder %v2555, 8.507059e+37
        %v2557 = vand.u32 %v2545, 2147483648
        %v2558 = vor.u32 1.1754944e-38, %v2557
        %v2559 = vsel %vm2556, %v2558, %v2554
        %v2560 = vmul.f32 1.0, %v2559
        %v2561 = vtanh.pop %v2521
        %v2562 = vxor.u32 %v2522, 2147483648
        %v2563 = vmul.f32 %v2562, 1.442695
        %v2564 = vpow.pop %v2563
        %v2565 = vadd.f32 %v2564, 1.0
        %v2566 = vrcp.pop %v2565
        %v2567 = vmul.f32 %v2565, %v2566
        %v2568 = vsub.f32 1.0, %v2567
        %v2569 = vmul.f32 %v2566, %v2568
        %v2570 = vadd.f32 %v2566, %v2569
        %vm2571 = vweird.f32 %v2565
        %vm2572 = vweird.f32 %v2566
        %vm2573 = vmor %vm2571, %vm2572
        %v2574 = vsel %vm2573, %v2566, %v2570
        %v2575 = vand.u32 2147483647, %v2565
        %vm2576 = vcmp.eq.f32.partialorder %v2575, 8.507059e+37
        %v2577 = vand.u32 %v2565, 2147483648
        %v2578 = vor.u32 1.1754944e-38, %v2577
        %v2579 = vsel %vm2576, %v2578, %v2574
        %v2580 = vmul.f32 1.0, %v2579
        %v2581 = vmul.f32 %v2560, %v2301
        %v2582 = vmul.f32 %v2541, %v2561
        %v2583 = vadd.f32 %v2581, %v2582
        %v2584 = vtanh.pop %v2583
        %v2585 = vmul.f32 %v2580, %v2584
        %v2586 = vsel %vm974, %v2583, %v2301
        %v2587 = vsel %vm974, %v2585, %v2299
        %v2588 = vld [vmem:[#allocation4 + $0x20] sm:$0xff]
        %v2589 = vld [vmem:[#allocation4 + $0x28] sm:$0xff]
        %v2590 = vld [vmem:[#allocation4 + $0x30] sm:$0xff]
        %v2591 = vld [vmem:[#allocation4 + $0x38] sm:$0xff]
        %v2592 = vpack.c.bf16 %v2587, %v2587
        %2593 = vmatpush.bf16.msra.mxu0 %v2431
        %2594 = vmatpush.bf16.msra.mxu0 %v2427
        %2595 = vmatpush.bf16.msra.mxu0 %v2423
        %2596 = vmatpush.bf16.msra.mxu0 %v2419
        %2597 = vmatpush.bf16.msra.mxu0 %v2415
        %2598 = vmatpush.bf16.msra.mxu0 %v2411
        %2599 = vmatpush.bf16.msra.mxu0 %v2407
        %2600 = vmatpush.bf16.msra.mxu0 %v2403
        %2601 = vmatmul.bf16.gmra.mxu0 %v2592
        %v2602 = vpop.f32.mrf.mxu0
        %v2603 = vadd.f32 0.0, %v2602
        %v2604 = vpop.f32.mrf.mxu0
        %2605 = vdwg.mxu0
        %2606 = vmatpush.bf16.msra.mxu0 %v2432
        %2607 = vmatpush.bf16.msra.mxu0 %v2428
        %2608 = vmatpush.bf16.msra.mxu0 %v2424
        %2609 = vmatpush.bf16.msra.mxu0 %v2420
        %2610 = vmatpush.bf16.msra.mxu0 %v2416
        %2611 = vmatpush.bf16.msra.mxu0 %v2412
        %2612 = vmatpush.bf16.msra.mxu0 %v2408
        %2613 = vmatpush.bf16.msra.mxu0 %v2404
        %2614 = vmatmul.bf16.gmra.mxu0 %v2592
        %v2615 = vpop.f32.mrf.mxu0
        %v2616 = vadd.f32 0.0, %v2615
        %v2617 = vpop.f32.mrf.mxu0
        %2618 = vdwg.mxu0
        %2619 = vmatpush.bf16.msra.mxu0 %v2433
        %2620 = vmatpush.bf16.msra.mxu0 %v2429
        %2621 = vmatpush.bf16.msra.mxu0 %v2425
        %2622 = vmatpush.bf16.msra.mxu0 %v2421
        %2623 = vmatpush.bf16.msra.mxu0 %v2417
        %2624 = vmatpush.bf16.msra.mxu0 %v2413
        %2625 = vmatpush.bf16.msra.mxu0 %v2409
        %2626 = vmatpush.bf16.msra.mxu0 %v2405
        %2627 = vmatmul.bf16.gmra.mxu0 %v2592
        %v2628 = vpop.f32.mrf.mxu0
        %v2629 = vadd.f32 0.0, %v2628
        %v2630 = vpop.f32.mrf.mxu0
        %2631 = vdwg.mxu0
        %2632 = vmatpush.bf16.msra.mxu0 %v2434
        %2633 = vmatpush.bf16.msra.mxu0 %v2430
        %2634 = vmatpush.bf16.msra.mxu0 %v2426
        %2635 = vmatpush.bf16.msra.mxu0 %v2422
        %2636 = vmatpush.bf16.msra.mxu0 %v2418
        %2637 = vmatpush.bf16.msra.mxu0 %v2414
        %2638 = vmatpush.bf16.msra.mxu0 %v2410
        %2639 = vmatpush.bf16.msra.mxu0 %v2406
        %2640 = vmatmul.bf16.gmra.mxu0 %v2592
        %v2641 = vpop.f32.mrf.mxu0
        %v2642 = vadd.f32 0.0, %v2641
        %v2643 = vpop.f32.mrf.mxu0
        %2644 = vdwg.mxu0
        %v2645 = vadd.f32 %v2588, %v2603
        %v2646 = vadd.f32 %v2589, %v2616
        %v2647 = vadd.f32 %v2590, %v2629
        %v2648 = vadd.f32 %v2591, %v2642
        %v2649 = vxor.u32 %v2645, 2147483648
        %v2650 = vmul.f32 %v2649, 1.442695
        %v2651 = vpow.pop %v2650
        %v2652 = vadd.f32 %v2651, 1.0
        %v2653 = vrcp.pop %v2652
        %v2654 = vmul.f32 %v2652, %v2653
        %v2655 = vsub.f32 1.0, %v2654
        %v2656 = vmul.f32 %v2653, %v2655
        %v2657 = vadd.f32 %v2653, %v2656
        %vm2658 = vweird.f32 %v2652
        %vm2659 = vweird.f32 %v2653
        %vm2660 = vmor %vm2658, %vm2659
        %v2661 = vsel %vm2660, %v2653, %v2657
        %v2662 = vand.u32 2147483647, %v2652
        %vm2663 = vcmp.eq.f32.partialorder %v2662, 8.507059e+37
        %v2664 = vand.u32 %v2652, 2147483648
        %v2665 = vor.u32 1.1754944e-38, %v2664
        %v2666 = vsel %vm2663, %v2665, %v2661
        %v2667 = vmul.f32 1.0, %v2666
        %v2668 = vxor.u32 %v2646, 2147483648
        %v2669 = vmul.f32 %v2668, 1.442695
        %v2670 = vpow.pop %v2669
        %v2671 = vadd.f32 %v2670, 1.0
        %v2672 = vrcp.pop %v2671
        %v2673 = vmul.f32 %v2671, %v2672
        %v2674 = vsub.f32 1.0, %v2673
        %v2675 = vmul.f32 %v2672, %v2674
        %v2676 = vadd.f32 %v2672, %v2675
        %vm2677 = vweird.f32 %v2671
        %vm2678 = vweird.f32 %v2672
        %vm2679 = vmor %vm2677, %vm2678
        %v2680 = vsel %vm2679, %v2672, %v2676
        %v2681 = vand.u32 2147483647, %v2671
        %vm2682 = vcmp.eq.f32.partialorder %v2681, 8.507059e+37
        %v2683 = vand.u32 %v2671, 2147483648
        %v2684 = vor.u32 1.1754944e-38, %v2683
        %v2685 = vsel %vm2682, %v2684, %v2680
        %v2686 = vmul.f32 1.0, %v2685
        %v2687 = vtanh.pop %v2647
        %v2688 = vxor.u32 %v2648, 2147483648
        %v2689 = vmul.f32 %v2688, 1.442695
        %v2690 = vpow.pop %v2689
        %v2691 = vadd.f32 %v2690, 1.0
        %v2692 = vrcp.pop %v2691
        %v2693 = vmul.f32 %v2691, %v2692
        %v2694 = vsub.f32 1.0, %v2693
        %v2695 = vmul.f32 %v2692, %v2694
        %v2696 = vadd.f32 %v2692, %v2695
        %vm2697 = vweird.f32 %v2691
        %vm2698 = vweird.f32 %v2692
        %vm2699 = vmor %vm2697, %vm2698
        %v2700 = vsel %vm2699, %v2692, %v2696
        %v2701 = vand.u32 2147483647, %v2691
        %vm2702 = vcmp.eq.f32.partialorder %v2701, 8.507059e+37
        %v2703 = vand.u32 %v2691, 2147483648
        %v2704 = vor.u32 1.1754944e-38, %v2703
        %v2705 = vsel %vm2702, %v2704, %v2700
        %v2706 = vmul.f32 1.0, %v2705
        %v2707 = vmul.f32 %v2686, %v2586
        %v2708 = vmul.f32 %v2667, %v2687
        %v2709 = vadd.f32 %v2707, %v2708
        %v2710 = vtanh.pop %v2709
        %v2711 = vmul.f32 %v2706, %v2710
        %v2712 = vsel %vm1106, %v2709, %v2586
        %v2713 = vsel %vm1106, %v2711, %v2587
        %v2714 = vld [vmem:[#allocation4 + $0x40] sm:$0xff]
        %v2715 = vld [vmem:[#allocation4 + $0x48] sm:$0xff]
        %v2716 = vld [vmem:[#allocation4 + $0x50] sm:$0xff]
        %v2717 = vld [vmem:[#allocation4 + $0x58] sm:$0xff]
        %v2718 = vpack.c.bf16 %v2713, %v2713
        %2719 = vmatpush.bf16.msra.mxu0 %v2431
        %2720 = vmatpush.bf16.msra.mxu0 %v2427
        %2721 = vmatpush.bf16.msra.mxu0 %v2423
        %2722 = vmatpush.bf16.msra.mxu0 %v2419
        %2723 = vmatpush.bf16.msra.mxu0 %v2415
        %2724 = vmatpush.bf16.msra.mxu0 %v2411
        %2725 = vmatpush.bf16.msra.mxu0 %v2407
        %2726 = vmatpush.bf16.msra.mxu0 %v2403
        %2727 = vmatmul.bf16.gmra.mxu0 %v2718
        %v2728 = vpop.f32.mrf.mxu0
        %v2729 = vadd.f32 0.0, %v2728
        %v2730 = vpop.f32.mrf.mxu0
        %2731 = vdwg.mxu0
        %2732 = vmatpush.bf16.msra.mxu0 %v2432
        %2733 = vmatpush.bf16.msra.mxu0 %v2428
        %2734 = vmatpush.bf16.msra.mxu0 %v2424
        %2735 = vmatpush.bf16.msra.mxu0 %v2420
        %2736 = vmatpush.bf16.msra.mxu0 %v2416
        %2737 = vmatpush.bf16.msra.mxu0 %v2412
        %2738 = vmatpush.bf16.msra.mxu0 %v2408
        %2739 = vmatpush.bf16.msra.mxu0 %v2404
        %2740 = vmatmul.bf16.gmra.mxu0 %v2718
        %v2741 = vpop.f32.mrf.mxu0
        %v2742 = vadd.f32 0.0, %v2741
        %v2743 = vpop.f32.mrf.mxu0
        %2744 = vdwg.mxu0
        %2745 = vmatpush.bf16.msra.mxu0 %v2433
        %2746 = vmatpush.bf16.msra.mxu0 %v2429
        %2747 = vmatpush.bf16.msra.mxu0 %v2425
        %2748 = vmatpush.bf16.msra.mxu0 %v2421
        %2749 = vmatpush.bf16.msra.mxu0 %v2417
        %2750 = vmatpush.bf16.msra.mxu0 %v2413
        %2751 = vmatpush.bf16.msra.mxu0 %v2409
        %2752 = vmatpush.bf16.msra.mxu0 %v2405
        %2753 = vmatmul.bf16.gmra.mxu0 %v2718
        %v2754 = vpop.f32.mrf.mxu0
        %v2755 = vadd.f32 0.0, %v2754
        %v2756 = vpop.f32.mrf.mxu0
        %2757 = vdwg.mxu0
        %2758 = vmatpush.bf16.msra.mxu0 %v2434
        %2759 = vmatpush.bf16.msra.mxu0 %v2430
        %2760 = vmatpush.bf16.msra.mxu0 %v2426
        %2761 = vmatpush.bf16.msra.mxu0 %v2422
        %2762 = vmatpush.bf16.msra.mxu0 %v2418
        %2763 = vmatpush.bf16.msra.mxu0 %v2414
        %2764 = vmatpush.bf16.msra.mxu0 %v2410
        %2765 = vmatpush.bf16.msra.mxu0 %v2406
        %2766 = vmatmul.bf16.gmra.mxu0 %v2718
        %v2767 = vpop.f32.mrf.mxu0
        %v2768 = vadd.f32 0.0, %v2767
        %v2769 = vpop.f32.mrf.mxu0
        %2770 = vdwg.mxu0
        %v2771 = vadd.f32 %v2714, %v2729
        %v2772 = vadd.f32 %v2715, %v2742
        %v2773 = vadd.f32 %v2716, %v2755
        %v2774 = vadd.f32 %v2717, %v2768
        %v2775 = vxor.u32 %v2771, 2147483648
        %v2776 = vmul.f32 %v2775, 1.442695
        %v2777 = vpow.pop %v2776
        %v2778 = vadd.f32 %v2777, 1.0
        %v2779 = vrcp.pop %v2778
        %v2780 = vmul.f32 %v2778, %v2779
        %v2781 = vsub.f32 1.0, %v2780
        %v2782 = vmul.f32 %v2779, %v2781
        %v2783 = vadd.f32 %v2779, %v2782
        %vm2784 = vweird.f32 %v2778
        %vm2785 = vweird.f32 %v2779
        %vm2786 = vmor %vm2784, %vm2785
        %v2787 = vsel %vm2786, %v2779, %v2783
        %v2788 = vand.u32 2147483647, %v2778
        %vm2789 = vcmp.eq.f32.partialorder %v2788, 8.507059e+37
        %v2790 = vand.u32 %v2778, 2147483648
        %v2791 = vor.u32 1.1754944e-38, %v2790
        %v2792 = vsel %vm2789, %v2791, %v2787
        %v2793 = vmul.f32 1.0, %v2792
        %v2794 = vxor.u32 %v2772, 2147483648
        %v2795 = vmul.f32 %v2794, 1.442695
        %v2796 = vpow.pop %v2795
        %v2797 = vadd.f32 %v2796, 1.0
        %v2798 = vrcp.pop %v2797
        %v2799 = vmul.f32 %v2797, %v2798
        %v2800 = vsub.f32 1.0, %v2799
        %v2801 = vmul.f32 %v2798, %v2800
        %v2802 = vadd.f32 %v2798, %v2801
        %vm2803 = vweird.f32 %v2797
        %vm2804 = vweird.f32 %v2798
        %vm2805 = vmor %vm2803, %vm2804
        %v2806 = vsel %vm2805, %v2798, %v2802
        %v2807 = vand.u32 2147483647, %v2797
        %vm2808 = vcmp.eq.f32.partialorder %v2807, 8.507059e+37
        %v2809 = vand.u32 %v2797, 2147483648
        %v2810 = vor.u32 1.1754944e-38, %v2809
        %v2811 = vsel %vm2808, %v2810, %v2806
        %v2812 = vmul.f32 1.0, %v2811
        %v2813 = vtanh.pop %v2773
        %v2814 = vxor.u32 %v2774, 2147483648
        %v2815 = vmul.f32 %v2814, 1.442695
        %v2816 = vpow.pop %v2815
        %v2817 = vadd.f32 %v2816, 1.0
        %v2818 = vrcp.pop %v2817
        %v2819 = vmul.f32 %v2817, %v2818
        %v2820 = vsub.f32 1.0, %v2819
        %v2821 = vmul.f32 %v2818, %v2820
        %v2822 = vadd.f32 %v2818, %v2821
        %vm2823 = vweird.f32 %v2817
        %vm2824 = vweird.f32 %v2818
        %vm2825 = vmor %vm2823, %vm2824
        %v2826 = vsel %vm2825, %v2818, %v2822
        %v2827 = vand.u32 2147483647, %v2817
        %vm2828 = vcmp.eq.f32.partialorder %v2827, 8.507059e+37
        %v2829 = vand.u32 %v2817, 2147483648
        %v2830 = vor.u32 1.1754944e-38, %v2829
        %v2831 = vsel %vm2828, %v2830, %v2826
        %v2832 = vmul.f32 1.0, %v2831
        %v2833 = vmul.f32 %v2812, %v2712
        %v2834 = vmul.f32 %v2793, %v2813
        %v2835 = vadd.f32 %v2833, %v2834
        %v2836 = vtanh.pop %v2835
        %v2837 = vmul.f32 %v2832, %v2836
        %v2838 = vsel %vm1238, %v2835, %v2712
        %v2839 = vsel %vm1238, %v2837, %v2713
        %v2840 = vld [vmem:[#allocation4 + $0x60] sm:$0xff]
        %v2841 = vld [vmem:[#allocation4 + $0x68] sm:$0xff]
        %v2842 = vld [vmem:[#allocation4 + $0x70] sm:$0xff]
        %v2843 = vld [vmem:[#allocation4 + $0x78] sm:$0xff]
        %v2844 = vpack.c.bf16 %v2839, %v2839
        %2845 = vmatpush.bf16.msra.mxu0 %v2431
        %2846 = vmatpush.bf16.msra.mxu0 %v2427
        %2847 = vmatpush.bf16.msra.mxu0 %v2423
        %2848 = vmatpush.bf16.msra.mxu0 %v2419
        %2849 = vmatpush.bf16.msra.mxu0 %v2415
        %2850 = vmatpush.bf16.msra.mxu0 %v2411
        %2851 = vmatpush.bf16.msra.mxu0 %v2407
        %2852 = vmatpush.bf16.msra.mxu0 %v2403
        %2853 = vmatmul.bf16.gmra.mxu0 %v2844
        %v2854 = vpop.f32.mrf.mxu0
        %v2855 = vadd.f32 0.0, %v2854
        %v2856 = vpop.f32.mrf.mxu0
        %2857 = vdwg.mxu0
        %2858 = vmatpush.bf16.msra.mxu0 %v2432
        %2859 = vmatpush.bf16.msra.mxu0 %v2428
        %2860 = vmatpush.bf16.msra.mxu0 %v2424
        %2861 = vmatpush.bf16.msra.mxu0 %v2420
        %2862 = vmatpush.bf16.msra.mxu0 %v2416
        %2863 = vmatpush.bf16.msra.mxu0 %v2412
        %2864 = vmatpush.bf16.msra.mxu0 %v2408
        %2865 = vmatpush.bf16.msra.mxu0 %v2404
        %2866 = vmatmul.bf16.gmra.mxu0 %v2844
        %v2867 = vpop.f32.mrf.mxu0
        %v2868 = vadd.f32 0.0, %v2867
        %v2869 = vpop.f32.mrf.mxu0
        %2870 = vdwg.mxu0
        %2871 = vmatpush.bf16.msra.mxu0 %v2433
        %2872 = vmatpush.bf16.msra.mxu0 %v2429
        %2873 = vmatpush.bf16.msra.mxu0 %v2425
        %2874 = vmatpush.bf16.msra.mxu0 %v2421
        %2875 = vmatpush.bf16.msra.mxu0 %v2417
        %2876 = vmatpush.bf16.msra.mxu0 %v2413
        %2877 = vmatpush.bf16.msra.mxu0 %v2409
        %2878 = vmatpush.bf16.msra.mxu0 %v2405
        %2879 = vmatmul.bf16.gmra.mxu0 %v2844
        %v2880 = vpop.f32.mrf.mxu0
        %v2881 = vadd.f32 0.0, %v2880
        %v2882 = vpop.f32.mrf.mxu0
        %2883 = vdwg.mxu0
        %2884 = vmatpush.bf16.msra.mxu0 %v2434
        %2885 = vmatpush.bf16.msra.mxu0 %v2430
        %2886 = vmatpush.bf16.msra.mxu0 %v2426
        %2887 = vmatpush.bf16.msra.mxu0 %v2422
        %2888 = vmatpush.bf16.msra.mxu0 %v2418
        %2889 = vmatpush.bf16.msra.mxu0 %v2414
        %2890 = vmatpush.bf16.msra.mxu0 %v2410
        %2891 = vmatpush.bf16.msra.mxu0 %v2406
        %2892 = vmatmul.bf16.gmra.mxu0 %v2844
        %v2893 = vpop.f32.mrf.mxu0
        %v2894 = vadd.f32 0.0, %v2893
        %v2895 = vpop.f32.mrf.mxu0
        %2896 = vdwg.mxu0
        %v2897 = vadd.f32 %v2840, %v2855
        %v2898 = vadd.f32 %v2841, %v2868
        %v2899 = vadd.f32 %v2842, %v2881
        %v2900 = vadd.f32 %v2843, %v2894
        %v2901 = vxor.u32 %v2897, 2147483648
        %v2902 = vmul.f32 %v2901, 1.442695
        %v2903 = vpow.pop %v2902
        %v2904 = vadd.f32 %v2903, 1.0
        %v2905 = vrcp.pop %v2904
        %v2906 = vmul.f32 %v2904, %v2905
        %v2907 = vsub.f32 1.0, %v2906
        %v2908 = vmul.f32 %v2905, %v2907
        %v2909 = vadd.f32 %v2905, %v2908
        %vm2910 = vweird.f32 %v2904
        %vm2911 = vweird.f32 %v2905
        %vm2912 = vmor %vm2910, %vm2911
        %v2913 = vsel %vm2912, %v2905, %v2909
        %v2914 = vand.u32 2147483647, %v2904
        %vm2915 = vcmp.eq.f32.partialorder %v2914, 8.507059e+37
        %v2916 = vand.u32 %v2904, 2147483648
        %v2917 = vor.u32 1.1754944e-38, %v2916
        %v2918 = vsel %vm2915, %v2917, %v2913
        %v2919 = vmul.f32 1.0, %v2918
        %v2920 = vxor.u32 %v2898, 2147483648
        %v2921 = vmul.f32 %v2920, 1.442695
        %v2922 = vpow.pop %v2921
        %v2923 = vadd.f32 %v2922, 1.0
        %v2924 = vrcp.pop %v2923
        %v2925 = vmul.f32 %v2923, %v2924
        %v2926 = vsub.f32 1.0, %v2925
        %v2927 = vmul.f32 %v2924, %v2926
        %v2928 = vadd.f32 %v2924, %v2927
        %vm2929 = vweird.f32 %v2923
        %vm2930 = vweird.f32 %v2924
        %vm2931 = vmor %vm2929, %vm2930
        %v2932 = vsel %vm2931, %v2924, %v2928
        %v2933 = vand.u32 2147483647, %v2923
        %vm2934 = vcmp.eq.f32.partialorder %v2933, 8.507059e+37
        %v2935 = vand.u32 %v2923, 2147483648
        %v2936 = vor.u32 1.1754944e-38, %v2935
        %v2937 = vsel %vm2934, %v2936, %v2932
        %v2938 = vmul.f32 1.0, %v2937
        %v2939 = vtanh.pop %v2899
        %v2940 = vxor.u32 %v2900, 2147483648
        %v2941 = vmul.f32 %v2940, 1.442695
        %v2942 = vpow.pop %v2941
        %v2943 = vadd.f32 %v2942, 1.0
        %v2944 = vrcp.pop %v2943
        %v2945 = vmul.f32 %v2943, %v2944
        %v2946 = vsub.f32 1.0, %v2945
        %v2947 = vmul.f32 %v2944, %v2946
        %v2948 = vadd.f32 %v2944, %v2947
        %vm2949 = vweird.f32 %v2943
        %vm2950 = vweird.f32 %v2944
        %vm2951 = vmor %vm2949, %vm2950
        %v2952 = vsel %vm2951, %v2944, %v2948
        %v2953 = vand.u32 2147483647, %v2943
        %vm2954 = vcmp.eq.f32.partialorder %v2953, 8.507059e+37
        %v2955 = vand.u32 %v2943, 2147483648
        %v2956 = vor.u32 1.1754944e-38, %v2955
        %v2957 = vsel %vm2954, %v2956, %v2952
        %v2958 = vmul.f32 1.0, %v2957
        %v2959 = vmul.f32 %v2938, %v2838
        %v2960 = vmul.f32 %v2919, %v2939
        %v2961 = vadd.f32 %v2959, %v2960
        %v2962 = vtanh.pop %v2961
        %v2963 = vmul.f32 %v2958, %v2962
        %v2964 = vsel %vm1370, %v2961, %v2838
        %v2965 = vsel %vm1370, %v2963, %v2839
        %v2966 = vld [vmem:[#allocation4 + $0x80] sm:$0xff]
        %v2967 = vld [vmem:[#allocation4 + $0x88] sm:$0xff]
        %v2968 = vld [vmem:[#allocation4 + $0x90] sm:$0xff]
        %v2969 = vld [vmem:[#allocation4 + $0x98] sm:$0xff]
        %v2970 = vpack.c.bf16 %v2965, %v2965
        %2971 = vmatpush.bf16.msra.mxu0 %v2431
        %2972 = vmatpush.bf16.msra.mxu0 %v2427
        %2973 = vmatpush.bf16.msra.mxu0 %v2423
        %2974 = vmatpush.bf16.msra.mxu0 %v2419
        %2975 = vmatpush.bf16.msra.mxu0 %v2415
        %2976 = vmatpush.bf16.msra.mxu0 %v2411
        %2977 = vmatpush.bf16.msra.mxu0 %v2407
        %2978 = vmatpush.bf16.msra.mxu0 %v2403
        %2979 = vmatmul.bf16.gmra.mxu0 %v2970
        %v2980 = vpop.f32.mrf.mxu0
        %v2981 = vadd.f32 0.0, %v2980
        %v2982 = vpop.f32.mrf.mxu0
        %2983 = vdwg.mxu0
        %2984 = vmatpush.bf16.msra.mxu0 %v2432
        %2985 = vmatpush.bf16.msra.mxu0 %v2428
        %2986 = vmatpush.bf16.msra.mxu0 %v2424
        %2987 = vmatpush.bf16.msra.mxu0 %v2420
        %2988 = vmatpush.bf16.msra.mxu0 %v2416
        %2989 = vmatpush.bf16.msra.mxu0 %v2412
        %2990 = vmatpush.bf16.msra.mxu0 %v2408
        %2991 = vmatpush.bf16.msra.mxu0 %v2404
        %2992 = vmatmul.bf16.gmra.mxu0 %v2970
        %v2993 = vpop.f32.mrf.mxu0
        %v2994 = vadd.f32 0.0, %v2993
        %v2995 = vpop.f32.mrf.mxu0
        %2996 = vdwg.mxu0
        %2997 = vmatpush.bf16.msra.mxu0 %v2433
        %2998 = vmatpush.bf16.msra.mxu0 %v2429
        %2999 = vmatpush.bf16.msra.mxu0 %v2425
        %3000 = vmatpush.bf16.msra.mxu0 %v2421
        %3001 = vmatpush.bf16.msra.mxu0 %v2417
        %3002 = vmatpush.bf16.msra.mxu0 %v2413
        %3003 = vmatpush.bf16.msra.mxu0 %v2409
        %3004 = vmatpush.bf16.msra.mxu0 %v2405
        %3005 = vmatmul.bf16.gmra.mxu0 %v2970
        %v3006 = vpop.f32.mrf.mxu0
        %v3007 = vadd.f32 0.0, %v3006
        %v3008 = vpop.f32.mrf.mxu0
        %3009 = vdwg.mxu0
        %3010 = vmatpush.bf16.msra.mxu0 %v2434
        %3011 = vmatpush.bf16.msra.mxu0 %v2430
        %3012 = vmatpush.bf16.msra.mxu0 %v2426
        %3013 = vmatpush.bf16.msra.mxu0 %v2422
        %3014 = vmatpush.bf16.msra.mxu0 %v2418
        %3015 = vmatpush.bf16.msra.mxu0 %v2414
        %3016 = vmatpush.bf16.msra.mxu0 %v2410
        %3017 = vmatpush.bf16.msra.mxu0 %v2406
        %3018 = vmatmul.bf16.gmra.mxu0 %v2970
        %v3019 = vpop.f32.mrf.mxu0
        %v3020 = vadd.f32 0.0, %v3019
        %v3021 = vpop.f32.mrf.mxu0
        %3022 = vdwg.mxu0
        %v3023 = vadd.f32 %v2966, %v2981
        %v3024 = vadd.f32 %v2967, %v2994
        %v3025 = vadd.f32 %v2968, %v3007
        %v3026 = vadd.f32 %v2969, %v3020
        %v3027 = vxor.u32 %v3023, 2147483648
        %v3028 = vmul.f32 %v3027, 1.442695
        %v3029 = vpow.pop %v3028
        %v3030 = vadd.f32 %v3029, 1.0
        %v3031 = vrcp.pop %v3030
        %v3032 = vmul.f32 %v3030, %v3031
        %v3033 = vsub.f32 1.0, %v3032
        %v3034 = vmul.f32 %v3031, %v3033
        %v3035 = vadd.f32 %v3031, %v3034
        %vm3036 = vweird.f32 %v3030
        %vm3037 = vweird.f32 %v3031
        %vm3038 = vmor %vm3036, %vm3037
        %v3039 = vsel %vm3038, %v3031, %v3035
        %v3040 = vand.u32 2147483647, %v3030
        %vm3041 = vcmp.eq.f32.partialorder %v3040, 8.507059e+37
        %v3042 = vand.u32 %v3030, 2147483648
        %v3043 = vor.u32 1.1754944e-38, %v3042
        %v3044 = vsel %vm3041, %v3043, %v3039
        %v3045 = vmul.f32 1.0, %v3044
        %v3046 = vxor.u32 %v3024, 2147483648
        %v3047 = vmul.f32 %v3046, 1.442695
        %v3048 = vpow.pop %v3047
        %v3049 = vadd.f32 %v3048, 1.0
        %v3050 = vrcp.pop %v3049
        %v3051 = vmul.f32 %v3049, %v3050
        %v3052 = vsub.f32 1.0, %v3051
        %v3053 = vmul.f32 %v3050, %v3052
        %v3054 = vadd.f32 %v3050, %v3053
        %vm3055 = vweird.f32 %v3049
        %vm3056 = vweird.f32 %v3050
        %vm3057 = vmor %vm3055, %vm3056
        %v3058 = vsel %vm3057, %v3050, %v3054
        %v3059 = vand.u32 2147483647, %v3049
        %vm3060 = vcmp.eq.f32.partialorder %v3059, 8.507059e+37
        %v3061 = vand.u32 %v3049, 2147483648
        %v3062 = vor.u32 1.1754944e-38, %v3061
        %v3063 = vsel %vm3060, %v3062, %v3058
        %v3064 = vmul.f32 1.0, %v3063
        %v3065 = vtanh.pop %v3025
        %v3066 = vxor.u32 %v3026, 2147483648
        %v3067 = vmul.f32 %v3066, 1.442695
        %v3068 = vpow.pop %v3067
        %v3069 = vadd.f32 %v3068, 1.0
        %v3070 = vrcp.pop %v3069
        %v3071 = vmul.f32 %v3069, %v3070
        %v3072 = vsub.f32 1.0, %v3071
        %v3073 = vmul.f32 %v3070, %v3072
        %v3074 = vadd.f32 %v3070, %v3073
        %vm3075 = vweird.f32 %v3069
        %vm3076 = vweird.f32 %v3070
        %vm3077 = vmor %vm3075, %vm3076
        %v3078 = vsel %vm3077, %v3070, %v3074
        %v3079 = vand.u32 2147483647, %v3069
        %vm3080 = vcmp.eq.f32.partialorder %v3079, 8.507059e+37
        %v3081 = vand.u32 %v3069, 2147483648
        %v3082 = vor.u32 1.1754944e-38, %v3081
        %v3083 = vsel %vm3080, %v3082, %v3078
        %v3084 = vmul.f32 1.0, %v3083
        %v3085 = vmul.f32 %v3064, %v2964
        %v3086 = vmul.f32 %v3045, %v3065
        %v3087 = vadd.f32 %v3085, %v3086
        %v3088 = vtanh.pop %v3087
        %v3089 = vmul.f32 %v3084, %v3088
        %v3090 = vsel %vm1502, %v3087, %v2964
        %v3091 = vsel %vm1502, %v3089, %v2965
        %v3092 = vld [vmem:[#allocation4 + $0xa0] sm:$0xff]
        %v3093 = vld [vmem:[#allocation4 + $0xa8] sm:$0xff]
        %v3094 = vld [vmem:[#allocation4 + $0xb0] sm:$0xff]
        %v3095 = vld [vmem:[#allocation4 + $0xb8] sm:$0xff]
        %v3096 = vpack.c.bf16 %v3091, %v3091
        %3097 = vmatpush.bf16.msra.mxu0 %v2431
        %3098 = vmatpush.bf16.msra.mxu0 %v2427
        %3099 = vmatpush.bf16.msra.mxu0 %v2423
        %3100 = vmatpush.bf16.msra.mxu0 %v2419
        %3101 = vmatpush.bf16.msra.mxu0 %v2415
        %3102 = vmatpush.bf16.msra.mxu0 %v2411
        %3103 = vmatpush.bf16.msra.mxu0 %v2407
        %3104 = vmatpush.bf16.msra.mxu0 %v2403
        %3105 = vmatmul.bf16.gmra.mxu0 %v3096
        %v3106 = vpop.f32.mrf.mxu0
        %v3107 = vadd.f32 0.0, %v3106
        %v3108 = vpop.f32.mrf.mxu0
        %3109 = vdwg.mxu0
        %3110 = vmatpush.bf16.msra.mxu0 %v2432
        %3111 = vmatpush.bf16.msra.mxu0 %v2428
        %3112 = vmatpush.bf16.msra.mxu0 %v2424
        %3113 = vmatpush.bf16.msra.mxu0 %v2420
        %3114 = vmatpush.bf16.msra.mxu0 %v2416
        %3115 = vmatpush.bf16.msra.mxu0 %v2412
        %3116 = vmatpush.bf16.msra.mxu0 %v2408
        %3117 = vmatpush.bf16.msra.mxu0 %v2404
        %3118 = vmatmul.bf16.gmra.mxu0 %v3096
        %v3119 = vpop.f32.mrf.mxu0
        %v3120 = vadd.f32 0.0, %v3119
        %v3121 = vpop.f32.mrf.mxu0
        %3122 = vdwg.mxu0
        %3123 = vmatpush.bf16.msra.mxu0 %v2433
        %3124 = vmatpush.bf16.msra.mxu0 %v2429
        %3125 = vmatpush.bf16.msra.mxu0 %v2425
        %3126 = vmatpush.bf16.msra.mxu0 %v2421
        %3127 = vmatpush.bf16.msra.mxu0 %v2417
        %3128 = vmatpush.bf16.msra.mxu0 %v2413
        %3129 = vmatpush.bf16.msra.mxu0 %v2409
        %3130 = vmatpush.bf16.msra.mxu0 %v2405
        %3131 = vmatmul.bf16.gmra.mxu0 %v3096
        %v3132 = vpop.f32.mrf.mxu0
        %v3133 = vadd.f32 0.0, %v3132
        %v3134 = vpop.f32.mrf.mxu0
        %3135 = vdwg.mxu0
        %3136 = vmatpush.bf16.msra.mxu0 %v2434
        %3137 = vmatpush.bf16.msra.mxu0 %v2430
        %3138 = vmatpush.bf16.msra.mxu0 %v2426
        %3139 = vmatpush.bf16.msra.mxu0 %v2422
        %3140 = vmatpush.bf16.msra.mxu0 %v2418
        %3141 = vmatpush.bf16.msra.mxu0 %v2414
        %3142 = vmatpush.bf16.msra.mxu0 %v2410
        %3143 = vmatpush.bf16.msra.mxu0 %v2406
        %3144 = vmatmul.bf16.gmra.mxu0 %v3096
        %v3145 = vpop.f32.mrf.mxu0
        %v3146 = vadd.f32 0.0, %v3145
        %v3147 = vpop.f32.mrf.mxu0
        %3148 = vdwg.mxu0
        %v3149 = vadd.f32 %v3092, %v3107
        %v3150 = vadd.f32 %v3093, %v3120
        %v3151 = vadd.f32 %v3094, %v3133
        %v3152 = vadd.f32 %v3095, %v3146
        %v3153 = vxor.u32 %v3149, 2147483648
        %v3154 = vmul.f32 %v3153, 1.442695
        %v3155 = vpow.pop %v3154
        %v3156 = vadd.f32 %v3155, 1.0
        %v3157 = vrcp.pop %v3156
        %v3158 = vmul.f32 %v3156, %v3157
        %v3159 = vsub.f32 1.0, %v3158
        %v3160 = vmul.f32 %v3157, %v3159
        %v3161 = vadd.f32 %v3157, %v3160
        %vm3162 = vweird.f32 %v3156
        %vm3163 = vweird.f32 %v3157
        %vm3164 = vmor %vm3162, %vm3163
        %v3165 = vsel %vm3164, %v3157, %v3161
        %v3166 = vand.u32 2147483647, %v3156
        %vm3167 = vcmp.eq.f32.partialorder %v3166, 8.507059e+37
        %v3168 = vand.u32 %v3156, 2147483648
        %v3169 = vor.u32 1.1754944e-38, %v3168
        %v3170 = vsel %vm3167, %v3169, %v3165
        %v3171 = vmul.f32 1.0, %v3170
        %v3172 = vxor.u32 %v3150, 2147483648
        %v3173 = vmul.f32 %v3172, 1.442695
        %v3174 = vpow.pop %v3173
        %v3175 = vadd.f32 %v3174, 1.0
        %v3176 = vrcp.pop %v3175
        %v3177 = vmul.f32 %v3175, %v3176
        %v3178 = vsub.f32 1.0, %v3177
        %v3179 = vmul.f32 %v3176, %v3178
        %v3180 = vadd.f32 %v3176, %v3179
        %vm3181 = vweird.f32 %v3175
        %vm3182 = vweird.f32 %v3176
        %vm3183 = vmor %vm3181, %vm3182
        %v3184 = vsel %vm3183, %v3176, %v3180
        %v3185 = vand.u32 2147483647, %v3175
        %vm3186 = vcmp.eq.f32.partialorder %v3185, 8.507059e+37
        %v3187 = vand.u32 %v3175, 2147483648
        %v3188 = vor.u32 1.1754944e-38, %v3187
        %v3189 = vsel %vm3186, %v3188, %v3184
        %v3190 = vmul.f32 1.0, %v3189
        %v3191 = vtanh.pop %v3151
        %v3192 = vxor.u32 %v3152, 2147483648
        %v3193 = vmul.f32 %v3192, 1.442695
        %v3194 = vpow.pop %v3193
        %v3195 = vadd.f32 %v3194, 1.0
        %v3196 = vrcp.pop %v3195
        %v3197 = vmul.f32 %v3195, %v3196
        %v3198 = vsub.f32 1.0, %v3197
        %v3199 = vmul.f32 %v3196, %v3198
        %v3200 = vadd.f32 %v3196, %v3199
        %vm3201 = vweird.f32 %v3195
        %vm3202 = vweird.f32 %v3196
        %vm3203 = vmor %vm3201, %vm3202
        %v3204 = vsel %vm3203, %v3196, %v3200
        %v3205 = vand.u32 2147483647, %v3195
        %vm3206 = vcmp.eq.f32.partialorder %v3205, 8.507059e+37
        %v3207 = vand.u32 %v3195, 2147483648
        %v3208 = vor.u32 1.1754944e-38, %v3207
        %v3209 = vsel %vm3206, %v3208, %v3204
        %v3210 = vmul.f32 1.0, %v3209
        %v3211 = vmul.f32 %v3190, %v3090
        %v3212 = vmul.f32 %v3171, %v3191
        %v3213 = vadd.f32 %v3211, %v3212
        %v3214 = vtanh.pop %v3213
        %v3215 = vmul.f32 %v3210, %v3214
        %v3216 = vsel %vm1634, %v3213, %v3090
        %v3217 = vsel %vm1634, %v3215, %v3091
        %v3218 = vld [vmem:[#allocation4 + $0xc0] sm:$0xff]
        %v3219 = vld [vmem:[#allocation4 + $0xc8] sm:$0xff]
        %v3220 = vld [vmem:[#allocation4 + $0xd0] sm:$0xff]
        %v3221 = vld [vmem:[#allocation4 + $0xd8] sm:$0xff]
        %v3222 = vpack.c.bf16 %v3217, %v3217
        %3223 = vmatpush.bf16.msra.mxu0 %v2431
        %3224 = vmatpush.bf16.msra.mxu0 %v2427
        %3225 = vmatpush.bf16.msra.mxu0 %v2423
        %3226 = vmatpush.bf16.msra.mxu0 %v2419
        %3227 = vmatpush.bf16.msra.mxu0 %v2415
        %3228 = vmatpush.bf16.msra.mxu0 %v2411
        %3229 = vmatpush.bf16.msra.mxu0 %v2407
        %3230 = vmatpush.bf16.msra.mxu0 %v2403
        %3231 = vmatmul.bf16.gmra.mxu0 %v3222
        %v3232 = vpop.f32.mrf.mxu0
        %v3233 = vadd.f32 0.0, %v3232
        %v3234 = vpop.f32.mrf.mxu0
        %3235 = vdwg.mxu0
        %3236 = vmatpush.bf16.msra.mxu0 %v2432
        %3237 = vmatpush.bf16.msra.mxu0 %v2428
        %3238 = vmatpush.bf16.msra.mxu0 %v2424
        %3239 = vmatpush.bf16.msra.mxu0 %v2420
        %3240 = vmatpush.bf16.msra.mxu0 %v2416
        %3241 = vmatpush.bf16.msra.mxu0 %v2412
        %3242 = vmatpush.bf16.msra.mxu0 %v2408
        %3243 = vmatpush.bf16.msra.mxu0 %v2404
        %3244 = vmatmul.bf16.gmra.mxu0 %v3222
        %v3245 = vpop.f32.mrf.mxu0
        %v3246 = vadd.f32 0.0, %v3245
        %v3247 = vpop.f32.mrf.mxu0
        %3248 = vdwg.mxu0
        %3249 = vmatpush.bf16.msra.mxu0 %v2433
        %3250 = vmatpush.bf16.msra.mxu0 %v2429
        %3251 = vmatpush.bf16.msra.mxu0 %v2425
        %3252 = vmatpush.bf16.msra.mxu0 %v2421
        %3253 = vmatpush.bf16.msra.mxu0 %v2417
        %3254 = vmatpush.bf16.msra.mxu0 %v2413
        %3255 = vmatpush.bf16.msra.mxu0 %v2409
        %3256 = vmatpush.bf16.msra.mxu0 %v2405
        %3257 = vmatmul.bf16.gmra.mxu0 %v3222
        %v3258 = vpop.f32.mrf.mxu0
        %v3259 = vadd.f32 0.0, %v3258
        %v3260 = vpop.f32.mrf.mxu0
        %3261 = vdwg.mxu0
        %3262 = vmatpush.bf16.msra.mxu0 %v2434
        %3263 = vmatpush.bf16.msra.mxu0 %v2430
        %3264 = vmatpush.bf16.msra.mxu0 %v2426
        %3265 = vmatpush.bf16.msra.mxu0 %v2422
        %3266 = vmatpush.bf16.msra.mxu0 %v2418
        %3267 = vmatpush.bf16.msra.mxu0 %v2414
        %3268 = vmatpush.bf16.msra.mxu0 %v2410
        %3269 = vmatpush.bf16.msra.mxu0 %v2406
        %3270 = vmatmul.bf16.gmra.mxu0 %v3222
        %v3271 = vpop.f32.mrf.mxu0
        %v3272 = vadd.f32 0.0, %v3271
        %v3273 = vpop.f32.mrf.mxu0
        %3274 = vdwg.mxu0
        %v3275 = vadd.f32 %v3218, %v3233
        %v3276 = vadd.f32 %v3219, %v3246
        %v3277 = vadd.f32 %v3220, %v3259
        %v3278 = vadd.f32 %v3221, %v3272
        %v3279 = vxor.u32 %v3275, 2147483648
        %v3280 = vmul.f32 %v3279, 1.442695
        %v3281 = vpow.pop %v3280
        %v3282 = vadd.f32 %v3281, 1.0
        %v3283 = vrcp.pop %v3282
        %v3284 = vmul.f32 %v3282, %v3283
        %v3285 = vsub.f32 1.0, %v3284
        %v3286 = vmul.f32 %v3283, %v3285
        %v3287 = vadd.f32 %v3283, %v3286
        %vm3288 = vweird.f32 %v3282
        %vm3289 = vweird.f32 %v3283
        %vm3290 = vmor %vm3288, %vm3289
        %v3291 = vsel %vm3290, %v3283, %v3287
        %v3292 = vand.u32 2147483647, %v3282
        %vm3293 = vcmp.eq.f32.partialorder %v3292, 8.507059e+37
        %v3294 = vand.u32 %v3282, 2147483648
        %v3295 = vor.u32 1.1754944e-38, %v3294
        %v3296 = vsel %vm3293, %v3295, %v3291
        %v3297 = vmul.f32 1.0, %v3296
        %v3298 = vxor.u32 %v3276, 2147483648
        %v3299 = vmul.f32 %v3298, 1.442695
        %v3300 = vpow.pop %v3299
        %v3301 = vadd.f32 %v3300, 1.0
        %v3302 = vrcp.pop %v3301
        %v3303 = vmul.f32 %v3301, %v3302
        %v3304 = vsub.f32 1.0, %v3303
        %v3305 = vmul.f32 %v3302, %v3304
        %v3306 = vadd.f32 %v3302, %v3305
        %vm3307 = vweird.f32 %v3301
        %vm3308 = vweird.f32 %v3302
        %vm3309 = vmor %vm3307, %vm3308
        %v3310 = vsel %vm3309, %v3302, %v3306
        %v3311 = vand.u32 2147483647, %v3301
        %vm3312 = vcmp.eq.f32.partialorder %v3311, 8.507059e+37
        %v3313 = vand.u32 %v3301, 2147483648
        %v3314 = vor.u32 1.1754944e-38, %v3313
        %v3315 = vsel %vm3312, %v3314, %v3310
        %v3316 = vmul.f32 1.0, %v3315
        %v3317 = vtanh.pop %v3277
        %v3318 = vxor.u32 %v3278, 2147483648
        %v3319 = vmul.f32 %v3318, 1.442695
        %v3320 = vpow.pop %v3319
        %v3321 = vadd.f32 %v3320, 1.0
        %v3322 = vrcp.pop %v3321
        %v3323 = vmul.f32 %v3321, %v3322
        %v3324 = vsub.f32 1.0, %v3323
        %v3325 = vmul.f32 %v3322, %v3324
        %v3326 = vadd.f32 %v3322, %v3325
        %vm3327 = vweird.f32 %v3321
        %vm3328 = vweird.f32 %v3322
        %vm3329 = vmor %vm3327, %vm3328
        %v3330 = vsel %vm3329, %v3322, %v3326
        %v3331 = vand.u32 2147483647, %v3321
        %vm3332 = vcmp.eq.f32.partialorder %v3331, 8.507059e+37
        %v3333 = vand.u32 %v3321, 2147483648
        %v3334 = vor.u32 1.1754944e-38, %v3333
        %v3335 = vsel %vm3332, %v3334, %v3330
        %v3336 = vmul.f32 1.0, %v3335
        %v3337 = vmul.f32 %v3316, %v3216
        %v3338 = vmul.f32 %v3297, %v3317
        %v3339 = vadd.f32 %v3337, %v3338
        %v3340 = vtanh.pop %v3339
        %v3341 = vmul.f32 %v3336, %v3340
        %v3342 = vsel %vm1766, %v3339, %v3216
        %v3343 = vsel %vm1766, %v3341, %v3217
        %v3344 = vld [vmem:[#allocation4 + $0xe0] sm:$0xff]
        %v3345 = vld [vmem:[#allocation4 + $0xe8] sm:$0xff]
        %v3346 = vld [vmem:[#allocation4 + $0xf0] sm:$0xff]
        %v3347 = vld [vmem:[#allocation4 + $0xf8] sm:$0xff]
        %v3348 = vpack.c.bf16 %v3343, %v3343
        %3349 = vmatpush.bf16.msra.mxu0 %v2431
        %3350 = vmatpush.bf16.msra.mxu0 %v2427
        %3351 = vmatpush.bf16.msra.mxu0 %v2423
        %3352 = vmatpush.bf16.msra.mxu0 %v2419
        %3353 = vmatpush.bf16.msra.mxu0 %v2415
        %3354 = vmatpush.bf16.msra.mxu0 %v2411
        %3355 = vmatpush.bf16.msra.mxu0 %v2407
        %3356 = vmatpush.bf16.msra.mxu0 %v2403
        %3357 = vmatmul.bf16.gmra.mxu0 %v3348
        %v3358 = vpop.f32.mrf.mxu0
        %v3359 = vadd.f32 0.0, %v3358
        %v3360 = vpop.f32.mrf.mxu0
        %3361 = vdwg.mxu0
        %3362 = vmatpush.bf16.msra.mxu0 %v2432
        %3363 = vmatpush.bf16.msra.mxu0 %v2428
        %3364 = vmatpush.bf16.msra.mxu0 %v2424
        %3365 = vmatpush.bf16.msra.mxu0 %v2420
        %3366 = vmatpush.bf16.msra.mxu0 %v2416
        %3367 = vmatpush.bf16.msra.mxu0 %v2412
        %3368 = vmatpush.bf16.msra.mxu0 %v2408
        %3369 = vmatpush.bf16.msra.mxu0 %v2404
        %3370 = vmatmul.bf16.gmra.mxu0 %v3348
        %v3371 = vpop.f32.mrf.mxu0
        %v3372 = vadd.f32 0.0, %v3371
        %v3373 = vpop.f32.mrf.mxu0
        %3374 = vdwg.mxu0
        %3375 = vmatpush.bf16.msra.mxu0 %v2433
        %3376 = vmatpush.bf16.msra.mxu0 %v2429
        %3377 = vmatpush.bf16.msra.mxu0 %v2425
        %3378 = vmatpush.bf16.msra.mxu0 %v2421
        %3379 = vmatpush.bf16.msra.mxu0 %v2417
        %3380 = vmatpush.bf16.msra.mxu0 %v2413
        %3381 = vmatpush.bf16.msra.mxu0 %v2409
        %3382 = vmatpush.bf16.msra.mxu0 %v2405
        %3383 = vmatmul.bf16.gmra.mxu0 %v3348
        %v3384 = vpop.f32.mrf.mxu0
        %v3385 = vadd.f32 0.0, %v3384
        %v3386 = vpop.f32.mrf.mxu0
        %3387 = vdwg.mxu0
        %3388 = vmatpush.bf16.msra.mxu0 %v2434
        %3389 = vmatpush.bf16.msra.mxu0 %v2430
        %3390 = vmatpush.bf16.msra.mxu0 %v2426
        %3391 = vmatpush.bf16.msra.mxu0 %v2422
        %3392 = vmatpush.bf16.msra.mxu0 %v2418
        %3393 = vmatpush.bf16.msra.mxu0 %v2414
        %3394 = vmatpush.bf16.msra.mxu0 %v2410
        %3395 = vmatpush.bf16.msra.mxu0 %v2406
        %3396 = vmatmul.bf16.gmra.mxu0 %v3348
        %v3397 = vpop.f32.mrf.mxu0
        %v3398 = vadd.f32 0.0, %v3397
        %v3399 = vpop.f32.mrf.mxu0
        %3400 = vdwg.mxu0
        %v3401 = vadd.f32 %v3344, %v3359
        %v3402 = vadd.f32 %v3345, %v3372
        %v3403 = vadd.f32 %v3346, %v3385
        %v3404 = vadd.f32 %v3347, %v3398
        %v3405 = vxor.u32 %v3401, 2147483648
        %v3406 = vmul.f32 %v3405, 1.442695
        %v3407 = vpow.pop %v3406
        %v3408 = vadd.f32 %v3407, 1.0
        %v3409 = vrcp.pop %v3408
        %v3410 = vmul.f32 %v3408, %v3409
        %v3411 = vsub.f32 1.0, %v3410
        %v3412 = vmul.f32 %v3409, %v3411
        %v3413 = vadd.f32 %v3409, %v3412
        %vm3414 = vweird.f32 %v3408
        %vm3415 = vweird.f32 %v3409
        %vm3416 = vmor %vm3414, %vm3415
        %v3417 = vsel %vm3416, %v3409, %v3413
        %v3418 = vand.u32 2147483647, %v3408
        %vm3419 = vcmp.eq.f32.partialorder %v3418, 8.507059e+37
        %v3420 = vand.u32 %v3408, 2147483648
        %v3421 = vor.u32 1.1754944e-38, %v3420
        %v3422 = vsel %vm3419, %v3421, %v3417
        %v3423 = vmul.f32 1.0, %v3422
        %v3424 = vxor.u32 %v3402, 2147483648
        %v3425 = vmul.f32 %v3424, 1.442695
        %v3426 = vpow.pop %v3425
        %v3427 = vadd.f32 %v3426, 1.0
        %v3428 = vrcp.pop %v3427
        %v3429 = vmul.f32 %v3427, %v3428
        %v3430 = vsub.f32 1.0, %v3429
        %v3431 = vmul.f32 %v3428, %v3430
        %v3432 = vadd.f32 %v3428, %v3431
        %vm3433 = vweird.f32 %v3427
        %vm3434 = vweird.f32 %v3428
        %vm3435 = vmor %vm3433, %vm3434
        %v3436 = vsel %vm3435, %v3428, %v3432
        %v3437 = vand.u32 2147483647, %v3427
        %vm3438 = vcmp.eq.f32.partialorder %v3437, 8.507059e+37
        %v3439 = vand.u32 %v3427, 2147483648
        %v3440 = vor.u32 1.1754944e-38, %v3439
        %v3441 = vsel %vm3438, %v3440, %v3436
        %v3442 = vmul.f32 1.0, %v3441
        %v3443 = vtanh.pop %v3403
        %v3444 = vxor.u32 %v3404, 2147483648
        %v3445 = vmul.f32 %v3444, 1.442695
        %v3446 = vpow.pop %v3445
        %v3447 = vadd.f32 %v3446, 1.0
        %v3448 = vrcp.pop %v3447
        %v3449 = vmul.f32 %v3447, %v3448
        %v3450 = vsub.f32 1.0, %v3449
        %v3451 = vmul.f32 %v3448, %v3450
        %v3452 = vadd.f32 %v3448, %v3451
        %vm3453 = vweird.f32 %v3447
        %vm3454 = vweird.f32 %v3448
        %vm3455 = vmor %vm3453, %vm3454
        %v3456 = vsel %vm3455, %v3448, %v3452
        %v3457 = vand.u32 2147483647, %v3447
        %vm3458 = vcmp.eq.f32.partialorder %v3457, 8.507059e+37
        %v3459 = vand.u32 %v3447, 2147483648
        %v3460 = vor.u32 1.1754944e-38, %v3459
        %v3461 = vsel %vm3458, %v3460, %v3456
        %v3462 = vmul.f32 1.0, %v3461
        %v3463 = vmul.f32 %v3442, %v3342
        %v3464 = vmul.f32 %v3423, %v3443
        %v3465 = vadd.f32 %v3463, %v3464
        %v3466 = vtanh.pop %v3465
        %v3467 = vmul.f32 %v3462, %v3466
        %v3468 = vsel %vm1898, %v3465, %v3342
        %v3469 = vsel %vm1898, %v3467, %v3343
        %3470 = vst [vmem:[%s2298] sm:$0xff] %v3469
        %3471 = vst [vmem:[%s2300] sm:$0xff] %v3468
        %p3472 = scmp.eq.s32.totalorder %s29, 1
        // Predicated region
        $region77: #{tpu_custom_call.1} parent=55 // pred_check
          %p3473 = pneg %p3472
        $region78: #{tpu_custom_call.1} parent=55 // pred_check_branch
          %3475 = sbr.rel (%p3473) target = $region80
        $region79: #{tpu_custom_call.1} parent=55 // pred_region
          %v3476 = vpack.c.bf16 %v3469, %v3469
          %v3477 = vld [vmem:[%s7] sm:$0xf]
          %v3478 = vld [vmem:[%s7 + $0x4] sm:$0xf]
          %v3479 = vld [vmem:[%s7 + $0x8] sm:$0xf]
          %v3480 = vld [vmem:[%s7 + $0xc] sm:$0xf]
          %v3481 = vld [vmem:[%s7 + $0x10] sm:$0xf]
          %v3482 = vld [vmem:[%s7 + $0x14] sm:$0xf]
          %v3483 = vld [vmem:[%s7 + $0x18] sm:$0xf]
          %v3484 = vld [vmem:[%s7 + $0x1c] sm:$0xf]
          %v3485 = vld [vmem:[%s7 + $0x20] sm:$0xf]
          %v3486 = vld [vmem:[%s7 + $0x24] sm:$0xf]
          %v3487 = vld [vmem:[%s7 + $0x28] sm:$0xf]
          %v3488 = vld [vmem:[%s7 + $0x2c] sm:$0xf]
          %v3489 = vld [vmem:[%s7 + $0x30] sm:$0xf]
          %v3490 = vld [vmem:[%s7 + $0x34] sm:$0xf]
          %v3491 = vld [vmem:[%s7 + $0x38] sm:$0xf]
          %v3492 = vld [vmem:[%s7 + $0x3c] sm:$0xf]
          %v3493 = vld [vmem:[%s8] sm:$0x1]
          %v3495 = vperm.slane %v3493, 0
          %v3513 = vunpack.c.l.b16 %v3477
          %v3514 = vunpack.c.l.b16 %v3478
          %v3515 = vunpack.c.l.b16 %v3479
          %v3516 = vunpack.c.l.b16 %v3480
          %v3517 = vunpack.c.l.b16 %v3481
          %v3518 = vunpack.c.l.b16 %v3482
          %v3519 = vunpack.c.l.b16 %v3483
          %v3520 = vunpack.c.l.b16 %v3484
          %v3521 = vunpack.c.l.b16 %v3485
          %v3522 = vunpack.c.l.b16 %v3486
          %v3523 = vunpack.c.l.b16 %v3487
          %v3524 = vunpack.c.l.b16 %v3488
          %v3525 = vunpack.c.l.b16 %v3489
          %v3526 = vunpack.c.l.b16 %v3490
          %v3527 = vunpack.c.l.b16 %v3491
          %v3528 = vunpack.c.l.b16 %v3492
          %v3529 = vpack.c.b16 %v3514, %v3513
          %v3530 = vpack.c.b16 %v3516, %v3515
          %v3531 = vpack.c.b16 %v3518, %v3517
          %v3532 = vpack.c.b16 %v3520, %v3519
          %v3533 = vpack.c.b16 %v3522, %v3521
          %v3534 = vpack.c.b16 %v3524, %v3523
          %v3535 = vpack.c.b16 %v3526, %v3525
          %v3536 = vpack.c.b16 %v3528, %v3527
          %3545 = vmatpush.bf16.msra.mxu0 %v3536
          %3546 = vmatpush.bf16.msra.mxu0 %v3535
          %3547 = vmatpush.bf16.msra.mxu0 %v3534
          %3548 = vmatpush.bf16.msra.mxu0 %v3533
          %3549 = vmatpush.bf16.msra.mxu0 %v3532
          %3550 = vmatpush.bf16.msra.mxu0 %v3531
          %3551 = vmatpush.bf16.msra.mxu0 %v3530
          %3552 = vmatpush.bf16.msra.mxu0 %v3529
          %3553 = vmatmul.bf16.gmra.mxu0 %v3476
          %v3554 = vpop.f32.mrf.mxu0
          %v3555 = vadd.f32 %v3495, %v3554
          %v3556 = vpop.f32.mrf.mxu0
          %3557 = vdwg.mxu0
          %3558 = vst [vmem:[#allocation14] sm:$0xff] %v3555
        $region80: #{tpu_custom_call.1} parent=55 // pred_fallthru
          _
        // Predicated region
        $region81: #{tpu_custom_call.1} parent=55 // pred_check
          %p3559 = pneg %p250
        $region82: #{tpu_custom_call.1} parent=55 // pred_check_branch
          %3561 = sbr.rel (%p3559) target = $region84
        $region83: #{tpu_custom_call.1} parent=55 // pred_region
          %3563 = vsyncadd [#allocation8], 0
          %s3564 = smul.addr %s28, 8
          %s3565 = scalar_lea.hbm %s9, %s3564
          %s3567 = sshll.u32 [#allocation14], 4
          %s3568 = int_to_ptr.vmem [resolvable:$true] %s3567
          %s3569 = sshll.u32 %s3565, 4
          %s3570 = int_to_ptr.hbm [resolvable:$true] %s3569
          %3572 = dma.vmem_to_hbm [thread:$0]  %s3568, 128, %s3570, [#allocation8]
        $region84: #{tpu_custom_call.1} parent=55 // pred_fallthru
          _
        // Predicated region
        $region85: #{tpu_custom_call.1} parent=55 // pred_check
          %p3573 = pneg %p250
        $region86: #{tpu_custom_call.1} parent=55 // pred_check_branch
          %3575 = sbr.rel (%p3573) target = $region88
        $region87: #{tpu_custom_call.1} parent=55 // pred_region
          %3577 = dma.done [#allocation8], 128
        $region88: #{tpu_custom_call.1} parent=55 // pred_fallthru
          _
      $region56: #{tpu_custom_call.1} parent=5 // pred_fallthru
        _
      %p3578 = scmp.le.s32.totalorder 2, %s19
      // Predicated region
      $region89: #{tpu_custom_call.1} parent=5 // pred_check
        %p3579 = pneg %p3578
      $region90: #{tpu_custom_call.1} parent=5 // pred_check_branch
        %3581 = sbr.rel (%p3579) target = $region92
      $region91: #{tpu_custom_call.1} parent=5 // pred_region
        %s3582 = ssub.s32 %s19, 2
      $region92: #{tpu_custom_call.1} parent=5 // pred_fallthru
        _
    $region6: #{tpu_custom_call.1} parent=1 // loop_footer
      %s23 = sadd.s32 1, %s19
    $region7: #{tpu_custom_call.1} parent=1 // loop_footer_branch
      %18 = sbr.rel target = $region3
    $region8: #{tpu_custom_call.1} parent=1 // loop_exit
      _
    %3583 = vsyncpa [#allocation7], 1
    %s3584 = scalar_lea.sflag [#allocation7], 1
    %3585 = vsyncpa %s3584, 1
    %3586 = vsyncpa [#allocation10], 1
    %3587 = vsyncpa [#allocation13], 1
    %3588 = vsyncpa [#allocation8], 1
    %s3589 = scalar_lea.sflag [#allocation8], 1
    %3590 = vsyncpa %s3589, 1

</llo_original>
